<compile_context>
chip_gen: v6e
topology: v6e:2x2x1
jax: 0.10.0
libtpu: 0.0.40
codegen_flags: <defaults>
</compile_context>

<pallas_src>
import jax
import jax.numpy as jnp
from jax.experimental import pallas as pl
from jax.experimental.pallas import tpu as pltpu

# Module hyper-parameters (match the PyTorch module).
INPUT_SIZE = 28
HIDDEN_SIZE = 256
NUM_LAYERS = 2          # hard-wired to 2 in the kernel below
SEQ_LEN = 28
NUM_CLASSES = 10
BATCH = 2

B_PAD = 8               # sublane-pad batch 2 -> 8 (one full sublane group)
I_PAD = 128             # lane-pad input feature dim 28 -> 128 (zero-filled)


def _rnn_fc_kernel(x_ref,       # (T*B_PAD, I_PAD) bf16  time-major rows (t, b)
                   wih0_ref,    # (I_PAD, H) bf16  W_ih_l0^T, zero rows beyond I
                   whh0_ref,    # (H, H)     bf16  W_hh_l0^T
                   b0_ref,      # (1, H)     f32   b_ih_l0 + b_hh_l0
                   w1cat_ref,   # (2H, H)    bf16  [W_ih_l1^T ; W_hh_l1^T]
                   b1_ref,      # (1, H)     f32   b_ih_l1 + b_hh_l1
                   wfc_ref,     # (T, H, C)  bf16  W_fc^T reshaped (t, h, c)
                   bfc_ref,     # (1, C)     f32
                   out_ref,     # (B_PAD, C) f32   logits (padded batch rows junk)
                   xproj_ref):  # scratch (T, B_PAD, H) f32  hoisted layer-0 proj
    T, B, H = xproj_ref.shape
    C = out_ref.shape[1]

    # Hoisted, non-recurrent layer-0 input projection for ALL timesteps:
    # one (T*B, I_PAD) @ (I_PAD, H) bf16 MXU pass, stored (T, B, H).
    xp = (jnp.dot(x_ref[...], wih0_ref[...], preferred_element_type=jnp.float32)
          + b0_ref[...])
    xproj_ref[...] = xp.reshape(T, B, H)

    b1 = b1_ref[...]                                  # read once, above the loop
    h1b = jnp.zeros((B, H), jnp.bfloat16)
    h2b = jnp.zeros((B, H), jnp.bfloat16)
    acc = jnp.zeros((B, C), jnp.float32)              # per-step-accumulated FC

    # Statically unrolled recurrence over the fixed, small T.  MXU operands are
    # bf16; accumulation / bias adds / tanh stay in f32.
    # TODO(synk): on v6e/v7x, keep whh0 / w1cat resident in MXU weight staging
    # (pltpu.matmul_push_rhs / matmul_acc_lhs / matmul_pop) instead of
    # re-streaming the loop-invariant 256x256 RHS weights every step.
    for t in range(T):
        # layer 0: h1_t = tanh(x_t W_ih0^T + b0 + h1_{t-1} W_hh0^T)
        h1 = jnp.tanh(
            xproj_ref[t]
            + jnp.dot(h1b, whh0_ref[...], preferred_element_type=jnp.float32))
        h1b = h1.astype(jnp.bfloat16)

        # layer 1 (fused K=2H): h2_t = tanh([h1_t, h2_{t-1}] [Wih1^T; Whh1^T] + b1)
        h12 = jnp.concatenate([h1b, h2b], axis=1)
        h2 = jnp.tanh(
            jnp.dot(h12, w1cat_ref[...], preferred_element_type=jnp.float32)
            + b1)
        h2b = h2.astype(jnp.bfloat16)

        # per-step FC accumulation (replaces the deferred (B, T*H) matmul)
        acc = acc + jnp.dot(h2b, wfc_ref[t], preferred_element_type=jnp.float32)

    out_ref[...] = acc + bfc_ref[...]


def prepare_params(params):
    """One-time static weight prep (transpose / fuse biases / pad / bf16 cast).
    Do NOT call per forward — cache the result."""
    H, I, T, C = HIDDEN_SIZE, INPUT_SIZE, SEQ_LEN, NUM_CLASSES
    bf = jnp.bfloat16

    wih0 = jnp.pad(params["w_ih_l0"].T, ((0, I_PAD - I), (0, 0))).astype(bf)
    whh0 = params["w_hh_l0"].T.astype(bf)                               # (H, H)
    b0 = (params["b_ih_l0"] + params["b_hh_l0"]).reshape(1, H).astype(jnp.float32)

    # layer-1 input and recurrent weights concatenated along K (for the fused dot)
    w1cat = jnp.concatenate(
        [params["w_ih_l1"].T, params["w_hh_l1"].T], axis=0).astype(bf)  # (2H, H)
    b1 = (params["b_ih_l1"] + params["b_hh_l1"]).reshape(1, H).astype(jnp.float32)

    # fc weight is (C, T*H) against flatten(out) with (t, h) ordering.
    wfc = params["w_fc"].T.reshape(T, H, C).astype(bf)                  # (T, H, C)
    bfc = params["b_fc"].reshape(1, C).astype(jnp.float32)              # (1, C)

    return dict(wih0=wih0, whh0=whh0, b0=b0, w1cat=w1cat, b1=b1, wfc=wfc, bfc=bfc)


@jax.jit
def rnn_forward(x, prep):
    """x: (B, T, I) float32 (batch-first, like the PyTorch module)."""
    B, T, I = x.shape
    H = HIDDEN_SIZE

    # pad batch to a full sublane group and features to 128 lanes, time-major (t, b)
    x_p = jnp.pad(x.astype(jnp.float32), ((0, B_PAD - B), (0, 0), (0, I_PAD - I)))
    x_tm = jnp.transpose(x_p, (1, 0, 2)).reshape(T * B_PAD, I_PAD).astype(jnp.bfloat16)

    out = pl.pallas_call(
        _rnn_fc_kernel,
        out_shape=jax.ShapeDtypeStruct((B_PAD, NUM_CLASSES), jnp.float32),
        scratch_shapes=[
            pltpu.VMEM((T, B_PAD, H), jnp.float32),   # hoisted layer-0 projection
        ],
    )(x_tm, prep["wih0"], prep["whh0"], prep["b0"],
      prep["w1cat"], prep["b1"], prep["wfc"], prep["bfc"])

    return out[:B]                                    # drop padded batch rows


def init_params(key):
    """Deterministic PyTorch-style init (uniform +/- 1/sqrt(fan))."""
    H, I, T, C = HIDDEN_SIZE, INPUT_SIZE, SEQ_LEN, NUM_CLASSES
    ks = jax.random.split(key, 10)
    k_rnn = 1.0 / jnp.sqrt(jnp.float32(H))
    k_fc = 1.0 / jnp.sqrt(jnp.float32(H * T))

    def u(k, shape, bound):
        return jax.random.uniform(k, shape, jnp.float32, -bound, bound)

    return {
        "w_ih_l0": u(ks[0], (H, I), k_rnn),
        "w_hh_l0": u(ks[1], (H, H), k_rnn),
        "b_ih_l0": u(ks[2], (H,), k_rnn),
        "b_hh_l0": u(ks[3], (H,), k_rnn),
        "w_ih_l1": u(ks[4], (H, H), k_rnn),
        "w_hh_l1": u(ks[5], (H, H), k_rnn),
        "b_ih_l1": u(ks[6], (H,), k_rnn),
        "b_hh_l1": u(ks[7], (H,), k_rnn),
        "w_fc":    u(ks[8], (C, H * T), k_fc),
        "b_fc":    u(ks[9], (C,), k_fc),
    }


def _reference(x, p):
    """Pure-JAX f32 reference of the same forward (sanity check)."""
    B, T, I = x.shape
    H = HIDDEN_SIZE
    h1 = jnp.zeros((B, H), jnp.float32)
    h2 = jnp.zeros((B, H), jnp.float32)
    outs = []
    for t in range(T):
        xt = x[:, t, :]
        h1 = jnp.tanh(xt @ p["w_ih_l0"].T + p["b_ih_l0"]
                      + h1 @ p["w_hh_l0"].T + p["b_hh_l0"])
        h2 = jnp.tanh(h1 @ p["w_ih_l1"].T + p["b_ih_l1"]
                      + h2 @ p["w_hh_l1"].T + p["b_hh_l1"])
        outs.append(h2)
    out = jnp.stack(outs, axis=1).reshape(B, -1)   # (B, T*H), (t, h) flatten order
    return out @ p["w_fc"].T + p["b_fc"]


if __name__ == "__main__":
    key = jax.random.PRNGKey(0)
    k_x, k_p = jax.random.split(key)
    x = jax.random.normal(k_x, (BATCH, SEQ_LEN, INPUT_SIZE), jnp.float32)
    params = init_params(k_p)

    prep = prepare_params(params)           # one-time static weight prep

    logits = rnn_forward(x, prep)
    jax.block_until_ready(logits)

    ref = _reference(x, params)
    assert logits.shape == (BATCH, NUM_CLASSES)
    # bf16 MXU operands over a 28-step recurrence + EUP tanh: modest tolerance
    # vs the pure-f32 reference (a wrong kernel is off by O(logit magnitude)).
    err = float(jnp.max(jnp.abs(logits - ref)))
    assert jnp.allclose(logits, ref, atol=5e-2, rtol=5e-2), err

    print("KERNEL_OK")
</pallas_src>

<mosaic_0001>
module attributes {stable_mosaic.version = 11 : i64} {
  func.func @_rnn_fc_kernel(%arg0: memref<224x128xbf16, #tpu.memory_space<vmem>>, %arg1: memref<128x256xbf16, #tpu.memory_space<vmem>>, %arg2: memref<256x256xbf16, #tpu.memory_space<vmem>>, %arg3: memref<1x256xf32, #tpu.memory_space<vmem>>, %arg4: memref<512x256xbf16, #tpu.memory_space<vmem>>, %arg5: memref<1x256xf32, #tpu.memory_space<vmem>>, %arg6: memref<28x256x10xbf16, #tpu.memory_space<vmem>>, %arg7: memref<1x10xf32, #tpu.memory_space<vmem>>, %arg8: memref<8x10xf32, #tpu.memory_space<vmem>>, %arg9: memref<28x8x256xf32, #tpu.memory_space<vmem>>) attributes {dimension_semantics = [], scalar_prefetch = 0 : i64, scratch_operands = 1 : i64, tpu.core_type = #tpu.core_type<tc>} {
    %c0 = arith.constant 0 : index
    %c0_0 = arith.constant 0 : index
    %0 = vector.load %arg0[%c0, %c0_0] : memref<224x128xbf16, #tpu.memory_space<vmem>>, vector<224x128xbf16>
    %c0_1 = arith.constant 0 : index
    %c0_2 = arith.constant 0 : index
    %1 = vector.load %arg1[%c0_1, %c0_2] : memref<128x256xbf16, #tpu.memory_space<vmem>>, vector<128x256xbf16>
    %cst = arith.constant dense<0.000000e+00> : vector<224x256xf32>
    %2 = tpu.matmul %0, %1, %cst {dimension_numbers = #tpu.dot_dimension_numbers<[1], [0], [0], [1], [0, 0, 1, 1], [], []>} : vector<224x128xbf16>, vector<128x256xbf16>, vector<224x256xf32> -> vector<224x256xf32>
    %c0_3 = arith.constant 0 : index
    %c0_4 = arith.constant 0 : index
    %3 = vector.load %arg3[%c0_3, %c0_4] : memref<1x256xf32, #tpu.memory_space<vmem>>, vector<1x256xf32>
    %4 = vector.broadcast %3 : vector<1x256xf32> to vector<224x256xf32>
    %5 = arith.addf %2, %4 : vector<224x256xf32>
    %6 = vector.shape_cast %5 : vector<224x256xf32> to vector<28x8x256xf32>
    %c0_5 = arith.constant 0 : index
    %c0_6 = arith.constant 0 : index
    %c0_7 = arith.constant 0 : index
    %7 = vector.load %arg9[%c0_5, %c0_6, %c0_7] : memref<28x8x256xf32, #tpu.memory_space<vmem>>, vector<28x8x256xf32>
    tpu.vector_store %arg9[%c0_5, %c0_6, %c0_7], %6 {strides = array<i32>} : memref<28x8x256xf32, #tpu.memory_space<vmem>>, vector<28x8x256xf32>,
    %c0_8 = arith.constant 0 : index
    %c0_9 = arith.constant 0 : index
    %8 = vector.load %arg5[%c0_8, %c0_9] : memref<1x256xf32, #tpu.memory_space<vmem>>, vector<1x256xf32>
    %cst_10 = arith.constant 0.000000e+00 : bf16
    %9 = vector.broadcast %cst_10 : bf16 to vector<8x256xbf16>
    %cst_11 = arith.constant 0.000000e+00 : bf16
    %10 = vector.broadcast %cst_11 : bf16 to vector<8x256xbf16>
    %cst_12 = arith.constant 0.000000e+00 : f32
    %11 = vector.broadcast %cst_12 : f32 to vector<8x10xf32>
    %c0_13 = arith.constant 0 : index
    %c0_14 = arith.constant 0 : index
    %c0_15 = arith.constant 0 : index
    %12 = vector.load %arg9[%c0_13, %c0_14, %c0_15] : memref<28x8x256xf32, #tpu.memory_space<vmem>>, vector<1x8x256xf32>
    %13 = vector.shape_cast %12 : vector<1x8x256xf32> to vector<8x256xf32>
    %c0_16 = arith.constant 0 : index
    %c0_17 = arith.constant 0 : index
    %14 = vector.load %arg2[%c0_16, %c0_17] : memref<256x256xbf16, #tpu.memory_space<vmem>>, vector<256x256xbf16>
    %cst_18 = arith.constant dense<0.000000e+00> : vector<8x256xf32>
    %15 = tpu.matmul %9, %14, %cst_18 {dimension_numbers = #tpu.dot_dimension_numbers<[1], [0], [0], [1], [0, 0, 1, 1], [], []>} : vector<8x256xbf16>, vector<256x256xbf16>, vector<8x256xf32> -> vector<8x256xf32>
    %16 = arith.addf %13, %15 : vector<8x256xf32>
    %17 = math.tanh %16 : vector<8x256xf32>
    %18 = arith.truncf %17 : vector<8x256xf32> to vector<8x256xbf16>
    %19 = tpu.concatenate %18, %10 in 1 : vector<8x256xbf16>, vector<8x256xbf16> -> vector<8x512xbf16>
    %c0_19 = arith.constant 0 : index
    %c0_20 = arith.constant 0 : index
    %20 = vector.load %arg4[%c0_19, %c0_20] : memref<512x256xbf16, #tpu.memory_space<vmem>>, vector<512x256xbf16>
    %cst_21 = arith.constant dense<0.000000e+00> : vector<8x256xf32>
    %21 = tpu.matmul %19, %20, %cst_21 {dimension_numbers = #tpu.dot_dimension_numbers<[1], [0], [0], [1], [0, 0, 1, 1], [], []>} : vector<8x512xbf16>, vector<512x256xbf16>, vector<8x256xf32> -> vector<8x256xf32>
    %22 = vector.broadcast %8 : vector<1x256xf32> to vector<8x256xf32>
    %23 = arith.addf %21, %22 : vector<8x256xf32>
    %24 = math.tanh %23 : vector<8x256xf32>
    %25 = arith.truncf %24 : vector<8x256xf32> to vector<8x256xbf16>
    %c0_22 = arith.constant 0 : index
    %c0_23 = arith.constant 0 : index
    %c0_24 = arith.constant 0 : index
    %26 = vector.load %arg6[%c0_22, %c0_23, %c0_24] : memref<28x256x10xbf16, #tpu.memory_space<vmem>>, vector<1x256x10xbf16>
    %27 = vector.shape_cast %26 : vector<1x256x10xbf16> to vector<256x10xbf16>
    %cst_25 = arith.constant dense<0.000000e+00> : vector<8x10xf32>
    %28 = tpu.matmul %25, %27, %cst_25 {dimension_numbers = #tpu.dot_dimension_numbers<[1], [0], [0], [1], [0, 0, 1, 1], [], []>} : vector<8x256xbf16>, vector<256x10xbf16>, vector<8x10xf32> -> vector<8x10xf32>
    %29 = arith.addf %11, %28 : vector<8x10xf32>
    %c1 = arith.constant 1 : index
    %c0_26 = arith.constant 0 : index
    %c0_27 = arith.constant 0 : index
    %30 = vector.load %arg9[%c1, %c0_26, %c0_27] : memref<28x8x256xf32, #tpu.memory_space<vmem>>, vector<1x8x256xf32>
    %31 = vector.shape_cast %30 : vector<1x8x256xf32> to vector<8x256xf32>
    %c0_28 = arith.constant 0 : index
    %c0_29 = arith.constant 0 : index
    %32 = vector.load %arg2[%c0_28, %c0_29] : memref<256x256xbf16, #tpu.memory_space<vmem>>, vector<256x256xbf16>
    %cst_30 = arith.constant dense<0.000000e+00> : vector<8x256xf32>
    %33 = tpu.matmul %18, %32, %cst_30 {dimension_numbers = #tpu.dot_dimension_numbers<[1], [0], [0], [1], [0, 0, 1, 1], [], []>} : vector<8x256xbf16>, vector<256x256xbf16>, vector<8x256xf32> -> vector<8x256xf32>
    %34 = arith.addf %31, %33 : vector<8x256xf32>
    %35 = math.tanh %34 : vector<8x256xf32>
    %36 = arith.truncf %35 : vector<8x256xf32> to vector<8x256xbf16>
    %37 = tpu.concatenate %36, %25 in 1 : vector<8x256xbf16>, vector<8x256xbf16> -> vector<8x512xbf16>
    %c0_31 = arith.constant 0 : index
    %c0_32 = arith.constant 0 : index
    %38 = vector.load %arg4[%c0_31, %c0_32] : memref<512x256xbf16, #tpu.memory_space<vmem>>, vector<512x256xbf16>
    %cst_33 = arith.constant dense<0.000000e+00> : vector<8x256xf32>
    %39 = tpu.matmul %37, %38, %cst_33 {dimension_numbers = #tpu.dot_dimension_numbers<[1], [0], [0], [1], [0, 0, 1, 1], [], []>} : vector<8x512xbf16>, vector<512x256xbf16>, vector<8x256xf32> -> vector<8x256xf32>
    %40 = vector.broadcast %8 : vector<1x256xf32> to vector<8x256xf32>
    %41 = arith.addf %39, %40 : vector<8x256xf32>
    %42 = math.tanh %41 : vector<8x256xf32>
    %43 = arith.truncf %42 : vector<8x256xf32> to vector<8x256xbf16>
    %c1_34 = arith.constant 1 : index
    %c0_35 = arith.constant 0 : index
    %c0_36 = arith.constant 0 : index
    %44 = vector.load %arg6[%c1_34, %c0_35, %c0_36] : memref<28x256x10xbf16, #tpu.memory_space<vmem>>, vector<1x256x10xbf16>
    %45 = vector.shape_cast %44 : vector<1x256x10xbf16> to vector<256x10xbf16>
    %cst_37 = arith.constant dense<0.000000e+00> : vector<8x10xf32>
    %46 = tpu.matmul %43, %45, %cst_37 {dimension_numbers = #tpu.dot_dimension_numbers<[1], [0], [0], [1], [0, 0, 1, 1], [], []>} : vector<8x256xbf16>, vector<256x10xbf16>, vector<8x10xf32> -> vector<8x10xf32>
    %47 = arith.addf %29, %46 : vector<8x10xf32>
    %c2 = arith.constant 2 : index
    %c0_38 = arith.constant 0 : index
    %c0_39 = arith.constant 0 : index
    %48 = vector.load %arg9[%c2, %c0_38, %c0_39] : memref<28x8x256xf32, #tpu.memory_space<vmem>>, vector<1x8x256xf32>
    %49 = vector.shape_cast %48 : vector<1x8x256xf32> to vector<8x256xf32>
    %c0_40 = arith.constant 0 : index
    %c0_41 = arith.constant 0 : index
    %50 = vector.load %arg2[%c0_40, %c0_41] : memref<256x256xbf16, #tpu.memory_space<vmem>>, vector<256x256xbf16>
    %cst_42 = arith.constant dense<0.000000e+00> : vector<8x256xf32>
    %51 = tpu.matmul %36, %50, %cst_42 {dimension_numbers = #tpu.dot_dimension_numbers<[1], [0], [0], [1], [0, 0, 1, 1], [], []>} : vector<8x256xbf16>, vector<256x256xbf16>, vector<8x256xf32> -> vector<8x256xf32>
    %52 = arith.addf %49, %51 : vector<8x256xf32>
    %53 = math.tanh %52 : vector<8x256xf32>
    %54 = arith.truncf %53 : vector<8x256xf32> to vector<8x256xbf16>
    %55 = tpu.concatenate %54, %43 in 1 : vector<8x256xbf16>, vector<8x256xbf16> -> vector<8x512xbf16>
    %c0_43 = arith.constant 0 : index
    %c0_44 = arith.constant 0 : index
    %56 = vector.load %arg4[%c0_43, %c0_44] : memref<512x256xbf16, #tpu.memory_space<vmem>>, vector<512x256xbf16>
    %cst_45 = arith.constant dense<0.000000e+00> : vector<8x256xf32>
    %57 = tpu.matmul %55, %56, %cst_45 {dimension_numbers = #tpu.dot_dimension_numbers<[1], [0], [0], [1], [0, 0, 1, 1], [], []>} : vector<8x512xbf16>, vector<512x256xbf16>, vector<8x256xf32> -> vector<8x256xf32>
    %58 = vector.broadcast %8 : vector<1x256xf32> to vector<8x256xf32>
    %59 = arith.addf %57, %58 : vector<8x256xf32>
    %60 = math.tanh %59 : vector<8x256xf32>
    %61 = arith.truncf %60 : vector<8x256xf32> to vector<8x256xbf16>
    %c2_46 = arith.constant 2 : index
    %c0_47 = arith.constant 0 : index
    %c0_48 = arith.constant 0 : index
    %62 = vector.load %arg6[%c2_46, %c0_47, %c0_48] : memref<28x256x10xbf16, #tpu.memory_space<vmem>>, vector<1x256x10xbf16>
    %63 = vector.shape_cast %62 : vector<1x256x10xbf16> to vector<256x10xbf16>
    %cst_49 = arith.constant dense<0.000000e+00> : vector<8x10xf32>
    %64 = tpu.matmul %61, %63, %cst_49 {dimension_numbers = #tpu.dot_dimension_numbers<[1], [0], [0], [1], [0, 0, 1, 1], [], []>} : vector<8x256xbf16>, vector<256x10xbf16>, vector<8x10xf32> -> vector<8x10xf32>
    %65 = arith.addf %47, %64 : vector<8x10xf32>
    %c3 = arith.constant 3 : index
    %c0_50 = arith.constant 0 : index
    %c0_51 = arith.constant 0 : index
    %66 = vector.load %arg9[%c3, %c0_50, %c0_51] : memref<28x8x256xf32, #tpu.memory_space<vmem>>, vector<1x8x256xf32>
    %67 = vector.shape_cast %66 : vector<1x8x256xf32> to vector<8x256xf32>
    %c0_52 = arith.constant 0 : index
    %c0_53 = arith.constant 0 : index
    %68 = vector.load %arg2[%c0_52, %c0_53] : memref<256x256xbf16, #tpu.memory_space<vmem>>, vector<256x256xbf16>
    %cst_54 = arith.constant dense<0.000000e+00> : vector<8x256xf32>
    %69 = tpu.matmul %54, %68, %cst_54 {dimension_numbers = #tpu.dot_dimension_numbers<[1], [0], [0], [1], [0, 0, 1, 1], [], []>} : vector<8x256xbf16>, vector<256x256xbf16>, vector<8x256xf32> -> vector<8x256xf32>
    %70 = arith.addf %67, %69 : vector<8x256xf32>
    %71 = math.tanh %70 : vector<8x256xf32>
    %72 = arith.truncf %71 : vector<8x256xf32> to vector<8x256xbf16>
    %73 = tpu.concatenate %72, %61 in 1 : vector<8x256xbf16>, vector<8x256xbf16> -> vector<8x512xbf16>
    %c0_55 = arith.constant 0 : index
    %c0_56 = arith.constant 0 : index
    %74 = vector.load %arg4[%c0_55, %c0_56] : memref<512x256xbf16, #tpu.memory_space<vmem>>, vector<512x256xbf16>
    %cst_57 = arith.constant dense<0.000000e+00> : vector<8x256xf32>
    %75 = tpu.matmul %73, %74, %cst_57 {dimension_numbers = #tpu.dot_dimension_numbers<[1], [0], [0], [1], [0, 0, 1, 1], [], []>} : vector<8x512xbf16>, vector<512x256xbf16>, vector<8x256xf32> -> vector<8x256xf32>
    %76 = vector.broadcast %8 : vector<1x256xf32> to vector<8x256xf32>
    %77 = arith.addf %75, %76 : vector<8x256xf32>
    %78 = math.tanh %77 : vector<8x256xf32>
    %79 = arith.truncf %78 : vector<8x256xf32> to vector<8x256xbf16>
    %c3_58 = arith.constant 3 : index
    %c0_59 = arith.constant 0 : index
    %c0_60 = arith.constant 0 : index
    %80 = vector.load %arg6[%c3_58, %c0_59, %c0_60] : memref<28x256x10xbf16, #tpu.memory_space<vmem>>, vector<1x256x10xbf16>
    %81 = vector.shape_cast %80 : vector<1x256x10xbf16> to vector<256x10xbf16>
    %cst_61 = arith.constant dense<0.000000e+00> : vector<8x10xf32>
    %82 = tpu.matmul %79, %81, %cst_61 {dimension_numbers = #tpu.dot_dimension_numbers<[1], [0], [0], [1], [0, 0, 1, 1], [], []>} : vector<8x256xbf16>, vector<256x10xbf16>, vector<8x10xf32> -> vector<8x10xf32>
    %83 = arith.addf %65, %82 : vector<8x10xf32>
    %c4 = arith.constant 4 : index
    %c0_62 = arith.constant 0 : index
    %c0_63 = arith.constant 0 : index
    %84 = vector.load %arg9[%c4, %c0_62, %c0_63] : memref<28x8x256xf32, #tpu.memory_space<vmem>>, vector<1x8x256xf32>
    %85 = vector.shape_cast %84 : vector<1x8x256xf32> to vector<8x256xf32>
    %c0_64 = arith.constant 0 : index
    %c0_65 = arith.constant 0 : index
    %86 = vector.load %arg2[%c0_64, %c0_65] : memref<256x256xbf16, #tpu.memory_space<vmem>>, vector<256x256xbf16>
    %cst_66 = arith.constant dense<0.000000e+00> : vector<8x256xf32>
    %87 = tpu.matmul %72, %86, %cst_66 {dimension_numbers = #tpu.dot_dimension_numbers<[1], [0], [0], [1], [0, 0, 1, 1], [], []>} : vector<8x256xbf16>, vector<256x256xbf16>, vector<8x256xf32> -> vector<8x256xf32>
    %88 = arith.addf %85, %87 : vector<8x256xf32>
    %89 = math.tanh %88 : vector<8x256xf32>
    %90 = arith.truncf %89 : vector<8x256xf32> to vector<8x256xbf16>
    %91 = tpu.concatenate %90, %79 in 1 : vector<8x256xbf16>, vector<8x256xbf16> -> vector<8x512xbf16>
    %c0_67 = arith.constant 0 : index
    %c0_68 = arith.constant 0 : index
    %92 = vector.load %arg4[%c0_67, %c0_68] : memref<512x256xbf16, #tpu.memory_space<vmem>>, vector<512x256xbf16>
    %cst_69 = arith.constant dense<0.000000e+00> : vector<8x256xf32>
    %93 = tpu.matmul %91, %92, %cst_69 {dimension_numbers = #tpu.dot_dimension_numbers<[1], [0], [0], [1], [0, 0, 1, 1], [], []>} : vector<8x512xbf16>, vector<512x256xbf16>, vector<8x256xf32> -> vector<8x256xf32>
    %94 = vector.broadcast %8 : vector<1x256xf32> to vector<8x256xf32>
    %95 = arith.addf %93, %94 : vector<8x256xf32>
    %96 = math.tanh %95 : vector<8x256xf32>
    %97 = arith.truncf %96 : vector<8x256xf32> to vector<8x256xbf16>
    %c4_70 = arith.constant 4 : index
    %c0_71 = arith.constant 0 : index
    %c0_72 = arith.constant 0 : index
    %98 = vector.load %arg6[%c4_70, %c0_71, %c0_72] : memref<28x256x10xbf16, #tpu.memory_space<vmem>>, vector<1x256x10xbf16>
    %99 = vector.shape_cast %98 : vector<1x256x10xbf16> to vector<256x10xbf16>
    %cst_73 = arith.constant dense<0.000000e+00> : vector<8x10xf32>
    %100 = tpu.matmul %97, %99, %cst_73 {dimension_numbers = #tpu.dot_dimension_numbers<[1], [0], [0], [1], [0, 0, 1, 1], [], []>} : vector<8x256xbf16>, vector<256x10xbf16>, vector<8x10xf32> -> vector<8x10xf32>
    %101 = arith.addf %83, %100 : vector<8x10xf32>
    %c5 = arith.constant 5 : index
    %c0_74 = arith.constant 0 : index
    %c0_75 = arith.constant 0 : index
    %102 = vector.load %arg9[%c5, %c0_74, %c0_75] : memref<28x8x256xf32, #tpu.memory_space<vmem>>, vector<1x8x256xf32>
    %103 = vector.shape_cast %102 : vector<1x8x256xf32> to vector<8x256xf32>
    %c0_76 = arith.constant 0 : index
    %c0_77 = arith.constant 0 : index
    %104 = vector.load %arg2[%c0_76, %c0_77] : memref<256x256xbf16, #tpu.memory_space<vmem>>, vector<256x256xbf16>
    %cst_78 = arith.constant dense<0.000000e+00> : vector<8x256xf32>
    %105 = tpu.matmul %90, %104, %cst_78 {dimension_numbers = #tpu.dot_dimension_numbers<[1], [0], [0], [1], [0, 0, 1, 1], [], []>} : vector<8x256xbf16>, vector<256x256xbf16>, vector<8x256xf32> -> vector<8x256xf32>
    %106 = arith.addf %103, %105 : vector<8x256xf32>
    %107 = math.tanh %106 : vector<8x256xf32>
    %108 = arith.truncf %107 : vector<8x256xf32> to vector<8x256xbf16>
    %109 = tpu.concatenate %108, %97 in 1 : vector<8x256xbf16>, vector<8x256xbf16> -> vector<8x512xbf16>
    %c0_79 = arith.constant 0 : index
    %c0_80 = arith.constant 0 : index
    %110 = vector.load %arg4[%c0_79, %c0_80] : memref<512x256xbf16, #tpu.memory_space<vmem>>, vector<512x256xbf16>
    %cst_81 = arith.constant dense<0.000000e+00> : vector<8x256xf32>
    %111 = tpu.matmul %109, %110, %cst_81 {dimension_numbers = #tpu.dot_dimension_numbers<[1], [0], [0], [1], [0, 0, 1, 1], [], []>} : vector<8x512xbf16>, vector<512x256xbf16>, vector<8x256xf32> -> vector<8x256xf32>
    %112 = vector.broadcast %8 : vector<1x256xf32> to vector<8x256xf32>
    %113 = arith.addf %111, %112 : vector<8x256xf32>
    %114 = math.tanh %113 : vector<8x256xf32>
    %115 = arith.truncf %114 : vector<8x256xf32> to vector<8x256xbf16>
    %c5_82 = arith.constant 5 : index
    %c0_83 = arith.constant 0 : index
    %c0_84 = arith.constant 0 : index
    %116 = vector.load %arg6[%c5_82, %c0_83, %c0_84] : memref<28x256x10xbf16, #tpu.memory_space<vmem>>, vector<1x256x10xbf16>
    %117 = vector.shape_cast %116 : vector<1x256x10xbf16> to vector<256x10xbf16>
    %cst_85 = arith.constant dense<0.000000e+00> : vector<8x10xf32>
    %118 = tpu.matmul %115, %117, %cst_85 {dimension_numbers = #tpu.dot_dimension_numbers<[1], [0], [0], [1], [0, 0, 1, 1], [], []>} : vector<8x256xbf16>, vector<256x10xbf16>, vector<8x10xf32> -> vector<8x10xf32>
    %119 = arith.addf %101, %118 : vector<8x10xf32>
    %c6 = arith.constant 6 : index
    %c0_86 = arith.constant 0 : index
    %c0_87 = arith.constant 0 : index
    %120 = vector.load %arg9[%c6, %c0_86, %c0_87] : memref<28x8x256xf32, #tpu.memory_space<vmem>>, vector<1x8x256xf32>
    %121 = vector.shape_cast %120 : vector<1x8x256xf32> to vector<8x256xf32>
    %c0_88 = arith.constant 0 : index
    %c0_89 = arith.constant 0 : index
    %122 = vector.load %arg2[%c0_88, %c0_89] : memref<256x256xbf16, #tpu.memory_space<vmem>>, vector<256x256xbf16>
    %cst_90 = arith.constant dense<0.000000e+00> : vector<8x256xf32>
    %123 = tpu.matmul %108, %122, %cst_90 {dimension_numbers = #tpu.dot_dimension_numbers<[1], [0], [0], [1], [0, 0, 1, 1], [], []>} : vector<8x256xbf16>, vector<256x256xbf16>, vector<8x256xf32> -> vector<8x256xf32>
    %124 = arith.addf %121, %123 : vector<8x256xf32>
    %125 = math.tanh %124 : vector<8x256xf32>
    %126 = arith.truncf %125 : vector<8x256xf32> to vector<8x256xbf16>
    %127 = tpu.concatenate %126, %115 in 1 : vector<8x256xbf16>, vector<8x256xbf16> -> vector<8x512xbf16>
    %c0_91 = arith.constant 0 : index
    %c0_92 = arith.constant 0 : index
    %128 = vector.load %arg4[%c0_91, %c0_92] : memref<512x256xbf16, #tpu.memory_space<vmem>>, vector<512x256xbf16>
    %cst_93 = arith.constant dense<0.000000e+00> : vector<8x256xf32>
    %129 = tpu.matmul %127, %128, %cst_93 {dimension_numbers = #tpu.dot_dimension_numbers<[1], [0], [0], [1], [0, 0, 1, 1], [], []>} : vector<8x512xbf16>, vector<512x256xbf16>, vector<8x256xf32> -> vector<8x256xf32>
    %130 = vector.broadcast %8 : vector<1x256xf32> to vector<8x256xf32>
    %131 = arith.addf %129, %130 : vector<8x256xf32>
    %132 = math.tanh %131 : vector<8x256xf32>
    %133 = arith.truncf %132 : vector<8x256xf32> to vector<8x256xbf16>
    %c6_94 = arith.constant 6 : index
    %c0_95 = arith.constant 0 : index
    %c0_96 = arith.constant 0 : index
    %134 = vector.load %arg6[%c6_94, %c0_95, %c0_96] : memref<28x256x10xbf16, #tpu.memory_space<vmem>>, vector<1x256x10xbf16>
    %135 = vector.shape_cast %134 : vector<1x256x10xbf16> to vector<256x10xbf16>
    %cst_97 = arith.constant dense<0.000000e+00> : vector<8x10xf32>
    %136 = tpu.matmul %133, %135, %cst_97 {dimension_numbers = #tpu.dot_dimension_numbers<[1], [0], [0], [1], [0, 0, 1, 1], [], []>} : vector<8x256xbf16>, vector<256x10xbf16>, vector<8x10xf32> -> vector<8x10xf32>
    %137 = arith.addf %119, %136 : vector<8x10xf32>
    %c7 = arith.constant 7 : index
    %c0_98 = arith.constant 0 : index
    %c0_99 = arith.constant 0 : index
    %138 = vector.load %arg9[%c7, %c0_98, %c0_99] : memref<28x8x256xf32, #tpu.memory_space<vmem>>, vector<1x8x256xf32>
    %139 = vector.shape_cast %138 : vector<1x8x256xf32> to vector<8x256xf32>
    %c0_100 = arith.constant 0 : index
    %c0_101 = arith.constant 0 : index
    %140 = vector.load %arg2[%c0_100, %c0_101] : memref<256x256xbf16, #tpu.memory_space<vmem>>, vector<256x256xbf16>
    %cst_102 = arith.constant dense<0.000000e+00> : vector<8x256xf32>
    %141 = tpu.matmul %126, %140, %cst_102 {dimension_numbers = #tpu.dot_dimension_numbers<[1], [0], [0], [1], [0, 0, 1, 1], [], []>} : vector<8x256xbf16>, vector<256x256xbf16>, vector<8x256xf32> -> vector<8x256xf32>
    %142 = arith.addf %139, %141 : vector<8x256xf32>
    %143 = math.tanh %142 : vector<8x256xf32>
    %144 = arith.truncf %143 : vector<8x256xf32> to vector<8x256xbf16>
    %145 = tpu.concatenate %144, %133 in 1 : vector<8x256xbf16>, vector<8x256xbf16> -> vector<8x512xbf16>
    %c0_103 = arith.constant 0 : index
    %c0_104 = arith.constant 0 : index
    %146 = vector.load %arg4[%c0_103, %c0_104] : memref<512x256xbf16, #tpu.memory_space<vmem>>, vector<512x256xbf16>
    %cst_105 = arith.constant dense<0.000000e+00> : vector<8x256xf32>
    %147 = tpu.matmul %145, %146, %cst_105 {dimension_numbers = #tpu.dot_dimension_numbers<[1], [0], [0], [1], [0, 0, 1, 1], [], []>} : vector<8x512xbf16>, vector<512x256xbf16>, vector<8x256xf32> -> vector<8x256xf32>
    %148 = vector.broadcast %8 : vector<1x256xf32> to vector<8x256xf32>
    %149 = arith.addf %147, %148 : vector<8x256xf32>
    %150 = math.tanh %149 : vector<8x256xf32>
    %151 = arith.truncf %150 : vector<8x256xf32> to vector<8x256xbf16>
    %c7_106 = arith.constant 7 : index
    %c0_107 = arith.constant 0 : index
    %c0_108 = arith.constant 0 : index
    %152 = vector.load %arg6[%c7_106, %c0_107, %c0_108] : memref<28x256x10xbf16, #tpu.memory_space<vmem>>, vector<1x256x10xbf16>
    %153 = vector.shape_cast %152 : vector<1x256x10xbf16> to vector<256x10xbf16>
    %cst_109 = arith.constant dense<0.000000e+00> : vector<8x10xf32>
    %154 = tpu.matmul %151, %153, %cst_109 {dimension_numbers = #tpu.dot_dimension_numbers<[1], [0], [0], [1], [0, 0, 1, 1], [], []>} : vector<8x256xbf16>, vector<256x10xbf16>, vector<8x10xf32> -> vector<8x10xf32>
    %155 = arith.addf %137, %154 : vector<8x10xf32>
    %c8 = arith.constant 8 : index
    %c0_110 = arith.constant 0 : index
    %c0_111 = arith.constant 0 : index
    %156 = vector.load %arg9[%c8, %c0_110, %c0_111] : memref<28x8x256xf32, #tpu.memory_space<vmem>>, vector<1x8x256xf32>
    %157 = vector.shape_cast %156 : vector<1x8x256xf32> to vector<8x256xf32>
    %c0_112 = arith.constant 0 : index
    %c0_113 = arith.constant 0 : index
    %158 = vector.load %arg2[%c0_112, %c0_113] : memref<256x256xbf16, #tpu.memory_space<vmem>>, vector<256x256xbf16>
    %cst_114 = arith.constant dense<0.000000e+00> : vector<8x256xf32>
    %159 = tpu.matmul %144, %158, %cst_114 {dimension_numbers = #tpu.dot_dimension_numbers<[1], [0], [0], [1], [0, 0, 1, 1], [], []>} : vector<8x256xbf16>, vector<256x256xbf16>, vector<8x256xf32> -> vector<8x256xf32>
    %160 = arith.addf %157, %159 : vector<8x256xf32>
    %161 = math.tanh %160 : vector<8x256xf32>
    %162 = arith.truncf %161 : vector<8x256xf32> to vector<8x256xbf16>
    %163 = tpu.concatenate %162, %151 in 1 : vector<8x256xbf16>, vector<8x256xbf16> -> vector<8x512xbf16>
    %c0_115 = arith.constant 0 : index
    %c0_116 = arith.constant 0 : index
    %164 = vector.load %arg4[%c0_115, %c0_116] : memref<512x256xbf16, #tpu.memory_space<vmem>>, vector<512x256xbf16>
    %cst_117 = arith.constant dense<0.000000e+00> : vector<8x256xf32>
    %165 = tpu.matmul %163, %164, %cst_117 {dimension_numbers = #tpu.dot_dimension_numbers<[1], [0], [0], [1], [0, 0, 1, 1], [], []>} : vector<8x512xbf16>, vector<512x256xbf16>, vector<8x256xf32> -> vector<8x256xf32>
    %166 = vector.broadcast %8 : vector<1x256xf32> to vector<8x256xf32>
    %167 = arith.addf %165, %166 : vector<8x256xf32>
    %168 = math.tanh %167 : vector<8x256xf32>
    %169 = arith.truncf %168 : vector<8x256xf32> to vector<8x256xbf16>
    %c8_118 = arith.constant 8 : index
    %c0_119 = arith.constant 0 : index
    %c0_120 = arith.constant 0 : index
    %170 = vector.load %arg6[%c8_118, %c0_119, %c0_120] : memref<28x256x10xbf16, #tpu.memory_space<vmem>>, vector<1x256x10xbf16>
    %171 = vector.shape_cast %170 : vector<1x256x10xbf16> to vector<256x10xbf16>
    %cst_121 = arith.constant dense<0.000000e+00> : vector<8x10xf32>
    %172 = tpu.matmul %169, %171, %cst_121 {dimension_numbers = #tpu.dot_dimension_numbers<[1], [0], [0], [1], [0, 0, 1, 1], [], []>} : vector<8x256xbf16>, vector<256x10xbf16>, vector<8x10xf32> -> vector<8x10xf32>
    %173 = arith.addf %155, %172 : vector<8x10xf32>
    %c9 = arith.constant 9 : index
    %c0_122 = arith.constant 0 : index
    %c0_123 = arith.constant 0 : index
    %174 = vector.load %arg9[%c9, %c0_122, %c0_123] : memref<28x8x256xf32, #tpu.memory_space<vmem>>, vector<1x8x256xf32>
    %175 = vector.shape_cast %174 : vector<1x8x256xf32> to vector<8x256xf32>
    %c0_124 = arith.constant 0 : index
    %c0_125 = arith.constant 0 : index
    %176 = vector.load %arg2[%c0_124, %c0_125] : memref<256x256xbf16, #tpu.memory_space<vmem>>, vector<256x256xbf16>
    %cst_126 = arith.constant dense<0.000000e+00> : vector<8x256xf32>
    %177 = tpu.matmul %162, %176, %cst_126 {dimension_numbers = #tpu.dot_dimension_numbers<[1], [0], [0], [1], [0, 0, 1, 1], [], []>} : vector<8x256xbf16>, vector<256x256xbf16>, vector<8x256xf32> -> vector<8x256xf32>
    %178 = arith.addf %175, %177 : vector<8x256xf32>
    %179 = math.tanh %178 : vector<8x256xf32>
    %180 = arith.truncf %179 : vector<8x256xf32> to vector<8x256xbf16>
    %181 = tpu.concatenate %180, %169 in 1 : vector<8x256xbf16>, vector<8x256xbf16> -> vector<8x512xbf16>
    %c0_127 = arith.constant 0 : index
    %c0_128 = arith.constant 0 : index
    %182 = vector.load %arg4[%c0_127, %c0_128] : memref<512x256xbf16, #tpu.memory_space<vmem>>, vector<512x256xbf16>
    %cst_129 = arith.constant dense<0.000000e+00> : vector<8x256xf32>
    %183 = tpu.matmul %181, %182, %cst_129 {dimension_numbers = #tpu.dot_dimension_numbers<[1], [0], [0], [1], [0, 0, 1, 1], [], []>} : vector<8x512xbf16>, vector<512x256xbf16>, vector<8x256xf32> -> vector<8x256xf32>
    %184 = vector.broadcast %8 : vector<1x256xf32> to vector<8x256xf32>
    %185 = arith.addf %183, %184 : vector<8x256xf32>
    %186 = math.tanh %185 : vector<8x256xf32>
    %187 = arith.truncf %186 : vector<8x256xf32> to vector<8x256xbf16>
    %c9_130 = arith.constant 9 : index
    %c0_131 = arith.constant 0 : index
    %c0_132 = arith.constant 0 : index
    %188 = vector.load %arg6[%c9_130, %c0_131, %c0_132] : memref<28x256x10xbf16, #tpu.memory_space<vmem>>, vector<1x256x10xbf16>
    %189 = vector.shape_cast %188 : vector<1x256x10xbf16> to vector<256x10xbf16>
    %cst_133 = arith.constant dense<0.000000e+00> : vector<8x10xf32>
    %190 = tpu.matmul %187, %189, %cst_133 {dimension_numbers = #tpu.dot_dimension_numbers<[1], [0], [0], [1], [0, 0, 1, 1], [], []>} : vector<8x256xbf16>, vector<256x10xbf16>, vector<8x10xf32> -> vector<8x10xf32>
    %191 = arith.addf %173, %190 : vector<8x10xf32>
    %c10 = arith.constant 10 : index
    %c0_134 = arith.constant 0 : index
    %c0_135 = arith.constant 0 : index
    %192 = vector.load %arg9[%c10, %c0_134, %c0_135] : memref<28x8x256xf32, #tpu.memory_space<vmem>>, vector<1x8x256xf32>
    %193 = vector.shape_cast %192 : vector<1x8x256xf32> to vector<8x256xf32>
    %c0_136 = arith.constant 0 : index
    %c0_137 = arith.constant 0 : index
    %194 = vector.load %arg2[%c0_136, %c0_137] : memref<256x256xbf16, #tpu.memory_space<vmem>>, vector<256x256xbf16>
    %cst_138 = arith.constant dense<0.000000e+00> : vector<8x256xf32>
    %195 = tpu.matmul %180, %194, %cst_138 {dimension_numbers = #tpu.dot_dimension_numbers<[1], [0], [0], [1], [0, 0, 1, 1], [], []>} : vector<8x256xbf16>, vector<256x256xbf16>, vector<8x256xf32> -> vector<8x256xf32>
    %196 = arith.addf %193, %195 : vector<8x256xf32>
    %197 = math.tanh %196 : vector<8x256xf32>
    %198 = arith.truncf %197 : vector<8x256xf32> to vector<8x256xbf16>
    %199 = tpu.concatenate %198, %187 in 1 : vector<8x256xbf16>, vector<8x256xbf16> -> vector<8x512xbf16>
    %c0_139 = arith.constant 0 : index
    %c0_140 = arith.constant 0 : index
    %200 = vector.load %arg4[%c0_139, %c0_140] : memref<512x256xbf16, #tpu.memory_space<vmem>>, vector<512x256xbf16>
    %cst_141 = arith.constant dense<0.000000e+00> : vector<8x256xf32>
    %201 = tpu.matmul %199, %200, %cst_141 {dimension_numbers = #tpu.dot_dimension_numbers<[1], [0], [0], [1], [0, 0, 1, 1], [], []>} : vector<8x512xbf16>, vector<512x256xbf16>, vector<8x256xf32> -> vector<8x256xf32>
    %202 = vector.broadcast %8 : vector<1x256xf32> to vector<8x256xf32>
    %203 = arith.addf %201, %202 : vector<8x256xf32>
    %204 = math.tanh %203 : vector<8x256xf32>
    %205 = arith.truncf %204 : vector<8x256xf32> to vector<8x256xbf16>
    %c10_142 = arith.constant 10 : index
    %c0_143 = arith.constant 0 : index
    %c0_144 = arith.constant 0 : index
    %206 = vector.load %arg6[%c10_142, %c0_143, %c0_144] : memref<28x256x10xbf16, #tpu.memory_space<vmem>>, vector<1x256x10xbf16>
    %207 = vector.shape_cast %206 : vector<1x256x10xbf16> to vector<256x10xbf16>
    %cst_145 = arith.constant dense<0.000000e+00> : vector<8x10xf32>
    %208 = tpu.matmul %205, %207, %cst_145 {dimension_numbers = #tpu.dot_dimension_numbers<[1], [0], [0], [1], [0, 0, 1, 1], [], []>} : vector<8x256xbf16>, vector<256x10xbf16>, vector<8x10xf32> -> vector<8x10xf32>
    %209 = arith.addf %191, %208 : vector<8x10xf32>
    %c11 = arith.constant 11 : index
    %c0_146 = arith.constant 0 : index
    %c0_147 = arith.constant 0 : index
    %210 = vector.load %arg9[%c11, %c0_146, %c0_147] : memref<28x8x256xf32, #tpu.memory_space<vmem>>, vector<1x8x256xf32>
    %211 = vector.shape_cast %210 : vector<1x8x256xf32> to vector<8x256xf32>
    %c0_148 = arith.constant 0 : index
    %c0_149 = arith.constant 0 : index
    %212 = vector.load %arg2[%c0_148, %c0_149] : memref<256x256xbf16, #tpu.memory_space<vmem>>, vector<256x256xbf16>
    %cst_150 = arith.constant dense<0.000000e+00> : vector<8x256xf32>
    %213 = tpu.matmul %198, %212, %cst_150 {dimension_numbers = #tpu.dot_dimension_numbers<[1], [0], [0], [1], [0, 0, 1, 1], [], []>} : vector<8x256xbf16>, vector<256x256xbf16>, vector<8x256xf32> -> vector<8x256xf32>
    %214 = arith.addf %211, %213 : vector<8x256xf32>
    %215 = math.tanh %214 : vector<8x256xf32>
    %216 = arith.truncf %215 : vector<8x256xf32> to vector<8x256xbf16>
    %217 = tpu.concatenate %216, %205 in 1 : vector<8x256xbf16>, vector<8x256xbf16> -> vector<8x512xbf16>
    %c0_151 = arith.constant 0 : index
    %c0_152 = arith.constant 0 : index
    %218 = vector.load %arg4[%c0_151, %c0_152] : memref<512x256xbf16, #tpu.memory_space<vmem>>, vector<512x256xbf16>
    %cst_153 = arith.constant dense<0.000000e+00> : vector<8x256xf32>
    %219 = tpu.matmul %217, %218, %cst_153 {dimension_numbers = #tpu.dot_dimension_numbers<[1], [0], [0], [1], [0, 0, 1, 1], [], []>} : vector<8x512xbf16>, vector<512x256xbf16>, vector<8x256xf32> -> vector<8x256xf32>
    %220 = vector.broadcast %8 : vector<1x256xf32> to vector<8x256xf32>
    %221 = arith.addf %219, %220 : vector<8x256xf32>
    %222 = math.tanh %221 : vector<8x256xf32>
    %223 = arith.truncf %222 : vector<8x256xf32> to vector<8x256xbf16>
    %c11_154 = arith.constant 11 : index
    %c0_155 = arith.constant 0 : index
    %c0_156 = arith.constant 0 : index
    %224 = vector.load %arg6[%c11_154, %c0_155, %c0_156] : memref<28x256x10xbf16, #tpu.memory_space<vmem>>, vector<1x256x10xbf16>
    %225 = vector.shape_cast %224 : vector<1x256x10xbf16> to vector<256x10xbf16>
    %cst_157 = arith.constant dense<0.000000e+00> : vector<8x10xf32>
    %226 = tpu.matmul %223, %225, %cst_157 {dimension_numbers = #tpu.dot_dimension_numbers<[1], [0], [0], [1], [0, 0, 1, 1], [], []>} : vector<8x256xbf16>, vector<256x10xbf16>, vector<8x10xf32> -> vector<8x10xf32>
    %227 = arith.addf %209, %226 : vector<8x10xf32>
    %c12 = arith.constant 12 : index
    %c0_158 = arith.constant 0 : index
    %c0_159 = arith.constant 0 : index
    %228 = vector.load %arg9[%c12, %c0_158, %c0_159] : memref<28x8x256xf32, #tpu.memory_space<vmem>>, vector<1x8x256xf32>
    %229 = vector.shape_cast %228 : vector<1x8x256xf32> to vector<8x256xf32>
    %c0_160 = arith.constant 0 : index
    %c0_161 = arith.constant 0 : index
    %230 = vector.load %arg2[%c0_160, %c0_161] : memref<256x256xbf16, #tpu.memory_space<vmem>>, vector<256x256xbf16>
    %cst_162 = arith.constant dense<0.000000e+00> : vector<8x256xf32>
    %231 = tpu.matmul %216, %230, %cst_162 {dimension_numbers = #tpu.dot_dimension_numbers<[1], [0], [0], [1], [0, 0, 1, 1], [], []>} : vector<8x256xbf16>, vector<256x256xbf16>, vector<8x256xf32> -> vector<8x256xf32>
    %232 = arith.addf %229, %231 : vector<8x256xf32>
    %233 = math.tanh %232 : vector<8x256xf32>
    %234 = arith.truncf %233 : vector<8x256xf32> to vector<8x256xbf16>
    %235 = tpu.concatenate %234, %223 in 1 : vector<8x256xbf16>, vector<8x256xbf16> -> vector<8x512xbf16>
    %c0_163 = arith.constant 0 : index
    %c0_164 = arith.constant 0 : index
    %236 = vector.load %arg4[%c0_163, %c0_164] : memref<512x256xbf16, #tpu.memory_space<vmem>>, vector<512x256xbf16>
    %cst_165 = arith.constant dense<0.000000e+00> : vector<8x256xf32>
    %237 = tpu.matmul %235, %236, %cst_165 {dimension_numbers = #tpu.dot_dimension_numbers<[1], [0], [0], [1], [0, 0, 1, 1], [], []>} : vector<8x512xbf16>, vector<512x256xbf16>, vector<8x256xf32> -> vector<8x256xf32>
    %238 = vector.broadcast %8 : vector<1x256xf32> to vector<8x256xf32>
    %239 = arith.addf %237, %238 : vector<8x256xf32>
    %240 = math.tanh %239 : vector<8x256xf32>
    %241 = arith.truncf %240 : vector<8x256xf32> to vector<8x256xbf16>
    %c12_166 = arith.constant 12 : index
    %c0_167 = arith.constant 0 : index
    %c0_168 = arith.constant 0 : index
    %242 = vector.load %arg6[%c12_166, %c0_167, %c0_168] : memref<28x256x10xbf16, #tpu.memory_space<vmem>>, vector<1x256x10xbf16>
    %243 = vector.shape_cast %242 : vector<1x256x10xbf16> to vector<256x10xbf16>
    %cst_169 = arith.constant dense<0.000000e+00> : vector<8x10xf32>
    %244 = tpu.matmul %241, %243, %cst_169 {dimension_numbers = #tpu.dot_dimension_numbers<[1], [0], [0], [1], [0, 0, 1, 1], [], []>} : vector<8x256xbf16>, vector<256x10xbf16>, vector<8x10xf32> -> vector<8x10xf32>
    %245 = arith.addf %227, %244 : vector<8x10xf32>
    %c13 = arith.constant 13 : index
    %c0_170 = arith.constant 0 : index
    %c0_171 = arith.constant 0 : index
    %246 = vector.load %arg9[%c13, %c0_170, %c0_171] : memref<28x8x256xf32, #tpu.memory_space<vmem>>, vector<1x8x256xf32>
    %247 = vector.shape_cast %246 : vector<1x8x256xf32> to vector<8x256xf32>
    %c0_172 = arith.constant 0 : index
    %c0_173 = arith.constant 0 : index
    %248 = vector.load %arg2[%c0_172, %c0_173] : memref<256x256xbf16, #tpu.memory_space<vmem>>, vector<256x256xbf16>
    %cst_174 = arith.constant dense<0.000000e+00> : vector<8x256xf32>
    %249 = tpu.matmul %234, %248, %cst_174 {dimension_numbers = #tpu.dot_dimension_numbers<[1], [0], [0], [1], [0, 0, 1, 1], [], []>} : vector<8x256xbf16>, vector<256x256xbf16>, vector<8x256xf32> -> vector<8x256xf32>
    %250 = arith.addf %247, %249 : vector<8x256xf32>
    %251 = math.tanh %250 : vector<8x256xf32>
    %252 = arith.truncf %251 : vector<8x256xf32> to vector<8x256xbf16>
    %253 = tpu.concatenate %252, %241 in 1 : vector<8x256xbf16>, vector<8x256xbf16> -> vector<8x512xbf16>
    %c0_175 = arith.constant 0 : index
    %c0_176 = arith.constant 0 : index
    %254 = vector.load %arg4[%c0_175, %c0_176] : memref<512x256xbf16, #tpu.memory_space<vmem>>, vector<512x256xbf16>
    %cst_177 = arith.constant dense<0.000000e+00> : vector<8x256xf32>
    %255 = tpu.matmul %253, %254, %cst_177 {dimension_numbers = #tpu.dot_dimension_numbers<[1], [0], [0], [1], [0, 0, 1, 1], [], []>} : vector<8x512xbf16>, vector<512x256xbf16>, vector<8x256xf32> -> vector<8x256xf32>
    %256 = vector.broadcast %8 : vector<1x256xf32> to vector<8x256xf32>
    %257 = arith.addf %255, %256 : vector<8x256xf32>
    %258 = math.tanh %257 : vector<8x256xf32>
    %259 = arith.truncf %258 : vector<8x256xf32> to vector<8x256xbf16>
    %c13_178 = arith.constant 13 : index
    %c0_179 = arith.constant 0 : index
    %c0_180 = arith.constant 0 : index
    %260 = vector.load %arg6[%c13_178, %c0_179, %c0_180] : memref<28x256x10xbf16, #tpu.memory_space<vmem>>, vector<1x256x10xbf16>
    %261 = vector.shape_cast %260 : vector<1x256x10xbf16> to vector<256x10xbf16>
    %cst_181 = arith.constant dense<0.000000e+00> : vector<8x10xf32>
    %262 = tpu.matmul %259, %261, %cst_181 {dimension_numbers = #tpu.dot_dimension_numbers<[1], [0], [0], [1], [0, 0, 1, 1], [], []>} : vector<8x256xbf16>, vector<256x10xbf16>, vector<8x10xf32> -> vector<8x10xf32>
    %263 = arith.addf %245, %262 : vector<8x10xf32>
    %c14 = arith.constant 14 : index
    %c0_182 = arith.constant 0 : index
    %c0_183 = arith.constant 0 : index
    %264 = vector.load %arg9[%c14, %c0_182, %c0_183] : memref<28x8x256xf32, #tpu.memory_space<vmem>>, vector<1x8x256xf32>
    %265 = vector.shape_cast %264 : vector<1x8x256xf32> to vector<8x256xf32>
    %c0_184 = arith.constant 0 : index
    %c0_185 = arith.constant 0 : index
    %266 = vector.load %arg2[%c0_184, %c0_185] : memref<256x256xbf16, #tpu.memory_space<vmem>>, vector<256x256xbf16>
    %cst_186 = arith.constant dense<0.000000e+00> : vector<8x256xf32>
    %267 = tpu.matmul %252, %266, %cst_186 {dimension_numbers = #tpu.dot_dimension_numbers<[1], [0], [0], [1], [0, 0, 1, 1], [], []>} : vector<8x256xbf16>, vector<256x256xbf16>, vector<8x256xf32> -> vector<8x256xf32>
    %268 = arith.addf %265, %267 : vector<8x256xf32>
    %269 = math.tanh %268 : vector<8x256xf32>
    %270 = arith.truncf %269 : vector<8x256xf32> to vector<8x256xbf16>
    %271 = tpu.concatenate %270, %259 in 1 : vector<8x256xbf16>, vector<8x256xbf16> -> vector<8x512xbf16>
    %c0_187 = arith.constant 0 : index
    %c0_188 = arith.constant 0 : index
    %272 = vector.load %arg4[%c0_187, %c0_188] : memref<512x256xbf16, #tpu.memory_space<vmem>>, vector<512x256xbf16>
    %cst_189 = arith.constant dense<0.000000e+00> : vector<8x256xf32>
    %273 = tpu.matmul %271, %272, %cst_189 {dimension_numbers = #tpu.dot_dimension_numbers<[1], [0], [0], [1], [0, 0, 1, 1], [], []>} : vector<8x512xbf16>, vector<512x256xbf16>, vector<8x256xf32> -> vector<8x256xf32>
    %274 = vector.broadcast %8 : vector<1x256xf32> to vector<8x256xf32>
    %275 = arith.addf %273, %274 : vector<8x256xf32>
    %276 = math.tanh %275 : vector<8x256xf32>
    %277 = arith.truncf %276 : vector<8x256xf32> to vector<8x256xbf16>
    %c14_190 = arith.constant 14 : index
    %c0_191 = arith.constant 0 : index
    %c0_192 = arith.constant 0 : index
    %278 = vector.load %arg6[%c14_190, %c0_191, %c0_192] : memref<28x256x10xbf16, #tpu.memory_space<vmem>>, vector<1x256x10xbf16>
    %279 = vector.shape_cast %278 : vector<1x256x10xbf16> to vector<256x10xbf16>
    %cst_193 = arith.constant dense<0.000000e+00> : vector<8x10xf32>
    %280 = tpu.matmul %277, %279, %cst_193 {dimension_numbers = #tpu.dot_dimension_numbers<[1], [0], [0], [1], [0, 0, 1, 1], [], []>} : vector<8x256xbf16>, vector<256x10xbf16>, vector<8x10xf32> -> vector<8x10xf32>
    %281 = arith.addf %263, %280 : vector<8x10xf32>
    %c15 = arith.constant 15 : index
    %c0_194 = arith.constant 0 : index
    %c0_195 = arith.constant 0 : index
    %282 = vector.load %arg9[%c15, %c0_194, %c0_195] : memref<28x8x256xf32, #tpu.memory_space<vmem>>, vector<1x8x256xf32>
    %283 = vector.shape_cast %282 : vector<1x8x256xf32> to vector<8x256xf32>
    %c0_196 = arith.constant 0 : index
    %c0_197 = arith.constant 0 : index
    %284 = vector.load %arg2[%c0_196, %c0_197] : memref<256x256xbf16, #tpu.memory_space<vmem>>, vector<256x256xbf16>
    %cst_198 = arith.constant dense<0.000000e+00> : vector<8x256xf32>
    %285 = tpu.matmul %270, %284, %cst_198 {dimension_numbers = #tpu.dot_dimension_numbers<[1], [0], [0], [1], [0, 0, 1, 1], [], []>} : vector<8x256xbf16>, vector<256x256xbf16>, vector<8x256xf32> -> vector<8x256xf32>
    %286 = arith.addf %283, %285 : vector<8x256xf32>
    %287 = math.tanh %286 : vector<8x256xf32>
    %288 = arith.truncf %287 : vector<8x256xf32> to vector<8x256xbf16>
    %289 = tpu.concatenate %288, %277 in 1 : vector<8x256xbf16>, vector<8x256xbf16> -> vector<8x512xbf16>
    %c0_199 = arith.constant 0 : index
    %c0_200 = arith.constant 0 : index
    %290 = vector.load %arg4[%c0_199, %c0_200] : memref<512x256xbf16, #tpu.memory_space<vmem>>, vector<512x256xbf16>
    %cst_201 = arith.constant dense<0.000000e+00> : vector<8x256xf32>
    %291 = tpu.matmul %289, %290, %cst_201 {dimension_numbers = #tpu.dot_dimension_numbers<[1], [0], [0], [1], [0, 0, 1, 1], [], []>} : vector<8x512xbf16>, vector<512x256xbf16>, vector<8x256xf32> -> vector<8x256xf32>
    %292 = vector.broadcast %8 : vector<1x256xf32> to vector<8x256xf32>
    %293 = arith.addf %291, %292 : vector<8x256xf32>
    %294 = math.tanh %293 : vector<8x256xf32>
    %295 = arith.truncf %294 : vector<8x256xf32> to vector<8x256xbf16>
    %c15_202 = arith.constant 15 : index
    %c0_203 = arith.constant 0 : index
    %c0_204 = arith.constant 0 : index
    %296 = vector.load %arg6[%c15_202, %c0_203, %c0_204] : memref<28x256x10xbf16, #tpu.memory_space<vmem>>, vector<1x256x10xbf16>
    %297 = vector.shape_cast %296 : vector<1x256x10xbf16> to vector<256x10xbf16>
    %cst_205 = arith.constant dense<0.000000e+00> : vector<8x10xf32>
    %298 = tpu.matmul %295, %297, %cst_205 {dimension_numbers = #tpu.dot_dimension_numbers<[1], [0], [0], [1], [0, 0, 1, 1], [], []>} : vector<8x256xbf16>, vector<256x10xbf16>, vector<8x10xf32> -> vector<8x10xf32>
    %299 = arith.addf %281, %298 : vector<8x10xf32>
    %c16 = arith.constant 16 : index
    %c0_206 = arith.constant 0 : index
    %c0_207 = arith.constant 0 : index
    %300 = vector.load %arg9[%c16, %c0_206, %c0_207] : memref<28x8x256xf32, #tpu.memory_space<vmem>>, vector<1x8x256xf32>
    %301 = vector.shape_cast %300 : vector<1x8x256xf32> to vector<8x256xf32>
    %c0_208 = arith.constant 0 : index
    %c0_209 = arith.constant 0 : index
    %302 = vector.load %arg2[%c0_208, %c0_209] : memref<256x256xbf16, #tpu.memory_space<vmem>>, vector<256x256xbf16>
    %cst_210 = arith.constant dense<0.000000e+00> : vector<8x256xf32>
    %303 = tpu.matmul %288, %302, %cst_210 {dimension_numbers = #tpu.dot_dimension_numbers<[1], [0], [0], [1], [0, 0, 1, 1], [], []>} : vector<8x256xbf16>, vector<256x256xbf16>, vector<8x256xf32> -> vector<8x256xf32>
    %304 = arith.addf %301, %303 : vector<8x256xf32>
    %305 = math.tanh %304 : vector<8x256xf32>
    %306 = arith.truncf %305 : vector<8x256xf32> to vector<8x256xbf16>
    %307 = tpu.concatenate %306, %295 in 1 : vector<8x256xbf16>, vector<8x256xbf16> -> vector<8x512xbf16>
    %c0_211 = arith.constant 0 : index
    %c0_212 = arith.constant 0 : index
    %308 = vector.load %arg4[%c0_211, %c0_212] : memref<512x256xbf16, #tpu.memory_space<vmem>>, vector<512x256xbf16>
    %cst_213 = arith.constant dense<0.000000e+00> : vector<8x256xf32>
    %309 = tpu.matmul %307, %308, %cst_213 {dimension_numbers = #tpu.dot_dimension_numbers<[1], [0], [0], [1], [0, 0, 1, 1], [], []>} : vector<8x512xbf16>, vector<512x256xbf16>, vector<8x256xf32> -> vector<8x256xf32>
    %310 = vector.broadcast %8 : vector<1x256xf32> to vector<8x256xf32>
    %311 = arith.addf %309, %310 : vector<8x256xf32>
    %312 = math.tanh %311 : vector<8x256xf32>
    %313 = arith.truncf %312 : vector<8x256xf32> to vector<8x256xbf16>
    %c16_214 = arith.constant 16 : index
    %c0_215 = arith.constant 0 : index
    %c0_216 = arith.constant 0 : index
    %314 = vector.load %arg6[%c16_214, %c0_215, %c0_216] : memref<28x256x10xbf16, #tpu.memory_space<vmem>>, vector<1x256x10xbf16>
    %315 = vector.shape_cast %314 : vector<1x256x10xbf16> to vector<256x10xbf16>
    %cst_217 = arith.constant dense<0.000000e+00> : vector<8x10xf32>
    %316 = tpu.matmul %313, %315, %cst_217 {dimension_numbers = #tpu.dot_dimension_numbers<[1], [0], [0], [1], [0, 0, 1, 1], [], []>} : vector<8x256xbf16>, vector<256x10xbf16>, vector<8x10xf32> -> vector<8x10xf32>
    %317 = arith.addf %299, %316 : vector<8x10xf32>
    %c17 = arith.constant 17 : index
    %c0_218 = arith.constant 0 : index
    %c0_219 = arith.constant 0 : index
    %318 = vector.load %arg9[%c17, %c0_218, %c0_219] : memref<28x8x256xf32, #tpu.memory_space<vmem>>, vector<1x8x256xf32>
    %319 = vector.shape_cast %318 : vector<1x8x256xf32> to vector<8x256xf32>
    %c0_220 = arith.constant 0 : index
    %c0_221 = arith.constant 0 : index
    %320 = vector.load %arg2[%c0_220, %c0_221] : memref<256x256xbf16, #tpu.memory_space<vmem>>, vector<256x256xbf16>
    %cst_222 = arith.constant dense<0.000000e+00> : vector<8x256xf32>
    %321 = tpu.matmul %306, %320, %cst_222 {dimension_numbers = #tpu.dot_dimension_numbers<[1], [0], [0], [1], [0, 0, 1, 1], [], []>} : vector<8x256xbf16>, vector<256x256xbf16>, vector<8x256xf32> -> vector<8x256xf32>
    %322 = arith.addf %319, %321 : vector<8x256xf32>
    %323 = math.tanh %322 : vector<8x256xf32>
    %324 = arith.truncf %323 : vector<8x256xf32> to vector<8x256xbf16>
    %325 = tpu.concatenate %324, %313 in 1 : vector<8x256xbf16>, vector<8x256xbf16> -> vector<8x512xbf16>
    %c0_223 = arith.constant 0 : index
    %c0_224 = arith.constant 0 : index
    %326 = vector.load %arg4[%c0_223, %c0_224] : memref<512x256xbf16, #tpu.memory_space<vmem>>, vector<512x256xbf16>
    %cst_225 = arith.constant dense<0.000000e+00> : vector<8x256xf32>
    %327 = tpu.matmul %325, %326, %cst_225 {dimension_numbers = #tpu.dot_dimension_numbers<[1], [0], [0], [1], [0, 0, 1, 1], [], []>} : vector<8x512xbf16>, vector<512x256xbf16>, vector<8x256xf32> -> vector<8x256xf32>
    %328 = vector.broadcast %8 : vector<1x256xf32> to vector<8x256xf32>
    %329 = arith.addf %327, %328 : vector<8x256xf32>
    %330 = math.tanh %329 : vector<8x256xf32>
    %331 = arith.truncf %330 : vector<8x256xf32> to vector<8x256xbf16>
    %c17_226 = arith.constant 17 : index
    %c0_227 = arith.constant 0 : index
    %c0_228 = arith.constant 0 : index
    %332 = vector.load %arg6[%c17_226, %c0_227, %c0_228] : memref<28x256x10xbf16, #tpu.memory_space<vmem>>, vector<1x256x10xbf16>
    %333 = vector.shape_cast %332 : vector<1x256x10xbf16> to vector<256x10xbf16>
    %cst_229 = arith.constant dense<0.000000e+00> : vector<8x10xf32>
    %334 = tpu.matmul %331, %333, %cst_229 {dimension_numbers = #tpu.dot_dimension_numbers<[1], [0], [0], [1], [0, 0, 1, 1], [], []>} : vector<8x256xbf16>, vector<256x10xbf16>, vector<8x10xf32> -> vector<8x10xf32>
    %335 = arith.addf %317, %334 : vector<8x10xf32>
    %c18 = arith.constant 18 : index
    %c0_230 = arith.constant 0 : index
    %c0_231 = arith.constant 0 : index
    %336 = vector.load %arg9[%c18, %c0_230, %c0_231] : memref<28x8x256xf32, #tpu.memory_space<vmem>>, vector<1x8x256xf32>
    %337 = vector.shape_cast %336 : vector<1x8x256xf32> to vector<8x256xf32>
    %c0_232 = arith.constant 0 : index
    %c0_233 = arith.constant 0 : index
    %338 = vector.load %arg2[%c0_232, %c0_233] : memref<256x256xbf16, #tpu.memory_space<vmem>>, vector<256x256xbf16>
    %cst_234 = arith.constant dense<0.000000e+00> : vector<8x256xf32>
    %339 = tpu.matmul %324, %338, %cst_234 {dimension_numbers = #tpu.dot_dimension_numbers<[1], [0], [0], [1], [0, 0, 1, 1], [], []>} : vector<8x256xbf16>, vector<256x256xbf16>, vector<8x256xf32> -> vector<8x256xf32>
    %340 = arith.addf %337, %339 : vector<8x256xf32>
    %341 = math.tanh %340 : vector<8x256xf32>
    %342 = arith.truncf %341 : vector<8x256xf32> to vector<8x256xbf16>
    %343 = tpu.concatenate %342, %331 in 1 : vector<8x256xbf16>, vector<8x256xbf16> -> vector<8x512xbf16>
    %c0_235 = arith.constant 0 : index
    %c0_236 = arith.constant 0 : index
    %344 = vector.load %arg4[%c0_235, %c0_236] : memref<512x256xbf16, #tpu.memory_space<vmem>>, vector<512x256xbf16>
    %cst_237 = arith.constant dense<0.000000e+00> : vector<8x256xf32>
    %345 = tpu.matmul %343, %344, %cst_237 {dimension_numbers = #tpu.dot_dimension_numbers<[1], [0], [0], [1], [0, 0, 1, 1], [], []>} : vector<8x512xbf16>, vector<512x256xbf16>, vector<8x256xf32> -> vector<8x256xf32>
    %346 = vector.broadcast %8 : vector<1x256xf32> to vector<8x256xf32>
    %347 = arith.addf %345, %346 : vector<8x256xf32>
    %348 = math.tanh %347 : vector<8x256xf32>
    %349 = arith.truncf %348 : vector<8x256xf32> to vector<8x256xbf16>
    %c18_238 = arith.constant 18 : index
    %c0_239 = arith.constant 0 : index
    %c0_240 = arith.constant 0 : index
    %350 = vector.load %arg6[%c18_238, %c0_239, %c0_240] : memref<28x256x10xbf16, #tpu.memory_space<vmem>>, vector<1x256x10xbf16>
    %351 = vector.shape_cast %350 : vector<1x256x10xbf16> to vector<256x10xbf16>
    %cst_241 = arith.constant dense<0.000000e+00> : vector<8x10xf32>
    %352 = tpu.matmul %349, %351, %cst_241 {dimension_numbers = #tpu.dot_dimension_numbers<[1], [0], [0], [1], [0, 0, 1, 1], [], []>} : vector<8x256xbf16>, vector<256x10xbf16>, vector<8x10xf32> -> vector<8x10xf32>
    %353 = arith.addf %335, %352 : vector<8x10xf32>
    %c19 = arith.constant 19 : index
    %c0_242 = arith.constant 0 : index
    %c0_243 = arith.constant 0 : index
    %354 = vector.load %arg9[%c19, %c0_242, %c0_243] : memref<28x8x256xf32, #tpu.memory_space<vmem>>, vector<1x8x256xf32>
    %355 = vector.shape_cast %354 : vector<1x8x256xf32> to vector<8x256xf32>
    %c0_244 = arith.constant 0 : index
    %c0_245 = arith.constant 0 : index
    %356 = vector.load %arg2[%c0_244, %c0_245] : memref<256x256xbf16, #tpu.memory_space<vmem>>, vector<256x256xbf16>
    %cst_246 = arith.constant dense<0.000000e+00> : vector<8x256xf32>
    %357 = tpu.matmul %342, %356, %cst_246 {dimension_numbers = #tpu.dot_dimension_numbers<[1], [0], [0], [1], [0, 0, 1, 1], [], []>} : vector<8x256xbf16>, vector<256x256xbf16>, vector<8x256xf32> -> vector<8x256xf32>
    %358 = arith.addf %355, %357 : vector<8x256xf32>
    %359 = math.tanh %358 : vector<8x256xf32>
    %360 = arith.truncf %359 : vector<8x256xf32> to vector<8x256xbf16>
    %361 = tpu.concatenate %360, %349 in 1 : vector<8x256xbf16>, vector<8x256xbf16> -> vector<8x512xbf16>
    %c0_247 = arith.constant 0 : index
    %c0_248 = arith.constant 0 : index
    %362 = vector.load %arg4[%c0_247, %c0_248] : memref<512x256xbf16, #tpu.memory_space<vmem>>, vector<512x256xbf16>
    %cst_249 = arith.constant dense<0.000000e+00> : vector<8x256xf32>
    %363 = tpu.matmul %361, %362, %cst_249 {dimension_numbers = #tpu.dot_dimension_numbers<[1], [0], [0], [1], [0, 0, 1, 1], [], []>} : vector<8x512xbf16>, vector<512x256xbf16>, vector<8x256xf32> -> vector<8x256xf32>
    %364 = vector.broadcast %8 : vector<1x256xf32> to vector<8x256xf32>
    %365 = arith.addf %363, %364 : vector<8x256xf32>
    %366 = math.tanh %365 : vector<8x256xf32>
    %367 = arith.truncf %366 : vector<8x256xf32> to vector<8x256xbf16>
    %c19_250 = arith.constant 19 : index
    %c0_251 = arith.constant 0 : index
    %c0_252 = arith.constant 0 : index
    %368 = vector.load %arg6[%c19_250, %c0_251, %c0_252] : memref<28x256x10xbf16, #tpu.memory_space<vmem>>, vector<1x256x10xbf16>
    %369 = vector.shape_cast %368 : vector<1x256x10xbf16> to vector<256x10xbf16>
    %cst_253 = arith.constant dense<0.000000e+00> : vector<8x10xf32>
    %370 = tpu.matmul %367, %369, %cst_253 {dimension_numbers = #tpu.dot_dimension_numbers<[1], [0], [0], [1], [0, 0, 1, 1], [], []>} : vector<8x256xbf16>, vector<256x10xbf16>, vector<8x10xf32> -> vector<8x10xf32>
    %371 = arith.addf %353, %370 : vector<8x10xf32>
    %c20 = arith.constant 20 : index
    %c0_254 = arith.constant 0 : index
    %c0_255 = arith.constant 0 : index
    %372 = vector.load %arg9[%c20, %c0_254, %c0_255] : memref<28x8x256xf32, #tpu.memory_space<vmem>>, vector<1x8x256xf32>
    %373 = vector.shape_cast %372 : vector<1x8x256xf32> to vector<8x256xf32>
    %c0_256 = arith.constant 0 : index
    %c0_257 = arith.constant 0 : index
    %374 = vector.load %arg2[%c0_256, %c0_257] : memref<256x256xbf16, #tpu.memory_space<vmem>>, vector<256x256xbf16>
    %cst_258 = arith.constant dense<0.000000e+00> : vector<8x256xf32>
    %375 = tpu.matmul %360, %374, %cst_258 {dimension_numbers = #tpu.dot_dimension_numbers<[1], [0], [0], [1], [0, 0, 1, 1], [], []>} : vector<8x256xbf16>, vector<256x256xbf16>, vector<8x256xf32> -> vector<8x256xf32>
    %376 = arith.addf %373, %375 : vector<8x256xf32>
    %377 = math.tanh %376 : vector<8x256xf32>
    %378 = arith.truncf %377 : vector<8x256xf32> to vector<8x256xbf16>
    %379 = tpu.concatenate %378, %367 in 1 : vector<8x256xbf16>, vector<8x256xbf16> -> vector<8x512xbf16>
    %c0_259 = arith.constant 0 : index
    %c0_260 = arith.constant 0 : index
    %380 = vector.load %arg4[%c0_259, %c0_260] : memref<512x256xbf16, #tpu.memory_space<vmem>>, vector<512x256xbf16>
    %cst_261 = arith.constant dense<0.000000e+00> : vector<8x256xf32>
    %381 = tpu.matmul %379, %380, %cst_261 {dimension_numbers = #tpu.dot_dimension_numbers<[1], [0], [0], [1], [0, 0, 1, 1], [], []>} : vector<8x512xbf16>, vector<512x256xbf16>, vector<8x256xf32> -> vector<8x256xf32>
    %382 = vector.broadcast %8 : vector<1x256xf32> to vector<8x256xf32>
    %383 = arith.addf %381, %382 : vector<8x256xf32>
    %384 = math.tanh %383 : vector<8x256xf32>
    %385 = arith.truncf %384 : vector<8x256xf32> to vector<8x256xbf16>
    %c20_262 = arith.constant 20 : index
    %c0_263 = arith.constant 0 : index
    %c0_264 = arith.constant 0 : index
    %386 = vector.load %arg6[%c20_262, %c0_263, %c0_264] : memref<28x256x10xbf16, #tpu.memory_space<vmem>>, vector<1x256x10xbf16>
    %387 = vector.shape_cast %386 : vector<1x256x10xbf16> to vector<256x10xbf16>
    %cst_265 = arith.constant dense<0.000000e+00> : vector<8x10xf32>
    %388 = tpu.matmul %385, %387, %cst_265 {dimension_numbers = #tpu.dot_dimension_numbers<[1], [0], [0], [1], [0, 0, 1, 1], [], []>} : vector<8x256xbf16>, vector<256x10xbf16>, vector<8x10xf32> -> vector<8x10xf32>
    %389 = arith.addf %371, %388 : vector<8x10xf32>
    %c21 = arith.constant 21 : index
    %c0_266 = arith.constant 0 : index
    %c0_267 = arith.constant 0 : index
    %390 = vector.load %arg9[%c21, %c0_266, %c0_267] : memref<28x8x256xf32, #tpu.memory_space<vmem>>, vector<1x8x256xf32>
    %391 = vector.shape_cast %390 : vector<1x8x256xf32> to vector<8x256xf32>
    %c0_268 = arith.constant 0 : index
    %c0_269 = arith.constant 0 : index
    %392 = vector.load %arg2[%c0_268, %c0_269] : memref<256x256xbf16, #tpu.memory_space<vmem>>, vector<256x256xbf16>
    %cst_270 = arith.constant dense<0.000000e+00> : vector<8x256xf32>
    %393 = tpu.matmul %378, %392, %cst_270 {dimension_numbers = #tpu.dot_dimension_numbers<[1], [0], [0], [1], [0, 0, 1, 1], [], []>} : vector<8x256xbf16>, vector<256x256xbf16>, vector<8x256xf32> -> vector<8x256xf32>
    %394 = arith.addf %391, %393 : vector<8x256xf32>
    %395 = math.tanh %394 : vector<8x256xf32>
    %396 = arith.truncf %395 : vector<8x256xf32> to vector<8x256xbf16>
    %397 = tpu.concatenate %396, %385 in 1 : vector<8x256xbf16>, vector<8x256xbf16> -> vector<8x512xbf16>
    %c0_271 = arith.constant 0 : index
    %c0_272 = arith.constant 0 : index
    %398 = vector.load %arg4[%c0_271, %c0_272] : memref<512x256xbf16, #tpu.memory_space<vmem>>, vector<512x256xbf16>
    %cst_273 = arith.constant dense<0.000000e+00> : vector<8x256xf32>
    %399 = tpu.matmul %397, %398, %cst_273 {dimension_numbers = #tpu.dot_dimension_numbers<[1], [0], [0], [1], [0, 0, 1, 1], [], []>} : vector<8x512xbf16>, vector<512x256xbf16>, vector<8x256xf32> -> vector<8x256xf32>
    %400 = vector.broadcast %8 : vector<1x256xf32> to vector<8x256xf32>
    %401 = arith.addf %399, %400 : vector<8x256xf32>
    %402 = math.tanh %401 : vector<8x256xf32>
    %403 = arith.truncf %402 : vector<8x256xf32> to vector<8x256xbf16>
    %c21_274 = arith.constant 21 : index
    %c0_275 = arith.constant 0 : index
    %c0_276 = arith.constant 0 : index
    %404 = vector.load %arg6[%c21_274, %c0_275, %c0_276] : memref<28x256x10xbf16, #tpu.memory_space<vmem>>, vector<1x256x10xbf16>
    %405 = vector.shape_cast %404 : vector<1x256x10xbf16> to vector<256x10xbf16>
    %cst_277 = arith.constant dense<0.000000e+00> : vector<8x10xf32>
    %406 = tpu.matmul %403, %405, %cst_277 {dimension_numbers = #tpu.dot_dimension_numbers<[1], [0], [0], [1], [0, 0, 1, 1], [], []>} : vector<8x256xbf16>, vector<256x10xbf16>, vector<8x10xf32> -> vector<8x10xf32>
    %407 = arith.addf %389, %406 : vector<8x10xf32>
    %c22 = arith.constant 22 : index
    %c0_278 = arith.constant 0 : index
    %c0_279 = arith.constant 0 : index
    %408 = vector.load %arg9[%c22, %c0_278, %c0_279] : memref<28x8x256xf32, #tpu.memory_space<vmem>>, vector<1x8x256xf32>
    %409 = vector.shape_cast %408 : vector<1x8x256xf32> to vector<8x256xf32>
    %c0_280 = arith.constant 0 : index
    %c0_281 = arith.constant 0 : index
    %410 = vector.load %arg2[%c0_280, %c0_281] : memref<256x256xbf16, #tpu.memory_space<vmem>>, vector<256x256xbf16>
    %cst_282 = arith.constant dense<0.000000e+00> : vector<8x256xf32>
    %411 = tpu.matmul %396, %410, %cst_282 {dimension_numbers = #tpu.dot_dimension_numbers<[1], [0], [0], [1], [0, 0, 1, 1], [], []>} : vector<8x256xbf16>, vector<256x256xbf16>, vector<8x256xf32> -> vector<8x256xf32>
    %412 = arith.addf %409, %411 : vector<8x256xf32>
    %413 = math.tanh %412 : vector<8x256xf32>
    %414 = arith.truncf %413 : vector<8x256xf32> to vector<8x256xbf16>
    %415 = tpu.concatenate %414, %403 in 1 : vector<8x256xbf16>, vector<8x256xbf16> -> vector<8x512xbf16>
    %c0_283 = arith.constant 0 : index
    %c0_284 = arith.constant 0 : index
    %416 = vector.load %arg4[%c0_283, %c0_284] : memref<512x256xbf16, #tpu.memory_space<vmem>>, vector<512x256xbf16>
    %cst_285 = arith.constant dense<0.000000e+00> : vector<8x256xf32>
    %417 = tpu.matmul %415, %416, %cst_285 {dimension_numbers = #tpu.dot_dimension_numbers<[1], [0], [0], [1], [0, 0, 1, 1], [], []>} : vector<8x512xbf16>, vector<512x256xbf16>, vector<8x256xf32> -> vector<8x256xf32>
    %418 = vector.broadcast %8 : vector<1x256xf32> to vector<8x256xf32>
    %419 = arith.addf %417, %418 : vector<8x256xf32>
    %420 = math.tanh %419 : vector<8x256xf32>
    %421 = arith.truncf %420 : vector<8x256xf32> to vector<8x256xbf16>
    %c22_286 = arith.constant 22 : index
    %c0_287 = arith.constant 0 : index
    %c0_288 = arith.constant 0 : index
    %422 = vector.load %arg6[%c22_286, %c0_287, %c0_288] : memref<28x256x10xbf16, #tpu.memory_space<vmem>>, vector<1x256x10xbf16>
    %423 = vector.shape_cast %422 : vector<1x256x10xbf16> to vector<256x10xbf16>
    %cst_289 = arith.constant dense<0.000000e+00> : vector<8x10xf32>
    %424 = tpu.matmul %421, %423, %cst_289 {dimension_numbers = #tpu.dot_dimension_numbers<[1], [0], [0], [1], [0, 0, 1, 1], [], []>} : vector<8x256xbf16>, vector<256x10xbf16>, vector<8x10xf32> -> vector<8x10xf32>
    %425 = arith.addf %407, %424 : vector<8x10xf32>
    %c23 = arith.constant 23 : index
    %c0_290 = arith.constant 0 : index
    %c0_291 = arith.constant 0 : index
    %426 = vector.load %arg9[%c23, %c0_290, %c0_291] : memref<28x8x256xf32, #tpu.memory_space<vmem>>, vector<1x8x256xf32>
    %427 = vector.shape_cast %426 : vector<1x8x256xf32> to vector<8x256xf32>
    %c0_292 = arith.constant 0 : index
    %c0_293 = arith.constant 0 : index
    %428 = vector.load %arg2[%c0_292, %c0_293] : memref<256x256xbf16, #tpu.memory_space<vmem>>, vector<256x256xbf16>
    %cst_294 = arith.constant dense<0.000000e+00> : vector<8x256xf32>
    %429 = tpu.matmul %414, %428, %cst_294 {dimension_numbers = #tpu.dot_dimension_numbers<[1], [0], [0], [1], [0, 0, 1, 1], [], []>} : vector<8x256xbf16>, vector<256x256xbf16>, vector<8x256xf32> -> vector<8x256xf32>
    %430 = arith.addf %427, %429 : vector<8x256xf32>
    %431 = math.tanh %430 : vector<8x256xf32>
    %432 = arith.truncf %431 : vector<8x256xf32> to vector<8x256xbf16>
    %433 = tpu.concatenate %432, %421 in 1 : vector<8x256xbf16>, vector<8x256xbf16> -> vector<8x512xbf16>
    %c0_295 = arith.constant 0 : index
    %c0_296 = arith.constant 0 : index
    %434 = vector.load %arg4[%c0_295, %c0_296] : memref<512x256xbf16, #tpu.memory_space<vmem>>, vector<512x256xbf16>
    %cst_297 = arith.constant dense<0.000000e+00> : vector<8x256xf32>
    %435 = tpu.matmul %433, %434, %cst_297 {dimension_numbers = #tpu.dot_dimension_numbers<[1], [0], [0], [1], [0, 0, 1, 1], [], []>} : vector<8x512xbf16>, vector<512x256xbf16>, vector<8x256xf32> -> vector<8x256xf32>
    %436 = vector.broadcast %8 : vector<1x256xf32> to vector<8x256xf32>
    %437 = arith.addf %435, %436 : vector<8x256xf32>
    %438 = math.tanh %437 : vector<8x256xf32>
    %439 = arith.truncf %438 : vector<8x256xf32> to vector<8x256xbf16>
    %c23_298 = arith.constant 23 : index
    %c0_299 = arith.constant 0 : index
    %c0_300 = arith.constant 0 : index
    %440 = vector.load %arg6[%c23_298, %c0_299, %c0_300] : memref<28x256x10xbf16, #tpu.memory_space<vmem>>, vector<1x256x10xbf16>
    %441 = vector.shape_cast %440 : vector<1x256x10xbf16> to vector<256x10xbf16>
    %cst_301 = arith.constant dense<0.000000e+00> : vector<8x10xf32>
    %442 = tpu.matmul %439, %441, %cst_301 {dimension_numbers = #tpu.dot_dimension_numbers<[1], [0], [0], [1], [0, 0, 1, 1], [], []>} : vector<8x256xbf16>, vector<256x10xbf16>, vector<8x10xf32> -> vector<8x10xf32>
    %443 = arith.addf %425, %442 : vector<8x10xf32>
    %c24 = arith.constant 24 : index
    %c0_302 = arith.constant 0 : index
    %c0_303 = arith.constant 0 : index
    %444 = vector.load %arg9[%c24, %c0_302, %c0_303] : memref<28x8x256xf32, #tpu.memory_space<vmem>>, vector<1x8x256xf32>
    %445 = vector.shape_cast %444 : vector<1x8x256xf32> to vector<8x256xf32>
    %c0_304 = arith.constant 0 : index
    %c0_305 = arith.constant 0 : index
    %446 = vector.load %arg2[%c0_304, %c0_305] : memref<256x256xbf16, #tpu.memory_space<vmem>>, vector<256x256xbf16>
    %cst_306 = arith.constant dense<0.000000e+00> : vector<8x256xf32>
    %447 = tpu.matmul %432, %446, %cst_306 {dimension_numbers = #tpu.dot_dimension_numbers<[1], [0], [0], [1], [0, 0, 1, 1], [], []>} : vector<8x256xbf16>, vector<256x256xbf16>, vector<8x256xf32> -> vector<8x256xf32>
    %448 = arith.addf %445, %447 : vector<8x256xf32>
    %449 = math.tanh %448 : vector<8x256xf32>
    %450 = arith.truncf %449 : vector<8x256xf32> to vector<8x256xbf16>
    %451 = tpu.concatenate %450, %439 in 1 : vector<8x256xbf16>, vector<8x256xbf16> -> vector<8x512xbf16>
    %c0_307 = arith.constant 0 : index
    %c0_308 = arith.constant 0 : index
    %452 = vector.load %arg4[%c0_307, %c0_308] : memref<512x256xbf16, #tpu.memory_space<vmem>>, vector<512x256xbf16>
    %cst_309 = arith.constant dense<0.000000e+00> : vector<8x256xf32>
    %453 = tpu.matmul %451, %452, %cst_309 {dimension_numbers = #tpu.dot_dimension_numbers<[1], [0], [0], [1], [0, 0, 1, 1], [], []>} : vector<8x512xbf16>, vector<512x256xbf16>, vector<8x256xf32> -> vector<8x256xf32>
    %454 = vector.broadcast %8 : vector<1x256xf32> to vector<8x256xf32>
    %455 = arith.addf %453, %454 : vector<8x256xf32>
    %456 = math.tanh %455 : vector<8x256xf32>
    %457 = arith.truncf %456 : vector<8x256xf32> to vector<8x256xbf16>
    %c24_310 = arith.constant 24 : index
    %c0_311 = arith.constant 0 : index
    %c0_312 = arith.constant 0 : index
    %458 = vector.load %arg6[%c24_310, %c0_311, %c0_312] : memref<28x256x10xbf16, #tpu.memory_space<vmem>>, vector<1x256x10xbf16>
    %459 = vector.shape_cast %458 : vector<1x256x10xbf16> to vector<256x10xbf16>
    %cst_313 = arith.constant dense<0.000000e+00> : vector<8x10xf32>
    %460 = tpu.matmul %457, %459, %cst_313 {dimension_numbers = #tpu.dot_dimension_numbers<[1], [0], [0], [1], [0, 0, 1, 1], [], []>} : vector<8x256xbf16>, vector<256x10xbf16>, vector<8x10xf32> -> vector<8x10xf32>
    %461 = arith.addf %443, %460 : vector<8x10xf32>
    %c25 = arith.constant 25 : index
    %c0_314 = arith.constant 0 : index
    %c0_315 = arith.constant 0 : index
    %462 = vector.load %arg9[%c25, %c0_314, %c0_315] : memref<28x8x256xf32, #tpu.memory_space<vmem>>, vector<1x8x256xf32>
    %463 = vector.shape_cast %462 : vector<1x8x256xf32> to vector<8x256xf32>
    %c0_316 = arith.constant 0 : index
    %c0_317 = arith.constant 0 : index
    %464 = vector.load %arg2[%c0_316, %c0_317] : memref<256x256xbf16, #tpu.memory_space<vmem>>, vector<256x256xbf16>
    %cst_318 = arith.constant dense<0.000000e+00> : vector<8x256xf32>
    %465 = tpu.matmul %450, %464, %cst_318 {dimension_numbers = #tpu.dot_dimension_numbers<[1], [0], [0], [1], [0, 0, 1, 1], [], []>} : vector<8x256xbf16>, vector<256x256xbf16>, vector<8x256xf32> -> vector<8x256xf32>
    %466 = arith.addf %463, %465 : vector<8x256xf32>
    %467 = math.tanh %466 : vector<8x256xf32>
    %468 = arith.truncf %467 : vector<8x256xf32> to vector<8x256xbf16>
    %469 = tpu.concatenate %468, %457 in 1 : vector<8x256xbf16>, vector<8x256xbf16> -> vector<8x512xbf16>
    %c0_319 = arith.constant 0 : index
    %c0_320 = arith.constant 0 : index
    %470 = vector.load %arg4[%c0_319, %c0_320] : memref<512x256xbf16, #tpu.memory_space<vmem>>, vector<512x256xbf16>
    %cst_321 = arith.constant dense<0.000000e+00> : vector<8x256xf32>
    %471 = tpu.matmul %469, %470, %cst_321 {dimension_numbers = #tpu.dot_dimension_numbers<[1], [0], [0], [1], [0, 0, 1, 1], [], []>} : vector<8x512xbf16>, vector<512x256xbf16>, vector<8x256xf32> -> vector<8x256xf32>
    %472 = vector.broadcast %8 : vector<1x256xf32> to vector<8x256xf32>
    %473 = arith.addf %471, %472 : vector<8x256xf32>
    %474 = math.tanh %473 : vector<8x256xf32>
    %475 = arith.truncf %474 : vector<8x256xf32> to vector<8x256xbf16>
    %c25_322 = arith.constant 25 : index
    %c0_323 = arith.constant 0 : index
    %c0_324 = arith.constant 0 : index
    %476 = vector.load %arg6[%c25_322, %c0_323, %c0_324] : memref<28x256x10xbf16, #tpu.memory_space<vmem>>, vector<1x256x10xbf16>
    %477 = vector.shape_cast %476 : vector<1x256x10xbf16> to vector<256x10xbf16>
    %cst_325 = arith.constant dense<0.000000e+00> : vector<8x10xf32>
    %478 = tpu.matmul %475, %477, %cst_325 {dimension_numbers = #tpu.dot_dimension_numbers<[1], [0], [0], [1], [0, 0, 1, 1], [], []>} : vector<8x256xbf16>, vector<256x10xbf16>, vector<8x10xf32> -> vector<8x10xf32>
    %479 = arith.addf %461, %478 : vector<8x10xf32>
    %c26 = arith.constant 26 : index
    %c0_326 = arith.constant 0 : index
    %c0_327 = arith.constant 0 : index
    %480 = vector.load %arg9[%c26, %c0_326, %c0_327] : memref<28x8x256xf32, #tpu.memory_space<vmem>>, vector<1x8x256xf32>
    %481 = vector.shape_cast %480 : vector<1x8x256xf32> to vector<8x256xf32>
    %c0_328 = arith.constant 0 : index
    %c0_329 = arith.constant 0 : index
    %482 = vector.load %arg2[%c0_328, %c0_329] : memref<256x256xbf16, #tpu.memory_space<vmem>>, vector<256x256xbf16>
    %cst_330 = arith.constant dense<0.000000e+00> : vector<8x256xf32>
    %483 = tpu.matmul %468, %482, %cst_330 {dimension_numbers = #tpu.dot_dimension_numbers<[1], [0], [0], [1], [0, 0, 1, 1], [], []>} : vector<8x256xbf16>, vector<256x256xbf16>, vector<8x256xf32> -> vector<8x256xf32>
    %484 = arith.addf %481, %483 : vector<8x256xf32>
    %485 = math.tanh %484 : vector<8x256xf32>
    %486 = arith.truncf %485 : vector<8x256xf32> to vector<8x256xbf16>
    %487 = tpu.concatenate %486, %475 in 1 : vector<8x256xbf16>, vector<8x256xbf16> -> vector<8x512xbf16>
    %c0_331 = arith.constant 0 : index
    %c0_332 = arith.constant 0 : index
    %488 = vector.load %arg4[%c0_331, %c0_332] : memref<512x256xbf16, #tpu.memory_space<vmem>>, vector<512x256xbf16>
    %cst_333 = arith.constant dense<0.000000e+00> : vector<8x256xf32>
    %489 = tpu.matmul %487, %488, %cst_333 {dimension_numbers = #tpu.dot_dimension_numbers<[1], [0], [0], [1], [0, 0, 1, 1], [], []>} : vector<8x512xbf16>, vector<512x256xbf16>, vector<8x256xf32> -> vector<8x256xf32>
    %490 = vector.broadcast %8 : vector<1x256xf32> to vector<8x256xf32>
    %491 = arith.addf %489, %490 : vector<8x256xf32>
    %492 = math.tanh %491 : vector<8x256xf32>
    %493 = arith.truncf %492 : vector<8x256xf32> to vector<8x256xbf16>
    %c26_334 = arith.constant 26 : index
    %c0_335 = arith.constant 0 : index
    %c0_336 = arith.constant 0 : index
    %494 = vector.load %arg6[%c26_334, %c0_335, %c0_336] : memref<28x256x10xbf16, #tpu.memory_space<vmem>>, vector<1x256x10xbf16>
    %495 = vector.shape_cast %494 : vector<1x256x10xbf16> to vector<256x10xbf16>
    %cst_337 = arith.constant dense<0.000000e+00> : vector<8x10xf32>
    %496 = tpu.matmul %493, %495, %cst_337 {dimension_numbers = #tpu.dot_dimension_numbers<[1], [0], [0], [1], [0, 0, 1, 1], [], []>} : vector<8x256xbf16>, vector<256x10xbf16>, vector<8x10xf32> -> vector<8x10xf32>
    %497 = arith.addf %479, %496 : vector<8x10xf32>
    %c27 = arith.constant 27 : index
    %c0_338 = arith.constant 0 : index
    %c0_339 = arith.constant 0 : index
    %498 = vector.load %arg9[%c27, %c0_338, %c0_339] : memref<28x8x256xf32, #tpu.memory_space<vmem>>, vector<1x8x256xf32>
    %499 = vector.shape_cast %498 : vector<1x8x256xf32> to vector<8x256xf32>
    %c0_340 = arith.constant 0 : index
    %c0_341 = arith.constant 0 : index
    %500 = vector.load %arg2[%c0_340, %c0_341] : memref<256x256xbf16, #tpu.memory_space<vmem>>, vector<256x256xbf16>
    %cst_342 = arith.constant dense<0.000000e+00> : vector<8x256xf32>
    %501 = tpu.matmul %486, %500, %cst_342 {dimension_numbers = #tpu.dot_dimension_numbers<[1], [0], [0], [1], [0, 0, 1, 1], [], []>} : vector<8x256xbf16>, vector<256x256xbf16>, vector<8x256xf32> -> vector<8x256xf32>
    %502 = arith.addf %499, %501 : vector<8x256xf32>
    %503 = math.tanh %502 : vector<8x256xf32>
    %504 = arith.truncf %503 : vector<8x256xf32> to vector<8x256xbf16>
    %505 = tpu.concatenate %504, %493 in 1 : vector<8x256xbf16>, vector<8x256xbf16> -> vector<8x512xbf16>
    %c0_343 = arith.constant 0 : index
    %c0_344 = arith.constant 0 : index
    %506 = vector.load %arg4[%c0_343, %c0_344] : memref<512x256xbf16, #tpu.memory_space<vmem>>, vector<512x256xbf16>
    %cst_345 = arith.constant dense<0.000000e+00> : vector<8x256xf32>
    %507 = tpu.matmul %505, %506, %cst_345 {dimension_numbers = #tpu.dot_dimension_numbers<[1], [0], [0], [1], [0, 0, 1, 1], [], []>} : vector<8x512xbf16>, vector<512x256xbf16>, vector<8x256xf32> -> vector<8x256xf32>
    %508 = vector.broadcast %8 : vector<1x256xf32> to vector<8x256xf32>
    %509 = arith.addf %507, %508 : vector<8x256xf32>
    %510 = math.tanh %509 : vector<8x256xf32>
    %511 = arith.truncf %510 : vector<8x256xf32> to vector<8x256xbf16>
    %c27_346 = arith.constant 27 : index
    %c0_347 = arith.constant 0 : index
    %c0_348 = arith.constant 0 : index
    %512 = vector.load %arg6[%c27_346, %c0_347, %c0_348] : memref<28x256x10xbf16, #tpu.memory_space<vmem>>, vector<1x256x10xbf16>
    %513 = vector.shape_cast %512 : vector<1x256x10xbf16> to vector<256x10xbf16>
    %cst_349 = arith.constant dense<0.000000e+00> : vector<8x10xf32>
    %514 = tpu.matmul %511, %513, %cst_349 {dimension_numbers = #tpu.dot_dimension_numbers<[1], [0], [0], [1], [0, 0, 1, 1], [], []>} : vector<8x256xbf16>, vector<256x10xbf16>, vector<8x10xf32> -> vector<8x10xf32>
    %515 = arith.addf %497, %514 : vector<8x10xf32>
    %c0_350 = arith.constant 0 : index
    %c0_351 = arith.constant 0 : index
    %516 = vector.load %arg7[%c0_350, %c0_351] : memref<1x10xf32, #tpu.memory_space<vmem>>, vector<1x10xf32>
    %517 = vector.broadcast %516 : vector<1x10xf32> to vector<8x10xf32>
    %518 = arith.addf %515, %517 : vector<8x10xf32>
    %c0_352 = arith.constant 0 : index
    %c0_353 = arith.constant 0 : index
    %519 = vector.load %arg8[%c0_352, %c0_353] : memref<8x10xf32, #tpu.memory_space<vmem>>, vector<8x10xf32>
    tpu.vector_store %arg8[%c0_352, %c0_353], %518 {strides = array<i32>} : memref<8x10xf32, #tpu.memory_space<vmem>>, vector<8x10xf32>,
    return
  }
}

</mosaic_0001>

<llo_original>
// kernel: rnn_forward.1
$region0: #{rnn_forward.1}
  #allocation0 [shape = 'u32[]', space=smem, size = 0x4, offset = 0x4, fixed_abs, tag = 'smem constant byte address 0x4 - core index']
  #allocation1 [shape = 'u32[144,128]{1,0:T(1,128)}', space=vmem, size = 0x12000, scoped, tag = 'internal scratch']
  #allocation2 [shape = 'f32[28,8,256]{2,1,0:T(8,128)}', space=vmem, size = 0x38000, scoped, tag = 'scratch operand']
  %s0 = inlined_call_operand.vmem [shape: bf16[224,128], index: 0, kind: input, shape index: {}]
  %s1 = inlined_call_operand.vmem [shape: bf16[128,256], index: 1, kind: input, shape index: {}]
  %s2 = inlined_call_operand.vmem [shape: bf16[256,256], index: 2, kind: input, shape index: {}]
  %s3 = inlined_call_operand.vmem [shape: f32[1,256], index: 3, kind: input, shape index: {}]
  %s4 = inlined_call_operand.vmem [shape: bf16[512,256], index: 4, kind: input, shape index: {}]
  %s5 = inlined_call_operand.vmem [shape: f32[1,256], index: 5, kind: input, shape index: {}]
  %s6 = inlined_call_operand.vmem [shape: bf16[28,256,10], index: 6, kind: input, shape index: {}]
  %s7 = inlined_call_operand.vmem [shape: f32[1,10], index: 7, kind: input, shape index: {}]
  %s8 = inlined_call_operand.vmem [shape: f32[8,10], index: 8, kind: output, shape index: {}]
  %s9 = sld [smem:[#allocation0]]
  $region42: #{rnn_forward.1} parent=0
    _
  %s11 = ssub.s32 1, %s9
  %s12 = scalar_select 0, %s11, %s9
  // Predicated region
  $region2: #{rnn_forward.1} parent=0 // pred_check
    _
  $region3: #{rnn_forward.1} parent=0 // pred_check_branch
    %14 = sbr.rel (0) target = $region5
  $region4: #{rnn_forward.1} parent=0 // pred_region
    _
  $region5: #{rnn_forward.1} parent=0 // pred_fallthru
    _
  // Predicated region
  $region6: #{rnn_forward.1} parent=0 // pred_check
    _
  $region7: #{rnn_forward.1} parent=0 // pred_check_branch
    %16 = sbr.rel (0) target = $region9
  $region8: #{rnn_forward.1} parent=0 // pred_region
    _
  $region9: #{rnn_forward.1} parent=0 // pred_fallthru
    _
  // Predicated region
  $region10: #{rnn_forward.1} parent=0 // pred_check
    _
  $region11: #{rnn_forward.1} parent=0 // pred_check_branch
    %18 = sbr.rel (0) target = $region13
  $region12: #{rnn_forward.1} parent=0 // pred_region
    _
  $region13: #{rnn_forward.1} parent=0 // pred_fallthru
    _
  // Predicated region
  $region14: #{rnn_forward.1} parent=0 // pred_check
    _
  $region15: #{rnn_forward.1} parent=0 // pred_check_branch
    %20 = sbr.rel (0) target = $region17
  $region16: #{rnn_forward.1} parent=0 // pred_region
    _
  $region17: #{rnn_forward.1} parent=0 // pred_fallthru
    _
  // Predicated region
  $region18: #{rnn_forward.1} parent=0 // pred_check
    _
  $region19: #{rnn_forward.1} parent=0 // pred_check_branch
    %22 = sbr.rel (0) target = $region21
  $region20: #{rnn_forward.1} parent=0 // pred_region
    _
  $region21: #{rnn_forward.1} parent=0 // pred_fallthru
    _
  // Predicated region
  $region22: #{rnn_forward.1} parent=0 // pred_check
    _
  $region23: #{rnn_forward.1} parent=0 // pred_check_branch
    %24 = sbr.rel (0) target = $region25
  $region24: #{rnn_forward.1} parent=0 // pred_region
    _
  $region25: #{rnn_forward.1} parent=0 // pred_fallthru
    _
  // Predicated region
  $region26: #{rnn_forward.1} parent=0 // pred_check
    _
  $region27: #{rnn_forward.1} parent=0 // pred_check_branch
    %26 = sbr.rel (0) target = $region29
  $region28: #{rnn_forward.1} parent=0 // pred_region
    _
  $region29: #{rnn_forward.1} parent=0 // pred_fallthru
    _
  // Predicated region
  $region30: #{rnn_forward.1} parent=0 // pred_check
    _
  $region31: #{rnn_forward.1} parent=0 // pred_check_branch
    %28 = sbr.rel (0) target = $region33
  $region32: #{rnn_forward.1} parent=0 // pred_region
    _
  $region33: #{rnn_forward.1} parent=0 // pred_fallthru
    _
  %v30 = vld [vmem:[%s0] sm:$0xf]
  %v31 = vld [vmem:[%s0 + $0x4] sm:$0xf]
  %v32 = vld [vmem:[%s0 + $0x8] sm:$0xf]
  %v33 = vld [vmem:[%s0 + $0xc] sm:$0xf]
  %v34 = vld [vmem:[%s0 + $0x10] sm:$0xf]
  %v35 = vld [vmem:[%s0 + $0x14] sm:$0xf]
  %v36 = vld [vmem:[%s0 + $0x18] sm:$0xf]
  %v37 = vld [vmem:[%s0 + $0x1c] sm:$0xf]
  %v38 = vld [vmem:[%s0 + $0x20] sm:$0xf]
  %v39 = vld [vmem:[%s0 + $0x24] sm:$0xf]
  %v40 = vld [vmem:[%s0 + $0x28] sm:$0xf]
  %v41 = vld [vmem:[%s0 + $0x2c] sm:$0xf]
  %v42 = vld [vmem:[%s0 + $0x30] sm:$0xf]
  %v43 = vld [vmem:[%s0 + $0x34] sm:$0xf]
  %v44 = vld [vmem:[%s0 + $0x38] sm:$0xf]
  %v45 = vld [vmem:[%s0 + $0x3c] sm:$0xf]
  %v46 = vld [vmem:[%s0 + $0x40] sm:$0xf]
  %v47 = vld [vmem:[%s0 + $0x44] sm:$0xf]
  %v48 = vld [vmem:[%s0 + $0x48] sm:$0xf]
  %v49 = vld [vmem:[%s0 + $0x4c] sm:$0xf]
  %v50 = vld [vmem:[%s0 + $0x50] sm:$0xf]
  %v51 = vld [vmem:[%s0 + $0x54] sm:$0xf]
  %v52 = vld [vmem:[%s0 + $0x58] sm:$0xf]
  %v53 = vld [vmem:[%s0 + $0x5c] sm:$0xf]
  %v54 = vld [vmem:[%s0 + $0x60] sm:$0xf]
  %v55 = vld [vmem:[%s0 + $0x64] sm:$0xf]
  %v56 = vld [vmem:[%s0 + $0x68] sm:$0xf]
  %v57 = vld [vmem:[%s0 + $0x6c] sm:$0xf]
  %v58 = vld [vmem:[%s1] sm:$0xff]
  %v59 = vld [vmem:[%s1 + $0x8] sm:$0xff]
  %v60 = vld [vmem:[%s1 + $0x10] sm:$0xff]
  %v61 = vld [vmem:[%s1 + $0x18] sm:$0xff]
  %v62 = vld [vmem:[%s1 + $0x20] sm:$0xff]
  %v63 = vld [vmem:[%s1 + $0x28] sm:$0xff]
  %v64 = vld [vmem:[%s1 + $0x30] sm:$0xff]
  %v65 = vld [vmem:[%s1 + $0x38] sm:$0xff]
  %v66 = vld [vmem:[%s1 + $0x40] sm:$0xff]
  %v67 = vld [vmem:[%s1 + $0x48] sm:$0xff]
  %v68 = vld [vmem:[%s1 + $0x50] sm:$0xff]
  %v69 = vld [vmem:[%s1 + $0x58] sm:$0xff]
  %v70 = vld [vmem:[%s1 + $0x60] sm:$0xff]
  %v71 = vld [vmem:[%s1 + $0x68] sm:$0xff]
  %v72 = vld [vmem:[%s1 + $0x70] sm:$0xff]
  %v73 = vld [vmem:[%s1 + $0x78] sm:$0xff]
  %v74 = vld [vmem:[%s3] sm:$0x3]
  %v76 = vlaneseq
  %v77 = vshrl.u32 %v76, 7
  %v78 = vsub.s32 0, %v77
  %v79 = vrot.slane %v74, %v78
  %v80 = vlaneseq
  %v81 = vshrl.u32 %v80, 7
  %v82 = vsub.s32 1, %v81
  %v83 = vrot.slane %v74, %v82
  %v114 = vunpack.c.l.b16 %v30
  %v115 = vunpack.c.l.b16 %v31
  %v116 = vunpack.c.l.b16 %v32
  %v117 = vunpack.c.l.b16 %v33
  %v118 = vunpack.c.l.b16 %v34
  %v119 = vunpack.c.l.b16 %v35
  %v120 = vunpack.c.l.b16 %v36
  %v121 = vunpack.c.l.b16 %v37
  %v122 = vunpack.c.l.b16 %v38
  %v123 = vunpack.c.l.b16 %v39
  %v124 = vunpack.c.l.b16 %v40
  %v125 = vunpack.c.l.b16 %v41
  %v126 = vunpack.c.l.b16 %v42
  %v127 = vunpack.c.l.b16 %v43
  %v128 = vunpack.c.l.b16 %v44
  %v129 = vunpack.c.l.b16 %v45
  %v130 = vunpack.c.l.b16 %v46
  %v131 = vunpack.c.l.b16 %v47
  %v132 = vunpack.c.l.b16 %v48
  %v133 = vunpack.c.l.b16 %v49
  %v134 = vunpack.c.l.b16 %v50
  %v135 = vunpack.c.l.b16 %v51
  %v136 = vunpack.c.l.b16 %v52
  %v137 = vunpack.c.l.b16 %v53
  %v138 = vunpack.c.l.b16 %v54
  %v139 = vunpack.c.l.b16 %v55
  %v140 = vunpack.c.l.b16 %v56
  %v141 = vunpack.c.l.b16 %v57
  %v142 = vpack.c.b16 %v115, %v114
  %v143 = vpack.c.b16 %v117, %v116
  %v144 = vpack.c.b16 %v119, %v118
  %v145 = vpack.c.b16 %v121, %v120
  %v146 = vpack.c.b16 %v123, %v122
  %v147 = vpack.c.b16 %v125, %v124
  %v148 = vpack.c.b16 %v127, %v126
  %v149 = vpack.c.b16 %v129, %v128
  %v150 = vpack.c.b16 %v131, %v130
  %v151 = vpack.c.b16 %v133, %v132
  %v152 = vpack.c.b16 %v135, %v134
  %v153 = vpack.c.b16 %v137, %v136
  %v154 = vpack.c.b16 %v139, %v138
  %v155 = vpack.c.b16 %v141, %v140
  %v186 = vunpack.c.l.b16 %v58
  %v187 = vunpack.c.h.b16 %v58
  %v188 = vunpack.c.l.b16 %v59
  %v189 = vunpack.c.h.b16 %v59
  %v190 = vunpack.c.l.b16 %v60
  %v191 = vunpack.c.h.b16 %v60
  %v192 = vunpack.c.l.b16 %v61
  %v193 = vunpack.c.h.b16 %v61
  %v194 = vunpack.c.l.b16 %v62
  %v195 = vunpack.c.h.b16 %v62
  %v196 = vunpack.c.l.b16 %v63
  %v197 = vunpack.c.h.b16 %v63
  %v198 = vunpack.c.l.b16 %v64
  %v199 = vunpack.c.h.b16 %v64
  %v200 = vunpack.c.l.b16 %v65
  %v201 = vunpack.c.h.b16 %v65
  %v202 = vunpack.c.l.b16 %v66
  %v203 = vunpack.c.h.b16 %v66
  %v204 = vunpack.c.l.b16 %v67
  %v205 = vunpack.c.h.b16 %v67
  %v206 = vunpack.c.l.b16 %v68
  %v207 = vunpack.c.h.b16 %v68
  %v208 = vunpack.c.l.b16 %v69
  %v209 = vunpack.c.h.b16 %v69
  %v210 = vunpack.c.l.b16 %v70
  %v211 = vunpack.c.h.b16 %v70
  %v212 = vunpack.c.l.b16 %v71
  %v213 = vunpack.c.h.b16 %v71
  %v214 = vunpack.c.l.b16 %v72
  %v215 = vunpack.c.h.b16 %v72
  %v216 = vunpack.c.l.b16 %v73
  %v217 = vunpack.c.h.b16 %v73
  %v218 = vpack.c.b16 %v188, %v186
  %v219 = vpack.c.b16 %v189, %v187
  %v220 = vpack.c.b16 %v192, %v190
  %v221 = vpack.c.b16 %v193, %v191
  %v222 = vpack.c.b16 %v196, %v194
  %v223 = vpack.c.b16 %v197, %v195
  %v224 = vpack.c.b16 %v200, %v198
  %v225 = vpack.c.b16 %v201, %v199
  %v226 = vpack.c.b16 %v204, %v202
  %v227 = vpack.c.b16 %v205, %v203
  %v228 = vpack.c.b16 %v208, %v206
  %v229 = vpack.c.b16 %v209, %v207
  %v230 = vpack.c.b16 %v212, %v210
  %v231 = vpack.c.b16 %v213, %v211
  %v232 = vpack.c.b16 %v216, %v214
  %v233 = vpack.c.b16 %v217, %v215
  %250 = vmatprep.subr.bf16.mxu0 %v233
  %251 = vmatpush1.bf16.msra.mxu0 %v232
  %252 = vmatprep.subr.bf16.mxu0 %v231
  %253 = vmatpush1.bf16.msra.mxu0 %v230
  %254 = vmatprep.subr.bf16.mxu0 %v229
  %255 = vmatpush1.bf16.msra.mxu0 %v228
  %256 = vmatprep.subr.bf16.mxu0 %v227
  %257 = vmatpush1.bf16.msra.mxu0 %v226
  %258 = vmatprep.subr.bf16.mxu0 %v225
  %259 = vmatpush1.bf16.msra.mxu0 %v224
  %260 = vmatprep.subr.bf16.mxu0 %v223
  %261 = vmatpush1.bf16.msra.mxu0 %v222
  %262 = vmatprep.subr.bf16.mxu0 %v221
  %263 = vmatpush1.bf16.msra.mxu0 %v220
  %264 = vmatprep.subr.bf16.mxu0 %v219
  %265 = vmatpush1.bf16.msra.mxu0 %v218
  %266 = vmatprep.subr.bf16.mxu0 0
  %267 = vmatpush2.bf16.msra.mxu0 0
  %268 = vmatprep.subr.bf16.mxu0 0
  %269 = vmatpush2.bf16.msra.mxu0 0
  %270 = vmatprep.subr.bf16.mxu0 0
  %271 = vmatpush2.bf16.msra.mxu0 0
  %272 = vmatprep.subr.bf16.mxu0 0
  %273 = vmatpush2.bf16.msra.mxu0 0
  %274 = vmatprep.subr.bf16.mxu0 0
  %275 = vmatpush2.bf16.msra.mxu0 0
  %276 = vmatprep.subr.bf16.mxu0 0
  %277 = vmatpush2.bf16.msra.mxu0 0
  %278 = vmatprep.subr.bf16.mxu0 0
  %279 = vmatpush2.bf16.msra.mxu0 0
  %280 = vmatprep.subr.bf16.mxu0 0
  %281 = vmatpush2.bf16.msra.mxu0 0
  %282 = vmatprep.mubr.bf16.mxu0 0
  %283 = vmatmul.mubr.bf16.gmra.mxu0 %v142
  %v284 = vpop.f32.mrf.mxu0
  %v285 = vadd.f32 %v79, %v284
  %v286 = vpop.f32.mrf.mxu0
  %v287 = vadd.f32 %v83, %v286
  %v288 = vpop.f32.mrf.mxu0
  %v289 = vadd.f32 %v79, %v288
  %v290 = vpop.f32.mrf.mxu0
  %v291 = vadd.f32 %v83, %v290
  %292 = vmatprep.mubr.bf16.mxu0 0
  %293 = vmatmul.mubr.bf16.gmra.mxu0 %v143
  %v294 = vpop.f32.mrf.mxu0
  %v295 = vadd.f32 %v79, %v294
  %v296 = vpop.f32.mrf.mxu0
  %v297 = vadd.f32 %v83, %v296
  %v298 = vpop.f32.mrf.mxu0
  %v299 = vadd.f32 %v79, %v298
  %v300 = vpop.f32.mrf.mxu0
  %v301 = vadd.f32 %v83, %v300
  %302 = vmatprep.mubr.bf16.mxu0 0
  %303 = vmatmul.mubr.bf16.gmra.mxu0 %v144
  %v304 = vpop.f32.mrf.mxu0
  %v305 = vadd.f32 %v79, %v304
  %v306 = vpop.f32.mrf.mxu0
  %v307 = vadd.f32 %v83, %v306
  %v308 = vpop.f32.mrf.mxu0
  %v309 = vadd.f32 %v79, %v308
  %v310 = vpop.f32.mrf.mxu0
  %v311 = vadd.f32 %v83, %v310
  %312 = vmatprep.mubr.bf16.mxu0 0
  %313 = vmatmul.mubr.bf16.gmra.mxu0 %v145
  %v314 = vpop.f32.mrf.mxu0
  %v315 = vadd.f32 %v79, %v314
  %v316 = vpop.f32.mrf.mxu0
  %v317 = vadd.f32 %v83, %v316
  %v318 = vpop.f32.mrf.mxu0
  %v319 = vadd.f32 %v79, %v318
  %v320 = vpop.f32.mrf.mxu0
  %v321 = vadd.f32 %v83, %v320
  %322 = vmatprep.mubr.bf16.mxu0 0
  %323 = vmatmul.mubr.bf16.gmra.mxu0 %v146
  %v324 = vpop.f32.mrf.mxu0
  %v325 = vadd.f32 %v79, %v324
  %v326 = vpop.f32.mrf.mxu0
  %v327 = vadd.f32 %v83, %v326
  %v328 = vpop.f32.mrf.mxu0
  %v329 = vadd.f32 %v79, %v328
  %v330 = vpop.f32.mrf.mxu0
  %v331 = vadd.f32 %v83, %v330
  %332 = vmatprep.mubr.bf16.mxu0 0
  %333 = vmatmul.mubr.bf16.gmra.mxu0 %v147
  %v334 = vpop.f32.mrf.mxu0
  %v335 = vadd.f32 %v79, %v334
  %v336 = vpop.f32.mrf.mxu0
  %v337 = vadd.f32 %v83, %v336
  %v338 = vpop.f32.mrf.mxu0
  %v339 = vadd.f32 %v79, %v338
  %v340 = vpop.f32.mrf.mxu0
  %v341 = vadd.f32 %v83, %v340
  %342 = vmatprep.mubr.bf16.mxu0 0
  %343 = vmatmul.mubr.bf16.gmra.mxu0 %v148
  %v344 = vpop.f32.mrf.mxu0
  %v345 = vadd.f32 %v79, %v344
  %v346 = vpop.f32.mrf.mxu0
  %v347 = vadd.f32 %v83, %v346
  %v348 = vpop.f32.mrf.mxu0
  %v349 = vadd.f32 %v79, %v348
  %v350 = vpop.f32.mrf.mxu0
  %v351 = vadd.f32 %v83, %v350
  %352 = vmatprep.mubr.bf16.mxu0 0
  %353 = vmatmul.mubr.bf16.gmra.mxu0 %v149
  %v354 = vpop.f32.mrf.mxu0
  %v355 = vadd.f32 %v79, %v354
  %v356 = vpop.f32.mrf.mxu0
  %v357 = vadd.f32 %v83, %v356
  %v358 = vpop.f32.mrf.mxu0
  %v359 = vadd.f32 %v79, %v358
  %v360 = vpop.f32.mrf.mxu0
  %v361 = vadd.f32 %v83, %v360
  %362 = vmatprep.mubr.bf16.mxu0 0
  %363 = vmatmul.mubr.bf16.gmra.mxu0 %v150
  %v364 = vpop.f32.mrf.mxu0
  %v365 = vadd.f32 %v79, %v364
  %v366 = vpop.f32.mrf.mxu0
  %v367 = vadd.f32 %v83, %v366
  %v368 = vpop.f32.mrf.mxu0
  %v369 = vadd.f32 %v79, %v368
  %v370 = vpop.f32.mrf.mxu0
  %v371 = vadd.f32 %v83, %v370
  %372 = vmatprep.mubr.bf16.mxu0 0
  %373 = vmatmul.mubr.bf16.gmra.mxu0 %v151
  %v374 = vpop.f32.mrf.mxu0
  %v375 = vadd.f32 %v79, %v374
  %v376 = vpop.f32.mrf.mxu0
  %v377 = vadd.f32 %v83, %v376
  %v378 = vpop.f32.mrf.mxu0
  %v379 = vadd.f32 %v79, %v378
  %v380 = vpop.f32.mrf.mxu0
  %v381 = vadd.f32 %v83, %v380
  %382 = vmatprep.mubr.bf16.mxu0 0
  %383 = vmatmul.mubr.bf16.gmra.mxu0 %v152
  %v384 = vpop.f32.mrf.mxu0
  %v385 = vadd.f32 %v79, %v384
  %v386 = vpop.f32.mrf.mxu0
  %v387 = vadd.f32 %v83, %v386
  %v388 = vpop.f32.mrf.mxu0
  %v389 = vadd.f32 %v79, %v388
  %v390 = vpop.f32.mrf.mxu0
  %v391 = vadd.f32 %v83, %v390
  %392 = vmatprep.mubr.bf16.mxu0 0
  %393 = vmatmul.mubr.bf16.gmra.mxu0 %v153
  %v394 = vpop.f32.mrf.mxu0
  %v395 = vadd.f32 %v79, %v394
  %v396 = vpop.f32.mrf.mxu0
  %v397 = vadd.f32 %v83, %v396
  %v398 = vpop.f32.mrf.mxu0
  %v399 = vadd.f32 %v79, %v398
  %v400 = vpop.f32.mrf.mxu0
  %v401 = vadd.f32 %v83, %v400
  %402 = vmatprep.mubr.bf16.mxu0 0
  %403 = vmatmul.mubr.bf16.gmra.mxu0 %v154
  %v404 = vpop.f32.mrf.mxu0
  %v405 = vadd.f32 %v79, %v404
  %v406 = vpop.f32.mrf.mxu0
  %v407 = vadd.f32 %v83, %v406
  %v408 = vpop.f32.mrf.mxu0
  %v409 = vadd.f32 %v79, %v408
  %v410 = vpop.f32.mrf.mxu0
  %v411 = vadd.f32 %v83, %v410
  %412 = vmatprep.mubr.bf16.mxu0 0
  %413 = vmatmul.mubr.bf16.gmra.mxu0 %v155
  %v414 = vpop.f32.mrf.mxu0
  %v415 = vadd.f32 %v79, %v414
  %v416 = vpop.f32.mrf.mxu0
  %v417 = vadd.f32 %v83, %v416
  %v418 = vpop.f32.mrf.mxu0
  %v419 = vadd.f32 %v79, %v418
  %v420 = vpop.f32.mrf.mxu0
  %v421 = vadd.f32 %v83, %v420
  %422 = vdwg.mxu0
  %423 = vst [vmem:[#allocation2] sm:$0xff] %v285
  %424 = vst [vmem:[#allocation2 + $0x8] sm:$0xff] %v287
  %425 = vst [vmem:[#allocation2 + $0x10] sm:$0xff] %v289
  %426 = vst [vmem:[#allocation2 + $0x18] sm:$0xff] %v291
  %427 = vst [vmem:[#allocation2 + $0x20] sm:$0xff] %v295
  %428 = vst [vmem:[#allocation2 + $0x28] sm:$0xff] %v297
  %429 = vst [vmem:[#allocation2 + $0x30] sm:$0xff] %v299
  %430 = vst [vmem:[#allocation2 + $0x38] sm:$0xff] %v301
  %431 = vst [vmem:[#allocation2 + $0x40] sm:$0xff] %v305
  %432 = vst [vmem:[#allocation2 + $0x48] sm:$0xff] %v307
  %433 = vst [vmem:[#allocation2 + $0x50] sm:$0xff] %v309
  %434 = vst [vmem:[#allocation2 + $0x58] sm:$0xff] %v311
  %435 = vst [vmem:[#allocation2 + $0x60] sm:$0xff] %v315
  %436 = vst [vmem:[#allocation2 + $0x68] sm:$0xff] %v317
  %437 = vst [vmem:[#allocation2 + $0x70] sm:$0xff] %v319
  %438 = vst [vmem:[#allocation2 + $0x78] sm:$0xff] %v321
  %439 = vst [vmem:[#allocation2 + $0x80] sm:$0xff] %v325
  %440 = vst [vmem:[#allocation2 + $0x88] sm:$0xff] %v327
  %441 = vst [vmem:[#allocation2 + $0x90] sm:$0xff] %v329
  %442 = vst [vmem:[#allocation2 + $0x98] sm:$0xff] %v331
  %443 = vst [vmem:[#allocation2 + $0xa0] sm:$0xff] %v335
  %444 = vst [vmem:[#allocation2 + $0xa8] sm:$0xff] %v337
  %445 = vst [vmem:[#allocation2 + $0xb0] sm:$0xff] %v339
  %446 = vst [vmem:[#allocation2 + $0xb8] sm:$0xff] %v341
  %447 = vst [vmem:[#allocation2 + $0xc0] sm:$0xff] %v345
  %448 = vst [vmem:[#allocation2 + $0xc8] sm:$0xff] %v347
  %449 = vst [vmem:[#allocation2 + $0xd0] sm:$0xff] %v349
  %450 = vst [vmem:[#allocation2 + $0xd8] sm:$0xff] %v351
  %451 = vst [vmem:[#allocation2 + $0xe0] sm:$0xff] %v355
  %452 = vst [vmem:[#allocation2 + $0xe8] sm:$0xff] %v357
  %453 = vst [vmem:[#allocation2 + $0xf0] sm:$0xff] %v359
  %454 = vst [vmem:[#allocation2 + $0xf8] sm:$0xff] %v361
  %455 = vst [vmem:[#allocation2 + $0x100] sm:$0xff] %v365
  %456 = vst [vmem:[#allocation2 + $0x108] sm:$0xff] %v367
  %457 = vst [vmem:[#allocation2 + $0x110] sm:$0xff] %v369
  %458 = vst [vmem:[#allocation2 + $0x118] sm:$0xff] %v371
  %459 = vst [vmem:[#allocation2 + $0x120] sm:$0xff] %v375
  %460 = vst [vmem:[#allocation2 + $0x128] sm:$0xff] %v377
  %461 = vst [vmem:[#allocation2 + $0x130] sm:$0xff] %v379
  %462 = vst [vmem:[#allocation2 + $0x138] sm:$0xff] %v381
  %463 = vst [vmem:[#allocation2 + $0x140] sm:$0xff] %v385
  %464 = vst [vmem:[#allocation2 + $0x148] sm:$0xff] %v387
  %465 = vst [vmem:[#allocation2 + $0x150] sm:$0xff] %v389
  %466 = vst [vmem:[#allocation2 + $0x158] sm:$0xff] %v391
  %467 = vst [vmem:[#allocation2 + $0x160] sm:$0xff] %v395
  %468 = vst [vmem:[#allocation2 + $0x168] sm:$0xff] %v397
  %469 = vst [vmem:[#allocation2 + $0x170] sm:$0xff] %v399
  %470 = vst [vmem:[#allocation2 + $0x178] sm:$0xff] %v401
  %471 = vst [vmem:[#allocation2 + $0x180] sm:$0xff] %v405
  %472 = vst [vmem:[#allocation2 + $0x188] sm:$0xff] %v407
  %473 = vst [vmem:[#allocation2 + $0x190] sm:$0xff] %v409
  %474 = vst [vmem:[#allocation2 + $0x198] sm:$0xff] %v411
  %475 = vst [vmem:[#allocation2 + $0x1a0] sm:$0xff] %v415
  %476 = vst [vmem:[#allocation2 + $0x1a8] sm:$0xff] %v417
  %477 = vst [vmem:[#allocation2 + $0x1b0] sm:$0xff] %v419
  %478 = vst [vmem:[#allocation2 + $0x1b8] sm:$0xff] %v421
  %v479 = vld [vmem:[%s5] sm:$0x3]
  %v480 = vld [vmem:[#allocation2] sm:$0xff]
  %v481 = vld [vmem:[#allocation2 + $0x8] sm:$0xff]
  %v482 = vld [vmem:[%s2] sm:$0xff]
  %v483 = vld [vmem:[%s2 + $0x8] sm:$0xff]
  %v484 = vld [vmem:[%s2 + $0x10] sm:$0xff]
  %v485 = vld [vmem:[%s2 + $0x18] sm:$0xff]
  %v486 = vld [vmem:[%s2 + $0x20] sm:$0xff]
  %v487 = vld [vmem:[%s2 + $0x28] sm:$0xff]
  %v488 = vld [vmem:[%s2 + $0x30] sm:$0xff]
  %v489 = vld [vmem:[%s2 + $0x38] sm:$0xff]
  %v490 = vld [vmem:[%s2 + $0x40] sm:$0xff]
  %v491 = vld [vmem:[%s2 + $0x48] sm:$0xff]
  %v492 = vld [vmem:[%s2 + $0x50] sm:$0xff]
  %v493 = vld [vmem:[%s2 + $0x58] sm:$0xff]
  %v494 = vld [vmem:[%s2 + $0x60] sm:$0xff]
  %v495 = vld [vmem:[%s2 + $0x68] sm:$0xff]
  %v496 = vld [vmem:[%s2 + $0x70] sm:$0xff]
  %v497 = vld [vmem:[%s2 + $0x78] sm:$0xff]
  %v498 = vld [vmem:[%s2 + $0x80] sm:$0xff]
  %v499 = vld [vmem:[%s2 + $0x88] sm:$0xff]
  %v500 = vld [vmem:[%s2 + $0x90] sm:$0xff]
  %v501 = vld [vmem:[%s2 + $0x98] sm:$0xff]
  %v502 = vld [vmem:[%s2 + $0xa0] sm:$0xff]
  %v503 = vld [vmem:[%s2 + $0xa8] sm:$0xff]
  %v504 = vld [vmem:[%s2 + $0xb0] sm:$0xff]
  %v505 = vld [vmem:[%s2 + $0xb8] sm:$0xff]
  %v506 = vld [vmem:[%s2 + $0xc0] sm:$0xff]
  %v507 = vld [vmem:[%s2 + $0xc8] sm:$0xff]
  %v508 = vld [vmem:[%s2 + $0xd0] sm:$0xff]
  %v509 = vld [vmem:[%s2 + $0xd8] sm:$0xff]
  %v510 = vld [vmem:[%s2 + $0xe0] sm:$0xff]
  %v511 = vld [vmem:[%s2 + $0xe8] sm:$0xff]
  %v512 = vld [vmem:[%s2 + $0xf0] sm:$0xff]
  %v513 = vld [vmem:[%s2 + $0xf8] sm:$0xff]
  %v546 = vunpack.c.l.b16 %v482
  %v547 = vunpack.c.h.b16 %v482
  %v548 = vunpack.c.l.b16 %v483
  %v549 = vunpack.c.h.b16 %v483
  %v550 = vunpack.c.l.b16 %v484
  %v551 = vunpack.c.h.b16 %v484
  %v552 = vunpack.c.l.b16 %v485
  %v553 = vunpack.c.h.b16 %v485
  %v554 = vunpack.c.l.b16 %v486
  %v555 = vunpack.c.h.b16 %v486
  %v556 = vunpack.c.l.b16 %v487
  %v557 = vunpack.c.h.b16 %v487
  %v558 = vunpack.c.l.b16 %v488
  %v559 = vunpack.c.h.b16 %v488
  %v560 = vunpack.c.l.b16 %v489
  %v561 = vunpack.c.h.b16 %v489
  %v562 = vunpack.c.l.b16 %v490
  %v563 = vunpack.c.h.b16 %v490
  %v564 = vunpack.c.l.b16 %v491
  %v565 = vunpack.c.h.b16 %v491
  %v566 = vunpack.c.l.b16 %v492
  %v567 = vunpack.c.h.b16 %v492
  %v568 = vunpack.c.l.b16 %v493
  %v569 = vunpack.c.h.b16 %v493
  %v570 = vunpack.c.l.b16 %v494
  %v571 = vunpack.c.h.b16 %v494
  %v572 = vunpack.c.l.b16 %v495
  %v573 = vunpack.c.h.b16 %v495
  %v574 = vunpack.c.l.b16 %v496
  %v575 = vunpack.c.h.b16 %v496
  %v576 = vunpack.c.l.b16 %v497
  %v577 = vunpack.c.h.b16 %v497
  %v578 = vunpack.c.l.b16 %v498
  %v579 = vunpack.c.h.b16 %v498
  %v580 = vunpack.c.l.b16 %v499
  %v581 = vunpack.c.h.b16 %v499
  %v582 = vunpack.c.l.b16 %v500
  %v583 = vunpack.c.h.b16 %v500
  %v584 = vunpack.c.l.b16 %v501
  %v585 = vunpack.c.h.b16 %v501
  %v586 = vunpack.c.l.b16 %v502
  %v587 = vunpack.c.h.b16 %v502
  %v588 = vunpack.c.l.b16 %v503
  %v589 = vunpack.c.h.b16 %v503
  %v590 = vunpack.c.l.b16 %v504
  %v591 = vunpack.c.h.b16 %v504
  %v592 = vunpack.c.l.b16 %v505
  %v593 = vunpack.c.h.b16 %v505
  %v594 = vunpack.c.l.b16 %v506
  %v595 = vunpack.c.h.b16 %v506
  %v596 = vunpack.c.l.b16 %v507
  %v597 = vunpack.c.h.b16 %v507
  %v598 = vunpack.c.l.b16 %v508
  %v599 = vunpack.c.h.b16 %v508
  %v600 = vunpack.c.l.b16 %v509
  %v601 = vunpack.c.h.b16 %v509
  %v602 = vunpack.c.l.b16 %v510
  %v603 = vunpack.c.h.b16 %v510
  %v604 = vunpack.c.l.b16 %v511
  %v605 = vunpack.c.h.b16 %v511
  %v606 = vunpack.c.l.b16 %v512
  %v607 = vunpack.c.h.b16 %v512
  %v608 = vunpack.c.l.b16 %v513
  %v609 = vunpack.c.h.b16 %v513
  %v610 = vpack.c.b16 %v548, %v546
  %v611 = vpack.c.b16 %v549, %v547
  %v612 = vpack.c.b16 %v552, %v550
  %v613 = vpack.c.b16 %v553, %v551
  %v614 = vpack.c.b16 %v556, %v554
  %v615 = vpack.c.b16 %v557, %v555
  %v616 = vpack.c.b16 %v560, %v558
  %v617 = vpack.c.b16 %v561, %v559
  %v618 = vpack.c.b16 %v564, %v562
  %v619 = vpack.c.b16 %v565, %v563
  %v620 = vpack.c.b16 %v568, %v566
  %v621 = vpack.c.b16 %v569, %v567
  %v622 = vpack.c.b16 %v572, %v570
  %v623 = vpack.c.b16 %v573, %v571
  %v624 = vpack.c.b16 %v576, %v574
  %v625 = vpack.c.b16 %v577, %v575
  %v626 = vpack.c.b16 %v580, %v578
  %v627 = vpack.c.b16 %v581, %v579
  %v628 = vpack.c.b16 %v584, %v582
  %v629 = vpack.c.b16 %v585, %v583
  %v630 = vpack.c.b16 %v588, %v586
  %v631 = vpack.c.b16 %v589, %v587
  %v632 = vpack.c.b16 %v592, %v590
  %v633 = vpack.c.b16 %v593, %v591
  %v634 = vpack.c.b16 %v596, %v594
  %v635 = vpack.c.b16 %v597, %v595
  %v636 = vpack.c.b16 %v600, %v598
  %v637 = vpack.c.b16 %v601, %v599
  %v638 = vpack.c.b16 %v604, %v602
  %v639 = vpack.c.b16 %v605, %v603
  %v640 = vpack.c.b16 %v608, %v606
  %v641 = vpack.c.b16 %v609, %v607
  %674 = vmatprep.subr.bf16.mxu0 %v625
  %675 = vmatpush1.bf16.msra.mxu0 %v624
  %676 = vmatprep.subr.bf16.mxu0 %v623
  %677 = vmatpush1.bf16.msra.mxu0 %v622
  %678 = vmatprep.subr.bf16.mxu0 %v621
  %679 = vmatpush1.bf16.msra.mxu0 %v620
  %680 = vmatprep.subr.bf16.mxu0 %v619
  %681 = vmatpush1.bf16.msra.mxu0 %v618
  %682 = vmatprep.subr.bf16.mxu0 %v617
  %683 = vmatpush1.bf16.msra.mxu0 %v616
  %684 = vmatprep.subr.bf16.mxu0 %v615
  %685 = vmatpush1.bf16.msra.mxu0 %v614
  %686 = vmatprep.subr.bf16.mxu0 %v613
  %687 = vmatpush1.bf16.msra.mxu0 %v612
  %688 = vmatprep.subr.bf16.mxu0 %v611
  %689 = vmatpush1.bf16.msra.mxu0 %v610
  %690 = vmatprep.subr.bf16.mxu0 %v641
  %691 = vmatpush2.bf16.msra.mxu0 %v640
  %692 = vmatprep.subr.bf16.mxu0 %v639
  %693 = vmatpush2.bf16.msra.mxu0 %v638
  %694 = vmatprep.subr.bf16.mxu0 %v637
  %695 = vmatpush2.bf16.msra.mxu0 %v636
  %696 = vmatprep.subr.bf16.mxu0 %v635
  %697 = vmatpush2.bf16.msra.mxu0 %v634
  %698 = vmatprep.subr.bf16.mxu0 %v633
  %699 = vmatpush2.bf16.msra.mxu0 %v632
  %700 = vmatprep.subr.bf16.mxu0 %v631
  %701 = vmatpush2.bf16.msra.mxu0 %v630
  %702 = vmatprep.subr.bf16.mxu0 %v629
  %703 = vmatpush2.bf16.msra.mxu0 %v628
  %704 = vmatprep.subr.bf16.mxu0 %v627
  %705 = vmatpush2.bf16.msra.mxu0 %v626
  %706 = vmatprep.mubr.bf16.mxu0 0
  %707 = vmatmul.mubr.bf16.gmra.mxu0 0
  %v708 = vpop.f32.mrf.mxu0
  %v709 = vadd.f32 0.0, %v708
  %v710 = vpop.f32.mrf.mxu0
  %v711 = vadd.f32 0.0, %v710
  %v712 = vpop.f32.mrf.mxu0
  %v713 = vpop.f32.mrf.mxu0
  %714 = vdwg.mxu0
  %v715 = vadd.f32 %v480, %v709
  %v716 = vadd.f32 %v481, %v711
  %v717 = vtanh.pop %v715
  %v718 = vtanh.pop %v716
  %v719 = vpack.c.bf16 %v717, %v717
  %v720 = vpack.c.bf16 %v718, %v718
  %v721 = vld [vmem:[%s4] sm:$0xff]
  %v722 = vld [vmem:[%s4 + $0x8] sm:$0xff]
  %v723 = vld [vmem:[%s4 + $0x10] sm:$0xff]
  %v724 = vld [vmem:[%s4 + $0x18] sm:$0xff]
  %v725 = vld [vmem:[%s4 + $0x20] sm:$0xff]
  %v726 = vld [vmem:[%s4 + $0x28] sm:$0xff]
  %v727 = vld [vmem:[%s4 + $0x30] sm:$0xff]
  %v728 = vld [vmem:[%s4 + $0x38] sm:$0xff]
  %v729 = vld [vmem:[%s4 + $0x40] sm:$0xff]
  %v730 = vld [vmem:[%s4 + $0x48] sm:$0xff]
  %v731 = vld [vmem:[%s4 + $0x50] sm:$0xff]
  %v732 = vld [vmem:[%s4 + $0x58] sm:$0xff]
  %v733 = vld [vmem:[%s4 + $0x60] sm:$0xff]
  %v734 = vld [vmem:[%s4 + $0x68] sm:$0xff]
  %v735 = vld [vmem:[%s4 + $0x70] sm:$0xff]
  %v736 = vld [vmem:[%s4 + $0x78] sm:$0xff]
  %v737 = vld [vmem:[%s4 + $0x80] sm:$0xff]
  %v738 = vld [vmem:[%s4 + $0x88] sm:$0xff]
  %v739 = vld [vmem:[%s4 + $0x90] sm:$0xff]
  %v740 = vld [vmem:[%s4 + $0x98] sm:$0xff]
  %v741 = vld [vmem:[%s4 + $0xa0] sm:$0xff]
  %v742 = vld [vmem:[%s4 + $0xa8] sm:$0xff]
  %v743 = vld [vmem:[%s4 + $0xb0] sm:$0xff]
  %v744 = vld [vmem:[%s4 + $0xb8] sm:$0xff]
  %v745 = vld [vmem:[%s4 + $0xc0] sm:$0xff]
  %v746 = vld [vmem:[%s4 + $0xc8] sm:$0xff]
  %v747 = vld [vmem:[%s4 + $0xd0] sm:$0xff]
  %v748 = vld [vmem:[%s4 + $0xd8] sm:$0xff]
  %v749 = vld [vmem:[%s4 + $0xe0] sm:$0xff]
  %v750 = vld [vmem:[%s4 + $0xe8] sm:$0xff]
  %v751 = vld [vmem:[%s4 + $0xf0] sm:$0xff]
  %v752 = vld [vmem:[%s4 + $0xf8] sm:$0xff]
  %v753 = vld [vmem:[%s4 + $0x100] sm:$0xff]
  %v754 = vld [vmem:[%s4 + $0x108] sm:$0xff]
  %v755 = vld [vmem:[%s4 + $0x110] sm:$0xff]
  %v756 = vld [vmem:[%s4 + $0x118] sm:$0xff]
  %v757 = vld [vmem:[%s4 + $0x120] sm:$0xff]
  %v758 = vld [vmem:[%s4 + $0x128] sm:$0xff]
  %v759 = vld [vmem:[%s4 + $0x130] sm:$0xff]
  %v760 = vld [vmem:[%s4 + $0x138] sm:$0xff]
  %v761 = vld [vmem:[%s4 + $0x140] sm:$0xff]
  %v762 = vld [vmem:[%s4 + $0x148] sm:$0xff]
  %v763 = vld [vmem:[%s4 + $0x150] sm:$0xff]
  %v764 = vld [vmem:[%s4 + $0x158] sm:$0xff]
  %v765 = vld [vmem:[%s4 + $0x160] sm:$0xff]
  %v766 = vld [vmem:[%s4 + $0x168] sm:$0xff]
  %v767 = vld [vmem:[%s4 + $0x170] sm:$0xff]
  %v768 = vld [vmem:[%s4 + $0x178] sm:$0xff]
  %v769 = vld [vmem:[%s4 + $0x180] sm:$0xff]
  %v770 = vld [vmem:[%s4 + $0x188] sm:$0xff]
  %v771 = vld [vmem:[%s4 + $0x190] sm:$0xff]
  %v772 = vld [vmem:[%s4 + $0x198] sm:$0xff]
  %v773 = vld [vmem:[%s4 + $0x1a0] sm:$0xff]
  %v774 = vld [vmem:[%s4 + $0x1a8] sm:$0xff]
  %v775 = vld [vmem:[%s4 + $0x1b0] sm:$0xff]
  %v776 = vld [vmem:[%s4 + $0x1b8] sm:$0xff]
  %v777 = vld [vmem:[%s4 + $0x1c0] sm:$0xff]
  %v778 = vld [vmem:[%s4 + $0x1c8] sm:$0xff]
  %v779 = vld [vmem:[%s4 + $0x1d0] sm:$0xff]
  %v780 = vld [vmem:[%s4 + $0x1d8] sm:$0xff]
  %v781 = vld [vmem:[%s4 + $0x1e0] sm:$0xff]
  %v782 = vld [vmem:[%s4 + $0x1e8] sm:$0xff]
  %v783 = vld [vmem:[%s4 + $0x1f0] sm:$0xff]
  %v784 = vld [vmem:[%s4 + $0x1f8] sm:$0xff]
  %v786 = vlaneseq
  %v787 = vshrl.u32 %v786, 7
  %v788 = vsub.s32 0, %v787
  %v789 = vrot.slane %v479, %v788
  %v790 = vlaneseq
  %v791 = vshrl.u32 %v790, 7
  %v792 = vsub.s32 1, %v791
  %v793 = vrot.slane %v479, %v792
  %v860 = vunpack.c.l.b16 %v721
  %v861 = vunpack.c.h.b16 %v721
  %v862 = vunpack.c.l.b16 %v722
  %v863 = vunpack.c.h.b16 %v722
  %v864 = vunpack.c.l.b16 %v723
  %v865 = vunpack.c.h.b16 %v723
  %v866 = vunpack.c.l.b16 %v724
  %v867 = vunpack.c.h.b16 %v724
  %v868 = vunpack.c.l.b16 %v725
  %v869 = vunpack.c.h.b16 %v725
  %v870 = vunpack.c.l.b16 %v726
  %v871 = vunpack.c.h.b16 %v726
  %v872 = vunpack.c.l.b16 %v727
  %v873 = vunpack.c.h.b16 %v727
  %v874 = vunpack.c.l.b16 %v728
  %v875 = vunpack.c.h.b16 %v728
  %v876 = vunpack.c.l.b16 %v729
  %v877 = vunpack.c.h.b16 %v729
  %v878 = vunpack.c.l.b16 %v730
  %v879 = vunpack.c.h.b16 %v730
  %v880 = vunpack.c.l.b16 %v731
  %v881 = vunpack.c.h.b16 %v731
  %v882 = vunpack.c.l.b16 %v732
  %v883 = vunpack.c.h.b16 %v732
  %v884 = vunpack.c.l.b16 %v733
  %v885 = vunpack.c.h.b16 %v733
  %v886 = vunpack.c.l.b16 %v734
  %v887 = vunpack.c.h.b16 %v734
  %v888 = vunpack.c.l.b16 %v735
  %v889 = vunpack.c.h.b16 %v735
  %v890 = vunpack.c.l.b16 %v736
  %v891 = vunpack.c.h.b16 %v736
  %v892 = vunpack.c.l.b16 %v737
  %v893 = vunpack.c.h.b16 %v737
  %v894 = vunpack.c.l.b16 %v738
  %v895 = vunpack.c.h.b16 %v738
  %v896 = vunpack.c.l.b16 %v739
  %v897 = vunpack.c.h.b16 %v739
  %v898 = vunpack.c.l.b16 %v740
  %v899 = vunpack.c.h.b16 %v740
  %v900 = vunpack.c.l.b16 %v741
  %v901 = vunpack.c.h.b16 %v741
  %v902 = vunpack.c.l.b16 %v742
  %v903 = vunpack.c.h.b16 %v742
  %v904 = vunpack.c.l.b16 %v743
  %v905 = vunpack.c.h.b16 %v743
  %v906 = vunpack.c.l.b16 %v744
  %v907 = vunpack.c.h.b16 %v744
  %v908 = vunpack.c.l.b16 %v745
  %v909 = vunpack.c.h.b16 %v745
  %v910 = vunpack.c.l.b16 %v746
  %v911 = vunpack.c.h.b16 %v746
  %v912 = vunpack.c.l.b16 %v747
  %v913 = vunpack.c.h.b16 %v747
  %v914 = vunpack.c.l.b16 %v748
  %v915 = vunpack.c.h.b16 %v748
  %v916 = vunpack.c.l.b16 %v749
  %v917 = vunpack.c.h.b16 %v749
  %v918 = vunpack.c.l.b16 %v750
  %v919 = vunpack.c.h.b16 %v750
  %v920 = vunpack.c.l.b16 %v751
  %v921 = vunpack.c.h.b16 %v751
  %v922 = vunpack.c.l.b16 %v752
  %v923 = vunpack.c.h.b16 %v752
  %v924 = vunpack.c.l.b16 %v753
  %v925 = vunpack.c.h.b16 %v753
  %v926 = vunpack.c.l.b16 %v754
  %v927 = vunpack.c.h.b16 %v754
  %v928 = vunpack.c.l.b16 %v755
  %v929 = vunpack.c.h.b16 %v755
  %v930 = vunpack.c.l.b16 %v756
  %v931 = vunpack.c.h.b16 %v756
  %v932 = vunpack.c.l.b16 %v757
  %v933 = vunpack.c.h.b16 %v757
  %v934 = vunpack.c.l.b16 %v758
  %v935 = vunpack.c.h.b16 %v758
  %v936 = vunpack.c.l.b16 %v759
  %v937 = vunpack.c.h.b16 %v759
  %v938 = vunpack.c.l.b16 %v760
  %v939 = vunpack.c.h.b16 %v760
  %v940 = vunpack.c.l.b16 %v761
  %v941 = vunpack.c.h.b16 %v761
  %v942 = vunpack.c.l.b16 %v762
  %v943 = vunpack.c.h.b16 %v762
  %v944 = vunpack.c.l.b16 %v763
  %v945 = vunpack.c.h.b16 %v763
  %v946 = vunpack.c.l.b16 %v764
  %v947 = vunpack.c.h.b16 %v764
  %v948 = vunpack.c.l.b16 %v765
  %v949 = vunpack.c.h.b16 %v765
  %v950 = vunpack.c.l.b16 %v766
  %v951 = vunpack.c.h.b16 %v766
  %v952 = vunpack.c.l.b16 %v767
  %v953 = vunpack.c.h.b16 %v767
  %v954 = vunpack.c.l.b16 %v768
  %v955 = vunpack.c.h.b16 %v768
  %v956 = vunpack.c.l.b16 %v769
  %v957 = vunpack.c.h.b16 %v769
  %v958 = vunpack.c.l.b16 %v770
  %v959 = vunpack.c.h.b16 %v770
  %v960 = vunpack.c.l.b16 %v771
  %v961 = vunpack.c.h.b16 %v771
  %v962 = vunpack.c.l.b16 %v772
  %v963 = vunpack.c.h.b16 %v772
  %v964 = vunpack.c.l.b16 %v773
  %v965 = vunpack.c.h.b16 %v773
  %v966 = vunpack.c.l.b16 %v774
  %v967 = vunpack.c.h.b16 %v774
  %v968 = vunpack.c.l.b16 %v775
  %v969 = vunpack.c.h.b16 %v775
  %v970 = vunpack.c.l.b16 %v776
  %v971 = vunpack.c.h.b16 %v776
  %v972 = vunpack.c.l.b16 %v777
  %v973 = vunpack.c.h.b16 %v777
  %v974 = vunpack.c.l.b16 %v778
  %v975 = vunpack.c.h.b16 %v778
  %v976 = vunpack.c.l.b16 %v779
  %v977 = vunpack.c.h.b16 %v779
  %v978 = vunpack.c.l.b16 %v780
  %v979 = vunpack.c.h.b16 %v780
  %v980 = vunpack.c.l.b16 %v781
  %v981 = vunpack.c.h.b16 %v781
  %v982 = vunpack.c.l.b16 %v782
  %v983 = vunpack.c.h.b16 %v782
  %v984 = vunpack.c.l.b16 %v783
  %v985 = vunpack.c.h.b16 %v783
  %v986 = vunpack.c.l.b16 %v784
  %v987 = vunpack.c.h.b16 %v784
  %v988 = vpack.c.b16 %v862, %v860
  %v989 = vpack.c.b16 %v863, %v861
  %v990 = vpack.c.b16 %v866, %v864
  %v991 = vpack.c.b16 %v867, %v865
  %v992 = vpack.c.b16 %v870, %v868
  %v993 = vpack.c.b16 %v871, %v869
  %v994 = vpack.c.b16 %v874, %v872
  %v995 = vpack.c.b16 %v875, %v873
  %v996 = vpack.c.b16 %v878, %v876
  %v997 = vpack.c.b16 %v879, %v877
  %v998 = vpack.c.b16 %v882, %v880
  %v999 = vpack.c.b16 %v883, %v881
  %v1000 = vpack.c.b16 %v886, %v884
  %v1001 = vpack.c.b16 %v887, %v885
  %v1002 = vpack.c.b16 %v890, %v888
  %v1003 = vpack.c.b16 %v891, %v889
  %v1004 = vpack.c.b16 %v894, %v892
  %v1005 = vpack.c.b16 %v895, %v893
  %v1006 = vpack.c.b16 %v898, %v896
  %v1007 = vpack.c.b16 %v899, %v897
  %v1008 = vpack.c.b16 %v902, %v900
  %v1009 = vpack.c.b16 %v903, %v901
  %v1010 = vpack.c.b16 %v906, %v904
  %v1011 = vpack.c.b16 %v907, %v905
  %v1012 = vpack.c.b16 %v910, %v908
  %v1013 = vpack.c.b16 %v911, %v909
  %v1014 = vpack.c.b16 %v914, %v912
  %v1015 = vpack.c.b16 %v915, %v913
  %v1016 = vpack.c.b16 %v918, %v916
  %v1017 = vpack.c.b16 %v919, %v917
  %v1018 = vpack.c.b16 %v922, %v920
  %v1019 = vpack.c.b16 %v923, %v921
  %v1020 = vpack.c.b16 %v926, %v924
  %v1021 = vpack.c.b16 %v927, %v925
  %v1022 = vpack.c.b16 %v930, %v928
  %v1023 = vpack.c.b16 %v931, %v929
  %v1024 = vpack.c.b16 %v934, %v932
  %v1025 = vpack.c.b16 %v935, %v933
  %v1026 = vpack.c.b16 %v938, %v936
  %v1027 = vpack.c.b16 %v939, %v937
  %v1028 = vpack.c.b16 %v942, %v940
  %v1029 = vpack.c.b16 %v943, %v941
  %v1030 = vpack.c.b16 %v946, %v944
  %v1031 = vpack.c.b16 %v947, %v945
  %v1032 = vpack.c.b16 %v950, %v948
  %v1033 = vpack.c.b16 %v951, %v949
  %v1034 = vpack.c.b16 %v954, %v952
  %v1035 = vpack.c.b16 %v955, %v953
  %v1036 = vpack.c.b16 %v958, %v956
  %v1037 = vpack.c.b16 %v959, %v957
  %v1038 = vpack.c.b16 %v962, %v960
  %v1039 = vpack.c.b16 %v963, %v961
  %v1040 = vpack.c.b16 %v966, %v964
  %v1041 = vpack.c.b16 %v967, %v965
  %v1042 = vpack.c.b16 %v970, %v968
  %v1043 = vpack.c.b16 %v971, %v969
  %v1044 = vpack.c.b16 %v974, %v972
  %v1045 = vpack.c.b16 %v975, %v973
  %v1046 = vpack.c.b16 %v978, %v976
  %v1047 = vpack.c.b16 %v979, %v977
  %v1048 = vpack.c.b16 %v982, %v980
  %v1049 = vpack.c.b16 %v983, %v981
  %v1050 = vpack.c.b16 %v986, %v984
  %v1051 = vpack.c.b16 %v987, %v985
  %1116 = vmatprep.subr.bf16.mxu0 %v1003
  %1117 = vmatpush1.bf16.msra.mxu0 %v1002
  %1118 = vmatprep.subr.bf16.mxu0 %v1001
  %1119 = vmatpush1.bf16.msra.mxu0 %v1000
  %1120 = vmatprep.subr.bf16.mxu0 %v999
  %1121 = vmatpush1.bf16.msra.mxu0 %v998
  %1122 = vmatprep.subr.bf16.mxu0 %v997
  %1123 = vmatpush1.bf16.msra.mxu0 %v996
  %1124 = vmatprep.subr.bf16.mxu0 %v995
  %1125 = vmatpush1.bf16.msra.mxu0 %v994
  %1126 = vmatprep.subr.bf16.mxu0 %v993
  %1127 = vmatpush1.bf16.msra.mxu0 %v992
  %1128 = vmatprep.subr.bf16.mxu0 %v991
  %1129 = vmatpush1.bf16.msra.mxu0 %v990
  %1130 = vmatprep.subr.bf16.mxu0 %v989
  %1131 = vmatpush1.bf16.msra.mxu0 %v988
  %1132 = vmatprep.subr.bf16.mxu0 %v1019
  %1133 = vmatpush2.bf16.msra.mxu0 %v1018
  %1134 = vmatprep.subr.bf16.mxu0 %v1017
  %1135 = vmatpush2.bf16.msra.mxu0 %v1016
  %1136 = vmatprep.subr.bf16.mxu0 %v1015
  %1137 = vmatpush2.bf16.msra.mxu0 %v1014
  %1138 = vmatprep.subr.bf16.mxu0 %v1013
  %1139 = vmatpush2.bf16.msra.mxu0 %v1012
  %1140 = vmatprep.subr.bf16.mxu0 %v1011
  %1141 = vmatpush2.bf16.msra.mxu0 %v1010
  %1142 = vmatprep.subr.bf16.mxu0 %v1009
  %1143 = vmatpush2.bf16.msra.mxu0 %v1008
  %1144 = vmatprep.subr.bf16.mxu0 %v1007
  %1145 = vmatpush2.bf16.msra.mxu0 %v1006
  %1146 = vmatprep.subr.bf16.mxu0 %v1005
  %1147 = vmatpush2.bf16.msra.mxu0 %v1004
  %1148 = vmatprep.mubr.bf16.mxu0 %v720
  %1149 = vmatmul.mubr.bf16.gmra.mxu0 %v719
  %v1150 = vpop.f32.mrf.mxu0
  %v1151 = vadd.f32 %v789, %v1150
  %v1152 = vpop.f32.mrf.mxu0
  %v1153 = vadd.f32 %v793, %v1152
  %v1154 = vpop.f32.mrf.mxu0
  %v1155 = vpop.f32.mrf.mxu0
  %1156 = vdwg.mxu0
  %1157 = vmatprep.subr.bf16.mxu0 %v1035
  %1158 = vmatpush1.bf16.msra.mxu0 %v1034
  %1159 = vmatprep.subr.bf16.mxu0 %v1033
  %1160 = vmatpush1.bf16.msra.mxu0 %v1032
  %1161 = vmatprep.subr.bf16.mxu0 %v1031
  %1162 = vmatpush1.bf16.msra.mxu0 %v1030
  %1163 = vmatprep.subr.bf16.mxu0 %v1029
  %1164 = vmatpush1.bf16.msra.mxu0 %v1028
  %1165 = vmatprep.subr.bf16.mxu0 %v1027
  %1166 = vmatpush1.bf16.msra.mxu0 %v1026
  %1167 = vmatprep.subr.bf16.mxu0 %v1025
  %1168 = vmatpush1.bf16.msra.mxu0 %v1024
  %1169 = vmatprep.subr.bf16.mxu0 %v1023
  %1170 = vmatpush1.bf16.msra.mxu0 %v1022
  %1171 = vmatprep.subr.bf16.mxu0 %v1021
  %1172 = vmatpush1.bf16.msra.mxu0 %v1020
  %1173 = vmatprep.subr.bf16.mxu0 %v1051
  %1174 = vmatpush2.bf16.msra.mxu0 %v1050
  %1175 = vmatprep.subr.bf16.mxu0 %v1049
  %1176 = vmatpush2.bf16.msra.mxu0 %v1048
  %1177 = vmatprep.subr.bf16.mxu0 %v1047
  %1178 = vmatpush2.bf16.msra.mxu0 %v1046
  %1179 = vmatprep.subr.bf16.mxu0 %v1045
  %1180 = vmatpush2.bf16.msra.mxu0 %v1044
  %1181 = vmatprep.subr.bf16.mxu0 %v1043
  %1182 = vmatpush2.bf16.msra.mxu0 %v1042
  %1183 = vmatprep.subr.bf16.mxu0 %v1041
  %1184 = vmatpush2.bf16.msra.mxu0 %v1040
  %1185 = vmatprep.subr.bf16.mxu0 %v1039
  %1186 = vmatpush2.bf16.msra.mxu0 %v1038
  %1187 = vmatprep.subr.bf16.mxu0 %v1037
  %1188 = vmatpush2.bf16.msra.mxu0 %v1036
  %1189 = vmatprep.mubr.bf16.mxu0 0
  %1190 = vmatmul.mubr.bf16.gmra.mxu0 0
  %v1191 = vpop.f32.mrf.mxu0
  %v1192 = vadd.f32 %v1151, %v1191
  %v1193 = vpop.f32.mrf.mxu0
  %v1194 = vadd.f32 %v1153, %v1193
  %v1195 = vpop.f32.mrf.mxu0
  %v1196 = vpop.f32.mrf.mxu0
  %1197 = vdwg.mxu0
  %v1198 = vtanh.pop %v1192
  %v1199 = vtanh.pop %v1194
  %v1200 = vpack.c.bf16 %v1198, %v1198
  %v1201 = vpack.c.bf16 %v1199, %v1199
  %v1202 = vld [vmem:[%s6] sm:$0xf]
  %v1203 = vld [vmem:[%s6 + $0x4] sm:$0xf]
  %v1204 = vld [vmem:[%s6 + $0x8] sm:$0xf]
  %v1205 = vld [vmem:[%s6 + $0xc] sm:$0xf]
  %v1206 = vld [vmem:[%s6 + $0x10] sm:$0xf]
  %v1207 = vld [vmem:[%s6 + $0x14] sm:$0xf]
  %v1208 = vld [vmem:[%s6 + $0x18] sm:$0xf]
  %v1209 = vld [vmem:[%s6 + $0x1c] sm:$0xf]
  %v1210 = vld [vmem:[%s6 + $0x20] sm:$0xf]
  %v1211 = vld [vmem:[%s6 + $0x24] sm:$0xf]
  %v1212 = vld [vmem:[%s6 + $0x28] sm:$0xf]
  %v1213 = vld [vmem:[%s6 + $0x2c] sm:$0xf]
  %v1214 = vld [vmem:[%s6 + $0x30] sm:$0xf]
  %v1215 = vld [vmem:[%s6 + $0x34] sm:$0xf]
  %v1216 = vld [vmem:[%s6 + $0x38] sm:$0xf]
  %v1217 = vld [vmem:[%s6 + $0x3c] sm:$0xf]
  %v1218 = vld [vmem:[%s6 + $0x40] sm:$0xf]
  %v1219 = vld [vmem:[%s6 + $0x44] sm:$0xf]
  %v1220 = vld [vmem:[%s6 + $0x48] sm:$0xf]
  %v1221 = vld [vmem:[%s6 + $0x4c] sm:$0xf]
  %v1222 = vld [vmem:[%s6 + $0x50] sm:$0xf]
  %v1223 = vld [vmem:[%s6 + $0x54] sm:$0xf]
  %v1224 = vld [vmem:[%s6 + $0x58] sm:$0xf]
  %v1225 = vld [vmem:[%s6 + $0x5c] sm:$0xf]
  %v1226 = vld [vmem:[%s6 + $0x60] sm:$0xf]
  %v1227 = vld [vmem:[%s6 + $0x64] sm:$0xf]
  %v1228 = vld [vmem:[%s6 + $0x68] sm:$0xf]
  %v1229 = vld [vmem:[%s6 + $0x6c] sm:$0xf]
  %v1230 = vld [vmem:[%s6 + $0x70] sm:$0xf]
  %v1231 = vld [vmem:[%s6 + $0x74] sm:$0xf]
  %v1232 = vld [vmem:[%s6 + $0x78] sm:$0xf]
  %v1233 = vld [vmem:[%s6 + $0x7c] sm:$0xf]
  %s1234 = scalar_lea.vmem [#allocation2], 16
  %v1235 = vld [vmem:[%s1234] sm:$0xff]
  %v1236 = vld [vmem:[%s1234 + $0x8] sm:$0xff]
  %1237 = vmatprep.subr.bf16.mxu0 %v625
  %1238 = vmatpush1.bf16.msra.mxu0 %v624
  %1239 = vmatprep.subr.bf16.mxu0 %v623
  %1240 = vmatpush1.bf16.msra.mxu0 %v622
  %1241 = vmatprep.subr.bf16.mxu0 %v621
  %1242 = vmatpush1.bf16.msra.mxu0 %v620
  %1243 = vmatprep.subr.bf16.mxu0 %v619
  %1244 = vmatpush1.bf16.msra.mxu0 %v618
  %1245 = vmatprep.subr.bf16.mxu0 %v617
  %1246 = vmatpush1.bf16.msra.mxu0 %v616
  %1247 = vmatprep.subr.bf16.mxu0 %v615
  %1248 = vmatpush1.bf16.msra.mxu0 %v614
  %1249 = vmatprep.subr.bf16.mxu0 %v613
  %1250 = vmatpush1.bf16.msra.mxu0 %v612
  %1251 = vmatprep.subr.bf16.mxu0 %v611
  %1252 = vmatpush1.bf16.msra.mxu0 %v610
  %1253 = vmatprep.subr.bf16.mxu0 %v641
  %1254 = vmatpush2.bf16.msra.mxu0 %v640
  %1255 = vmatprep.subr.bf16.mxu0 %v639
  %1256 = vmatpush2.bf16.msra.mxu0 %v638
  %1257 = vmatprep.subr.bf16.mxu0 %v637
  %1258 = vmatpush2.bf16.msra.mxu0 %v636
  %1259 = vmatprep.subr.bf16.mxu0 %v635
  %1260 = vmatpush2.bf16.msra.mxu0 %v634
  %1261 = vmatprep.subr.bf16.mxu0 %v633
  %1262 = vmatpush2.bf16.msra.mxu0 %v632
  %1263 = vmatprep.subr.bf16.mxu0 %v631
  %1264 = vmatpush2.bf16.msra.mxu0 %v630
  %1265 = vmatprep.subr.bf16.mxu0 %v629
  %1266 = vmatpush2.bf16.msra.mxu0 %v628
  %1267 = vmatprep.subr.bf16.mxu0 %v627
  %1268 = vmatpush2.bf16.msra.mxu0 %v626
  %1269 = vmatprep.mubr.bf16.mxu0 %v720
  %1270 = vmatmul.mubr.bf16.gmra.mxu0 %v719
  %v1271 = vpop.f32.mrf.mxu0
  %v1272 = vadd.f32 0.0, %v1271
  %v1273 = vpop.f32.mrf.mxu0
  %v1274 = vadd.f32 0.0, %v1273
  %v1275 = vpop.f32.mrf.mxu0
  %v1276 = vpop.f32.mrf.mxu0
  %1277 = vdwg.mxu0
  %v1278 = vadd.f32 %v1235, %v1272
  %v1279 = vadd.f32 %v1236, %v1274
  %v1280 = vtanh.pop %v1278
  %v1281 = vtanh.pop %v1279
  %v1282 = vpack.c.bf16 %v1280, %v1280
  %v1283 = vpack.c.bf16 %v1281, %v1281
  %1284 = vmatprep.subr.bf16.mxu0 %v1003
  %1285 = vmatpush1.bf16.msra.mxu0 %v1002
  %1286 = vmatprep.subr.bf16.mxu0 %v1001
  %1287 = vmatpush1.bf16.msra.mxu0 %v1000
  %1288 = vmatprep.subr.bf16.mxu0 %v999
  %1289 = vmatpush1.bf16.msra.mxu0 %v998
  %1290 = vmatprep.subr.bf16.mxu0 %v997
  %1291 = vmatpush1.bf16.msra.mxu0 %v996
  %1292 = vmatprep.subr.bf16.mxu0 %v995
  %1293 = vmatpush1.bf16.msra.mxu0 %v994
  %1294 = vmatprep.subr.bf16.mxu0 %v993
  %1295 = vmatpush1.bf16.msra.mxu0 %v992
  %1296 = vmatprep.subr.bf16.mxu0 %v991
  %1297 = vmatpush1.bf16.msra.mxu0 %v990
  %1298 = vmatprep.subr.bf16.mxu0 %v989
  %1299 = vmatpush1.bf16.msra.mxu0 %v988
  %1300 = vmatprep.subr.bf16.mxu0 %v1019
  %1301 = vmatpush2.bf16.msra.mxu0 %v1018
  %1302 = vmatprep.subr.bf16.mxu0 %v1017
  %1303 = vmatpush2.bf16.msra.mxu0 %v1016
  %1304 = vmatprep.subr.bf16.mxu0 %v1015
  %1305 = vmatpush2.bf16.msra.mxu0 %v1014
  %1306 = vmatprep.subr.bf16.mxu0 %v1013
  %1307 = vmatpush2.bf16.msra.mxu0 %v1012
  %1308 = vmatprep.subr.bf16.mxu0 %v1011
  %1309 = vmatpush2.bf16.msra.mxu0 %v1010
  %1310 = vmatprep.subr.bf16.mxu0 %v1009
  %1311 = vmatpush2.bf16.msra.mxu0 %v1008
  %1312 = vmatprep.subr.bf16.mxu0 %v1007
  %1313 = vmatpush2.bf16.msra.mxu0 %v1006
  %1314 = vmatprep.subr.bf16.mxu0 %v1005
  %1315 = vmatpush2.bf16.msra.mxu0 %v1004
  %1316 = vmatprep.mubr.bf16.mxu0 %v1283
  %1317 = vmatmul.mubr.bf16.gmra.mxu0 %v1282
  %v1318 = vpop.f32.mrf.mxu0
  %v1319 = vadd.f32 %v789, %v1318
  %v1320 = vpop.f32.mrf.mxu0
  %v1321 = vadd.f32 %v793, %v1320
  %v1322 = vpop.f32.mrf.mxu0
  %v1323 = vpop.f32.mrf.mxu0
  %1324 = vdwg.mxu0
  %1325 = vmatprep.subr.bf16.mxu0 %v1035
  %1326 = vmatpush1.bf16.msra.mxu0 %v1034
  %1327 = vmatprep.subr.bf16.mxu0 %v1033
  %1328 = vmatpush1.bf16.msra.mxu0 %v1032
  %1329 = vmatprep.subr.bf16.mxu0 %v1031
  %1330 = vmatpush1.bf16.msra.mxu0 %v1030
  %1331 = vmatprep.subr.bf16.mxu0 %v1029
  %1332 = vmatpush1.bf16.msra.mxu0 %v1028
  %1333 = vmatprep.subr.bf16.mxu0 %v1027
  %1334 = vmatpush1.bf16.msra.mxu0 %v1026
  %1335 = vmatprep.subr.bf16.mxu0 %v1025
  %1336 = vmatpush1.bf16.msra.mxu0 %v1024
  %1337 = vmatprep.subr.bf16.mxu0 %v1023
  %1338 = vmatpush1.bf16.msra.mxu0 %v1022
  %1339 = vmatprep.subr.bf16.mxu0 %v1021
  %1340 = vmatpush1.bf16.msra.mxu0 %v1020
  %1341 = vmatprep.subr.bf16.mxu0 %v1051
  %1342 = vmatpush2.bf16.msra.mxu0 %v1050
  %1343 = vmatprep.subr.bf16.mxu0 %v1049
  %1344 = vmatpush2.bf16.msra.mxu0 %v1048
  %1345 = vmatprep.subr.bf16.mxu0 %v1047
  %1346 = vmatpush2.bf16.msra.mxu0 %v1046
  %1347 = vmatprep.subr.bf16.mxu0 %v1045
  %1348 = vmatpush2.bf16.msra.mxu0 %v1044
  %1349 = vmatprep.subr.bf16.mxu0 %v1043
  %1350 = vmatpush2.bf16.msra.mxu0 %v1042
  %1351 = vmatprep.subr.bf16.mxu0 %v1041
  %1352 = vmatpush2.bf16.msra.mxu0 %v1040
  %1353 = vmatprep.subr.bf16.mxu0 %v1039
  %1354 = vmatpush2.bf16.msra.mxu0 %v1038
  %1355 = vmatprep.subr.bf16.mxu0 %v1037
  %1356 = vmatpush2.bf16.msra.mxu0 %v1036
  %1357 = vmatprep.mubr.bf16.mxu0 %v1201
  %1358 = vmatmul.mubr.bf16.gmra.mxu0 %v1200
  %v1359 = vpop.f32.mrf.mxu0
  %v1360 = vadd.f32 %v1319, %v1359
  %v1361 = vpop.f32.mrf.mxu0
  %v1362 = vadd.f32 %v1321, %v1361
  %v1363 = vpop.f32.mrf.mxu0
  %v1364 = vpop.f32.mrf.mxu0
  %1365 = vdwg.mxu0
  %v1366 = vtanh.pop %v1360
  %v1367 = vtanh.pop %v1362
  %v1368 = vpack.c.bf16 %v1366, %v1366
  %v1369 = vpack.c.bf16 %v1367, %v1367
  %s1370 = scalar_lea.vmem %s6, 128
  %v1371 = vld [vmem:[%s1370] sm:$0xf]
  %v1372 = vld [vmem:[%s1370 + $0x4] sm:$0xf]
  %v1373 = vld [vmem:[%s1370 + $0x8] sm:$0xf]
  %v1374 = vld [vmem:[%s1370 + $0xc] sm:$0xf]
  %v1375 = vld [vmem:[%s1370 + $0x10] sm:$0xf]
  %v1376 = vld [vmem:[%s1370 + $0x14] sm:$0xf]
  %v1377 = vld [vmem:[%s1370 + $0x18] sm:$0xf]
  %v1378 = vld [vmem:[%s1370 + $0x1c] sm:$0xf]
  %v1379 = vld [vmem:[%s1370 + $0x20] sm:$0xf]
  %v1380 = vld [vmem:[%s1370 + $0x24] sm:$0xf]
  %v1381 = vld [vmem:[%s1370 + $0x28] sm:$0xf]
  %v1382 = vld [vmem:[%s1370 + $0x2c] sm:$0xf]
  %v1383 = vld [vmem:[%s1370 + $0x30] sm:$0xf]
  %v1384 = vld [vmem:[%s1370 + $0x34] sm:$0xf]
  %v1385 = vld [vmem:[%s1370 + $0x38] sm:$0xf]
  %v1386 = vld [vmem:[%s1370 + $0x3c] sm:$0xf]
  %v1387 = vld [vmem:[%s1370 + $0x40] sm:$0xf]
  %v1388 = vld [vmem:[%s1370 + $0x44] sm:$0xf]
  %v1389 = vld [vmem:[%s1370 + $0x48] sm:$0xf]
  %v1390 = vld [vmem:[%s1370 + $0x4c] sm:$0xf]
  %v1391 = vld [vmem:[%s1370 + $0x50] sm:$0xf]
  %v1392 = vld [vmem:[%s1370 + $0x54] sm:$0xf]
  %v1393 = vld [vmem:[%s1370 + $0x58] sm:$0xf]
  %v1394 = vld [vmem:[%s1370 + $0x5c] sm:$0xf]
  %v1395 = vld [vmem:[%s1370 + $0x60] sm:$0xf]
  %v1396 = vld [vmem:[%s1370 + $0x64] sm:$0xf]
  %v1397 = vld [vmem:[%s1370 + $0x68] sm:$0xf]
  %v1398 = vld [vmem:[%s1370 + $0x6c] sm:$0xf]
  %v1399 = vld [vmem:[%s1370 + $0x70] sm:$0xf]
  %v1400 = vld [vmem:[%s1370 + $0x74] sm:$0xf]
  %v1401 = vld [vmem:[%s1370 + $0x78] sm:$0xf]
  %v1402 = vld [vmem:[%s1370 + $0x7c] sm:$0xf]
  %v1435 = vunpack.c.l.b16 %v1371
  %v1436 = vunpack.c.l.b16 %v1372
  %v1437 = vunpack.c.l.b16 %v1373
  %v1438 = vunpack.c.l.b16 %v1374
  %v1439 = vunpack.c.l.b16 %v1375
  %v1440 = vunpack.c.l.b16 %v1376
  %v1441 = vunpack.c.l.b16 %v1377
  %v1442 = vunpack.c.l.b16 %v1378
  %v1443 = vunpack.c.l.b16 %v1379
  %v1444 = vunpack.c.l.b16 %v1380
  %v1445 = vunpack.c.l.b16 %v1381
  %v1446 = vunpack.c.l.b16 %v1382
  %v1447 = vunpack.c.l.b16 %v1383
  %v1448 = vunpack.c.l.b16 %v1384
  %v1449 = vunpack.c.l.b16 %v1385
  %v1450 = vunpack.c.l.b16 %v1386
  %v1451 = vunpack.c.l.b16 %v1387
  %v1452 = vunpack.c.l.b16 %v1388
  %v1453 = vunpack.c.l.b16 %v1389
  %v1454 = vunpack.c.l.b16 %v1390
  %v1455 = vunpack.c.l.b16 %v1391
  %v1456 = vunpack.c.l.b16 %v1392
  %v1457 = vunpack.c.l.b16 %v1393
  %v1458 = vunpack.c.l.b16 %v1394
  %v1459 = vunpack.c.l.b16 %v1395
  %v1460 = vunpack.c.l.b16 %v1396
  %v1461 = vunpack.c.l.b16 %v1397
  %v1462 = vunpack.c.l.b16 %v1398
  %v1463 = vunpack.c.l.b16 %v1399
  %v1464 = vunpack.c.l.b16 %v1400
  %v1465 = vunpack.c.l.b16 %v1401
  %v1466 = vunpack.c.l.b16 %v1402
  %v1467 = vpack.c.b16 %v1436, %v1435
  %v1468 = vpack.c.b16 %v1438, %v1437
  %v1469 = vpack.c.b16 %v1440, %v1439
  %v1470 = vpack.c.b16 %v1442, %v1441
  %v1471 = vpack.c.b16 %v1444, %v1443
  %v1472 = vpack.c.b16 %v1446, %v1445
  %v1473 = vpack.c.b16 %v1448, %v1447
  %v1474 = vpack.c.b16 %v1450, %v1449
  %v1475 = vpack.c.b16 %v1452, %v1451
  %v1476 = vpack.c.b16 %v1454, %v1453
  %v1477 = vpack.c.b16 %v1456, %v1455
  %v1478 = vpack.c.b16 %v1458, %v1457
  %v1479 = vpack.c.b16 %v1460, %v1459
  %v1480 = vpack.c.b16 %v1462, %v1461
  %v1481 = vpack.c.b16 %v1464, %v1463
  %v1482 = vpack.c.b16 %v1466, %v1465
  %1499 = vmatprep.subr.bf16.mxu0 0
  %1500 = vmatpush1.bf16.msra.mxu0 %v1474
  %1501 = vmatprep.subr.bf16.mxu0 0
  %1502 = vmatpush1.bf16.msra.mxu0 %v1473
  %1503 = vmatprep.subr.bf16.mxu0 0
  %1504 = vmatpush1.bf16.msra.mxu0 %v1472
  %1505 = vmatprep.subr.bf16.mxu0 0
  %1506 = vmatpush1.bf16.msra.mxu0 %v1471
  %1507 = vmatprep.subr.bf16.mxu0 0
  %1508 = vmatpush1.bf16.msra.mxu0 %v1470
  %1509 = vmatprep.subr.bf16.mxu0 0
  %1510 = vmatpush1.bf16.msra.mxu0 %v1469
  %1511 = vmatprep.subr.bf16.mxu0 0
  %1512 = vmatpush1.bf16.msra.mxu0 %v1468
  %1513 = vmatprep.subr.bf16.mxu0 0
  %1514 = vmatpush1.bf16.msra.mxu0 %v1467
  %1515 = vmatprep.subr.bf16.mxu0 0
  %1516 = vmatpush2.bf16.msra.mxu0 %v1482
  %1517 = vmatprep.subr.bf16.mxu0 0
  %1518 = vmatpush2.bf16.msra.mxu0 %v1481
  %1519 = vmatprep.subr.bf16.mxu0 0
  %1520 = vmatpush2.bf16.msra.mxu0 %v1480
  %1521 = vmatprep.subr.bf16.mxu0 0
  %1522 = vmatpush2.bf16.msra.mxu0 %v1479
  %1523 = vmatprep.subr.bf16.mxu0 0
  %1524 = vmatpush2.bf16.msra.mxu0 %v1478
  %1525 = vmatprep.subr.bf16.mxu0 0
  %1526 = vmatpush2.bf16.msra.mxu0 %v1477
  %1527 = vmatprep.subr.bf16.mxu0 0
  %1528 = vmatpush2.bf16.msra.mxu0 %v1476
  %1529 = vmatprep.subr.bf16.mxu0 0
  %1530 = vmatpush2.bf16.msra.mxu0 %v1475
  %1531 = vmatprep.mubr.bf16.mxu0 %v1369
  %1532 = vmatmul.mubr.bf16.gmra.mxu0 %v1368
  %v1533 = vpop.f32.mrf.mxu0
  %v1534 = vadd.f32 0.0, %v1533
  %v1535 = vpop.f32.mrf.mxu0
  %v1536 = vpop.f32.mrf.mxu0
  %v1537 = vpop.f32.mrf.mxu0
  %1538 = vdwg.mxu0
  %v1571 = vunpack.c.l.b16 %v1202
  %v1572 = vunpack.c.l.b16 %v1203
  %v1573 = vunpack.c.l.b16 %v1204
  %v1574 = vunpack.c.l.b16 %v1205
  %v1575 = vunpack.c.l.b16 %v1206
  %v1576 = vunpack.c.l.b16 %v1207
  %v1577 = vunpack.c.l.b16 %v1208
  %v1578 = vunpack.c.l.b16 %v1209
  %v1579 = vunpack.c.l.b16 %v1210
  %v1580 = vunpack.c.l.b16 %v1211
  %v1581 = vunpack.c.l.b16 %v1212
  %v1582 = vunpack.c.l.b16 %v1213
  %v1583 = vunpack.c.l.b16 %v1214
  %v1584 = vunpack.c.l.b16 %v1215
  %v1585 = vunpack.c.l.b16 %v1216
  %v1586 = vunpack.c.l.b16 %v1217
  %v1587 = vunpack.c.l.b16 %v1218
  %v1588 = vunpack.c.l.b16 %v1219
  %v1589 = vunpack.c.l.b16 %v1220
  %v1590 = vunpack.c.l.b16 %v1221
  %v1591 = vunpack.c.l.b16 %v1222
  %v1592 = vunpack.c.l.b16 %v1223
  %v1593 = vunpack.c.l.b16 %v1224
  %v1594 = vunpack.c.l.b16 %v1225
  %v1595 = vunpack.c.l.b16 %v1226
  %v1596 = vunpack.c.l.b16 %v1227
  %v1597 = vunpack.c.l.b16 %v1228
  %v1598 = vunpack.c.l.b16 %v1229
  %v1599 = vunpack.c.l.b16 %v1230
  %v1600 = vunpack.c.l.b16 %v1231
  %v1601 = vunpack.c.l.b16 %v1232
  %v1602 = vunpack.c.l.b16 %v1233
  %v1603 = vpack.c.b16 %v1572, %v1571
  %v1604 = vpack.c.b16 %v1574, %v1573
  %v1605 = vpack.c.b16 %v1576, %v1575
  %v1606 = vpack.c.b16 %v1578, %v1577
  %v1607 = vpack.c.b16 %v1580, %v1579
  %v1608 = vpack.c.b16 %v1582, %v1581
  %v1609 = vpack.c.b16 %v1584, %v1583
  %v1610 = vpack.c.b16 %v1586, %v1585
  %v1611 = vpack.c.b16 %v1588, %v1587
  %v1612 = vpack.c.b16 %v1590, %v1589
  %v1613 = vpack.c.b16 %v1592, %v1591
  %v1614 = vpack.c.b16 %v1594, %v1593
  %v1615 = vpack.c.b16 %v1596, %v1595
  %v1616 = vpack.c.b16 %v1598, %v1597
  %v1617 = vpack.c.b16 %v1600, %v1599
  %v1618 = vpack.c.b16 %v1602, %v1601
  %1635 = vmatprep.subr.bf16.mxu0 0
  %1636 = vmatpush1.bf16.msra.mxu0 %v1610
  %1637 = vmatprep.subr.bf16.mxu0 0
  %1638 = vmatpush1.bf16.msra.mxu0 %v1609
  %1639 = vmatprep.subr.bf16.mxu0 0
  %1640 = vmatpush1.bf16.msra.mxu0 %v1608
  %1641 = vmatprep.subr.bf16.mxu0 0
  %1642 = vmatpush1.bf16.msra.mxu0 %v1607
  %1643 = vmatprep.subr.bf16.mxu0 0
  %1644 = vmatpush1.bf16.msra.mxu0 %v1606
  %1645 = vmatprep.subr.bf16.mxu0 0
  %1646 = vmatpush1.bf16.msra.mxu0 %v1605
  %1647 = vmatprep.subr.bf16.mxu0 0
  %1648 = vmatpush1.bf16.msra.mxu0 %v1604
  %1649 = vmatprep.subr.bf16.mxu0 0
  %1650 = vmatpush1.bf16.msra.mxu0 %v1603
  %1651 = vmatprep.subr.bf16.mxu0 0
  %1652 = vmatpush2.bf16.msra.mxu0 %v1618
  %1653 = vmatprep.subr.bf16.mxu0 0
  %1654 = vmatpush2.bf16.msra.mxu0 %v1617
  %1655 = vmatprep.subr.bf16.mxu0 0
  %1656 = vmatpush2.bf16.msra.mxu0 %v1616
  %1657 = vmatprep.subr.bf16.mxu0 0
  %1658 = vmatpush2.bf16.msra.mxu0 %v1615
  %1659 = vmatprep.subr.bf16.mxu0 0
  %1660 = vmatpush2.bf16.msra.mxu0 %v1614
  %1661 = vmatprep.subr.bf16.mxu0 0
  %1662 = vmatpush2.bf16.msra.mxu0 %v1613
  %1663 = vmatprep.subr.bf16.mxu0 0
  %1664 = vmatpush2.bf16.msra.mxu0 %v1612
  %1665 = vmatprep.subr.bf16.mxu0 0
  %1666 = vmatpush2.bf16.msra.mxu0 %v1611
  %1667 = vmatprep.mubr.bf16.mxu0 %v1201
  %1668 = vmatmul.mubr.bf16.gmra.mxu0 %v1200
  %v1669 = vpop.f32.mrf.mxu0
  %v1670 = vadd.f32 %v1534, %v1669
  %v1671 = vpop.f32.mrf.mxu0
  %v1672 = vpop.f32.mrf.mxu0
  %v1673 = vpop.f32.mrf.mxu0
  %1674 = vdwg.mxu0
  %s1675 = scalar_lea.vmem [#allocation2], 32
  %v1676 = vld [vmem:[%s1675] sm:$0xff]
  %v1677 = vld [vmem:[%s1675 + $0x8] sm:$0xff]
  %1678 = vmatprep.subr.bf16.mxu0 %v625
  %1679 = vmatpush1.bf16.msra.mxu0 %v624
  %1680 = vmatprep.subr.bf16.mxu0 %v623
  %1681 = vmatpush1.bf16.msra.mxu0 %v622
  %1682 = vmatprep.subr.bf16.mxu0 %v621
  %1683 = vmatpush1.bf16.msra.mxu0 %v620
  %1684 = vmatprep.subr.bf16.mxu0 %v619
  %1685 = vmatpush1.bf16.msra.mxu0 %v618
  %1686 = vmatprep.subr.bf16.mxu0 %v617
  %1687 = vmatpush1.bf16.msra.mxu0 %v616
  %1688 = vmatprep.subr.bf16.mxu0 %v615
  %1689 = vmatpush1.bf16.msra.mxu0 %v614
  %1690 = vmatprep.subr.bf16.mxu0 %v613
  %1691 = vmatpush1.bf16.msra.mxu0 %v612
  %1692 = vmatprep.subr.bf16.mxu0 %v611
  %1693 = vmatpush1.bf16.msra.mxu0 %v610
  %1694 = vmatprep.subr.bf16.mxu0 %v641
  %1695 = vmatpush2.bf16.msra.mxu0 %v640
  %1696 = vmatprep.subr.bf16.mxu0 %v639
  %1697 = vmatpush2.bf16.msra.mxu0 %v638
  %1698 = vmatprep.subr.bf16.mxu0 %v637
  %1699 = vmatpush2.bf16.msra.mxu0 %v636
  %1700 = vmatprep.subr.bf16.mxu0 %v635
  %1701 = vmatpush2.bf16.msra.mxu0 %v634
  %1702 = vmatprep.subr.bf16.mxu0 %v633
  %1703 = vmatpush2.bf16.msra.mxu0 %v632
  %1704 = vmatprep.subr.bf16.mxu0 %v631
  %1705 = vmatpush2.bf16.msra.mxu0 %v630
  %1706 = vmatprep.subr.bf16.mxu0 %v629
  %1707 = vmatpush2.bf16.msra.mxu0 %v628
  %1708 = vmatprep.subr.bf16.mxu0 %v627
  %1709 = vmatpush2.bf16.msra.mxu0 %v626
  %1710 = vmatprep.mubr.bf16.mxu0 %v1283
  %1711 = vmatmul.mubr.bf16.gmra.mxu0 %v1282
  %v1712 = vpop.f32.mrf.mxu0
  %v1713 = vadd.f32 0.0, %v1712
  %v1714 = vpop.f32.mrf.mxu0
  %v1715 = vadd.f32 0.0, %v1714
  %v1716 = vpop.f32.mrf.mxu0
  %v1717 = vpop.f32.mrf.mxu0
  %1718 = vdwg.mxu0
  %v1719 = vadd.f32 %v1676, %v1713
  %v1720 = vadd.f32 %v1677, %v1715
  %v1721 = vtanh.pop %v1719
  %v1722 = vtanh.pop %v1720
  %v1723 = vpack.c.bf16 %v1721, %v1721
  %v1724 = vpack.c.bf16 %v1722, %v1722
  %1725 = vmatprep.subr.bf16.mxu0 %v1003
  %1726 = vmatpush1.bf16.msra.mxu0 %v1002
  %1727 = vmatprep.subr.bf16.mxu0 %v1001
  %1728 = vmatpush1.bf16.msra.mxu0 %v1000
  %1729 = vmatprep.subr.bf16.mxu0 %v999
  %1730 = vmatpush1.bf16.msra.mxu0 %v998
  %1731 = vmatprep.subr.bf16.mxu0 %v997
  %1732 = vmatpush1.bf16.msra.mxu0 %v996
  %1733 = vmatprep.subr.bf16.mxu0 %v995
  %1734 = vmatpush1.bf16.msra.mxu0 %v994
  %1735 = vmatprep.subr.bf16.mxu0 %v993
  %1736 = vmatpush1.bf16.msra.mxu0 %v992
  %1737 = vmatprep.subr.bf16.mxu0 %v991
  %1738 = vmatpush1.bf16.msra.mxu0 %v990
  %1739 = vmatprep.subr.bf16.mxu0 %v989
  %1740 = vmatpush1.bf16.msra.mxu0 %v988
  %1741 = vmatprep.subr.bf16.mxu0 %v1019
  %1742 = vmatpush2.bf16.msra.mxu0 %v1018
  %1743 = vmatprep.subr.bf16.mxu0 %v1017
  %1744 = vmatpush2.bf16.msra.mxu0 %v1016
  %1745 = vmatprep.subr.bf16.mxu0 %v1015
  %1746 = vmatpush2.bf16.msra.mxu0 %v1014
  %1747 = vmatprep.subr.bf16.mxu0 %v1013
  %1748 = vmatpush2.bf16.msra.mxu0 %v1012
  %1749 = vmatprep.subr.bf16.mxu0 %v1011
  %1750 = vmatpush2.bf16.msra.mxu0 %v1010
  %1751 = vmatprep.subr.bf16.mxu0 %v1009
  %1752 = vmatpush2.bf16.msra.mxu0 %v1008
  %1753 = vmatprep.subr.bf16.mxu0 %v1007
  %1754 = vmatpush2.bf16.msra.mxu0 %v1006
  %1755 = vmatprep.subr.bf16.mxu0 %v1005
  %1756 = vmatpush2.bf16.msra.mxu0 %v1004
  %1757 = vmatprep.mubr.bf16.mxu0 %v1724
  %1758 = vmatmul.mubr.bf16.gmra.mxu0 %v1723
  %v1759 = vpop.f32.mrf.mxu0
  %v1760 = vadd.f32 %v789, %v1759
  %v1761 = vpop.f32.mrf.mxu0
  %v1762 = vadd.f32 %v793, %v1761
  %v1763 = vpop.f32.mrf.mxu0
  %v1764 = vpop.f32.mrf.mxu0
  %1765 = vdwg.mxu0
  %1766 = vmatprep.subr.bf16.mxu0 %v1035
  %1767 = vmatpush1.bf16.msra.mxu0 %v1034
  %1768 = vmatprep.subr.bf16.mxu0 %v1033
  %1769 = vmatpush1.bf16.msra.mxu0 %v1032
  %1770 = vmatprep.subr.bf16.mxu0 %v1031
  %1771 = vmatpush1.bf16.msra.mxu0 %v1030
  %1772 = vmatprep.subr.bf16.mxu0 %v1029
  %1773 = vmatpush1.bf16.msra.mxu0 %v1028
  %1774 = vmatprep.subr.bf16.mxu0 %v1027
  %1775 = vmatpush1.bf16.msra.mxu0 %v1026
  %1776 = vmatprep.subr.bf16.mxu0 %v1025
  %1777 = vmatpush1.bf16.msra.mxu0 %v1024
  %1778 = vmatprep.subr.bf16.mxu0 %v1023
  %1779 = vmatpush1.bf16.msra.mxu0 %v1022
  %1780 = vmatprep.subr.bf16.mxu0 %v1021
  %1781 = vmatpush1.bf16.msra.mxu0 %v1020
  %1782 = vmatprep.subr.bf16.mxu0 %v1051
  %1783 = vmatpush2.bf16.msra.mxu0 %v1050
  %1784 = vmatprep.subr.bf16.mxu0 %v1049
  %1785 = vmatpush2.bf16.msra.mxu0 %v1048
  %1786 = vmatprep.subr.bf16.mxu0 %v1047
  %1787 = vmatpush2.bf16.msra.mxu0 %v1046
  %1788 = vmatprep.subr.bf16.mxu0 %v1045
  %1789 = vmatpush2.bf16.msra.mxu0 %v1044
  %1790 = vmatprep.subr.bf16.mxu0 %v1043
  %1791 = vmatpush2.bf16.msra.mxu0 %v1042
  %1792 = vmatprep.subr.bf16.mxu0 %v1041
  %1793 = vmatpush2.bf16.msra.mxu0 %v1040
  %1794 = vmatprep.subr.bf16.mxu0 %v1039
  %1795 = vmatpush2.bf16.msra.mxu0 %v1038
  %1796 = vmatprep.subr.bf16.mxu0 %v1037
  %1797 = vmatpush2.bf16.msra.mxu0 %v1036
  %1798 = vmatprep.mubr.bf16.mxu0 %v1369
  %1799 = vmatmul.mubr.bf16.gmra.mxu0 %v1368
  %v1800 = vpop.f32.mrf.mxu0
  %v1801 = vadd.f32 %v1760, %v1800
  %v1802 = vpop.f32.mrf.mxu0
  %v1803 = vadd.f32 %v1762, %v1802
  %v1804 = vpop.f32.mrf.mxu0
  %v1805 = vpop.f32.mrf.mxu0
  %1806 = vdwg.mxu0
  %v1807 = vtanh.pop %v1801
  %v1808 = vtanh.pop %v1803
  %v1809 = vpack.c.bf16 %v1807, %v1807
  %v1810 = vpack.c.bf16 %v1808, %v1808
  %s1811 = scalar_lea.vmem %s6, 256
  %v1812 = vld [vmem:[%s1811] sm:$0xf]
  %v1813 = vld [vmem:[%s1811 + $0x4] sm:$0xf]
  %v1814 = vld [vmem:[%s1811 + $0x8] sm:$0xf]
  %v1815 = vld [vmem:[%s1811 + $0xc] sm:$0xf]
  %v1816 = vld [vmem:[%s1811 + $0x10] sm:$0xf]
  %v1817 = vld [vmem:[%s1811 + $0x14] sm:$0xf]
  %v1818 = vld [vmem:[%s1811 + $0x18] sm:$0xf]
  %v1819 = vld [vmem:[%s1811 + $0x1c] sm:$0xf]
  %v1820 = vld [vmem:[%s1811 + $0x20] sm:$0xf]
  %v1821 = vld [vmem:[%s1811 + $0x24] sm:$0xf]
  %v1822 = vld [vmem:[%s1811 + $0x28] sm:$0xf]
  %v1823 = vld [vmem:[%s1811 + $0x2c] sm:$0xf]
  %v1824 = vld [vmem:[%s1811 + $0x30] sm:$0xf]
  %v1825 = vld [vmem:[%s1811 + $0x34] sm:$0xf]
  %v1826 = vld [vmem:[%s1811 + $0x38] sm:$0xf]
  %v1827 = vld [vmem:[%s1811 + $0x3c] sm:$0xf]
  %v1828 = vld [vmem:[%s1811 + $0x40] sm:$0xf]
  %v1829 = vld [vmem:[%s1811 + $0x44] sm:$0xf]
  %v1830 = vld [vmem:[%s1811 + $0x48] sm:$0xf]
  %v1831 = vld [vmem:[%s1811 + $0x4c] sm:$0xf]
  %v1832 = vld [vmem:[%s1811 + $0x50] sm:$0xf]
  %v1833 = vld [vmem:[%s1811 + $0x54] sm:$0xf]
  %v1834 = vld [vmem:[%s1811 + $0x58] sm:$0xf]
  %v1835 = vld [vmem:[%s1811 + $0x5c] sm:$0xf]
  %v1836 = vld [vmem:[%s1811 + $0x60] sm:$0xf]
  %v1837 = vld [vmem:[%s1811 + $0x64] sm:$0xf]
  %v1838 = vld [vmem:[%s1811 + $0x68] sm:$0xf]
  %v1839 = vld [vmem:[%s1811 + $0x6c] sm:$0xf]
  %v1840 = vld [vmem:[%s1811 + $0x70] sm:$0xf]
  %v1841 = vld [vmem:[%s1811 + $0x74] sm:$0xf]
  %v1842 = vld [vmem:[%s1811 + $0x78] sm:$0xf]
  %v1843 = vld [vmem:[%s1811 + $0x7c] sm:$0xf]
  %v1876 = vunpack.c.l.b16 %v1812
  %v1877 = vunpack.c.l.b16 %v1813
  %v1878 = vunpack.c.l.b16 %v1814
  %v1879 = vunpack.c.l.b16 %v1815
  %v1880 = vunpack.c.l.b16 %v1816
  %v1881 = vunpack.c.l.b16 %v1817
  %v1882 = vunpack.c.l.b16 %v1818
  %v1883 = vunpack.c.l.b16 %v1819
  %v1884 = vunpack.c.l.b16 %v1820
  %v1885 = vunpack.c.l.b16 %v1821
  %v1886 = vunpack.c.l.b16 %v1822
  %v1887 = vunpack.c.l.b16 %v1823
  %v1888 = vunpack.c.l.b16 %v1824
  %v1889 = vunpack.c.l.b16 %v1825
  %v1890 = vunpack.c.l.b16 %v1826
  %v1891 = vunpack.c.l.b16 %v1827
  %v1892 = vunpack.c.l.b16 %v1828
  %v1893 = vunpack.c.l.b16 %v1829
  %v1894 = vunpack.c.l.b16 %v1830
  %v1895 = vunpack.c.l.b16 %v1831
  %v1896 = vunpack.c.l.b16 %v1832
  %v1897 = vunpack.c.l.b16 %v1833
  %v1898 = vunpack.c.l.b16 %v1834
  %v1899 = vunpack.c.l.b16 %v1835
  %v1900 = vunpack.c.l.b16 %v1836
  %v1901 = vunpack.c.l.b16 %v1837
  %v1902 = vunpack.c.l.b16 %v1838
  %v1903 = vunpack.c.l.b16 %v1839
  %v1904 = vunpack.c.l.b16 %v1840
  %v1905 = vunpack.c.l.b16 %v1841
  %v1906 = vunpack.c.l.b16 %v1842
  %v1907 = vunpack.c.l.b16 %v1843
  %v1908 = vpack.c.b16 %v1877, %v1876
  %v1909 = vpack.c.b16 %v1879, %v1878
  %v1910 = vpack.c.b16 %v1881, %v1880
  %v1911 = vpack.c.b16 %v1883, %v1882
  %v1912 = vpack.c.b16 %v1885, %v1884
  %v1913 = vpack.c.b16 %v1887, %v1886
  %v1914 = vpack.c.b16 %v1889, %v1888
  %v1915 = vpack.c.b16 %v1891, %v1890
  %v1916 = vpack.c.b16 %v1893, %v1892
  %v1917 = vpack.c.b16 %v1895, %v1894
  %v1918 = vpack.c.b16 %v1897, %v1896
  %v1919 = vpack.c.b16 %v1899, %v1898
  %v1920 = vpack.c.b16 %v1901, %v1900
  %v1921 = vpack.c.b16 %v1903, %v1902
  %v1922 = vpack.c.b16 %v1905, %v1904
  %v1923 = vpack.c.b16 %v1907, %v1906
  %1940 = vmatprep.subr.bf16.mxu0 0
  %1941 = vmatpush1.bf16.msra.mxu0 %v1915
  %1942 = vmatprep.subr.bf16.mxu0 0
  %1943 = vmatpush1.bf16.msra.mxu0 %v1914
  %1944 = vmatprep.subr.bf16.mxu0 0
  %1945 = vmatpush1.bf16.msra.mxu0 %v1913
  %1946 = vmatprep.subr.bf16.mxu0 0
  %1947 = vmatpush1.bf16.msra.mxu0 %v1912
  %1948 = vmatprep.subr.bf16.mxu0 0
  %1949 = vmatpush1.bf16.msra.mxu0 %v1911
  %1950 = vmatprep.subr.bf16.mxu0 0
  %1951 = vmatpush1.bf16.msra.mxu0 %v1910
  %1952 = vmatprep.subr.bf16.mxu0 0
  %1953 = vmatpush1.bf16.msra.mxu0 %v1909
  %1954 = vmatprep.subr.bf16.mxu0 0
  %1955 = vmatpush1.bf16.msra.mxu0 %v1908
  %1956 = vmatprep.subr.bf16.mxu0 0
  %1957 = vmatpush2.bf16.msra.mxu0 %v1923
  %1958 = vmatprep.subr.bf16.mxu0 0
  %1959 = vmatpush2.bf16.msra.mxu0 %v1922
  %1960 = vmatprep.subr.bf16.mxu0 0
  %1961 = vmatpush2.bf16.msra.mxu0 %v1921
  %1962 = vmatprep.subr.bf16.mxu0 0
  %1963 = vmatpush2.bf16.msra.mxu0 %v1920
  %1964 = vmatprep.subr.bf16.mxu0 0
  %1965 = vmatpush2.bf16.msra.mxu0 %v1919
  %1966 = vmatprep.subr.bf16.mxu0 0
  %1967 = vmatpush2.bf16.msra.mxu0 %v1918
  %1968 = vmatprep.subr.bf16.mxu0 0
  %1969 = vmatpush2.bf16.msra.mxu0 %v1917
  %1970 = vmatprep.subr.bf16.mxu0 0
  %1971 = vmatpush2.bf16.msra.mxu0 %v1916
  %1972 = vmatprep.mubr.bf16.mxu0 %v1810
  %1973 = vmatmul.mubr.bf16.gmra.mxu0 %v1809
  %v1974 = vpop.f32.mrf.mxu0
  %v1975 = vadd.f32 0.0, %v1974
  %v1976 = vpop.f32.mrf.mxu0
  %v1977 = vpop.f32.mrf.mxu0
  %v1978 = vpop.f32.mrf.mxu0
  %1979 = vdwg.mxu0
  %v1980 = vadd.f32 %v1670, %v1975
  %s1981 = scalar_lea.vmem [#allocation2], 48
  %v1982 = vld [vmem:[%s1981] sm:$0xff]
  %v1983 = vld [vmem:[%s1981 + $0x8] sm:$0xff]
  %1984 = vmatprep.subr.bf16.mxu0 %v625
  %1985 = vmatpush1.bf16.msra.mxu0 %v624
  %1986 = vmatprep.subr.bf16.mxu0 %v623
  %1987 = vmatpush1.bf16.msra.mxu0 %v622
  %1988 = vmatprep.subr.bf16.mxu0 %v621
  %1989 = vmatpush1.bf16.msra.mxu0 %v620
  %1990 = vmatprep.subr.bf16.mxu0 %v619
  %1991 = vmatpush1.bf16.msra.mxu0 %v618
  %1992 = vmatprep.subr.bf16.mxu0 %v617
  %1993 = vmatpush1.bf16.msra.mxu0 %v616
  %1994 = vmatprep.subr.bf16.mxu0 %v615
  %1995 = vmatpush1.bf16.msra.mxu0 %v614
  %1996 = vmatprep.subr.bf16.mxu0 %v613
  %1997 = vmatpush1.bf16.msra.mxu0 %v612
  %1998 = vmatprep.subr.bf16.mxu0 %v611
  %1999 = vmatpush1.bf16.msra.mxu0 %v610
  %2000 = vmatprep.subr.bf16.mxu0 %v641
  %2001 = vmatpush2.bf16.msra.mxu0 %v640
  %2002 = vmatprep.subr.bf16.mxu0 %v639
  %2003 = vmatpush2.bf16.msra.mxu0 %v638
  %2004 = vmatprep.subr.bf16.mxu0 %v637
  %2005 = vmatpush2.bf16.msra.mxu0 %v636
  %2006 = vmatprep.subr.bf16.mxu0 %v635
  %2007 = vmatpush2.bf16.msra.mxu0 %v634
  %2008 = vmatprep.subr.bf16.mxu0 %v633
  %2009 = vmatpush2.bf16.msra.mxu0 %v632
  %2010 = vmatprep.subr.bf16.mxu0 %v631
  %2011 = vmatpush2.bf16.msra.mxu0 %v630
  %2012 = vmatprep.subr.bf16.mxu0 %v629
  %2013 = vmatpush2.bf16.msra.mxu0 %v628
  %2014 = vmatprep.subr.bf16.mxu0 %v627
  %2015 = vmatpush2.bf16.msra.mxu0 %v626
  %2016 = vmatprep.mubr.bf16.mxu0 %v1724
  %2017 = vmatmul.mubr.bf16.gmra.mxu0 %v1723
  %v2018 = vpop.f32.mrf.mxu0
  %v2019 = vadd.f32 0.0, %v2018
  %v2020 = vpop.f32.mrf.mxu0
  %v2021 = vadd.f32 0.0, %v2020
  %v2022 = vpop.f32.mrf.mxu0
  %v2023 = vpop.f32.mrf.mxu0
  %2024 = vdwg.mxu0
  %v2025 = vadd.f32 %v1982, %v2019
  %v2026 = vadd.f32 %v1983, %v2021
  %v2027 = vtanh.pop %v2025
  %v2028 = vtanh.pop %v2026
  %v2029 = vpack.c.bf16 %v2027, %v2027
  %v2030 = vpack.c.bf16 %v2028, %v2028
  %2031 = vmatprep.subr.bf16.mxu0 %v1003
  %2032 = vmatpush1.bf16.msra.mxu0 %v1002
  %2033 = vmatprep.subr.bf16.mxu0 %v1001
  %2034 = vmatpush1.bf16.msra.mxu0 %v1000
  %2035 = vmatprep.subr.bf16.mxu0 %v999
  %2036 = vmatpush1.bf16.msra.mxu0 %v998
  %2037 = vmatprep.subr.bf16.mxu0 %v997
  %2038 = vmatpush1.bf16.msra.mxu0 %v996
  %2039 = vmatprep.subr.bf16.mxu0 %v995
  %2040 = vmatpush1.bf16.msra.mxu0 %v994
  %2041 = vmatprep.subr.bf16.mxu0 %v993
  %2042 = vmatpush1.bf16.msra.mxu0 %v992
  %2043 = vmatprep.subr.bf16.mxu0 %v991
  %2044 = vmatpush1.bf16.msra.mxu0 %v990
  %2045 = vmatprep.subr.bf16.mxu0 %v989
  %2046 = vmatpush1.bf16.msra.mxu0 %v988
  %2047 = vmatprep.subr.bf16.mxu0 %v1019
  %2048 = vmatpush2.bf16.msra.mxu0 %v1018
  %2049 = vmatprep.subr.bf16.mxu0 %v1017
  %2050 = vmatpush2.bf16.msra.mxu0 %v1016
  %2051 = vmatprep.subr.bf16.mxu0 %v1015
  %2052 = vmatpush2.bf16.msra.mxu0 %v1014
  %2053 = vmatprep.subr.bf16.mxu0 %v1013
  %2054 = vmatpush2.bf16.msra.mxu0 %v1012
  %2055 = vmatprep.subr.bf16.mxu0 %v1011
  %2056 = vmatpush2.bf16.msra.mxu0 %v1010
  %2057 = vmatprep.subr.bf16.mxu0 %v1009
  %2058 = vmatpush2.bf16.msra.mxu0 %v1008
  %2059 = vmatprep.subr.bf16.mxu0 %v1007
  %2060 = vmatpush2.bf16.msra.mxu0 %v1006
  %2061 = vmatprep.subr.bf16.mxu0 %v1005
  %2062 = vmatpush2.bf16.msra.mxu0 %v1004
  %2063 = vmatprep.mubr.bf16.mxu0 %v2030
  %2064 = vmatmul.mubr.bf16.gmra.mxu0 %v2029
  %v2065 = vpop.f32.mrf.mxu0
  %v2066 = vadd.f32 %v789, %v2065
  %v2067 = vpop.f32.mrf.mxu0
  %v2068 = vadd.f32 %v793, %v2067
  %v2069 = vpop.f32.mrf.mxu0
  %v2070 = vpop.f32.mrf.mxu0
  %2071 = vdwg.mxu0
  %2072 = vmatprep.subr.bf16.mxu0 %v1035
  %2073 = vmatpush1.bf16.msra.mxu0 %v1034
  %2074 = vmatprep.subr.bf16.mxu0 %v1033
  %2075 = vmatpush1.bf16.msra.mxu0 %v1032
  %2076 = vmatprep.subr.bf16.mxu0 %v1031
  %2077 = vmatpush1.bf16.msra.mxu0 %v1030
  %2078 = vmatprep.subr.bf16.mxu0 %v1029
  %2079 = vmatpush1.bf16.msra.mxu0 %v1028
  %2080 = vmatprep.subr.bf16.mxu0 %v1027
  %2081 = vmatpush1.bf16.msra.mxu0 %v1026
  %2082 = vmatprep.subr.bf16.mxu0 %v1025
  %2083 = vmatpush1.bf16.msra.mxu0 %v1024
  %2084 = vmatprep.subr.bf16.mxu0 %v1023
  %2085 = vmatpush1.bf16.msra.mxu0 %v1022
  %2086 = vmatprep.subr.bf16.mxu0 %v1021
  %2087 = vmatpush1.bf16.msra.mxu0 %v1020
  %2088 = vmatprep.subr.bf16.mxu0 %v1051
  %2089 = vmatpush2.bf16.msra.mxu0 %v1050
  %2090 = vmatprep.subr.bf16.mxu0 %v1049
  %2091 = vmatpush2.bf16.msra.mxu0 %v1048
  %2092 = vmatprep.subr.bf16.mxu0 %v1047
  %2093 = vmatpush2.bf16.msra.mxu0 %v1046
  %2094 = vmatprep.subr.bf16.mxu0 %v1045
  %2095 = vmatpush2.bf16.msra.mxu0 %v1044
  %2096 = vmatprep.subr.bf16.mxu0 %v1043
  %2097 = vmatpush2.bf16.msra.mxu0 %v1042
  %2098 = vmatprep.subr.bf16.mxu0 %v1041
  %2099 = vmatpush2.bf16.msra.mxu0 %v1040
  %2100 = vmatprep.subr.bf16.mxu0 %v1039
  %2101 = vmatpush2.bf16.msra.mxu0 %v1038
  %2102 = vmatprep.subr.bf16.mxu0 %v1037
  %2103 = vmatpush2.bf16.msra.mxu0 %v1036
  %2104 = vmatprep.mubr.bf16.mxu0 %v1810
  %2105 = vmatmul.mubr.bf16.gmra.mxu0 %v1809
  %v2106 = vpop.f32.mrf.mxu0
  %v2107 = vadd.f32 %v2066, %v2106
  %v2108 = vpop.f32.mrf.mxu0
  %v2109 = vadd.f32 %v2068, %v2108
  %v2110 = vpop.f32.mrf.mxu0
  %v2111 = vpop.f32.mrf.mxu0
  %2112 = vdwg.mxu0
  %v2113 = vtanh.pop %v2107
  %v2114 = vtanh.pop %v2109
  %v2115 = vpack.c.bf16 %v2113, %v2113
  %v2116 = vpack.c.bf16 %v2114, %v2114
  %s2117 = scalar_lea.vmem %s6, 384
  %v2118 = vld [vmem:[%s2117] sm:$0xf]
  %v2119 = vld [vmem:[%s2117 + $0x4] sm:$0xf]
  %v2120 = vld [vmem:[%s2117 + $0x8] sm:$0xf]
  %v2121 = vld [vmem:[%s2117 + $0xc] sm:$0xf]
  %v2122 = vld [vmem:[%s2117 + $0x10] sm:$0xf]
  %v2123 = vld [vmem:[%s2117 + $0x14] sm:$0xf]
  %v2124 = vld [vmem:[%s2117 + $0x18] sm:$0xf]
  %v2125 = vld [vmem:[%s2117 + $0x1c] sm:$0xf]
  %v2126 = vld [vmem:[%s2117 + $0x20] sm:$0xf]
  %v2127 = vld [vmem:[%s2117 + $0x24] sm:$0xf]
  %v2128 = vld [vmem:[%s2117 + $0x28] sm:$0xf]
  %v2129 = vld [vmem:[%s2117 + $0x2c] sm:$0xf]
  %v2130 = vld [vmem:[%s2117 + $0x30] sm:$0xf]
  %v2131 = vld [vmem:[%s2117 + $0x34] sm:$0xf]
  %v2132 = vld [vmem:[%s2117 + $0x38] sm:$0xf]
  %v2133 = vld [vmem:[%s2117 + $0x3c] sm:$0xf]
  %v2134 = vld [vmem:[%s2117 + $0x40] sm:$0xf]
  %v2135 = vld [vmem:[%s2117 + $0x44] sm:$0xf]
  %v2136 = vld [vmem:[%s2117 + $0x48] sm:$0xf]
  %v2137 = vld [vmem:[%s2117 + $0x4c] sm:$0xf]
  %v2138 = vld [vmem:[%s2117 + $0x50] sm:$0xf]
  %v2139 = vld [vmem:[%s2117 + $0x54] sm:$0xf]
  %v2140 = vld [vmem:[%s2117 + $0x58] sm:$0xf]
  %v2141 = vld [vmem:[%s2117 + $0x5c] sm:$0xf]
  %v2142 = vld [vmem:[%s2117 + $0x60] sm:$0xf]
  %v2143 = vld [vmem:[%s2117 + $0x64] sm:$0xf]
  %v2144 = vld [vmem:[%s2117 + $0x68] sm:$0xf]
  %v2145 = vld [vmem:[%s2117 + $0x6c] sm:$0xf]
  %v2146 = vld [vmem:[%s2117 + $0x70] sm:$0xf]
  %v2147 = vld [vmem:[%s2117 + $0x74] sm:$0xf]
  %v2148 = vld [vmem:[%s2117 + $0x78] sm:$0xf]
  %v2149 = vld [vmem:[%s2117 + $0x7c] sm:$0xf]
  %v2182 = vunpack.c.l.b16 %v2118
  %v2183 = vunpack.c.l.b16 %v2119
  %v2184 = vunpack.c.l.b16 %v2120
  %v2185 = vunpack.c.l.b16 %v2121
  %v2186 = vunpack.c.l.b16 %v2122
  %v2187 = vunpack.c.l.b16 %v2123
  %v2188 = vunpack.c.l.b16 %v2124
  %v2189 = vunpack.c.l.b16 %v2125
  %v2190 = vunpack.c.l.b16 %v2126
  %v2191 = vunpack.c.l.b16 %v2127
  %v2192 = vunpack.c.l.b16 %v2128
  %v2193 = vunpack.c.l.b16 %v2129
  %v2194 = vunpack.c.l.b16 %v2130
  %v2195 = vunpack.c.l.b16 %v2131
  %v2196 = vunpack.c.l.b16 %v2132
  %v2197 = vunpack.c.l.b16 %v2133
  %v2198 = vunpack.c.l.b16 %v2134
  %v2199 = vunpack.c.l.b16 %v2135
  %v2200 = vunpack.c.l.b16 %v2136
  %v2201 = vunpack.c.l.b16 %v2137
  %v2202 = vunpack.c.l.b16 %v2138
  %v2203 = vunpack.c.l.b16 %v2139
  %v2204 = vunpack.c.l.b16 %v2140
  %v2205 = vunpack.c.l.b16 %v2141
  %v2206 = vunpack.c.l.b16 %v2142
  %v2207 = vunpack.c.l.b16 %v2143
  %v2208 = vunpack.c.l.b16 %v2144
  %v2209 = vunpack.c.l.b16 %v2145
  %v2210 = vunpack.c.l.b16 %v2146
  %v2211 = vunpack.c.l.b16 %v2147
  %v2212 = vunpack.c.l.b16 %v2148
  %v2213 = vunpack.c.l.b16 %v2149
  %v2214 = vpack.c.b16 %v2183, %v2182
  %v2215 = vpack.c.b16 %v2185, %v2184
  %v2216 = vpack.c.b16 %v2187, %v2186
  %v2217 = vpack.c.b16 %v2189, %v2188
  %v2218 = vpack.c.b16 %v2191, %v2190
  %v2219 = vpack.c.b16 %v2193, %v2192
  %v2220 = vpack.c.b16 %v2195, %v2194
  %v2221 = vpack.c.b16 %v2197, %v2196
  %v2222 = vpack.c.b16 %v2199, %v2198
  %v2223 = vpack.c.b16 %v2201, %v2200
  %v2224 = vpack.c.b16 %v2203, %v2202
  %v2225 = vpack.c.b16 %v2205, %v2204
  %v2226 = vpack.c.b16 %v2207, %v2206
  %v2227 = vpack.c.b16 %v2209, %v2208
  %v2228 = vpack.c.b16 %v2211, %v2210
  %v2229 = vpack.c.b16 %v2213, %v2212
  %2246 = vmatprep.subr.bf16.mxu0 0
  %2247 = vmatpush1.bf16.msra.mxu0 %v2221
  %2248 = vmatprep.subr.bf16.mxu0 0
  %2249 = vmatpush1.bf16.msra.mxu0 %v2220
  %2250 = vmatprep.subr.bf16.mxu0 0
  %2251 = vmatpush1.bf16.msra.mxu0 %v2219
  %2252 = vmatprep.subr.bf16.mxu0 0
  %2253 = vmatpush1.bf16.msra.mxu0 %v2218
  %2254 = vmatprep.subr.bf16.mxu0 0
  %2255 = vmatpush1.bf16.msra.mxu0 %v2217
  %2256 = vmatprep.subr.bf16.mxu0 0
  %2257 = vmatpush1.bf16.msra.mxu0 %v2216
  %2258 = vmatprep.subr.bf16.mxu0 0
  %2259 = vmatpush1.bf16.msra.mxu0 %v2215
  %2260 = vmatprep.subr.bf16.mxu0 0
  %2261 = vmatpush1.bf16.msra.mxu0 %v2214
  %2262 = vmatprep.subr.bf16.mxu0 0
  %2263 = vmatpush2.bf16.msra.mxu0 %v2229
  %2264 = vmatprep.subr.bf16.mxu0 0
  %2265 = vmatpush2.bf16.msra.mxu0 %v2228
  %2266 = vmatprep.subr.bf16.mxu0 0
  %2267 = vmatpush2.bf16.msra.mxu0 %v2227
  %2268 = vmatprep.subr.bf16.mxu0 0
  %2269 = vmatpush2.bf16.msra.mxu0 %v2226
  %2270 = vmatprep.subr.bf16.mxu0 0
  %2271 = vmatpush2.bf16.msra.mxu0 %v2225
  %2272 = vmatprep.subr.bf16.mxu0 0
  %2273 = vmatpush2.bf16.msra.mxu0 %v2224
  %2274 = vmatprep.subr.bf16.mxu0 0
  %2275 = vmatpush2.bf16.msra.mxu0 %v2223
  %2276 = vmatprep.subr.bf16.mxu0 0
  %2277 = vmatpush2.bf16.msra.mxu0 %v2222
  %2278 = vmatprep.mubr.bf16.mxu0 %v2116
  %2279 = vmatmul.mubr.bf16.gmra.mxu0 %v2115
  %v2280 = vpop.f32.mrf.mxu0
  %v2281 = vadd.f32 0.0, %v2280
  %v2282 = vpop.f32.mrf.mxu0
  %v2283 = vpop.f32.mrf.mxu0
  %v2284 = vpop.f32.mrf.mxu0
  %2285 = vdwg.mxu0
  %v2286 = vadd.f32 %v1980, %v2281
  %s2287 = scalar_lea.vmem [#allocation2], 64
  %v2288 = vld [vmem:[%s2287] sm:$0xff]
  %v2289 = vld [vmem:[%s2287 + $0x8] sm:$0xff]
  %2290 = vmatprep.subr.bf16.mxu0 %v625
  %2291 = vmatpush1.bf16.msra.mxu0 %v624
  %2292 = vmatprep.subr.bf16.mxu0 %v623
  %2293 = vmatpush1.bf16.msra.mxu0 %v622
  %2294 = vmatprep.subr.bf16.mxu0 %v621
  %2295 = vmatpush1.bf16.msra.mxu0 %v620
  %2296 = vmatprep.subr.bf16.mxu0 %v619
  %2297 = vmatpush1.bf16.msra.mxu0 %v618
  %2298 = vmatprep.subr.bf16.mxu0 %v617
  %2299 = vmatpush1.bf16.msra.mxu0 %v616
  %2300 = vmatprep.subr.bf16.mxu0 %v615
  %2301 = vmatpush1.bf16.msra.mxu0 %v614
  %2302 = vmatprep.subr.bf16.mxu0 %v613
  %2303 = vmatpush1.bf16.msra.mxu0 %v612
  %2304 = vmatprep.subr.bf16.mxu0 %v611
  %2305 = vmatpush1.bf16.msra.mxu0 %v610
  %2306 = vmatprep.subr.bf16.mxu0 %v641
  %2307 = vmatpush2.bf16.msra.mxu0 %v640
  %2308 = vmatprep.subr.bf16.mxu0 %v639
  %2309 = vmatpush2.bf16.msra.mxu0 %v638
  %2310 = vmatprep.subr.bf16.mxu0 %v637
  %2311 = vmatpush2.bf16.msra.mxu0 %v636
  %2312 = vmatprep.subr.bf16.mxu0 %v635
  %2313 = vmatpush2.bf16.msra.mxu0 %v634
  %2314 = vmatprep.subr.bf16.mxu0 %v633
  %2315 = vmatpush2.bf16.msra.mxu0 %v632
  %2316 = vmatprep.subr.bf16.mxu0 %v631
  %2317 = vmatpush2.bf16.msra.mxu0 %v630
  %2318 = vmatprep.subr.bf16.mxu0 %v629
  %2319 = vmatpush2.bf16.msra.mxu0 %v628
  %2320 = vmatprep.subr.bf16.mxu0 %v627
  %2321 = vmatpush2.bf16.msra.mxu0 %v626
  %2322 = vmatprep.mubr.bf16.mxu0 %v2030
  %2323 = vmatmul.mubr.bf16.gmra.mxu0 %v2029
  %v2324 = vpop.f32.mrf.mxu0
  %v2325 = vadd.f32 0.0, %v2324
  %v2326 = vpop.f32.mrf.mxu0
  %v2327 = vadd.f32 0.0, %v2326
  %v2328 = vpop.f32.mrf.mxu0
  %v2329 = vpop.f32.mrf.mxu0
  %2330 = vdwg.mxu0
  %v2331 = vadd.f32 %v2288, %v2325
  %v2332 = vadd.f32 %v2289, %v2327
  %v2333 = vtanh.pop %v2331
  %v2334 = vtanh.pop %v2332
  %v2335 = vpack.c.bf16 %v2333, %v2333
  %v2336 = vpack.c.bf16 %v2334, %v2334
  %2337 = vmatprep.subr.bf16.mxu0 %v1003
  %2338 = vmatpush1.bf16.msra.mxu0 %v1002
  %2339 = vmatprep.subr.bf16.mxu0 %v1001
  %2340 = vmatpush1.bf16.msra.mxu0 %v1000
  %2341 = vmatprep.subr.bf16.mxu0 %v999
  %2342 = vmatpush1.bf16.msra.mxu0 %v998
  %2343 = vmatprep.subr.bf16.mxu0 %v997
  %2344 = vmatpush1.bf16.msra.mxu0 %v996
  %2345 = vmatprep.subr.bf16.mxu0 %v995
  %2346 = vmatpush1.bf16.msra.mxu0 %v994
  %2347 = vmatprep.subr.bf16.mxu0 %v993
  %2348 = vmatpush1.bf16.msra.mxu0 %v992
  %2349 = vmatprep.subr.bf16.mxu0 %v991
  %2350 = vmatpush1.bf16.msra.mxu0 %v990
  %2351 = vmatprep.subr.bf16.mxu0 %v989
  %2352 = vmatpush1.bf16.msra.mxu0 %v988
  %2353 = vmatprep.subr.bf16.mxu0 %v1019
  %2354 = vmatpush2.bf16.msra.mxu0 %v1018
  %2355 = vmatprep.subr.bf16.mxu0 %v1017
  %2356 = vmatpush2.bf16.msra.mxu0 %v1016
  %2357 = vmatprep.subr.bf16.mxu0 %v1015
  %2358 = vmatpush2.bf16.msra.mxu0 %v1014
  %2359 = vmatprep.subr.bf16.mxu0 %v1013
  %2360 = vmatpush2.bf16.msra.mxu0 %v1012
  %2361 = vmatprep.subr.bf16.mxu0 %v1011
  %2362 = vmatpush2.bf16.msra.mxu0 %v1010
  %2363 = vmatprep.subr.bf16.mxu0 %v1009
  %2364 = vmatpush2.bf16.msra.mxu0 %v1008
  %2365 = vmatprep.subr.bf16.mxu0 %v1007
  %2366 = vmatpush2.bf16.msra.mxu0 %v1006
  %2367 = vmatprep.subr.bf16.mxu0 %v1005
  %2368 = vmatpush2.bf16.msra.mxu0 %v1004
  %2369 = vmatprep.mubr.bf16.mxu0 %v2336
  %2370 = vmatmul.mubr.bf16.gmra.mxu0 %v2335
  %v2371 = vpop.f32.mrf.mxu0
  %v2372 = vadd.f32 %v789, %v2371
  %v2373 = vpop.f32.mrf.mxu0
  %v2374 = vadd.f32 %v793, %v2373
  %v2375 = vpop.f32.mrf.mxu0
  %v2376 = vpop.f32.mrf.mxu0
  %2377 = vdwg.mxu0
  %2378 = vmatprep.subr.bf16.mxu0 %v1035
  %2379 = vmatpush1.bf16.msra.mxu0 %v1034
  %2380 = vmatprep.subr.bf16.mxu0 %v1033
  %2381 = vmatpush1.bf16.msra.mxu0 %v1032
  %2382 = vmatprep.subr.bf16.mxu0 %v1031
  %2383 = vmatpush1.bf16.msra.mxu0 %v1030
  %2384 = vmatprep.subr.bf16.mxu0 %v1029
  %2385 = vmatpush1.bf16.msra.mxu0 %v1028
  %2386 = vmatprep.subr.bf16.mxu0 %v1027
  %2387 = vmatpush1.bf16.msra.mxu0 %v1026
  %2388 = vmatprep.subr.bf16.mxu0 %v1025
  %2389 = vmatpush1.bf16.msra.mxu0 %v1024
  %2390 = vmatprep.subr.bf16.mxu0 %v1023
  %2391 = vmatpush1.bf16.msra.mxu0 %v1022
  %2392 = vmatprep.subr.bf16.mxu0 %v1021
  %2393 = vmatpush1.bf16.msra.mxu0 %v1020
  %2394 = vmatprep.subr.bf16.mxu0 %v1051
  %2395 = vmatpush2.bf16.msra.mxu0 %v1050
  %2396 = vmatprep.subr.bf16.mxu0 %v1049
  %2397 = vmatpush2.bf16.msra.mxu0 %v1048
  %2398 = vmatprep.subr.bf16.mxu0 %v1047
  %2399 = vmatpush2.bf16.msra.mxu0 %v1046
  %2400 = vmatprep.subr.bf16.mxu0 %v1045
  %2401 = vmatpush2.bf16.msra.mxu0 %v1044
  %2402 = vmatprep.subr.bf16.mxu0 %v1043
  %2403 = vmatpush2.bf16.msra.mxu0 %v1042
  %2404 = vmatprep.subr.bf16.mxu0 %v1041
  %2405 = vmatpush2.bf16.msra.mxu0 %v1040
  %2406 = vmatprep.subr.bf16.mxu0 %v1039
  %2407 = vmatpush2.bf16.msra.mxu0 %v1038
  %2408 = vmatprep.subr.bf16.mxu0 %v1037
  %2409 = vmatpush2.bf16.msra.mxu0 %v1036
  %2410 = vmatprep.mubr.bf16.mxu0 %v2116
  %2411 = vmatmul.mubr.bf16.gmra.mxu0 %v2115
  %v2412 = vpop.f32.mrf.mxu0
  %v2413 = vadd.f32 %v2372, %v2412
  %v2414 = vpop.f32.mrf.mxu0
  %v2415 = vadd.f32 %v2374, %v2414
  %v2416 = vpop.f32.mrf.mxu0
  %v2417 = vpop.f32.mrf.mxu0
  %2418 = vdwg.mxu0
  %v2419 = vtanh.pop %v2413
  %v2420 = vtanh.pop %v2415
  %v2421 = vpack.c.bf16 %v2419, %v2419
  %v2422 = vpack.c.bf16 %v2420, %v2420
  %s2423 = scalar_lea.vmem %s6, 512
  %v2424 = vld [vmem:[%s2423] sm:$0xf]
  %v2425 = vld [vmem:[%s2423 + $0x4] sm:$0xf]
  %v2426 = vld [vmem:[%s2423 + $0x8] sm:$0xf]
  %v2427 = vld [vmem:[%s2423 + $0xc] sm:$0xf]
  %v2428 = vld [vmem:[%s2423 + $0x10] sm:$0xf]
  %v2429 = vld [vmem:[%s2423 + $0x14] sm:$0xf]
  %v2430 = vld [vmem:[%s2423 + $0x18] sm:$0xf]
  %v2431 = vld [vmem:[%s2423 + $0x1c] sm:$0xf]
  %v2432 = vld [vmem:[%s2423 + $0x20] sm:$0xf]
  %v2433 = vld [vmem:[%s2423 + $0x24] sm:$0xf]
  %v2434 = vld [vmem:[%s2423 + $0x28] sm:$0xf]
  %v2435 = vld [vmem:[%s2423 + $0x2c] sm:$0xf]
  %v2436 = vld [vmem:[%s2423 + $0x30] sm:$0xf]
  %v2437 = vld [vmem:[%s2423 + $0x34] sm:$0xf]
  %v2438 = vld [vmem:[%s2423 + $0x38] sm:$0xf]
  %v2439 = vld [vmem:[%s2423 + $0x3c] sm:$0xf]
  %v2440 = vld [vmem:[%s2423 + $0x40] sm:$0xf]
  %v2441 = vld [vmem:[%s2423 + $0x44] sm:$0xf]
  %v2442 = vld [vmem:[%s2423 + $0x48] sm:$0xf]
  %v2443 = vld [vmem:[%s2423 + $0x4c] sm:$0xf]
  %v2444 = vld [vmem:[%s2423 + $0x50] sm:$0xf]
  %v2445 = vld [vmem:[%s2423 + $0x54] sm:$0xf]
  %v2446 = vld [vmem:[%s2423 + $0x58] sm:$0xf]
  %v2447 = vld [vmem:[%s2423 + $0x5c] sm:$0xf]
  %v2448 = vld [vmem:[%s2423 + $0x60] sm:$0xf]
  %v2449 = vld [vmem:[%s2423 + $0x64] sm:$0xf]
  %v2450 = vld [vmem:[%s2423 + $0x68] sm:$0xf]
  %v2451 = vld [vmem:[%s2423 + $0x6c] sm:$0xf]
  %v2452 = vld [vmem:[%s2423 + $0x70] sm:$0xf]
  %v2453 = vld [vmem:[%s2423 + $0x74] sm:$0xf]
  %v2454 = vld [vmem:[%s2423 + $0x78] sm:$0xf]
  %v2455 = vld [vmem:[%s2423 + $0x7c] sm:$0xf]
  %v2488 = vunpack.c.l.b16 %v2424
  %v2489 = vunpack.c.l.b16 %v2425
  %v2490 = vunpack.c.l.b16 %v2426
  %v2491 = vunpack.c.l.b16 %v2427
  %v2492 = vunpack.c.l.b16 %v2428
  %v2493 = vunpack.c.l.b16 %v2429
  %v2494 = vunpack.c.l.b16 %v2430
  %v2495 = vunpack.c.l.b16 %v2431
  %v2496 = vunpack.c.l.b16 %v2432
  %v2497 = vunpack.c.l.b16 %v2433
  %v2498 = vunpack.c.l.b16 %v2434
  %v2499 = vunpack.c.l.b16 %v2435
  %v2500 = vunpack.c.l.b16 %v2436
  %v2501 = vunpack.c.l.b16 %v2437
  %v2502 = vunpack.c.l.b16 %v2438
  %v2503 = vunpack.c.l.b16 %v2439
  %v2504 = vunpack.c.l.b16 %v2440
  %v2505 = vunpack.c.l.b16 %v2441
  %v2506 = vunpack.c.l.b16 %v2442
  %v2507 = vunpack.c.l.b16 %v2443
  %v2508 = vunpack.c.l.b16 %v2444
  %v2509 = vunpack.c.l.b16 %v2445
  %v2510 = vunpack.c.l.b16 %v2446
  %v2511 = vunpack.c.l.b16 %v2447
  %v2512 = vunpack.c.l.b16 %v2448
  %v2513 = vunpack.c.l.b16 %v2449
  %v2514 = vunpack.c.l.b16 %v2450
  %v2515 = vunpack.c.l.b16 %v2451
  %v2516 = vunpack.c.l.b16 %v2452
  %v2517 = vunpack.c.l.b16 %v2453
  %v2518 = vunpack.c.l.b16 %v2454
  %v2519 = vunpack.c.l.b16 %v2455
  %v2520 = vpack.c.b16 %v2489, %v2488
  %v2521 = vpack.c.b16 %v2491, %v2490
  %v2522 = vpack.c.b16 %v2493, %v2492
  %v2523 = vpack.c.b16 %v2495, %v2494
  %v2524 = vpack.c.b16 %v2497, %v2496
  %v2525 = vpack.c.b16 %v2499, %v2498
  %v2526 = vpack.c.b16 %v2501, %v2500
  %v2527 = vpack.c.b16 %v2503, %v2502
  %v2528 = vpack.c.b16 %v2505, %v2504
  %v2529 = vpack.c.b16 %v2507, %v2506
  %v2530 = vpack.c.b16 %v2509, %v2508
  %v2531 = vpack.c.b16 %v2511, %v2510
  %v2532 = vpack.c.b16 %v2513, %v2512
  %v2533 = vpack.c.b16 %v2515, %v2514
  %v2534 = vpack.c.b16 %v2517, %v2516
  %v2535 = vpack.c.b16 %v2519, %v2518
  %2552 = vmatprep.subr.bf16.mxu0 0
  %2553 = vmatpush1.bf16.msra.mxu0 %v2527
  %2554 = vmatprep.subr.bf16.mxu0 0
  %2555 = vmatpush1.bf16.msra.mxu0 %v2526
  %2556 = vmatprep.subr.bf16.mxu0 0
  %2557 = vmatpush1.bf16.msra.mxu0 %v2525
  %2558 = vmatprep.subr.bf16.mxu0 0
  %2559 = vmatpush1.bf16.msra.mxu0 %v2524
  %2560 = vmatprep.subr.bf16.mxu0 0
  %2561 = vmatpush1.bf16.msra.mxu0 %v2523
  %2562 = vmatprep.subr.bf16.mxu0 0
  %2563 = vmatpush1.bf16.msra.mxu0 %v2522
  %2564 = vmatprep.subr.bf16.mxu0 0
  %2565 = vmatpush1.bf16.msra.mxu0 %v2521
  %2566 = vmatprep.subr.bf16.mxu0 0
  %2567 = vmatpush1.bf16.msra.mxu0 %v2520
  %2568 = vmatprep.subr.bf16.mxu0 0
  %2569 = vmatpush2.bf16.msra.mxu0 %v2535
  %2570 = vmatprep.subr.bf16.mxu0 0
  %2571 = vmatpush2.bf16.msra.mxu0 %v2534
  %2572 = vmatprep.subr.bf16.mxu0 0
  %2573 = vmatpush2.bf16.msra.mxu0 %v2533
  %2574 = vmatprep.subr.bf16.mxu0 0
  %2575 = vmatpush2.bf16.msra.mxu0 %v2532
  %2576 = vmatprep.subr.bf16.mxu0 0
  %2577 = vmatpush2.bf16.msra.mxu0 %v2531
  %2578 = vmatprep.subr.bf16.mxu0 0
  %2579 = vmatpush2.bf16.msra.mxu0 %v2530
  %2580 = vmatprep.subr.bf16.mxu0 0
  %2581 = vmatpush2.bf16.msra.mxu0 %v2529
  %2582 = vmatprep.subr.bf16.mxu0 0
  %2583 = vmatpush2.bf16.msra.mxu0 %v2528
  %2584 = vmatprep.mubr.bf16.mxu0 %v2422
  %2585 = vmatmul.mubr.bf16.gmra.mxu0 %v2421
  %v2586 = vpop.f32.mrf.mxu0
  %v2587 = vadd.f32 0.0, %v2586
  %v2588 = vpop.f32.mrf.mxu0
  %v2589 = vpop.f32.mrf.mxu0
  %v2590 = vpop.f32.mrf.mxu0
  %2591 = vdwg.mxu0
  %v2592 = vadd.f32 %v2286, %v2587
  %s2593 = scalar_lea.vmem [#allocation2], 80
  %v2594 = vld [vmem:[%s2593] sm:$0xff]
  %v2595 = vld [vmem:[%s2593 + $0x8] sm:$0xff]
  %2596 = vmatprep.subr.bf16.mxu0 %v625
  %2597 = vmatpush1.bf16.msra.mxu0 %v624
  %2598 = vmatprep.subr.bf16.mxu0 %v623
  %2599 = vmatpush1.bf16.msra.mxu0 %v622
  %2600 = vmatprep.subr.bf16.mxu0 %v621
  %2601 = vmatpush1.bf16.msra.mxu0 %v620
  %2602 = vmatprep.subr.bf16.mxu0 %v619
  %2603 = vmatpush1.bf16.msra.mxu0 %v618
  %2604 = vmatprep.subr.bf16.mxu0 %v617
  %2605 = vmatpush1.bf16.msra.mxu0 %v616
  %2606 = vmatprep.subr.bf16.mxu0 %v615
  %2607 = vmatpush1.bf16.msra.mxu0 %v614
  %2608 = vmatprep.subr.bf16.mxu0 %v613
  %2609 = vmatpush1.bf16.msra.mxu0 %v612
  %2610 = vmatprep.subr.bf16.mxu0 %v611
  %2611 = vmatpush1.bf16.msra.mxu0 %v610
  %2612 = vmatprep.subr.bf16.mxu0 %v641
  %2613 = vmatpush2.bf16.msra.mxu0 %v640
  %2614 = vmatprep.subr.bf16.mxu0 %v639
  %2615 = vmatpush2.bf16.msra.mxu0 %v638
  %2616 = vmatprep.subr.bf16.mxu0 %v637
  %2617 = vmatpush2.bf16.msra.mxu0 %v636
  %2618 = vmatprep.subr.bf16.mxu0 %v635
  %2619 = vmatpush2.bf16.msra.mxu0 %v634
  %2620 = vmatprep.subr.bf16.mxu0 %v633
  %2621 = vmatpush2.bf16.msra.mxu0 %v632
  %2622 = vmatprep.subr.bf16.mxu0 %v631
  %2623 = vmatpush2.bf16.msra.mxu0 %v630
  %2624 = vmatprep.subr.bf16.mxu0 %v629
  %2625 = vmatpush2.bf16.msra.mxu0 %v628
  %2626 = vmatprep.subr.bf16.mxu0 %v627
  %2627 = vmatpush2.bf16.msra.mxu0 %v626
  %2628 = vmatprep.mubr.bf16.mxu0 %v2336
  %2629 = vmatmul.mubr.bf16.gmra.mxu0 %v2335
  %v2630 = vpop.f32.mrf.mxu0
  %v2631 = vadd.f32 0.0, %v2630
  %v2632 = vpop.f32.mrf.mxu0
  %v2633 = vadd.f32 0.0, %v2632
  %v2634 = vpop.f32.mrf.mxu0
  %v2635 = vpop.f32.mrf.mxu0
  %2636 = vdwg.mxu0
  %v2637 = vadd.f32 %v2594, %v2631
  %v2638 = vadd.f32 %v2595, %v2633
  %v2639 = vtanh.pop %v2637
  %v2640 = vtanh.pop %v2638
  %v2641 = vpack.c.bf16 %v2639, %v2639
  %v2642 = vpack.c.bf16 %v2640, %v2640
  %2643 = vmatprep.subr.bf16.mxu0 %v1003
  %2644 = vmatpush1.bf16.msra.mxu0 %v1002
  %2645 = vmatprep.subr.bf16.mxu0 %v1001
  %2646 = vmatpush1.bf16.msra.mxu0 %v1000
  %2647 = vmatprep.subr.bf16.mxu0 %v999
  %2648 = vmatpush1.bf16.msra.mxu0 %v998
  %2649 = vmatprep.subr.bf16.mxu0 %v997
  %2650 = vmatpush1.bf16.msra.mxu0 %v996
  %2651 = vmatprep.subr.bf16.mxu0 %v995
  %2652 = vmatpush1.bf16.msra.mxu0 %v994
  %2653 = vmatprep.subr.bf16.mxu0 %v993
  %2654 = vmatpush1.bf16.msra.mxu0 %v992
  %2655 = vmatprep.subr.bf16.mxu0 %v991
  %2656 = vmatpush1.bf16.msra.mxu0 %v990
  %2657 = vmatprep.subr.bf16.mxu0 %v989
  %2658 = vmatpush1.bf16.msra.mxu0 %v988
  %2659 = vmatprep.subr.bf16.mxu0 %v1019
  %2660 = vmatpush2.bf16.msra.mxu0 %v1018
  %2661 = vmatprep.subr.bf16.mxu0 %v1017
  %2662 = vmatpush2.bf16.msra.mxu0 %v1016
  %2663 = vmatprep.subr.bf16.mxu0 %v1015
  %2664 = vmatpush2.bf16.msra.mxu0 %v1014
  %2665 = vmatprep.subr.bf16.mxu0 %v1013
  %2666 = vmatpush2.bf16.msra.mxu0 %v1012
  %2667 = vmatprep.subr.bf16.mxu0 %v1011
  %2668 = vmatpush2.bf16.msra.mxu0 %v1010
  %2669 = vmatprep.subr.bf16.mxu0 %v1009
  %2670 = vmatpush2.bf16.msra.mxu0 %v1008
  %2671 = vmatprep.subr.bf16.mxu0 %v1007
  %2672 = vmatpush2.bf16.msra.mxu0 %v1006
  %2673 = vmatprep.subr.bf16.mxu0 %v1005
  %2674 = vmatpush2.bf16.msra.mxu0 %v1004
  %2675 = vmatprep.mubr.bf16.mxu0 %v2642
  %2676 = vmatmul.mubr.bf16.gmra.mxu0 %v2641
  %v2677 = vpop.f32.mrf.mxu0
  %v2678 = vadd.f32 %v789, %v2677
  %v2679 = vpop.f32.mrf.mxu0
  %v2680 = vadd.f32 %v793, %v2679
  %v2681 = vpop.f32.mrf.mxu0
  %v2682 = vpop.f32.mrf.mxu0
  %2683 = vdwg.mxu0
  %2684 = vmatprep.subr.bf16.mxu0 %v1035
  %2685 = vmatpush1.bf16.msra.mxu0 %v1034
  %2686 = vmatprep.subr.bf16.mxu0 %v1033
  %2687 = vmatpush1.bf16.msra.mxu0 %v1032
  %2688 = vmatprep.subr.bf16.mxu0 %v1031
  %2689 = vmatpush1.bf16.msra.mxu0 %v1030
  %2690 = vmatprep.subr.bf16.mxu0 %v1029
  %2691 = vmatpush1.bf16.msra.mxu0 %v1028
  %2692 = vmatprep.subr.bf16.mxu0 %v1027
  %2693 = vmatpush1.bf16.msra.mxu0 %v1026
  %2694 = vmatprep.subr.bf16.mxu0 %v1025
  %2695 = vmatpush1.bf16.msra.mxu0 %v1024
  %2696 = vmatprep.subr.bf16.mxu0 %v1023
  %2697 = vmatpush1.bf16.msra.mxu0 %v1022
  %2698 = vmatprep.subr.bf16.mxu0 %v1021
  %2699 = vmatpush1.bf16.msra.mxu0 %v1020
  %2700 = vmatprep.subr.bf16.mxu0 %v1051
  %2701 = vmatpush2.bf16.msra.mxu0 %v1050
  %2702 = vmatprep.subr.bf16.mxu0 %v1049
  %2703 = vmatpush2.bf16.msra.mxu0 %v1048
  %2704 = vmatprep.subr.bf16.mxu0 %v1047
  %2705 = vmatpush2.bf16.msra.mxu0 %v1046
  %2706 = vmatprep.subr.bf16.mxu0 %v1045
  %2707 = vmatpush2.bf16.msra.mxu0 %v1044
  %2708 = vmatprep.subr.bf16.mxu0 %v1043
  %2709 = vmatpush2.bf16.msra.mxu0 %v1042
  %2710 = vmatprep.subr.bf16.mxu0 %v1041
  %2711 = vmatpush2.bf16.msra.mxu0 %v1040
  %2712 = vmatprep.subr.bf16.mxu0 %v1039
  %2713 = vmatpush2.bf16.msra.mxu0 %v1038
  %2714 = vmatprep.subr.bf16.mxu0 %v1037
  %2715 = vmatpush2.bf16.msra.mxu0 %v1036
  %2716 = vmatprep.mubr.bf16.mxu0 %v2422
  %2717 = vmatmul.mubr.bf16.gmra.mxu0 %v2421
  %v2718 = vpop.f32.mrf.mxu0
  %v2719 = vadd.f32 %v2678, %v2718
  %v2720 = vpop.f32.mrf.mxu0
  %v2721 = vadd.f32 %v2680, %v2720
  %v2722 = vpop.f32.mrf.mxu0
  %v2723 = vpop.f32.mrf.mxu0
  %2724 = vdwg.mxu0
  %v2725 = vtanh.pop %v2719
  %v2726 = vtanh.pop %v2721
  %v2727 = vpack.c.bf16 %v2725, %v2725
  %v2728 = vpack.c.bf16 %v2726, %v2726
  %s2729 = scalar_lea.vmem %s6, 640
  %v2730 = vld [vmem:[%s2729] sm:$0xf]
  %v2731 = vld [vmem:[%s2729 + $0x4] sm:$0xf]
  %v2732 = vld [vmem:[%s2729 + $0x8] sm:$0xf]
  %v2733 = vld [vmem:[%s2729 + $0xc] sm:$0xf]
  %v2734 = vld [vmem:[%s2729 + $0x10] sm:$0xf]
  %v2735 = vld [vmem:[%s2729 + $0x14] sm:$0xf]
  %v2736 = vld [vmem:[%s2729 + $0x18] sm:$0xf]
  %v2737 = vld [vmem:[%s2729 + $0x1c] sm:$0xf]
  %v2738 = vld [vmem:[%s2729 + $0x20] sm:$0xf]
  %v2739 = vld [vmem:[%s2729 + $0x24] sm:$0xf]
  %v2740 = vld [vmem:[%s2729 + $0x28] sm:$0xf]
  %v2741 = vld [vmem:[%s2729 + $0x2c] sm:$0xf]
  %v2742 = vld [vmem:[%s2729 + $0x30] sm:$0xf]
  %v2743 = vld [vmem:[%s2729 + $0x34] sm:$0xf]
  %v2744 = vld [vmem:[%s2729 + $0x38] sm:$0xf]
  %v2745 = vld [vmem:[%s2729 + $0x3c] sm:$0xf]
  %v2746 = vld [vmem:[%s2729 + $0x40] sm:$0xf]
  %v2747 = vld [vmem:[%s2729 + $0x44] sm:$0xf]
  %v2748 = vld [vmem:[%s2729 + $0x48] sm:$0xf]
  %v2749 = vld [vmem:[%s2729 + $0x4c] sm:$0xf]
  %v2750 = vld [vmem:[%s2729 + $0x50] sm:$0xf]
  %v2751 = vld [vmem:[%s2729 + $0x54] sm:$0xf]
  %v2752 = vld [vmem:[%s2729 + $0x58] sm:$0xf]
  %v2753 = vld [vmem:[%s2729 + $0x5c] sm:$0xf]
  %v2754 = vld [vmem:[%s2729 + $0x60] sm:$0xf]
  %v2755 = vld [vmem:[%s2729 + $0x64] sm:$0xf]
  %v2756 = vld [vmem:[%s2729 + $0x68] sm:$0xf]
  %v2757 = vld [vmem:[%s2729 + $0x6c] sm:$0xf]
  %v2758 = vld [vmem:[%s2729 + $0x70] sm:$0xf]
  %v2759 = vld [vmem:[%s2729 + $0x74] sm:$0xf]
  %v2760 = vld [vmem:[%s2729 + $0x78] sm:$0xf]
  %v2761 = vld [vmem:[%s2729 + $0x7c] sm:$0xf]
  %v2794 = vunpack.c.l.b16 %v2730
  %v2795 = vunpack.c.l.b16 %v2731
  %v2796 = vunpack.c.l.b16 %v2732
  %v2797 = vunpack.c.l.b16 %v2733
  %v2798 = vunpack.c.l.b16 %v2734
  %v2799 = vunpack.c.l.b16 %v2735
  %v2800 = vunpack.c.l.b16 %v2736
  %v2801 = vunpack.c.l.b16 %v2737
  %v2802 = vunpack.c.l.b16 %v2738
  %v2803 = vunpack.c.l.b16 %v2739
  %v2804 = vunpack.c.l.b16 %v2740
  %v2805 = vunpack.c.l.b16 %v2741
  %v2806 = vunpack.c.l.b16 %v2742
  %v2807 = vunpack.c.l.b16 %v2743
  %v2808 = vunpack.c.l.b16 %v2744
  %v2809 = vunpack.c.l.b16 %v2745
  %v2810 = vunpack.c.l.b16 %v2746
  %v2811 = vunpack.c.l.b16 %v2747
  %v2812 = vunpack.c.l.b16 %v2748
  %v2813 = vunpack.c.l.b16 %v2749
  %v2814 = vunpack.c.l.b16 %v2750
  %v2815 = vunpack.c.l.b16 %v2751
  %v2816 = vunpack.c.l.b16 %v2752
  %v2817 = vunpack.c.l.b16 %v2753
  %v2818 = vunpack.c.l.b16 %v2754
  %v2819 = vunpack.c.l.b16 %v2755
  %v2820 = vunpack.c.l.b16 %v2756
  %v2821 = vunpack.c.l.b16 %v2757
  %v2822 = vunpack.c.l.b16 %v2758
  %v2823 = vunpack.c.l.b16 %v2759
  %v2824 = vunpack.c.l.b16 %v2760
  %v2825 = vunpack.c.l.b16 %v2761
  %v2826 = vpack.c.b16 %v2795, %v2794
  %v2827 = vpack.c.b16 %v2797, %v2796
  %v2828 = vpack.c.b16 %v2799, %v2798
  %v2829 = vpack.c.b16 %v2801, %v2800
  %v2830 = vpack.c.b16 %v2803, %v2802
  %v2831 = vpack.c.b16 %v2805, %v2804
  %v2832 = vpack.c.b16 %v2807, %v2806
  %v2833 = vpack.c.b16 %v2809, %v2808
  %v2834 = vpack.c.b16 %v2811, %v2810
  %v2835 = vpack.c.b16 %v2813, %v2812
  %v2836 = vpack.c.b16 %v2815, %v2814
  %v2837 = vpack.c.b16 %v2817, %v2816
  %v2838 = vpack.c.b16 %v2819, %v2818
  %v2839 = vpack.c.b16 %v2821, %v2820
  %v2840 = vpack.c.b16 %v2823, %v2822
  %v2841 = vpack.c.b16 %v2825, %v2824
  %2858 = vmatprep.subr.bf16.mxu0 0
  %2859 = vmatpush1.bf16.msra.mxu0 %v2833
  %2860 = vmatprep.subr.bf16.mxu0 0
  %2861 = vmatpush1.bf16.msra.mxu0 %v2832
  %2862 = vmatprep.subr.bf16.mxu0 0
  %2863 = vmatpush1.bf16.msra.mxu0 %v2831
  %2864 = vmatprep.subr.bf16.mxu0 0
  %2865 = vmatpush1.bf16.msra.mxu0 %v2830
  %2866 = vmatprep.subr.bf16.mxu0 0
  %2867 = vmatpush1.bf16.msra.mxu0 %v2829
  %2868 = vmatprep.subr.bf16.mxu0 0
  %2869 = vmatpush1.bf16.msra.mxu0 %v2828
  %2870 = vmatprep.subr.bf16.mxu0 0
  %2871 = vmatpush1.bf16.msra.mxu0 %v2827
  %2872 = vmatprep.subr.bf16.mxu0 0
  %2873 = vmatpush1.bf16.msra.mxu0 %v2826
  %2874 = vmatprep.subr.bf16.mxu0 0
  %2875 = vmatpush2.bf16.msra.mxu0 %v2841
  %2876 = vmatprep.subr.bf16.mxu0 0
  %2877 = vmatpush2.bf16.msra.mxu0 %v2840
  %2878 = vmatprep.subr.bf16.mxu0 0
  %2879 = vmatpush2.bf16.msra.mxu0 %v2839
  %2880 = vmatprep.subr.bf16.mxu0 0
  %2881 = vmatpush2.bf16.msra.mxu0 %v2838
  %2882 = vmatprep.subr.bf16.mxu0 0
  %2883 = vmatpush2.bf16.msra.mxu0 %v2837
  %2884 = vmatprep.subr.bf16.mxu0 0
  %2885 = vmatpush2.bf16.msra.mxu0 %v2836
  %2886 = vmatprep.subr.bf16.mxu0 0
  %2887 = vmatpush2.bf16.msra.mxu0 %v2835
  %2888 = vmatprep.subr.bf16.mxu0 0
  %2889 = vmatpush2.bf16.msra.mxu0 %v2834
  %2890 = vmatprep.mubr.bf16.mxu0 %v2728
  %2891 = vmatmul.mubr.bf16.gmra.mxu0 %v2727
  %v2892 = vpop.f32.mrf.mxu0
  %v2893 = vadd.f32 0.0, %v2892
  %v2894 = vpop.f32.mrf.mxu0
  %v2895 = vpop.f32.mrf.mxu0
  %v2896 = vpop.f32.mrf.mxu0
  %2897 = vdwg.mxu0
  %v2898 = vadd.f32 %v2592, %v2893
  %s2899 = scalar_lea.vmem [#allocation2], 96
  %v2900 = vld [vmem:[%s2899] sm:$0xff]
  %v2901 = vld [vmem:[%s2899 + $0x8] sm:$0xff]
  %2902 = vmatprep.subr.bf16.mxu0 %v625
  %2903 = vmatpush1.bf16.msra.mxu0 %v624
  %2904 = vmatprep.subr.bf16.mxu0 %v623
  %2905 = vmatpush1.bf16.msra.mxu0 %v622
  %2906 = vmatprep.subr.bf16.mxu0 %v621
  %2907 = vmatpush1.bf16.msra.mxu0 %v620
  %2908 = vmatprep.subr.bf16.mxu0 %v619
  %2909 = vmatpush1.bf16.msra.mxu0 %v618
  %2910 = vmatprep.subr.bf16.mxu0 %v617
  %2911 = vmatpush1.bf16.msra.mxu0 %v616
  %2912 = vmatprep.subr.bf16.mxu0 %v615
  %2913 = vmatpush1.bf16.msra.mxu0 %v614
  %2914 = vmatprep.subr.bf16.mxu0 %v613
  %2915 = vmatpush1.bf16.msra.mxu0 %v612
  %2916 = vmatprep.subr.bf16.mxu0 %v611
  %2917 = vmatpush1.bf16.msra.mxu0 %v610
  %2918 = vmatprep.subr.bf16.mxu0 %v641
  %2919 = vmatpush2.bf16.msra.mxu0 %v640
  %2920 = vmatprep.subr.bf16.mxu0 %v639
  %2921 = vmatpush2.bf16.msra.mxu0 %v638
  %2922 = vmatprep.subr.bf16.mxu0 %v637
  %2923 = vmatpush2.bf16.msra.mxu0 %v636
  %2924 = vmatprep.subr.bf16.mxu0 %v635
  %2925 = vmatpush2.bf16.msra.mxu0 %v634
  %2926 = vmatprep.subr.bf16.mxu0 %v633
  %2927 = vmatpush2.bf16.msra.mxu0 %v632
  %2928 = vmatprep.subr.bf16.mxu0 %v631
  %2929 = vmatpush2.bf16.msra.mxu0 %v630
  %2930 = vmatprep.subr.bf16.mxu0 %v629
  %2931 = vmatpush2.bf16.msra.mxu0 %v628
  %2932 = vmatprep.subr.bf16.mxu0 %v627
  %2933 = vmatpush2.bf16.msra.mxu0 %v626
  %2934 = vmatprep.mubr.bf16.mxu0 %v2642
  %2935 = vmatmul.mubr.bf16.gmra.mxu0 %v2641
  %v2936 = vpop.f32.mrf.mxu0
  %v2937 = vadd.f32 0.0, %v2936
  %v2938 = vpop.f32.mrf.mxu0
  %v2939 = vadd.f32 0.0, %v2938
  %v2940 = vpop.f32.mrf.mxu0
  %v2941 = vpop.f32.mrf.mxu0
  %2942 = vdwg.mxu0
  %v2943 = vadd.f32 %v2900, %v2937
  %v2944 = vadd.f32 %v2901, %v2939
  %v2945 = vtanh.pop %v2943
  %v2946 = vtanh.pop %v2944
  %v2947 = vpack.c.bf16 %v2945, %v2945
  %v2948 = vpack.c.bf16 %v2946, %v2946
  %2949 = vmatprep.subr.bf16.mxu0 %v1003
  %2950 = vmatpush1.bf16.msra.mxu0 %v1002
  %2951 = vmatprep.subr.bf16.mxu0 %v1001
  %2952 = vmatpush1.bf16.msra.mxu0 %v1000
  %2953 = vmatprep.subr.bf16.mxu0 %v999
  %2954 = vmatpush1.bf16.msra.mxu0 %v998
  %2955 = vmatprep.subr.bf16.mxu0 %v997
  %2956 = vmatpush1.bf16.msra.mxu0 %v996
  %2957 = vmatprep.subr.bf16.mxu0 %v995
  %2958 = vmatpush1.bf16.msra.mxu0 %v994
  %2959 = vmatprep.subr.bf16.mxu0 %v993
  %2960 = vmatpush1.bf16.msra.mxu0 %v992
  %2961 = vmatprep.subr.bf16.mxu0 %v991
  %2962 = vmatpush1.bf16.msra.mxu0 %v990
  %2963 = vmatprep.subr.bf16.mxu0 %v989
  %2964 = vmatpush1.bf16.msra.mxu0 %v988
  %2965 = vmatprep.subr.bf16.mxu0 %v1019
  %2966 = vmatpush2.bf16.msra.mxu0 %v1018
  %2967 = vmatprep.subr.bf16.mxu0 %v1017
  %2968 = vmatpush2.bf16.msra.mxu0 %v1016
  %2969 = vmatprep.subr.bf16.mxu0 %v1015
  %2970 = vmatpush2.bf16.msra.mxu0 %v1014
  %2971 = vmatprep.subr.bf16.mxu0 %v1013
  %2972 = vmatpush2.bf16.msra.mxu0 %v1012
  %2973 = vmatprep.subr.bf16.mxu0 %v1011
  %2974 = vmatpush2.bf16.msra.mxu0 %v1010
  %2975 = vmatprep.subr.bf16.mxu0 %v1009
  %2976 = vmatpush2.bf16.msra.mxu0 %v1008
  %2977 = vmatprep.subr.bf16.mxu0 %v1007
  %2978 = vmatpush2.bf16.msra.mxu0 %v1006
  %2979 = vmatprep.subr.bf16.mxu0 %v1005
  %2980 = vmatpush2.bf16.msra.mxu0 %v1004
  %2981 = vmatprep.mubr.bf16.mxu0 %v2948
  %2982 = vmatmul.mubr.bf16.gmra.mxu0 %v2947
  %v2983 = vpop.f32.mrf.mxu0
  %v2984 = vadd.f32 %v789, %v2983
  %v2985 = vpop.f32.mrf.mxu0
  %v2986 = vadd.f32 %v793, %v2985
  %v2987 = vpop.f32.mrf.mxu0
  %v2988 = vpop.f32.mrf.mxu0
  %2989 = vdwg.mxu0
  %2990 = vmatprep.subr.bf16.mxu0 %v1035
  %2991 = vmatpush1.bf16.msra.mxu0 %v1034
  %2992 = vmatprep.subr.bf16.mxu0 %v1033
  %2993 = vmatpush1.bf16.msra.mxu0 %v1032
  %2994 = vmatprep.subr.bf16.mxu0 %v1031
  %2995 = vmatpush1.bf16.msra.mxu0 %v1030
  %2996 = vmatprep.subr.bf16.mxu0 %v1029
  %2997 = vmatpush1.bf16.msra.mxu0 %v1028
  %2998 = vmatprep.subr.bf16.mxu0 %v1027
  %2999 = vmatpush1.bf16.msra.mxu0 %v1026
  %3000 = vmatprep.subr.bf16.mxu0 %v1025
  %3001 = vmatpush1.bf16.msra.mxu0 %v1024
  %3002 = vmatprep.subr.bf16.mxu0 %v1023
  %3003 = vmatpush1.bf16.msra.mxu0 %v1022
  %3004 = vmatprep.subr.bf16.mxu0 %v1021
  %3005 = vmatpush1.bf16.msra.mxu0 %v1020
  %3006 = vmatprep.subr.bf16.mxu0 %v1051
  %3007 = vmatpush2.bf16.msra.mxu0 %v1050
  %3008 = vmatprep.subr.bf16.mxu0 %v1049
  %3009 = vmatpush2.bf16.msra.mxu0 %v1048
  %3010 = vmatprep.subr.bf16.mxu0 %v1047
  %3011 = vmatpush2.bf16.msra.mxu0 %v1046
  %3012 = vmatprep.subr.bf16.mxu0 %v1045
  %3013 = vmatpush2.bf16.msra.mxu0 %v1044
  %3014 = vmatprep.subr.bf16.mxu0 %v1043
  %3015 = vmatpush2.bf16.msra.mxu0 %v1042
  %3016 = vmatprep.subr.bf16.mxu0 %v1041
  %3017 = vmatpush2.bf16.msra.mxu0 %v1040
  %3018 = vmatprep.subr.bf16.mxu0 %v1039
  %3019 = vmatpush2.bf16.msra.mxu0 %v1038
  %3020 = vmatprep.subr.bf16.mxu0 %v1037
  %3021 = vmatpush2.bf16.msra.mxu0 %v1036
  %3022 = vmatprep.mubr.bf16.mxu0 %v2728
  %3023 = vmatmul.mubr.bf16.gmra.mxu0 %v2727
  %v3024 = vpop.f32.mrf.mxu0
  %v3025 = vadd.f32 %v2984, %v3024
  %v3026 = vpop.f32.mrf.mxu0
  %v3027 = vadd.f32 %v2986, %v3026
  %v3028 = vpop.f32.mrf.mxu0
  %v3029 = vpop.f32.mrf.mxu0
  %3030 = vdwg.mxu0
  %v3031 = vtanh.pop %v3025
  %v3032 = vtanh.pop %v3027
  %v3033 = vpack.c.bf16 %v3031, %v3031
  %v3034 = vpack.c.bf16 %v3032, %v3032
  %s3035 = scalar_lea.vmem %s6, 768
  %v3036 = vld [vmem:[%s3035] sm:$0xf]
  %v3037 = vld [vmem:[%s3035 + $0x4] sm:$0xf]
  %v3038 = vld [vmem:[%s3035 + $0x8] sm:$0xf]
  %v3039 = vld [vmem:[%s3035 + $0xc] sm:$0xf]
  %v3040 = vld [vmem:[%s3035 + $0x10] sm:$0xf]
  %v3041 = vld [vmem:[%s3035 + $0x14] sm:$0xf]
  %v3042 = vld [vmem:[%s3035 + $0x18] sm:$0xf]
  %v3043 = vld [vmem:[%s3035 + $0x1c] sm:$0xf]
  %v3044 = vld [vmem:[%s3035 + $0x20] sm:$0xf]
  %v3045 = vld [vmem:[%s3035 + $0x24] sm:$0xf]
  %v3046 = vld [vmem:[%s3035 + $0x28] sm:$0xf]
  %v3047 = vld [vmem:[%s3035 + $0x2c] sm:$0xf]
  %v3048 = vld [vmem:[%s3035 + $0x30] sm:$0xf]
  %v3049 = vld [vmem:[%s3035 + $0x34] sm:$0xf]
  %v3050 = vld [vmem:[%s3035 + $0x38] sm:$0xf]
  %v3051 = vld [vmem:[%s3035 + $0x3c] sm:$0xf]
  %v3052 = vld [vmem:[%s3035 + $0x40] sm:$0xf]
  %v3053 = vld [vmem:[%s3035 + $0x44] sm:$0xf]
  %v3054 = vld [vmem:[%s3035 + $0x48] sm:$0xf]
  %v3055 = vld [vmem:[%s3035 + $0x4c] sm:$0xf]
  %v3056 = vld [vmem:[%s3035 + $0x50] sm:$0xf]
  %v3057 = vld [vmem:[%s3035 + $0x54] sm:$0xf]
  %v3058 = vld [vmem:[%s3035 + $0x58] sm:$0xf]
  %v3059 = vld [vmem:[%s3035 + $0x5c] sm:$0xf]
  %v3060 = vld [vmem:[%s3035 + $0x60] sm:$0xf]
  %v3061 = vld [vmem:[%s3035 + $0x64] sm:$0xf]
  %v3062 = vld [vmem:[%s3035 + $0x68] sm:$0xf]
  %v3063 = vld [vmem:[%s3035 + $0x6c] sm:$0xf]
  %v3064 = vld [vmem:[%s3035 + $0x70] sm:$0xf]
  %v3065 = vld [vmem:[%s3035 + $0x74] sm:$0xf]
  %v3066 = vld [vmem:[%s3035 + $0x78] sm:$0xf]
  %v3067 = vld [vmem:[%s3035 + $0x7c] sm:$0xf]
  %v3100 = vunpack.c.l.b16 %v3036
  %v3101 = vunpack.c.l.b16 %v3037
  %v3102 = vunpack.c.l.b16 %v3038
  %v3103 = vunpack.c.l.b16 %v3039
  %v3104 = vunpack.c.l.b16 %v3040
  %v3105 = vunpack.c.l.b16 %v3041
  %v3106 = vunpack.c.l.b16 %v3042
  %v3107 = vunpack.c.l.b16 %v3043
  %v3108 = vunpack.c.l.b16 %v3044
  %v3109 = vunpack.c.l.b16 %v3045
  %v3110 = vunpack.c.l.b16 %v3046
  %v3111 = vunpack.c.l.b16 %v3047
  %v3112 = vunpack.c.l.b16 %v3048
  %v3113 = vunpack.c.l.b16 %v3049
  %v3114 = vunpack.c.l.b16 %v3050
  %v3115 = vunpack.c.l.b16 %v3051
  %v3116 = vunpack.c.l.b16 %v3052
  %v3117 = vunpack.c.l.b16 %v3053
  %v3118 = vunpack.c.l.b16 %v3054
  %v3119 = vunpack.c.l.b16 %v3055
  %v3120 = vunpack.c.l.b16 %v3056
  %v3121 = vunpack.c.l.b16 %v3057
  %v3122 = vunpack.c.l.b16 %v3058
  %v3123 = vunpack.c.l.b16 %v3059
  %v3124 = vunpack.c.l.b16 %v3060
  %v3125 = vunpack.c.l.b16 %v3061
  %v3126 = vunpack.c.l.b16 %v3062
  %v3127 = vunpack.c.l.b16 %v3063
  %v3128 = vunpack.c.l.b16 %v3064
  %v3129 = vunpack.c.l.b16 %v3065
  %v3130 = vunpack.c.l.b16 %v3066
  %v3131 = vunpack.c.l.b16 %v3067
  %v3132 = vpack.c.b16 %v3101, %v3100
  %v3133 = vpack.c.b16 %v3103, %v3102
  %v3134 = vpack.c.b16 %v3105, %v3104
  %v3135 = vpack.c.b16 %v3107, %v3106
  %v3136 = vpack.c.b16 %v3109, %v3108
  %v3137 = vpack.c.b16 %v3111, %v3110
  %v3138 = vpack.c.b16 %v3113, %v3112
  %v3139 = vpack.c.b16 %v3115, %v3114
  %v3140 = vpack.c.b16 %v3117, %v3116
  %v3141 = vpack.c.b16 %v3119, %v3118
  %v3142 = vpack.c.b16 %v3121, %v3120
  %v3143 = vpack.c.b16 %v3123, %v3122
  %v3144 = vpack.c.b16 %v3125, %v3124
  %v3145 = vpack.c.b16 %v3127, %v3126
  %v3146 = vpack.c.b16 %v3129, %v3128
  %v3147 = vpack.c.b16 %v3131, %v3130
  %3164 = vmatprep.subr.bf16.mxu0 0
  %3165 = vmatpush1.bf16.msra.mxu0 %v3139
  %3166 = vmatprep.subr.bf16.mxu0 0
  %3167 = vmatpush1.bf16.msra.mxu0 %v3138
  %3168 = vmatprep.subr.bf16.mxu0 0
  %3169 = vmatpush1.bf16.msra.mxu0 %v3137
  %3170 = vmatprep.subr.bf16.mxu0 0
  %3171 = vmatpush1.bf16.msra.mxu0 %v3136
  %3172 = vmatprep.subr.bf16.mxu0 0
  %3173 = vmatpush1.bf16.msra.mxu0 %v3135
  %3174 = vmatprep.subr.bf16.mxu0 0
  %3175 = vmatpush1.bf16.msra.mxu0 %v3134
  %3176 = vmatprep.subr.bf16.mxu0 0
  %3177 = vmatpush1.bf16.msra.mxu0 %v3133
  %3178 = vmatprep.subr.bf16.mxu0 0
  %3179 = vmatpush1.bf16.msra.mxu0 %v3132
  %3180 = vmatprep.subr.bf16.mxu0 0
  %3181 = vmatpush2.bf16.msra.mxu0 %v3147
  %3182 = vmatprep.subr.bf16.mxu0 0
  %3183 = vmatpush2.bf16.msra.mxu0 %v3146
  %3184 = vmatprep.subr.bf16.mxu0 0
  %3185 = vmatpush2.bf16.msra.mxu0 %v3145
  %3186 = vmatprep.subr.bf16.mxu0 0
  %3187 = vmatpush2.bf16.msra.mxu0 %v3144
  %3188 = vmatprep.subr.bf16.mxu0 0
  %3189 = vmatpush2.bf16.msra.mxu0 %v3143
  %3190 = vmatprep.subr.bf16.mxu0 0
  %3191 = vmatpush2.bf16.msra.mxu0 %v3142
  %3192 = vmatprep.subr.bf16.mxu0 0
  %3193 = vmatpush2.bf16.msra.mxu0 %v3141
  %3194 = vmatprep.subr.bf16.mxu0 0
  %3195 = vmatpush2.bf16.msra.mxu0 %v3140
  %3196 = vmatprep.mubr.bf16.mxu0 %v3034
  %3197 = vmatmul.mubr.bf16.gmra.mxu0 %v3033
  %v3198 = vpop.f32.mrf.mxu0
  %v3199 = vadd.f32 0.0, %v3198
  %v3200 = vpop.f32.mrf.mxu0
  %v3201 = vpop.f32.mrf.mxu0
  %v3202 = vpop.f32.mrf.mxu0
  %3203 = vdwg.mxu0
  %v3204 = vadd.f32 %v2898, %v3199
  %s3205 = scalar_lea.vmem [#allocation2], 112
  %v3206 = vld [vmem:[%s3205] sm:$0xff]
  %v3207 = vld [vmem:[%s3205 + $0x8] sm:$0xff]
  %3208 = vmatprep.subr.bf16.mxu0 %v625
  %3209 = vmatpush1.bf16.msra.mxu0 %v624
  %3210 = vmatprep.subr.bf16.mxu0 %v623
  %3211 = vmatpush1.bf16.msra.mxu0 %v622
  %3212 = vmatprep.subr.bf16.mxu0 %v621
  %3213 = vmatpush1.bf16.msra.mxu0 %v620
  %3214 = vmatprep.subr.bf16.mxu0 %v619
  %3215 = vmatpush1.bf16.msra.mxu0 %v618
  %3216 = vmatprep.subr.bf16.mxu0 %v617
  %3217 = vmatpush1.bf16.msra.mxu0 %v616
  %3218 = vmatprep.subr.bf16.mxu0 %v615
  %3219 = vmatpush1.bf16.msra.mxu0 %v614
  %3220 = vmatprep.subr.bf16.mxu0 %v613
  %3221 = vmatpush1.bf16.msra.mxu0 %v612
  %3222 = vmatprep.subr.bf16.mxu0 %v611
  %3223 = vmatpush1.bf16.msra.mxu0 %v610
  %3224 = vmatprep.subr.bf16.mxu0 %v641
  %3225 = vmatpush2.bf16.msra.mxu0 %v640
  %3226 = vmatprep.subr.bf16.mxu0 %v639
  %3227 = vmatpush2.bf16.msra.mxu0 %v638
  %3228 = vmatprep.subr.bf16.mxu0 %v637
  %3229 = vmatpush2.bf16.msra.mxu0 %v636
  %3230 = vmatprep.subr.bf16.mxu0 %v635
  %3231 = vmatpush2.bf16.msra.mxu0 %v634
  %3232 = vmatprep.subr.bf16.mxu0 %v633
  %3233 = vmatpush2.bf16.msra.mxu0 %v632
  %3234 = vmatprep.subr.bf16.mxu0 %v631
  %3235 = vmatpush2.bf16.msra.mxu0 %v630
  %3236 = vmatprep.subr.bf16.mxu0 %v629
  %3237 = vmatpush2.bf16.msra.mxu0 %v628
  %3238 = vmatprep.subr.bf16.mxu0 %v627
  %3239 = vmatpush2.bf16.msra.mxu0 %v626
  %3240 = vmatprep.mubr.bf16.mxu0 %v2948
  %3241 = vmatmul.mubr.bf16.gmra.mxu0 %v2947
  %v3242 = vpop.f32.mrf.mxu0
  %v3243 = vadd.f32 0.0, %v3242
  %v3244 = vpop.f32.mrf.mxu0
  %v3245 = vadd.f32 0.0, %v3244
  %v3246 = vpop.f32.mrf.mxu0
  %v3247 = vpop.f32.mrf.mxu0
  %3248 = vdwg.mxu0
  %v3249 = vadd.f32 %v3206, %v3243
  %v3250 = vadd.f32 %v3207, %v3245
  %v3251 = vtanh.pop %v3249
  %v3252 = vtanh.pop %v3250
  %v3253 = vpack.c.bf16 %v3251, %v3251
  %v3254 = vpack.c.bf16 %v3252, %v3252
  %3255 = vmatprep.subr.bf16.mxu0 %v1003
  %3256 = vmatpush1.bf16.msra.mxu0 %v1002
  %3257 = vmatprep.subr.bf16.mxu0 %v1001
  %3258 = vmatpush1.bf16.msra.mxu0 %v1000
  %3259 = vmatprep.subr.bf16.mxu0 %v999
  %3260 = vmatpush1.bf16.msra.mxu0 %v998
  %3261 = vmatprep.subr.bf16.mxu0 %v997
  %3262 = vmatpush1.bf16.msra.mxu0 %v996
  %3263 = vmatprep.subr.bf16.mxu0 %v995
  %3264 = vmatpush1.bf16.msra.mxu0 %v994
  %3265 = vmatprep.subr.bf16.mxu0 %v993
  %3266 = vmatpush1.bf16.msra.mxu0 %v992
  %3267 = vmatprep.subr.bf16.mxu0 %v991
  %3268 = vmatpush1.bf16.msra.mxu0 %v990
  %3269 = vmatprep.subr.bf16.mxu0 %v989
  %3270 = vmatpush1.bf16.msra.mxu0 %v988
  %3271 = vmatprep.subr.bf16.mxu0 %v1019
  %3272 = vmatpush2.bf16.msra.mxu0 %v1018
  %3273 = vmatprep.subr.bf16.mxu0 %v1017
  %3274 = vmatpush2.bf16.msra.mxu0 %v1016
  %3275 = vmatprep.subr.bf16.mxu0 %v1015
  %3276 = vmatpush2.bf16.msra.mxu0 %v1014
  %3277 = vmatprep.subr.bf16.mxu0 %v1013
  %3278 = vmatpush2.bf16.msra.mxu0 %v1012
  %3279 = vmatprep.subr.bf16.mxu0 %v1011
  %3280 = vmatpush2.bf16.msra.mxu0 %v1010
  %3281 = vmatprep.subr.bf16.mxu0 %v1009
  %3282 = vmatpush2.bf16.msra.mxu0 %v1008
  %3283 = vmatprep.subr.bf16.mxu0 %v1007
  %3284 = vmatpush2.bf16.msra.mxu0 %v1006
  %3285 = vmatprep.subr.bf16.mxu0 %v1005
  %3286 = vmatpush2.bf16.msra.mxu0 %v1004
  %3287 = vmatprep.mubr.bf16.mxu0 %v3254
  %3288 = vmatmul.mubr.bf16.gmra.mxu0 %v3253
  %v3289 = vpop.f32.mrf.mxu0
  %v3290 = vadd.f32 %v789, %v3289
  %v3291 = vpop.f32.mrf.mxu0
  %v3292 = vadd.f32 %v793, %v3291
  %v3293 = vpop.f32.mrf.mxu0
  %v3294 = vpop.f32.mrf.mxu0
  %3295 = vdwg.mxu0
  %3296 = vmatprep.subr.bf16.mxu0 %v1035
  %3297 = vmatpush1.bf16.msra.mxu0 %v1034
  %3298 = vmatprep.subr.bf16.mxu0 %v1033
  %3299 = vmatpush1.bf16.msra.mxu0 %v1032
  %3300 = vmatprep.subr.bf16.mxu0 %v1031
  %3301 = vmatpush1.bf16.msra.mxu0 %v1030
  %3302 = vmatprep.subr.bf16.mxu0 %v1029
  %3303 = vmatpush1.bf16.msra.mxu0 %v1028
  %3304 = vmatprep.subr.bf16.mxu0 %v1027
  %3305 = vmatpush1.bf16.msra.mxu0 %v1026
  %3306 = vmatprep.subr.bf16.mxu0 %v1025
  %3307 = vmatpush1.bf16.msra.mxu0 %v1024
  %3308 = vmatprep.subr.bf16.mxu0 %v1023
  %3309 = vmatpush1.bf16.msra.mxu0 %v1022
  %3310 = vmatprep.subr.bf16.mxu0 %v1021
  %3311 = vmatpush1.bf16.msra.mxu0 %v1020
  %3312 = vmatprep.subr.bf16.mxu0 %v1051
  %3313 = vmatpush2.bf16.msra.mxu0 %v1050
  %3314 = vmatprep.subr.bf16.mxu0 %v1049
  %3315 = vmatpush2.bf16.msra.mxu0 %v1048
  %3316 = vmatprep.subr.bf16.mxu0 %v1047
  %3317 = vmatpush2.bf16.msra.mxu0 %v1046
  %3318 = vmatprep.subr.bf16.mxu0 %v1045
  %3319 = vmatpush2.bf16.msra.mxu0 %v1044
  %3320 = vmatprep.subr.bf16.mxu0 %v1043
  %3321 = vmatpush2.bf16.msra.mxu0 %v1042
  %3322 = vmatprep.subr.bf16.mxu0 %v1041
  %3323 = vmatpush2.bf16.msra.mxu0 %v1040
  %3324 = vmatprep.subr.bf16.mxu0 %v1039
  %3325 = vmatpush2.bf16.msra.mxu0 %v1038
  %3326 = vmatprep.subr.bf16.mxu0 %v1037
  %3327 = vmatpush2.bf16.msra.mxu0 %v1036
  %3328 = vmatprep.mubr.bf16.mxu0 %v3034
  %3329 = vmatmul.mubr.bf16.gmra.mxu0 %v3033
  %v3330 = vpop.f32.mrf.mxu0
  %v3331 = vadd.f32 %v3290, %v3330
  %v3332 = vpop.f32.mrf.mxu0
  %v3333 = vadd.f32 %v3292, %v3332
  %v3334 = vpop.f32.mrf.mxu0
  %v3335 = vpop.f32.mrf.mxu0
  %3336 = vdwg.mxu0
  %v3337 = vtanh.pop %v3331
  %v3338 = vtanh.pop %v3333
  %v3339 = vpack.c.bf16 %v3337, %v3337
  %v3340 = vpack.c.bf16 %v3338, %v3338
  %s3341 = scalar_lea.vmem %s6, 896
  %v3342 = vld [vmem:[%s3341] sm:$0xf]
  %v3343 = vld [vmem:[%s3341 + $0x4] sm:$0xf]
  %v3344 = vld [vmem:[%s3341 + $0x8] sm:$0xf]
  %v3345 = vld [vmem:[%s3341 + $0xc] sm:$0xf]
  %v3346 = vld [vmem:[%s3341 + $0x10] sm:$0xf]
  %v3347 = vld [vmem:[%s3341 + $0x14] sm:$0xf]
  %v3348 = vld [vmem:[%s3341 + $0x18] sm:$0xf]
  %v3349 = vld [vmem:[%s3341 + $0x1c] sm:$0xf]
  %v3350 = vld [vmem:[%s3341 + $0x20] sm:$0xf]
  %v3351 = vld [vmem:[%s3341 + $0x24] sm:$0xf]
  %v3352 = vld [vmem:[%s3341 + $0x28] sm:$0xf]
  %v3353 = vld [vmem:[%s3341 + $0x2c] sm:$0xf]
  %v3354 = vld [vmem:[%s3341 + $0x30] sm:$0xf]
  %v3355 = vld [vmem:[%s3341 + $0x34] sm:$0xf]
  %v3356 = vld [vmem:[%s3341 + $0x38] sm:$0xf]
  %v3357 = vld [vmem:[%s3341 + $0x3c] sm:$0xf]
  %v3358 = vld [vmem:[%s3341 + $0x40] sm:$0xf]
  %v3359 = vld [vmem:[%s3341 + $0x44] sm:$0xf]
  %v3360 = vld [vmem:[%s3341 + $0x48] sm:$0xf]
  %v3361 = vld [vmem:[%s3341 + $0x4c] sm:$0xf]
  %v3362 = vld [vmem:[%s3341 + $0x50] sm:$0xf]
  %v3363 = vld [vmem:[%s3341 + $0x54] sm:$0xf]
  %v3364 = vld [vmem:[%s3341 + $0x58] sm:$0xf]
  %v3365 = vld [vmem:[%s3341 + $0x5c] sm:$0xf]
  %v3366 = vld [vmem:[%s3341 + $0x60] sm:$0xf]
  %v3367 = vld [vmem:[%s3341 + $0x64] sm:$0xf]
  %v3368 = vld [vmem:[%s3341 + $0x68] sm:$0xf]
  %v3369 = vld [vmem:[%s3341 + $0x6c] sm:$0xf]
  %v3370 = vld [vmem:[%s3341 + $0x70] sm:$0xf]
  %v3371 = vld [vmem:[%s3341 + $0x74] sm:$0xf]
  %v3372 = vld [vmem:[%s3341 + $0x78] sm:$0xf]
  %v3373 = vld [vmem:[%s3341 + $0x7c] sm:$0xf]
  %v3406 = vunpack.c.l.b16 %v3342
  %v3407 = vunpack.c.l.b16 %v3343
  %v3408 = vunpack.c.l.b16 %v3344
  %v3409 = vunpack.c.l.b16 %v3345
  %v3410 = vunpack.c.l.b16 %v3346
  %v3411 = vunpack.c.l.b16 %v3347
  %v3412 = vunpack.c.l.b16 %v3348
  %v3413 = vunpack.c.l.b16 %v3349
  %v3414 = vunpack.c.l.b16 %v3350
  %v3415 = vunpack.c.l.b16 %v3351
  %v3416 = vunpack.c.l.b16 %v3352
  %v3417 = vunpack.c.l.b16 %v3353
  %v3418 = vunpack.c.l.b16 %v3354
  %v3419 = vunpack.c.l.b16 %v3355
  %v3420 = vunpack.c.l.b16 %v3356
  %v3421 = vunpack.c.l.b16 %v3357
  %v3422 = vunpack.c.l.b16 %v3358
  %v3423 = vunpack.c.l.b16 %v3359
  %v3424 = vunpack.c.l.b16 %v3360
  %v3425 = vunpack.c.l.b16 %v3361
  %v3426 = vunpack.c.l.b16 %v3362
  %v3427 = vunpack.c.l.b16 %v3363
  %v3428 = vunpack.c.l.b16 %v3364
  %v3429 = vunpack.c.l.b16 %v3365
  %v3430 = vunpack.c.l.b16 %v3366
  %v3431 = vunpack.c.l.b16 %v3367
  %v3432 = vunpack.c.l.b16 %v3368
  %v3433 = vunpack.c.l.b16 %v3369
  %v3434 = vunpack.c.l.b16 %v3370
  %v3435 = vunpack.c.l.b16 %v3371
  %v3436 = vunpack.c.l.b16 %v3372
  %v3437 = vunpack.c.l.b16 %v3373
  %v3438 = vpack.c.b16 %v3407, %v3406
  %v3439 = vpack.c.b16 %v3409, %v3408
  %v3440 = vpack.c.b16 %v3411, %v3410
  %v3441 = vpack.c.b16 %v3413, %v3412
  %v3442 = vpack.c.b16 %v3415, %v3414
  %v3443 = vpack.c.b16 %v3417, %v3416
  %v3444 = vpack.c.b16 %v3419, %v3418
  %v3445 = vpack.c.b16 %v3421, %v3420
  %v3446 = vpack.c.b16 %v3423, %v3422
  %v3447 = vpack.c.b16 %v3425, %v3424
  %v3448 = vpack.c.b16 %v3427, %v3426
  %v3449 = vpack.c.b16 %v3429, %v3428
  %v3450 = vpack.c.b16 %v3431, %v3430
  %v3451 = vpack.c.b16 %v3433, %v3432
  %v3452 = vpack.c.b16 %v3435, %v3434
  %v3453 = vpack.c.b16 %v3437, %v3436
  %3470 = vmatprep.subr.bf16.mxu0 0
  %3471 = vmatpush1.bf16.msra.mxu0 %v3445
  %3472 = vmatprep.subr.bf16.mxu0 0
  %3473 = vmatpush1.bf16.msra.mxu0 %v3444
  %3474 = vmatprep.subr.bf16.mxu0 0
  %3475 = vmatpush1.bf16.msra.mxu0 %v3443
  %3476 = vmatprep.subr.bf16.mxu0 0
  %3477 = vmatpush1.bf16.msra.mxu0 %v3442
  %3478 = vmatprep.subr.bf16.mxu0 0
  %3479 = vmatpush1.bf16.msra.mxu0 %v3441
  %3480 = vmatprep.subr.bf16.mxu0 0
  %3481 = vmatpush1.bf16.msra.mxu0 %v3440
  %3482 = vmatprep.subr.bf16.mxu0 0
  %3483 = vmatpush1.bf16.msra.mxu0 %v3439
  %3484 = vmatprep.subr.bf16.mxu0 0
  %3485 = vmatpush1.bf16.msra.mxu0 %v3438
  %3486 = vmatprep.subr.bf16.mxu0 0
  %3487 = vmatpush2.bf16.msra.mxu0 %v3453
  %3488 = vmatprep.subr.bf16.mxu0 0
  %3489 = vmatpush2.bf16.msra.mxu0 %v3452
  %3490 = vmatprep.subr.bf16.mxu0 0
  %3491 = vmatpush2.bf16.msra.mxu0 %v3451
  %3492 = vmatprep.subr.bf16.mxu0 0
  %3493 = vmatpush2.bf16.msra.mxu0 %v3450
  %3494 = vmatprep.subr.bf16.mxu0 0
  %3495 = vmatpush2.bf16.msra.mxu0 %v3449
  %3496 = vmatprep.subr.bf16.mxu0 0
  %3497 = vmatpush2.bf16.msra.mxu0 %v3448
  %3498 = vmatprep.subr.bf16.mxu0 0
  %3499 = vmatpush2.bf16.msra.mxu0 %v3447
  %3500 = vmatprep.subr.bf16.mxu0 0
  %3501 = vmatpush2.bf16.msra.mxu0 %v3446
  %3502 = vmatprep.mubr.bf16.mxu0 %v3340
  %3503 = vmatmul.mubr.bf16.gmra.mxu0 %v3339
  %v3504 = vpop.f32.mrf.mxu0
  %v3505 = vadd.f32 0.0, %v3504
  %v3506 = vpop.f32.mrf.mxu0
  %v3507 = vpop.f32.mrf.mxu0
  %v3508 = vpop.f32.mrf.mxu0
  %3509 = vdwg.mxu0
  %v3510 = vadd.f32 %v3204, %v3505
  %s3511 = scalar_lea.vmem [#allocation2], 128
  %v3512 = vld [vmem:[%s3511] sm:$0xff]
  %v3513 = vld [vmem:[%s3511 + $0x8] sm:$0xff]
  %3514 = vmatprep.subr.bf16.mxu0 %v625
  %3515 = vmatpush1.bf16.msra.mxu0 %v624
  %3516 = vmatprep.subr.bf16.mxu0 %v623
  %3517 = vmatpush1.bf16.msra.mxu0 %v622
  %3518 = vmatprep.subr.bf16.mxu0 %v621
  %3519 = vmatpush1.bf16.msra.mxu0 %v620
  %3520 = vmatprep.subr.bf16.mxu0 %v619
  %3521 = vmatpush1.bf16.msra.mxu0 %v618
  %3522 = vmatprep.subr.bf16.mxu0 %v617
  %3523 = vmatpush1.bf16.msra.mxu0 %v616
  %3524 = vmatprep.subr.bf16.mxu0 %v615
  %3525 = vmatpush1.bf16.msra.mxu0 %v614
  %3526 = vmatprep.subr.bf16.mxu0 %v613
  %3527 = vmatpush1.bf16.msra.mxu0 %v612
  %3528 = vmatprep.subr.bf16.mxu0 %v611
  %3529 = vmatpush1.bf16.msra.mxu0 %v610
  %3530 = vmatprep.subr.bf16.mxu0 %v641
  %3531 = vmatpush2.bf16.msra.mxu0 %v640
  %3532 = vmatprep.subr.bf16.mxu0 %v639
  %3533 = vmatpush2.bf16.msra.mxu0 %v638
  %3534 = vmatprep.subr.bf16.mxu0 %v637
  %3535 = vmatpush2.bf16.msra.mxu0 %v636
  %3536 = vmatprep.subr.bf16.mxu0 %v635
  %3537 = vmatpush2.bf16.msra.mxu0 %v634
  %3538 = vmatprep.subr.bf16.mxu0 %v633
  %3539 = vmatpush2.bf16.msra.mxu0 %v632
  %3540 = vmatprep.subr.bf16.mxu0 %v631
  %3541 = vmatpush2.bf16.msra.mxu0 %v630
  %3542 = vmatprep.subr.bf16.mxu0 %v629
  %3543 = vmatpush2.bf16.msra.mxu0 %v628
  %3544 = vmatprep.subr.bf16.mxu0 %v627
  %3545 = vmatpush2.bf16.msra.mxu0 %v626
  %3546 = vmatprep.mubr.bf16.mxu0 %v3254
  %3547 = vmatmul.mubr.bf16.gmra.mxu0 %v3253
  %v3548 = vpop.f32.mrf.mxu0
  %v3549 = vadd.f32 0.0, %v3548
  %v3550 = vpop.f32.mrf.mxu0
  %v3551 = vadd.f32 0.0, %v3550
  %v3552 = vpop.f32.mrf.mxu0
  %v3553 = vpop.f32.mrf.mxu0
  %3554 = vdwg.mxu0
  %v3555 = vadd.f32 %v3512, %v3549
  %v3556 = vadd.f32 %v3513, %v3551
  %v3557 = vtanh.pop %v3555
  %v3558 = vtanh.pop %v3556
  %v3559 = vpack.c.bf16 %v3557, %v3557
  %v3560 = vpack.c.bf16 %v3558, %v3558
  %3561 = vmatprep.subr.bf16.mxu0 %v1003
  %3562 = vmatpush1.bf16.msra.mxu0 %v1002
  %3563 = vmatprep.subr.bf16.mxu0 %v1001
  %3564 = vmatpush1.bf16.msra.mxu0 %v1000
  %3565 = vmatprep.subr.bf16.mxu0 %v999
  %3566 = vmatpush1.bf16.msra.mxu0 %v998
  %3567 = vmatprep.subr.bf16.mxu0 %v997
  %3568 = vmatpush1.bf16.msra.mxu0 %v996
  %3569 = vmatprep.subr.bf16.mxu0 %v995
  %3570 = vmatpush1.bf16.msra.mxu0 %v994
  %3571 = vmatprep.subr.bf16.mxu0 %v993
  %3572 = vmatpush1.bf16.msra.mxu0 %v992
  %3573 = vmatprep.subr.bf16.mxu0 %v991
  %3574 = vmatpush1.bf16.msra.mxu0 %v990
  %3575 = vmatprep.subr.bf16.mxu0 %v989
  %3576 = vmatpush1.bf16.msra.mxu0 %v988
  %3577 = vmatprep.subr.bf16.mxu0 %v1019
  %3578 = vmatpush2.bf16.msra.mxu0 %v1018
  %3579 = vmatprep.subr.bf16.mxu0 %v1017
  %3580 = vmatpush2.bf16.msra.mxu0 %v1016
  %3581 = vmatprep.subr.bf16.mxu0 %v1015
  %3582 = vmatpush2.bf16.msra.mxu0 %v1014
  %3583 = vmatprep.subr.bf16.mxu0 %v1013
  %3584 = vmatpush2.bf16.msra.mxu0 %v1012
  %3585 = vmatprep.subr.bf16.mxu0 %v1011
  %3586 = vmatpush2.bf16.msra.mxu0 %v1010
  %3587 = vmatprep.subr.bf16.mxu0 %v1009
  %3588 = vmatpush2.bf16.msra.mxu0 %v1008
  %3589 = vmatprep.subr.bf16.mxu0 %v1007
  %3590 = vmatpush2.bf16.msra.mxu0 %v1006
  %3591 = vmatprep.subr.bf16.mxu0 %v1005
  %3592 = vmatpush2.bf16.msra.mxu0 %v1004
  %3593 = vmatprep.mubr.bf16.mxu0 %v3560
  %3594 = vmatmul.mubr.bf16.gmra.mxu0 %v3559
  %v3595 = vpop.f32.mrf.mxu0
  %v3596 = vadd.f32 %v789, %v3595
  %v3597 = vpop.f32.mrf.mxu0
  %v3598 = vadd.f32 %v793, %v3597
  %v3599 = vpop.f32.mrf.mxu0
  %v3600 = vpop.f32.mrf.mxu0
  %3601 = vdwg.mxu0
  %3602 = vmatprep.subr.bf16.mxu0 %v1035
  %3603 = vmatpush1.bf16.msra.mxu0 %v1034
  %3604 = vmatprep.subr.bf16.mxu0 %v1033
  %3605 = vmatpush1.bf16.msra.mxu0 %v1032
  %3606 = vmatprep.subr.bf16.mxu0 %v1031
  %3607 = vmatpush1.bf16.msra.mxu0 %v1030
  %3608 = vmatprep.subr.bf16.mxu0 %v1029
  %3609 = vmatpush1.bf16.msra.mxu0 %v1028
  %3610 = vmatprep.subr.bf16.mxu0 %v1027
  %3611 = vmatpush1.bf16.msra.mxu0 %v1026
  %3612 = vmatprep.subr.bf16.mxu0 %v1025
  %3613 = vmatpush1.bf16.msra.mxu0 %v1024
  %3614 = vmatprep.subr.bf16.mxu0 %v1023
  %3615 = vmatpush1.bf16.msra.mxu0 %v1022
  %3616 = vmatprep.subr.bf16.mxu0 %v1021
  %3617 = vmatpush1.bf16.msra.mxu0 %v1020
  %3618 = vmatprep.subr.bf16.mxu0 %v1051
  %3619 = vmatpush2.bf16.msra.mxu0 %v1050
  %3620 = vmatprep.subr.bf16.mxu0 %v1049
  %3621 = vmatpush2.bf16.msra.mxu0 %v1048
  %3622 = vmatprep.subr.bf16.mxu0 %v1047
  %3623 = vmatpush2.bf16.msra.mxu0 %v1046
  %3624 = vmatprep.subr.bf16.mxu0 %v1045
  %3625 = vmatpush2.bf16.msra.mxu0 %v1044
  %3626 = vmatprep.subr.bf16.mxu0 %v1043
  %3627 = vmatpush2.bf16.msra.mxu0 %v1042
  %3628 = vmatprep.subr.bf16.mxu0 %v1041
  %3629 = vmatpush2.bf16.msra.mxu0 %v1040
  %3630 = vmatprep.subr.bf16.mxu0 %v1039
  %3631 = vmatpush2.bf16.msra.mxu0 %v1038
  %3632 = vmatprep.subr.bf16.mxu0 %v1037
  %3633 = vmatpush2.bf16.msra.mxu0 %v1036
  %3634 = vmatprep.mubr.bf16.mxu0 %v3340
  %3635 = vmatmul.mubr.bf16.gmra.mxu0 %v3339
  %v3636 = vpop.f32.mrf.mxu0
  %v3637 = vadd.f32 %v3596, %v3636
  %v3638 = vpop.f32.mrf.mxu0
  %v3639 = vadd.f32 %v3598, %v3638
  %v3640 = vpop.f32.mrf.mxu0
  %v3641 = vpop.f32.mrf.mxu0
  %3642 = vdwg.mxu0
  %v3643 = vtanh.pop %v3637
  %v3644 = vtanh.pop %v3639
  %v3645 = vpack.c.bf16 %v3643, %v3643
  %v3646 = vpack.c.bf16 %v3644, %v3644
  %s3647 = scalar_lea.vmem %s6, 1024
  %v3648 = vld [vmem:[%s3647] sm:$0xf]
  %v3649 = vld [vmem:[%s3647 + $0x4] sm:$0xf]
  %v3650 = vld [vmem:[%s3647 + $0x8] sm:$0xf]
  %v3651 = vld [vmem:[%s3647 + $0xc] sm:$0xf]
  %v3652 = vld [vmem:[%s3647 + $0x10] sm:$0xf]
  %v3653 = vld [vmem:[%s3647 + $0x14] sm:$0xf]
  %v3654 = vld [vmem:[%s3647 + $0x18] sm:$0xf]
  %v3655 = vld [vmem:[%s3647 + $0x1c] sm:$0xf]
  %v3656 = vld [vmem:[%s3647 + $0x20] sm:$0xf]
  %v3657 = vld [vmem:[%s3647 + $0x24] sm:$0xf]
  %v3658 = vld [vmem:[%s3647 + $0x28] sm:$0xf]
  %v3659 = vld [vmem:[%s3647 + $0x2c] sm:$0xf]
  %v3660 = vld [vmem:[%s3647 + $0x30] sm:$0xf]
  %v3661 = vld [vmem:[%s3647 + $0x34] sm:$0xf]
  %v3662 = vld [vmem:[%s3647 + $0x38] sm:$0xf]
  %v3663 = vld [vmem:[%s3647 + $0x3c] sm:$0xf]
  %v3664 = vld [vmem:[%s3647 + $0x40] sm:$0xf]
  %v3665 = vld [vmem:[%s3647 + $0x44] sm:$0xf]
  %v3666 = vld [vmem:[%s3647 + $0x48] sm:$0xf]
  %v3667 = vld [vmem:[%s3647 + $0x4c] sm:$0xf]
  %v3668 = vld [vmem:[%s3647 + $0x50] sm:$0xf]
  %v3669 = vld [vmem:[%s3647 + $0x54] sm:$0xf]
  %v3670 = vld [vmem:[%s3647 + $0x58] sm:$0xf]
  %v3671 = vld [vmem:[%s3647 + $0x5c] sm:$0xf]
  %v3672 = vld [vmem:[%s3647 + $0x60] sm:$0xf]
  %v3673 = vld [vmem:[%s3647 + $0x64] sm:$0xf]
  %v3674 = vld [vmem:[%s3647 + $0x68] sm:$0xf]
  %v3675 = vld [vmem:[%s3647 + $0x6c] sm:$0xf]
  %v3676 = vld [vmem:[%s3647 + $0x70] sm:$0xf]
  %v3677 = vld [vmem:[%s3647 + $0x74] sm:$0xf]
  %v3678 = vld [vmem:[%s3647 + $0x78] sm:$0xf]
  %v3679 = vld [vmem:[%s3647 + $0x7c] sm:$0xf]
  %v3712 = vunpack.c.l.b16 %v3648
  %v3713 = vunpack.c.l.b16 %v3649
  %v3714 = vunpack.c.l.b16 %v3650
  %v3715 = vunpack.c.l.b16 %v3651
  %v3716 = vunpack.c.l.b16 %v3652
  %v3717 = vunpack.c.l.b16 %v3653
  %v3718 = vunpack.c.l.b16 %v3654
  %v3719 = vunpack.c.l.b16 %v3655
  %v3720 = vunpack.c.l.b16 %v3656
  %v3721 = vunpack.c.l.b16 %v3657
  %v3722 = vunpack.c.l.b16 %v3658
  %v3723 = vunpack.c.l.b16 %v3659
  %v3724 = vunpack.c.l.b16 %v3660
  %v3725 = vunpack.c.l.b16 %v3661
  %v3726 = vunpack.c.l.b16 %v3662
  %v3727 = vunpack.c.l.b16 %v3663
  %v3728 = vunpack.c.l.b16 %v3664
  %v3729 = vunpack.c.l.b16 %v3665
  %v3730 = vunpack.c.l.b16 %v3666
  %v3731 = vunpack.c.l.b16 %v3667
  %v3732 = vunpack.c.l.b16 %v3668
  %v3733 = vunpack.c.l.b16 %v3669
  %v3734 = vunpack.c.l.b16 %v3670
  %v3735 = vunpack.c.l.b16 %v3671
  %v3736 = vunpack.c.l.b16 %v3672
  %v3737 = vunpack.c.l.b16 %v3673
  %v3738 = vunpack.c.l.b16 %v3674
  %v3739 = vunpack.c.l.b16 %v3675
  %v3740 = vunpack.c.l.b16 %v3676
  %v3741 = vunpack.c.l.b16 %v3677
  %v3742 = vunpack.c.l.b16 %v3678
  %v3743 = vunpack.c.l.b16 %v3679
  %v3744 = vpack.c.b16 %v3713, %v3712
  %v3745 = vpack.c.b16 %v3715, %v3714
  %v3746 = vpack.c.b16 %v3717, %v3716
  %v3747 = vpack.c.b16 %v3719, %v3718
  %v3748 = vpack.c.b16 %v3721, %v3720
  %v3749 = vpack.c.b16 %v3723, %v3722
  %v3750 = vpack.c.b16 %v3725, %v3724
  %v3751 = vpack.c.b16 %v3727, %v3726
  %v3752 = vpack.c.b16 %v3729, %v3728
  %v3753 = vpack.c.b16 %v3731, %v3730
  %v3754 = vpack.c.b16 %v3733, %v3732
  %v3755 = vpack.c.b16 %v3735, %v3734
  %v3756 = vpack.c.b16 %v3737, %v3736
  %v3757 = vpack.c.b16 %v3739, %v3738
  %v3758 = vpack.c.b16 %v3741, %v3740
  %v3759 = vpack.c.b16 %v3743, %v3742
  %3776 = vmatprep.subr.bf16.mxu0 0
  %3777 = vmatpush1.bf16.msra.mxu0 %v3751
  %3778 = vmatprep.subr.bf16.mxu0 0
  %3779 = vmatpush1.bf16.msra.mxu0 %v3750
  %3780 = vmatprep.subr.bf16.mxu0 0
  %3781 = vmatpush1.bf16.msra.mxu0 %v3749
  %3782 = vmatprep.subr.bf16.mxu0 0
  %3783 = vmatpush1.bf16.msra.mxu0 %v3748
  %3784 = vmatprep.subr.bf16.mxu0 0
  %3785 = vmatpush1.bf16.msra.mxu0 %v3747
  %3786 = vmatprep.subr.bf16.mxu0 0
  %3787 = vmatpush1.bf16.msra.mxu0 %v3746
  %3788 = vmatprep.subr.bf16.mxu0 0
  %3789 = vmatpush1.bf16.msra.mxu0 %v3745
  %3790 = vmatprep.subr.bf16.mxu0 0
  %3791 = vmatpush1.bf16.msra.mxu0 %v3744
  %3792 = vmatprep.subr.bf16.mxu0 0
  %3793 = vmatpush2.bf16.msra.mxu0 %v3759
  %3794 = vmatprep.subr.bf16.mxu0 0
  %3795 = vmatpush2.bf16.msra.mxu0 %v3758
  %3796 = vmatprep.subr.bf16.mxu0 0
  %3797 = vmatpush2.bf16.msra.mxu0 %v3757
  %3798 = vmatprep.subr.bf16.mxu0 0
  %3799 = vmatpush2.bf16.msra.mxu0 %v3756
  %3800 = vmatprep.subr.bf16.mxu0 0
  %3801 = vmatpush2.bf16.msra.mxu0 %v3755
  %3802 = vmatprep.subr.bf16.mxu0 0
  %3803 = vmatpush2.bf16.msra.mxu0 %v3754
  %3804 = vmatprep.subr.bf16.mxu0 0
  %3805 = vmatpush2.bf16.msra.mxu0 %v3753
  %3806 = vmatprep.subr.bf16.mxu0 0
  %3807 = vmatpush2.bf16.msra.mxu0 %v3752
  %3808 = vmatprep.mubr.bf16.mxu0 %v3646
  %3809 = vmatmul.mubr.bf16.gmra.mxu0 %v3645
  %v3810 = vpop.f32.mrf.mxu0
  %v3811 = vadd.f32 0.0, %v3810
  %v3812 = vpop.f32.mrf.mxu0
  %v3813 = vpop.f32.mrf.mxu0
  %v3814 = vpop.f32.mrf.mxu0
  %3815 = vdwg.mxu0
  %v3816 = vadd.f32 %v3510, %v3811
  %s3817 = scalar_lea.vmem [#allocation2], 144
  %v3818 = vld [vmem:[%s3817] sm:$0xff]
  %v3819 = vld [vmem:[%s3817 + $0x8] sm:$0xff]
  %3820 = vmatprep.subr.bf16.mxu0 %v625
  %3821 = vmatpush1.bf16.msra.mxu0 %v624
  %3822 = vmatprep.subr.bf16.mxu0 %v623
  %3823 = vmatpush1.bf16.msra.mxu0 %v622
  %3824 = vmatprep.subr.bf16.mxu0 %v621
  %3825 = vmatpush1.bf16.msra.mxu0 %v620
  %3826 = vmatprep.subr.bf16.mxu0 %v619
  %3827 = vmatpush1.bf16.msra.mxu0 %v618
  %3828 = vmatprep.subr.bf16.mxu0 %v617
  %3829 = vmatpush1.bf16.msra.mxu0 %v616
  %3830 = vmatprep.subr.bf16.mxu0 %v615
  %3831 = vmatpush1.bf16.msra.mxu0 %v614
  %3832 = vmatprep.subr.bf16.mxu0 %v613
  %3833 = vmatpush1.bf16.msra.mxu0 %v612
  %3834 = vmatprep.subr.bf16.mxu0 %v611
  %3835 = vmatpush1.bf16.msra.mxu0 %v610
  %3836 = vmatprep.subr.bf16.mxu0 %v641
  %3837 = vmatpush2.bf16.msra.mxu0 %v640
  %3838 = vmatprep.subr.bf16.mxu0 %v639
  %3839 = vmatpush2.bf16.msra.mxu0 %v638
  %3840 = vmatprep.subr.bf16.mxu0 %v637
  %3841 = vmatpush2.bf16.msra.mxu0 %v636
  %3842 = vmatprep.subr.bf16.mxu0 %v635
  %3843 = vmatpush2.bf16.msra.mxu0 %v634
  %3844 = vmatprep.subr.bf16.mxu0 %v633
  %3845 = vmatpush2.bf16.msra.mxu0 %v632
  %3846 = vmatprep.subr.bf16.mxu0 %v631
  %3847 = vmatpush2.bf16.msra.mxu0 %v630
  %3848 = vmatprep.subr.bf16.mxu0 %v629
  %3849 = vmatpush2.bf16.msra.mxu0 %v628
  %3850 = vmatprep.subr.bf16.mxu0 %v627
  %3851 = vmatpush2.bf16.msra.mxu0 %v626
  %3852 = vmatprep.mubr.bf16.mxu0 %v3560
  %3853 = vmatmul.mubr.bf16.gmra.mxu0 %v3559
  %v3854 = vpop.f32.mrf.mxu0
  %v3855 = vadd.f32 0.0, %v3854
  %v3856 = vpop.f32.mrf.mxu0
  %v3857 = vadd.f32 0.0, %v3856
  %v3858 = vpop.f32.mrf.mxu0
  %v3859 = vpop.f32.mrf.mxu0
  %3860 = vdwg.mxu0
  %v3861 = vadd.f32 %v3818, %v3855
  %v3862 = vadd.f32 %v3819, %v3857
  %v3863 = vtanh.pop %v3861
  %v3864 = vtanh.pop %v3862
  %v3865 = vpack.c.bf16 %v3863, %v3863
  %v3866 = vpack.c.bf16 %v3864, %v3864
  %3867 = vmatprep.subr.bf16.mxu0 %v1003
  %3868 = vmatpush1.bf16.msra.mxu0 %v1002
  %3869 = vmatprep.subr.bf16.mxu0 %v1001
  %3870 = vmatpush1.bf16.msra.mxu0 %v1000
  %3871 = vmatprep.subr.bf16.mxu0 %v999
  %3872 = vmatpush1.bf16.msra.mxu0 %v998
  %3873 = vmatprep.subr.bf16.mxu0 %v997
  %3874 = vmatpush1.bf16.msra.mxu0 %v996
  %3875 = vmatprep.subr.bf16.mxu0 %v995
  %3876 = vmatpush1.bf16.msra.mxu0 %v994
  %3877 = vmatprep.subr.bf16.mxu0 %v993
  %3878 = vmatpush1.bf16.msra.mxu0 %v992
  %3879 = vmatprep.subr.bf16.mxu0 %v991
  %3880 = vmatpush1.bf16.msra.mxu0 %v990
  %3881 = vmatprep.subr.bf16.mxu0 %v989
  %3882 = vmatpush1.bf16.msra.mxu0 %v988
  %3883 = vmatprep.subr.bf16.mxu0 %v1019
  %3884 = vmatpush2.bf16.msra.mxu0 %v1018
  %3885 = vmatprep.subr.bf16.mxu0 %v1017
  %3886 = vmatpush2.bf16.msra.mxu0 %v1016
  %3887 = vmatprep.subr.bf16.mxu0 %v1015
  %3888 = vmatpush2.bf16.msra.mxu0 %v1014
  %3889 = vmatprep.subr.bf16.mxu0 %v1013
  %3890 = vmatpush2.bf16.msra.mxu0 %v1012
  %3891 = vmatprep.subr.bf16.mxu0 %v1011
  %3892 = vmatpush2.bf16.msra.mxu0 %v1010
  %3893 = vmatprep.subr.bf16.mxu0 %v1009
  %3894 = vmatpush2.bf16.msra.mxu0 %v1008
  %3895 = vmatprep.subr.bf16.mxu0 %v1007
  %3896 = vmatpush2.bf16.msra.mxu0 %v1006
  %3897 = vmatprep.subr.bf16.mxu0 %v1005
  %3898 = vmatpush2.bf16.msra.mxu0 %v1004
  %3899 = vmatprep.mubr.bf16.mxu0 %v3866
  %3900 = vmatmul.mubr.bf16.gmra.mxu0 %v3865
  %v3901 = vpop.f32.mrf.mxu0
  %v3902 = vadd.f32 %v789, %v3901
  %v3903 = vpop.f32.mrf.mxu0
  %v3904 = vadd.f32 %v793, %v3903
  %v3905 = vpop.f32.mrf.mxu0
  %v3906 = vpop.f32.mrf.mxu0
  %3907 = vdwg.mxu0
  %3908 = vmatprep.subr.bf16.mxu0 %v1035
  %3909 = vmatpush1.bf16.msra.mxu0 %v1034
  %3910 = vmatprep.subr.bf16.mxu0 %v1033
  %3911 = vmatpush1.bf16.msra.mxu0 %v1032
  %3912 = vmatprep.subr.bf16.mxu0 %v1031
  %3913 = vmatpush1.bf16.msra.mxu0 %v1030
  %3914 = vmatprep.subr.bf16.mxu0 %v1029
  %3915 = vmatpush1.bf16.msra.mxu0 %v1028
  %3916 = vmatprep.subr.bf16.mxu0 %v1027
  %3917 = vmatpush1.bf16.msra.mxu0 %v1026
  %3918 = vmatprep.subr.bf16.mxu0 %v1025
  %3919 = vmatpush1.bf16.msra.mxu0 %v1024
  %3920 = vmatprep.subr.bf16.mxu0 %v1023
  %3921 = vmatpush1.bf16.msra.mxu0 %v1022
  %3922 = vmatprep.subr.bf16.mxu0 %v1021
  %3923 = vmatpush1.bf16.msra.mxu0 %v1020
  %3924 = vmatprep.subr.bf16.mxu0 %v1051
  %3925 = vmatpush2.bf16.msra.mxu0 %v1050
  %3926 = vmatprep.subr.bf16.mxu0 %v1049
  %3927 = vmatpush2.bf16.msra.mxu0 %v1048
  %3928 = vmatprep.subr.bf16.mxu0 %v1047
  %3929 = vmatpush2.bf16.msra.mxu0 %v1046
  %3930 = vmatprep.subr.bf16.mxu0 %v1045
  %3931 = vmatpush2.bf16.msra.mxu0 %v1044
  %3932 = vmatprep.subr.bf16.mxu0 %v1043
  %3933 = vmatpush2.bf16.msra.mxu0 %v1042
  %3934 = vmatprep.subr.bf16.mxu0 %v1041
  %3935 = vmatpush2.bf16.msra.mxu0 %v1040
  %3936 = vmatprep.subr.bf16.mxu0 %v1039
  %3937 = vmatpush2.bf16.msra.mxu0 %v1038
  %3938 = vmatprep.subr.bf16.mxu0 %v1037
  %3939 = vmatpush2.bf16.msra.mxu0 %v1036
  %3940 = vmatprep.mubr.bf16.mxu0 %v3646
  %3941 = vmatmul.mubr.bf16.gmra.mxu0 %v3645
  %v3942 = vpop.f32.mrf.mxu0
  %v3943 = vadd.f32 %v3902, %v3942
  %v3944 = vpop.f32.mrf.mxu0
  %v3945 = vadd.f32 %v3904, %v3944
  %v3946 = vpop.f32.mrf.mxu0
  %v3947 = vpop.f32.mrf.mxu0
  %3948 = vdwg.mxu0
  %v3949 = vtanh.pop %v3943
  %v3950 = vtanh.pop %v3945
  %v3951 = vpack.c.bf16 %v3949, %v3949
  %v3952 = vpack.c.bf16 %v3950, %v3950
  %s3953 = scalar_lea.vmem %s6, 1152
  %v3954 = vld [vmem:[%s3953] sm:$0xf]
  %v3955 = vld [vmem:[%s3953 + $0x4] sm:$0xf]
  %v3956 = vld [vmem:[%s3953 + $0x8] sm:$0xf]
  %v3957 = vld [vmem:[%s3953 + $0xc] sm:$0xf]
  %v3958 = vld [vmem:[%s3953 + $0x10] sm:$0xf]
  %v3959 = vld [vmem:[%s3953 + $0x14] sm:$0xf]
  %v3960 = vld [vmem:[%s3953 + $0x18] sm:$0xf]
  %v3961 = vld [vmem:[%s3953 + $0x1c] sm:$0xf]
  %v3962 = vld [vmem:[%s3953 + $0x20] sm:$0xf]
  %v3963 = vld [vmem:[%s3953 + $0x24] sm:$0xf]
  %v3964 = vld [vmem:[%s3953 + $0x28] sm:$0xf]
  %v3965 = vld [vmem:[%s3953 + $0x2c] sm:$0xf]
  %v3966 = vld [vmem:[%s3953 + $0x30] sm:$0xf]
  %v3967 = vld [vmem:[%s3953 + $0x34] sm:$0xf]
  %v3968 = vld [vmem:[%s3953 + $0x38] sm:$0xf]
  %v3969 = vld [vmem:[%s3953 + $0x3c] sm:$0xf]
  %v3970 = vld [vmem:[%s3953 + $0x40] sm:$0xf]
  %v3971 = vld [vmem:[%s3953 + $0x44] sm:$0xf]
  %v3972 = vld [vmem:[%s3953 + $0x48] sm:$0xf]
  %v3973 = vld [vmem:[%s3953 + $0x4c] sm:$0xf]
  %v3974 = vld [vmem:[%s3953 + $0x50] sm:$0xf]
  %v3975 = vld [vmem:[%s3953 + $0x54] sm:$0xf]
  %v3976 = vld [vmem:[%s3953 + $0x58] sm:$0xf]
  %v3977 = vld [vmem:[%s3953 + $0x5c] sm:$0xf]
  %v3978 = vld [vmem:[%s3953 + $0x60] sm:$0xf]
  %v3979 = vld [vmem:[%s3953 + $0x64] sm:$0xf]
  %v3980 = vld [vmem:[%s3953 + $0x68] sm:$0xf]
  %v3981 = vld [vmem:[%s3953 + $0x6c] sm:$0xf]
  %v3982 = vld [vmem:[%s3953 + $0x70] sm:$0xf]
  %v3983 = vld [vmem:[%s3953 + $0x74] sm:$0xf]
  %v3984 = vld [vmem:[%s3953 + $0x78] sm:$0xf]
  %v3985 = vld [vmem:[%s3953 + $0x7c] sm:$0xf]
  %v4018 = vunpack.c.l.b16 %v3954
  %v4019 = vunpack.c.l.b16 %v3955
  %v4020 = vunpack.c.l.b16 %v3956
  %v4021 = vunpack.c.l.b16 %v3957
  %v4022 = vunpack.c.l.b16 %v3958
  %v4023 = vunpack.c.l.b16 %v3959
  %v4024 = vunpack.c.l.b16 %v3960
  %v4025 = vunpack.c.l.b16 %v3961
  %v4026 = vunpack.c.l.b16 %v3962
  %v4027 = vunpack.c.l.b16 %v3963
  %v4028 = vunpack.c.l.b16 %v3964
  %v4029 = vunpack.c.l.b16 %v3965
  %v4030 = vunpack.c.l.b16 %v3966
  %v4031 = vunpack.c.l.b16 %v3967
  %v4032 = vunpack.c.l.b16 %v3968
  %v4033 = vunpack.c.l.b16 %v3969
  %v4034 = vunpack.c.l.b16 %v3970
  %v4035 = vunpack.c.l.b16 %v3971
  %v4036 = vunpack.c.l.b16 %v3972
  %v4037 = vunpack.c.l.b16 %v3973
  %v4038 = vunpack.c.l.b16 %v3974
  %v4039 = vunpack.c.l.b16 %v3975
  %v4040 = vunpack.c.l.b16 %v3976
  %v4041 = vunpack.c.l.b16 %v3977
  %v4042 = vunpack.c.l.b16 %v3978
  %v4043 = vunpack.c.l.b16 %v3979
  %v4044 = vunpack.c.l.b16 %v3980
  %v4045 = vunpack.c.l.b16 %v3981
  %v4046 = vunpack.c.l.b16 %v3982
  %v4047 = vunpack.c.l.b16 %v3983
  %v4048 = vunpack.c.l.b16 %v3984
  %v4049 = vunpack.c.l.b16 %v3985
  %v4050 = vpack.c.b16 %v4019, %v4018
  %v4051 = vpack.c.b16 %v4021, %v4020
  %v4052 = vpack.c.b16 %v4023, %v4022
  %v4053 = vpack.c.b16 %v4025, %v4024
  %v4054 = vpack.c.b16 %v4027, %v4026
  %v4055 = vpack.c.b16 %v4029, %v4028
  %v4056 = vpack.c.b16 %v4031, %v4030
  %v4057 = vpack.c.b16 %v4033, %v4032
  %v4058 = vpack.c.b16 %v4035, %v4034
  %v4059 = vpack.c.b16 %v4037, %v4036
  %v4060 = vpack.c.b16 %v4039, %v4038
  %v4061 = vpack.c.b16 %v4041, %v4040
  %v4062 = vpack.c.b16 %v4043, %v4042
  %v4063 = vpack.c.b16 %v4045, %v4044
  %v4064 = vpack.c.b16 %v4047, %v4046
  %v4065 = vpack.c.b16 %v4049, %v4048
  %4082 = vmatprep.subr.bf16.mxu0 0
  %4083 = vmatpush1.bf16.msra.mxu0 %v4057
  %4084 = vmatprep.subr.bf16.mxu0 0
  %4085 = vmatpush1.bf16.msra.mxu0 %v4056
  %4086 = vmatprep.subr.bf16.mxu0 0
  %4087 = vmatpush1.bf16.msra.mxu0 %v4055
  %4088 = vmatprep.subr.bf16.mxu0 0
  %4089 = vmatpush1.bf16.msra.mxu0 %v4054
  %4090 = vmatprep.subr.bf16.mxu0 0
  %4091 = vmatpush1.bf16.msra.mxu0 %v4053
  %4092 = vmatprep.subr.bf16.mxu0 0
  %4093 = vmatpush1.bf16.msra.mxu0 %v4052
  %4094 = vmatprep.subr.bf16.mxu0 0
  %4095 = vmatpush1.bf16.msra.mxu0 %v4051
  %4096 = vmatprep.subr.bf16.mxu0 0
  %4097 = vmatpush1.bf16.msra.mxu0 %v4050
  %4098 = vmatprep.subr.bf16.mxu0 0
  %4099 = vmatpush2.bf16.msra.mxu0 %v4065
  %4100 = vmatprep.subr.bf16.mxu0 0
  %4101 = vmatpush2.bf16.msra.mxu0 %v4064
  %4102 = vmatprep.subr.bf16.mxu0 0
  %4103 = vmatpush2.bf16.msra.mxu0 %v4063
  %4104 = vmatprep.subr.bf16.mxu0 0
  %4105 = vmatpush2.bf16.msra.mxu0 %v4062
  %4106 = vmatprep.subr.bf16.mxu0 0
  %4107 = vmatpush2.bf16.msra.mxu0 %v4061
  %4108 = vmatprep.subr.bf16.mxu0 0
  %4109 = vmatpush2.bf16.msra.mxu0 %v4060
  %4110 = vmatprep.subr.bf16.mxu0 0
  %4111 = vmatpush2.bf16.msra.mxu0 %v4059
  %4112 = vmatprep.subr.bf16.mxu0 0
  %4113 = vmatpush2.bf16.msra.mxu0 %v4058
  %4114 = vmatprep.mubr.bf16.mxu0 %v3952
  %4115 = vmatmul.mubr.bf16.gmra.mxu0 %v3951
  %v4116 = vpop.f32.mrf.mxu0
  %v4117 = vadd.f32 0.0, %v4116
  %v4118 = vpop.f32.mrf.mxu0
  %v4119 = vpop.f32.mrf.mxu0
  %v4120 = vpop.f32.mrf.mxu0
  %4121 = vdwg.mxu0
  %v4122 = vadd.f32 %v3816, %v4117
  %s4123 = scalar_lea.vmem [#allocation2], 160
  %v4124 = vld [vmem:[%s4123] sm:$0xff]
  %v4125 = vld [vmem:[%s4123 + $0x8] sm:$0xff]
  %4126 = vmatprep.subr.bf16.mxu0 %v625
  %4127 = vmatpush1.bf16.msra.mxu0 %v624
  %4128 = vmatprep.subr.bf16.mxu0 %v623
  %4129 = vmatpush1.bf16.msra.mxu0 %v622
  %4130 = vmatprep.subr.bf16.mxu0 %v621
  %4131 = vmatpush1.bf16.msra.mxu0 %v620
  %4132 = vmatprep.subr.bf16.mxu0 %v619
  %4133 = vmatpush1.bf16.msra.mxu0 %v618
  %4134 = vmatprep.subr.bf16.mxu0 %v617
  %4135 = vmatpush1.bf16.msra.mxu0 %v616
  %4136 = vmatprep.subr.bf16.mxu0 %v615
  %4137 = vmatpush1.bf16.msra.mxu0 %v614
  %4138 = vmatprep.subr.bf16.mxu0 %v613
  %4139 = vmatpush1.bf16.msra.mxu0 %v612
  %4140 = vmatprep.subr.bf16.mxu0 %v611
  %4141 = vmatpush1.bf16.msra.mxu0 %v610
  %4142 = vmatprep.subr.bf16.mxu0 %v641
  %4143 = vmatpush2.bf16.msra.mxu0 %v640
  %4144 = vmatprep.subr.bf16.mxu0 %v639
  %4145 = vmatpush2.bf16.msra.mxu0 %v638
  %4146 = vmatprep.subr.bf16.mxu0 %v637
  %4147 = vmatpush2.bf16.msra.mxu0 %v636
  %4148 = vmatprep.subr.bf16.mxu0 %v635
  %4149 = vmatpush2.bf16.msra.mxu0 %v634
  %4150 = vmatprep.subr.bf16.mxu0 %v633
  %4151 = vmatpush2.bf16.msra.mxu0 %v632
  %4152 = vmatprep.subr.bf16.mxu0 %v631
  %4153 = vmatpush2.bf16.msra.mxu0 %v630
  %4154 = vmatprep.subr.bf16.mxu0 %v629
  %4155 = vmatpush2.bf16.msra.mxu0 %v628
  %4156 = vmatprep.subr.bf16.mxu0 %v627
  %4157 = vmatpush2.bf16.msra.mxu0 %v626
  %4158 = vmatprep.mubr.bf16.mxu0 %v3866
  %4159 = vmatmul.mubr.bf16.gmra.mxu0 %v3865
  %v4160 = vpop.f32.mrf.mxu0
  %v4161 = vadd.f32 0.0, %v4160
  %v4162 = vpop.f32.mrf.mxu0
  %v4163 = vadd.f32 0.0, %v4162
  %v4164 = vpop.f32.mrf.mxu0
  %v4165 = vpop.f32.mrf.mxu0
  %4166 = vdwg.mxu0
  %v4167 = vadd.f32 %v4124, %v4161
  %v4168 = vadd.f32 %v4125, %v4163
  %v4169 = vtanh.pop %v4167
  %v4170 = vtanh.pop %v4168
  %v4171 = vpack.c.bf16 %v4169, %v4169
  %v4172 = vpack.c.bf16 %v4170, %v4170
  %4173 = vmatprep.subr.bf16.mxu0 %v1003
  %4174 = vmatpush1.bf16.msra.mxu0 %v1002
  %4175 = vmatprep.subr.bf16.mxu0 %v1001
  %4176 = vmatpush1.bf16.msra.mxu0 %v1000
  %4177 = vmatprep.subr.bf16.mxu0 %v999
  %4178 = vmatpush1.bf16.msra.mxu0 %v998
  %4179 = vmatprep.subr.bf16.mxu0 %v997
  %4180 = vmatpush1.bf16.msra.mxu0 %v996
  %4181 = vmatprep.subr.bf16.mxu0 %v995
  %4182 = vmatpush1.bf16.msra.mxu0 %v994
  %4183 = vmatprep.subr.bf16.mxu0 %v993
  %4184 = vmatpush1.bf16.msra.mxu0 %v992
  %4185 = vmatprep.subr.bf16.mxu0 %v991
  %4186 = vmatpush1.bf16.msra.mxu0 %v990
  %4187 = vmatprep.subr.bf16.mxu0 %v989
  %4188 = vmatpush1.bf16.msra.mxu0 %v988
  %4189 = vmatprep.subr.bf16.mxu0 %v1019
  %4190 = vmatpush2.bf16.msra.mxu0 %v1018
  %4191 = vmatprep.subr.bf16.mxu0 %v1017
  %4192 = vmatpush2.bf16.msra.mxu0 %v1016
  %4193 = vmatprep.subr.bf16.mxu0 %v1015
  %4194 = vmatpush2.bf16.msra.mxu0 %v1014
  %4195 = vmatprep.subr.bf16.mxu0 %v1013
  %4196 = vmatpush2.bf16.msra.mxu0 %v1012
  %4197 = vmatprep.subr.bf16.mxu0 %v1011
  %4198 = vmatpush2.bf16.msra.mxu0 %v1010
  %4199 = vmatprep.subr.bf16.mxu0 %v1009
  %4200 = vmatpush2.bf16.msra.mxu0 %v1008
  %4201 = vmatprep.subr.bf16.mxu0 %v1007
  %4202 = vmatpush2.bf16.msra.mxu0 %v1006
  %4203 = vmatprep.subr.bf16.mxu0 %v1005
  %4204 = vmatpush2.bf16.msra.mxu0 %v1004
  %4205 = vmatprep.mubr.bf16.mxu0 %v4172
  %4206 = vmatmul.mubr.bf16.gmra.mxu0 %v4171
  %v4207 = vpop.f32.mrf.mxu0
  %v4208 = vadd.f32 %v789, %v4207
  %v4209 = vpop.f32.mrf.mxu0
  %v4210 = vadd.f32 %v793, %v4209
  %v4211 = vpop.f32.mrf.mxu0
  %v4212 = vpop.f32.mrf.mxu0
  %4213 = vdwg.mxu0
  %4214 = vmatprep.subr.bf16.mxu0 %v1035
  %4215 = vmatpush1.bf16.msra.mxu0 %v1034
  %4216 = vmatprep.subr.bf16.mxu0 %v1033
  %4217 = vmatpush1.bf16.msra.mxu0 %v1032
  %4218 = vmatprep.subr.bf16.mxu0 %v1031
  %4219 = vmatpush1.bf16.msra.mxu0 %v1030
  %4220 = vmatprep.subr.bf16.mxu0 %v1029
  %4221 = vmatpush1.bf16.msra.mxu0 %v1028
  %4222 = vmatprep.subr.bf16.mxu0 %v1027
  %4223 = vmatpush1.bf16.msra.mxu0 %v1026
  %4224 = vmatprep.subr.bf16.mxu0 %v1025
  %4225 = vmatpush1.bf16.msra.mxu0 %v1024
  %4226 = vmatprep.subr.bf16.mxu0 %v1023
  %4227 = vmatpush1.bf16.msra.mxu0 %v1022
  %4228 = vmatprep.subr.bf16.mxu0 %v1021
  %4229 = vmatpush1.bf16.msra.mxu0 %v1020
  %4230 = vmatprep.subr.bf16.mxu0 %v1051
  %4231 = vmatpush2.bf16.msra.mxu0 %v1050
  %4232 = vmatprep.subr.bf16.mxu0 %v1049
  %4233 = vmatpush2.bf16.msra.mxu0 %v1048
  %4234 = vmatprep.subr.bf16.mxu0 %v1047
  %4235 = vmatpush2.bf16.msra.mxu0 %v1046
  %4236 = vmatprep.subr.bf16.mxu0 %v1045
  %4237 = vmatpush2.bf16.msra.mxu0 %v1044
  %4238 = vmatprep.subr.bf16.mxu0 %v1043
  %4239 = vmatpush2.bf16.msra.mxu0 %v1042
  %4240 = vmatprep.subr.bf16.mxu0 %v1041
  %4241 = vmatpush2.bf16.msra.mxu0 %v1040
  %4242 = vmatprep.subr.bf16.mxu0 %v1039
  %4243 = vmatpush2.bf16.msra.mxu0 %v1038
  %4244 = vmatprep.subr.bf16.mxu0 %v1037
  %4245 = vmatpush2.bf16.msra.mxu0 %v1036
  %4246 = vmatprep.mubr.bf16.mxu0 %v3952
  %4247 = vmatmul.mubr.bf16.gmra.mxu0 %v3951
  %v4248 = vpop.f32.mrf.mxu0
  %v4249 = vadd.f32 %v4208, %v4248
  %v4250 = vpop.f32.mrf.mxu0
  %v4251 = vadd.f32 %v4210, %v4250
  %v4252 = vpop.f32.mrf.mxu0
  %v4253 = vpop.f32.mrf.mxu0
  %4254 = vdwg.mxu0
  %v4255 = vtanh.pop %v4249
  %v4256 = vtanh.pop %v4251
  %v4257 = vpack.c.bf16 %v4255, %v4255
  %v4258 = vpack.c.bf16 %v4256, %v4256
  %s4259 = scalar_lea.vmem %s6, 1280
  %v4260 = vld [vmem:[%s4259] sm:$0xf]
  %v4261 = vld [vmem:[%s4259 + $0x4] sm:$0xf]
  %v4262 = vld [vmem:[%s4259 + $0x8] sm:$0xf]
  %v4263 = vld [vmem:[%s4259 + $0xc] sm:$0xf]
  %v4264 = vld [vmem:[%s4259 + $0x10] sm:$0xf]
  %v4265 = vld [vmem:[%s4259 + $0x14] sm:$0xf]
  %v4266 = vld [vmem:[%s4259 + $0x18] sm:$0xf]
  %v4267 = vld [vmem:[%s4259 + $0x1c] sm:$0xf]
  %v4268 = vld [vmem:[%s4259 + $0x20] sm:$0xf]
  %v4269 = vld [vmem:[%s4259 + $0x24] sm:$0xf]
  %v4270 = vld [vmem:[%s4259 + $0x28] sm:$0xf]
  %v4271 = vld [vmem:[%s4259 + $0x2c] sm:$0xf]
  %v4272 = vld [vmem:[%s4259 + $0x30] sm:$0xf]
  %v4273 = vld [vmem:[%s4259 + $0x34] sm:$0xf]
  %v4274 = vld [vmem:[%s4259 + $0x38] sm:$0xf]
  %v4275 = vld [vmem:[%s4259 + $0x3c] sm:$0xf]
  %v4276 = vld [vmem:[%s4259 + $0x40] sm:$0xf]
  %v4277 = vld [vmem:[%s4259 + $0x44] sm:$0xf]
  %v4278 = vld [vmem:[%s4259 + $0x48] sm:$0xf]
  %v4279 = vld [vmem:[%s4259 + $0x4c] sm:$0xf]
  %v4280 = vld [vmem:[%s4259 + $0x50] sm:$0xf]
  %v4281 = vld [vmem:[%s4259 + $0x54] sm:$0xf]
  %v4282 = vld [vmem:[%s4259 + $0x58] sm:$0xf]
  %v4283 = vld [vmem:[%s4259 + $0x5c] sm:$0xf]
  %v4284 = vld [vmem:[%s4259 + $0x60] sm:$0xf]
  %v4285 = vld [vmem:[%s4259 + $0x64] sm:$0xf]
  %v4286 = vld [vmem:[%s4259 + $0x68] sm:$0xf]
  %v4287 = vld [vmem:[%s4259 + $0x6c] sm:$0xf]
  %v4288 = vld [vmem:[%s4259 + $0x70] sm:$0xf]
  %v4289 = vld [vmem:[%s4259 + $0x74] sm:$0xf]
  %v4290 = vld [vmem:[%s4259 + $0x78] sm:$0xf]
  %v4291 = vld [vmem:[%s4259 + $0x7c] sm:$0xf]
  %v4324 = vunpack.c.l.b16 %v4260
  %v4325 = vunpack.c.l.b16 %v4261
  %v4326 = vunpack.c.l.b16 %v4262
  %v4327 = vunpack.c.l.b16 %v4263
  %v4328 = vunpack.c.l.b16 %v4264
  %v4329 = vunpack.c.l.b16 %v4265
  %v4330 = vunpack.c.l.b16 %v4266
  %v4331 = vunpack.c.l.b16 %v4267
  %v4332 = vunpack.c.l.b16 %v4268
  %v4333 = vunpack.c.l.b16 %v4269
  %v4334 = vunpack.c.l.b16 %v4270
  %v4335 = vunpack.c.l.b16 %v4271
  %v4336 = vunpack.c.l.b16 %v4272
  %v4337 = vunpack.c.l.b16 %v4273
  %v4338 = vunpack.c.l.b16 %v4274
  %v4339 = vunpack.c.l.b16 %v4275
  %v4340 = vunpack.c.l.b16 %v4276
  %v4341 = vunpack.c.l.b16 %v4277
  %v4342 = vunpack.c.l.b16 %v4278
  %v4343 = vunpack.c.l.b16 %v4279
  %v4344 = vunpack.c.l.b16 %v4280
  %v4345 = vunpack.c.l.b16 %v4281
  %v4346 = vunpack.c.l.b16 %v4282
  %v4347 = vunpack.c.l.b16 %v4283
  %v4348 = vunpack.c.l.b16 %v4284
  %v4349 = vunpack.c.l.b16 %v4285
  %v4350 = vunpack.c.l.b16 %v4286
  %v4351 = vunpack.c.l.b16 %v4287
  %v4352 = vunpack.c.l.b16 %v4288
  %v4353 = vunpack.c.l.b16 %v4289
  %v4354 = vunpack.c.l.b16 %v4290
  %v4355 = vunpack.c.l.b16 %v4291
  %v4356 = vpack.c.b16 %v4325, %v4324
  %v4357 = vpack.c.b16 %v4327, %v4326
  %v4358 = vpack.c.b16 %v4329, %v4328
  %v4359 = vpack.c.b16 %v4331, %v4330
  %v4360 = vpack.c.b16 %v4333, %v4332
  %v4361 = vpack.c.b16 %v4335, %v4334
  %v4362 = vpack.c.b16 %v4337, %v4336
  %v4363 = vpack.c.b16 %v4339, %v4338
  %v4364 = vpack.c.b16 %v4341, %v4340
  %v4365 = vpack.c.b16 %v4343, %v4342
  %v4366 = vpack.c.b16 %v4345, %v4344
  %v4367 = vpack.c.b16 %v4347, %v4346
  %v4368 = vpack.c.b16 %v4349, %v4348
  %v4369 = vpack.c.b16 %v4351, %v4350
  %v4370 = vpack.c.b16 %v4353, %v4352
  %v4371 = vpack.c.b16 %v4355, %v4354
  %4388 = vmatprep.subr.bf16.mxu0 0
  %4389 = vmatpush1.bf16.msra.mxu0 %v4363
  %4390 = vmatprep.subr.bf16.mxu0 0
  %4391 = vmatpush1.bf16.msra.mxu0 %v4362
  %4392 = vmatprep.subr.bf16.mxu0 0
  %4393 = vmatpush1.bf16.msra.mxu0 %v4361
  %4394 = vmatprep.subr.bf16.mxu0 0
  %4395 = vmatpush1.bf16.msra.mxu0 %v4360
  %4396 = vmatprep.subr.bf16.mxu0 0
  %4397 = vmatpush1.bf16.msra.mxu0 %v4359
  %4398 = vmatprep.subr.bf16.mxu0 0
  %4399 = vmatpush1.bf16.msra.mxu0 %v4358
  %4400 = vmatprep.subr.bf16.mxu0 0
  %4401 = vmatpush1.bf16.msra.mxu0 %v4357
  %4402 = vmatprep.subr.bf16.mxu0 0
  %4403 = vmatpush1.bf16.msra.mxu0 %v4356
  %4404 = vmatprep.subr.bf16.mxu0 0
  %4405 = vmatpush2.bf16.msra.mxu0 %v4371
  %4406 = vmatprep.subr.bf16.mxu0 0
  %4407 = vmatpush2.bf16.msra.mxu0 %v4370
  %4408 = vmatprep.subr.bf16.mxu0 0
  %4409 = vmatpush2.bf16.msra.mxu0 %v4369
  %4410 = vmatprep.subr.bf16.mxu0 0
  %4411 = vmatpush2.bf16.msra.mxu0 %v4368
  %4412 = vmatprep.subr.bf16.mxu0 0
  %4413 = vmatpush2.bf16.msra.mxu0 %v4367
  %4414 = vmatprep.subr.bf16.mxu0 0
  %4415 = vmatpush2.bf16.msra.mxu0 %v4366
  %4416 = vmatprep.subr.bf16.mxu0 0
  %4417 = vmatpush2.bf16.msra.mxu0 %v4365
  %4418 = vmatprep.subr.bf16.mxu0 0
  %4419 = vmatpush2.bf16.msra.mxu0 %v4364
  %4420 = vmatprep.mubr.bf16.mxu0 %v4258
  %4421 = vmatmul.mubr.bf16.gmra.mxu0 %v4257
  %v4422 = vpop.f32.mrf.mxu0
  %v4423 = vadd.f32 0.0, %v4422
  %v4424 = vpop.f32.mrf.mxu0
  %v4425 = vpop.f32.mrf.mxu0
  %v4426 = vpop.f32.mrf.mxu0
  %4427 = vdwg.mxu0
  %v4428 = vadd.f32 %v4122, %v4423
  %s4429 = scalar_lea.vmem [#allocation2], 176
  %v4430 = vld [vmem:[%s4429] sm:$0xff]
  %v4431 = vld [vmem:[%s4429 + $0x8] sm:$0xff]
  %4432 = vmatprep.subr.bf16.mxu0 %v625
  %4433 = vmatpush1.bf16.msra.mxu0 %v624
  %4434 = vmatprep.subr.bf16.mxu0 %v623
  %4435 = vmatpush1.bf16.msra.mxu0 %v622
  %4436 = vmatprep.subr.bf16.mxu0 %v621
  %4437 = vmatpush1.bf16.msra.mxu0 %v620
  %4438 = vmatprep.subr.bf16.mxu0 %v619
  %4439 = vmatpush1.bf16.msra.mxu0 %v618
  %4440 = vmatprep.subr.bf16.mxu0 %v617
  %4441 = vmatpush1.bf16.msra.mxu0 %v616
  %4442 = vmatprep.subr.bf16.mxu0 %v615
  %4443 = vmatpush1.bf16.msra.mxu0 %v614
  %4444 = vmatprep.subr.bf16.mxu0 %v613
  %4445 = vmatpush1.bf16.msra.mxu0 %v612
  %4446 = vmatprep.subr.bf16.mxu0 %v611
  %4447 = vmatpush1.bf16.msra.mxu0 %v610
  %4448 = vmatprep.subr.bf16.mxu0 %v641
  %4449 = vmatpush2.bf16.msra.mxu0 %v640
  %4450 = vmatprep.subr.bf16.mxu0 %v639
  %4451 = vmatpush2.bf16.msra.mxu0 %v638
  %4452 = vmatprep.subr.bf16.mxu0 %v637
  %4453 = vmatpush2.bf16.msra.mxu0 %v636
  %4454 = vmatprep.subr.bf16.mxu0 %v635
  %4455 = vmatpush2.bf16.msra.mxu0 %v634
  %4456 = vmatprep.subr.bf16.mxu0 %v633
  %4457 = vmatpush2.bf16.msra.mxu0 %v632
  %4458 = vmatprep.subr.bf16.mxu0 %v631
  %4459 = vmatpush2.bf16.msra.mxu0 %v630
  %4460 = vmatprep.subr.bf16.mxu0 %v629
  %4461 = vmatpush2.bf16.msra.mxu0 %v628
  %4462 = vmatprep.subr.bf16.mxu0 %v627
  %4463 = vmatpush2.bf16.msra.mxu0 %v626
  %4464 = vmatprep.mubr.bf16.mxu0 %v4172
  %4465 = vmatmul.mubr.bf16.gmra.mxu0 %v4171
  %v4466 = vpop.f32.mrf.mxu0
  %v4467 = vadd.f32 0.0, %v4466
  %v4468 = vpop.f32.mrf.mxu0
  %v4469 = vadd.f32 0.0, %v4468
  %v4470 = vpop.f32.mrf.mxu0
  %v4471 = vpop.f32.mrf.mxu0
  %4472 = vdwg.mxu0
  %v4473 = vadd.f32 %v4430, %v4467
  %v4474 = vadd.f32 %v4431, %v4469
  %v4475 = vtanh.pop %v4473
  %v4476 = vtanh.pop %v4474
  %v4477 = vpack.c.bf16 %v4475, %v4475
  %v4478 = vpack.c.bf16 %v4476, %v4476
  %4479 = vmatprep.subr.bf16.mxu0 %v1003
  %4480 = vmatpush1.bf16.msra.mxu0 %v1002
  %4481 = vmatprep.subr.bf16.mxu0 %v1001
  %4482 = vmatpush1.bf16.msra.mxu0 %v1000
  %4483 = vmatprep.subr.bf16.mxu0 %v999
  %4484 = vmatpush1.bf16.msra.mxu0 %v998
  %4485 = vmatprep.subr.bf16.mxu0 %v997
  %4486 = vmatpush1.bf16.msra.mxu0 %v996
  %4487 = vmatprep.subr.bf16.mxu0 %v995
  %4488 = vmatpush1.bf16.msra.mxu0 %v994
  %4489 = vmatprep.subr.bf16.mxu0 %v993
  %4490 = vmatpush1.bf16.msra.mxu0 %v992
  %4491 = vmatprep.subr.bf16.mxu0 %v991
  %4492 = vmatpush1.bf16.msra.mxu0 %v990
  %4493 = vmatprep.subr.bf16.mxu0 %v989
  %4494 = vmatpush1.bf16.msra.mxu0 %v988
  %4495 = vmatprep.subr.bf16.mxu0 %v1019
  %4496 = vmatpush2.bf16.msra.mxu0 %v1018
  %4497 = vmatprep.subr.bf16.mxu0 %v1017
  %4498 = vmatpush2.bf16.msra.mxu0 %v1016
  %4499 = vmatprep.subr.bf16.mxu0 %v1015
  %4500 = vmatpush2.bf16.msra.mxu0 %v1014
  %4501 = vmatprep.subr.bf16.mxu0 %v1013
  %4502 = vmatpush2.bf16.msra.mxu0 %v1012
  %4503 = vmatprep.subr.bf16.mxu0 %v1011
  %4504 = vmatpush2.bf16.msra.mxu0 %v1010
  %4505 = vmatprep.subr.bf16.mxu0 %v1009
  %4506 = vmatpush2.bf16.msra.mxu0 %v1008
  %4507 = vmatprep.subr.bf16.mxu0 %v1007
  %4508 = vmatpush2.bf16.msra.mxu0 %v1006
  %4509 = vmatprep.subr.bf16.mxu0 %v1005
  %4510 = vmatpush2.bf16.msra.mxu0 %v1004
  %4511 = vmatprep.mubr.bf16.mxu0 %v4478
  %4512 = vmatmul.mubr.bf16.gmra.mxu0 %v4477
  %v4513 = vpop.f32.mrf.mxu0
  %v4514 = vadd.f32 %v789, %v4513
  %v4515 = vpop.f32.mrf.mxu0
  %v4516 = vadd.f32 %v793, %v4515
  %v4517 = vpop.f32.mrf.mxu0
  %v4518 = vpop.f32.mrf.mxu0
  %4519 = vdwg.mxu0
  %4520 = vmatprep.subr.bf16.mxu0 %v1035
  %4521 = vmatpush1.bf16.msra.mxu0 %v1034
  %4522 = vmatprep.subr.bf16.mxu0 %v1033
  %4523 = vmatpush1.bf16.msra.mxu0 %v1032
  %4524 = vmatprep.subr.bf16.mxu0 %v1031
  %4525 = vmatpush1.bf16.msra.mxu0 %v1030
  %4526 = vmatprep.subr.bf16.mxu0 %v1029
  %4527 = vmatpush1.bf16.msra.mxu0 %v1028
  %4528 = vmatprep.subr.bf16.mxu0 %v1027
  %4529 = vmatpush1.bf16.msra.mxu0 %v1026
  %4530 = vmatprep.subr.bf16.mxu0 %v1025
  %4531 = vmatpush1.bf16.msra.mxu0 %v1024
  %4532 = vmatprep.subr.bf16.mxu0 %v1023
  %4533 = vmatpush1.bf16.msra.mxu0 %v1022
  %4534 = vmatprep.subr.bf16.mxu0 %v1021
  %4535 = vmatpush1.bf16.msra.mxu0 %v1020
  %4536 = vmatprep.subr.bf16.mxu0 %v1051
  %4537 = vmatpush2.bf16.msra.mxu0 %v1050
  %4538 = vmatprep.subr.bf16.mxu0 %v1049
  %4539 = vmatpush2.bf16.msra.mxu0 %v1048
  %4540 = vmatprep.subr.bf16.mxu0 %v1047
  %4541 = vmatpush2.bf16.msra.mxu0 %v1046
  %4542 = vmatprep.subr.bf16.mxu0 %v1045
  %4543 = vmatpush2.bf16.msra.mxu0 %v1044
  %4544 = vmatprep.subr.bf16.mxu0 %v1043
  %4545 = vmatpush2.bf16.msra.mxu0 %v1042
  %4546 = vmatprep.subr.bf16.mxu0 %v1041
  %4547 = vmatpush2.bf16.msra.mxu0 %v1040
  %4548 = vmatprep.subr.bf16.mxu0 %v1039
  %4549 = vmatpush2.bf16.msra.mxu0 %v1038
  %4550 = vmatprep.subr.bf16.mxu0 %v1037
  %4551 = vmatpush2.bf16.msra.mxu0 %v1036
  %4552 = vmatprep.mubr.bf16.mxu0 %v4258
  %4553 = vmatmul.mubr.bf16.gmra.mxu0 %v4257
  %v4554 = vpop.f32.mrf.mxu0
  %v4555 = vadd.f32 %v4514, %v4554
  %v4556 = vpop.f32.mrf.mxu0
  %v4557 = vadd.f32 %v4516, %v4556
  %v4558 = vpop.f32.mrf.mxu0
  %v4559 = vpop.f32.mrf.mxu0
  %4560 = vdwg.mxu0
  %v4561 = vtanh.pop %v4555
  %v4562 = vtanh.pop %v4557
  %v4563 = vpack.c.bf16 %v4561, %v4561
  %v4564 = vpack.c.bf16 %v4562, %v4562
  %s4565 = scalar_lea.vmem %s6, 1408
  %v4566 = vld [vmem:[%s4565] sm:$0xf]
  %v4567 = vld [vmem:[%s4565 + $0x4] sm:$0xf]
  %v4568 = vld [vmem:[%s4565 + $0x8] sm:$0xf]
  %v4569 = vld [vmem:[%s4565 + $0xc] sm:$0xf]
  %v4570 = vld [vmem:[%s4565 + $0x10] sm:$0xf]
  %v4571 = vld [vmem:[%s4565 + $0x14] sm:$0xf]
  %v4572 = vld [vmem:[%s4565 + $0x18] sm:$0xf]
  %v4573 = vld [vmem:[%s4565 + $0x1c] sm:$0xf]
  %v4574 = vld [vmem:[%s4565 + $0x20] sm:$0xf]
  %v4575 = vld [vmem:[%s4565 + $0x24] sm:$0xf]
  %v4576 = vld [vmem:[%s4565 + $0x28] sm:$0xf]
  %v4577 = vld [vmem:[%s4565 + $0x2c] sm:$0xf]
  %v4578 = vld [vmem:[%s4565 + $0x30] sm:$0xf]
  %v4579 = vld [vmem:[%s4565 + $0x34] sm:$0xf]
  %v4580 = vld [vmem:[%s4565 + $0x38] sm:$0xf]
  %v4581 = vld [vmem:[%s4565 + $0x3c] sm:$0xf]
  %v4582 = vld [vmem:[%s4565 + $0x40] sm:$0xf]
  %v4583 = vld [vmem:[%s4565 + $0x44] sm:$0xf]
  %v4584 = vld [vmem:[%s4565 + $0x48] sm:$0xf]
  %v4585 = vld [vmem:[%s4565 + $0x4c] sm:$0xf]
  %v4586 = vld [vmem:[%s4565 + $0x50] sm:$0xf]
  %v4587 = vld [vmem:[%s4565 + $0x54] sm:$0xf]
  %v4588 = vld [vmem:[%s4565 + $0x58] sm:$0xf]
  %v4589 = vld [vmem:[%s4565 + $0x5c] sm:$0xf]
  %v4590 = vld [vmem:[%s4565 + $0x60] sm:$0xf]
  %v4591 = vld [vmem:[%s4565 + $0x64] sm:$0xf]
  %v4592 = vld [vmem:[%s4565 + $0x68] sm:$0xf]
  %v4593 = vld [vmem:[%s4565 + $0x6c] sm:$0xf]
  %v4594 = vld [vmem:[%s4565 + $0x70] sm:$0xf]
  %v4595 = vld [vmem:[%s4565 + $0x74] sm:$0xf]
  %v4596 = vld [vmem:[%s4565 + $0x78] sm:$0xf]
  %v4597 = vld [vmem:[%s4565 + $0x7c] sm:$0xf]
  %v4630 = vunpack.c.l.b16 %v4566
  %v4631 = vunpack.c.l.b16 %v4567
  %v4632 = vunpack.c.l.b16 %v4568
  %v4633 = vunpack.c.l.b16 %v4569
  %v4634 = vunpack.c.l.b16 %v4570
  %v4635 = vunpack.c.l.b16 %v4571
  %v4636 = vunpack.c.l.b16 %v4572
  %v4637 = vunpack.c.l.b16 %v4573
  %v4638 = vunpack.c.l.b16 %v4574
  %v4639 = vunpack.c.l.b16 %v4575
  %v4640 = vunpack.c.l.b16 %v4576
  %v4641 = vunpack.c.l.b16 %v4577
  %v4642 = vunpack.c.l.b16 %v4578
  %v4643 = vunpack.c.l.b16 %v4579
  %v4644 = vunpack.c.l.b16 %v4580
  %v4645 = vunpack.c.l.b16 %v4581
  %v4646 = vunpack.c.l.b16 %v4582
  %v4647 = vunpack.c.l.b16 %v4583
  %v4648 = vunpack.c.l.b16 %v4584
  %v4649 = vunpack.c.l.b16 %v4585
  %v4650 = vunpack.c.l.b16 %v4586
  %v4651 = vunpack.c.l.b16 %v4587
  %v4652 = vunpack.c.l.b16 %v4588
  %v4653 = vunpack.c.l.b16 %v4589
  %v4654 = vunpack.c.l.b16 %v4590
  %v4655 = vunpack.c.l.b16 %v4591
  %v4656 = vunpack.c.l.b16 %v4592
  %v4657 = vunpack.c.l.b16 %v4593
  %v4658 = vunpack.c.l.b16 %v4594
  %v4659 = vunpack.c.l.b16 %v4595
  %v4660 = vunpack.c.l.b16 %v4596
  %v4661 = vunpack.c.l.b16 %v4597
  %v4662 = vpack.c.b16 %v4631, %v4630
  %v4663 = vpack.c.b16 %v4633, %v4632
  %v4664 = vpack.c.b16 %v4635, %v4634
  %v4665 = vpack.c.b16 %v4637, %v4636
  %v4666 = vpack.c.b16 %v4639, %v4638
  %v4667 = vpack.c.b16 %v4641, %v4640
  %v4668 = vpack.c.b16 %v4643, %v4642
  %v4669 = vpack.c.b16 %v4645, %v4644
  %v4670 = vpack.c.b16 %v4647, %v4646
  %v4671 = vpack.c.b16 %v4649, %v4648
  %v4672 = vpack.c.b16 %v4651, %v4650
  %v4673 = vpack.c.b16 %v4653, %v4652
  %v4674 = vpack.c.b16 %v4655, %v4654
  %v4675 = vpack.c.b16 %v4657, %v4656
  %v4676 = vpack.c.b16 %v4659, %v4658
  %v4677 = vpack.c.b16 %v4661, %v4660
  %4694 = vmatprep.subr.bf16.mxu0 0
  %4695 = vmatpush1.bf16.msra.mxu0 %v4669
  %4696 = vmatprep.subr.bf16.mxu0 0
  %4697 = vmatpush1.bf16.msra.mxu0 %v4668
  %4698 = vmatprep.subr.bf16.mxu0 0
  %4699 = vmatpush1.bf16.msra.mxu0 %v4667
  %4700 = vmatprep.subr.bf16.mxu0 0
  %4701 = vmatpush1.bf16.msra.mxu0 %v4666
  %4702 = vmatprep.subr.bf16.mxu0 0
  %4703 = vmatpush1.bf16.msra.mxu0 %v4665
  %4704 = vmatprep.subr.bf16.mxu0 0
  %4705 = vmatpush1.bf16.msra.mxu0 %v4664
  %4706 = vmatprep.subr.bf16.mxu0 0
  %4707 = vmatpush1.bf16.msra.mxu0 %v4663
  %4708 = vmatprep.subr.bf16.mxu0 0
  %4709 = vmatpush1.bf16.msra.mxu0 %v4662
  %4710 = vmatprep.subr.bf16.mxu0 0
  %4711 = vmatpush2.bf16.msra.mxu0 %v4677
  %4712 = vmatprep.subr.bf16.mxu0 0
  %4713 = vmatpush2.bf16.msra.mxu0 %v4676
  %4714 = vmatprep.subr.bf16.mxu0 0
  %4715 = vmatpush2.bf16.msra.mxu0 %v4675
  %4716 = vmatprep.subr.bf16.mxu0 0
  %4717 = vmatpush2.bf16.msra.mxu0 %v4674
  %4718 = vmatprep.subr.bf16.mxu0 0
  %4719 = vmatpush2.bf16.msra.mxu0 %v4673
  %4720 = vmatprep.subr.bf16.mxu0 0
  %4721 = vmatpush2.bf16.msra.mxu0 %v4672
  %4722 = vmatprep.subr.bf16.mxu0 0
  %4723 = vmatpush2.bf16.msra.mxu0 %v4671
  %4724 = vmatprep.subr.bf16.mxu0 0
  %4725 = vmatpush2.bf16.msra.mxu0 %v4670
  %4726 = vmatprep.mubr.bf16.mxu0 %v4564
  %4727 = vmatmul.mubr.bf16.gmra.mxu0 %v4563
  %v4728 = vpop.f32.mrf.mxu0
  %v4729 = vadd.f32 0.0, %v4728
  %v4730 = vpop.f32.mrf.mxu0
  %v4731 = vpop.f32.mrf.mxu0
  %v4732 = vpop.f32.mrf.mxu0
  %4733 = vdwg.mxu0
  %v4734 = vadd.f32 %v4428, %v4729
  %s4735 = scalar_lea.vmem [#allocation2], 192
  %v4736 = vld [vmem:[%s4735] sm:$0xff]
  %v4737 = vld [vmem:[%s4735 + $0x8] sm:$0xff]
  %4738 = vmatprep.subr.bf16.mxu0 %v625
  %4739 = vmatpush1.bf16.msra.mxu0 %v624
  %4740 = vmatprep.subr.bf16.mxu0 %v623
  %4741 = vmatpush1.bf16.msra.mxu0 %v622
  %4742 = vmatprep.subr.bf16.mxu0 %v621
  %4743 = vmatpush1.bf16.msra.mxu0 %v620
  %4744 = vmatprep.subr.bf16.mxu0 %v619
  %4745 = vmatpush1.bf16.msra.mxu0 %v618
  %4746 = vmatprep.subr.bf16.mxu0 %v617
  %4747 = vmatpush1.bf16.msra.mxu0 %v616
  %4748 = vmatprep.subr.bf16.mxu0 %v615
  %4749 = vmatpush1.bf16.msra.mxu0 %v614
  %4750 = vmatprep.subr.bf16.mxu0 %v613
  %4751 = vmatpush1.bf16.msra.mxu0 %v612
  %4752 = vmatprep.subr.bf16.mxu0 %v611
  %4753 = vmatpush1.bf16.msra.mxu0 %v610
  %4754 = vmatprep.subr.bf16.mxu0 %v641
  %4755 = vmatpush2.bf16.msra.mxu0 %v640
  %4756 = vmatprep.subr.bf16.mxu0 %v639
  %4757 = vmatpush2.bf16.msra.mxu0 %v638
  %4758 = vmatprep.subr.bf16.mxu0 %v637
  %4759 = vmatpush2.bf16.msra.mxu0 %v636
  %4760 = vmatprep.subr.bf16.mxu0 %v635
  %4761 = vmatpush2.bf16.msra.mxu0 %v634
  %4762 = vmatprep.subr.bf16.mxu0 %v633
  %4763 = vmatpush2.bf16.msra.mxu0 %v632
  %4764 = vmatprep.subr.bf16.mxu0 %v631
  %4765 = vmatpush2.bf16.msra.mxu0 %v630
  %4766 = vmatprep.subr.bf16.mxu0 %v629
  %4767 = vmatpush2.bf16.msra.mxu0 %v628
  %4768 = vmatprep.subr.bf16.mxu0 %v627
  %4769 = vmatpush2.bf16.msra.mxu0 %v626
  %4770 = vmatprep.mubr.bf16.mxu0 %v4478
  %4771 = vmatmul.mubr.bf16.gmra.mxu0 %v4477
  %v4772 = vpop.f32.mrf.mxu0
  %v4773 = vadd.f32 0.0, %v4772
  %v4774 = vpop.f32.mrf.mxu0
  %v4775 = vadd.f32 0.0, %v4774
  %v4776 = vpop.f32.mrf.mxu0
  %v4777 = vpop.f32.mrf.mxu0
  %4778 = vdwg.mxu0
  %v4779 = vadd.f32 %v4736, %v4773
  %v4780 = vadd.f32 %v4737, %v4775
  %v4781 = vtanh.pop %v4779
  %v4782 = vtanh.pop %v4780
  %v4783 = vpack.c.bf16 %v4781, %v4781
  %v4784 = vpack.c.bf16 %v4782, %v4782
  %4785 = vmatprep.subr.bf16.mxu0 %v1003
  %4786 = vmatpush1.bf16.msra.mxu0 %v1002
  %4787 = vmatprep.subr.bf16.mxu0 %v1001
  %4788 = vmatpush1.bf16.msra.mxu0 %v1000
  %4789 = vmatprep.subr.bf16.mxu0 %v999
  %4790 = vmatpush1.bf16.msra.mxu0 %v998
  %4791 = vmatprep.subr.bf16.mxu0 %v997
  %4792 = vmatpush1.bf16.msra.mxu0 %v996
  %4793 = vmatprep.subr.bf16.mxu0 %v995
  %4794 = vmatpush1.bf16.msra.mxu0 %v994
  %4795 = vmatprep.subr.bf16.mxu0 %v993
  %4796 = vmatpush1.bf16.msra.mxu0 %v992
  %4797 = vmatprep.subr.bf16.mxu0 %v991
  %4798 = vmatpush1.bf16.msra.mxu0 %v990
  %4799 = vmatprep.subr.bf16.mxu0 %v989
  %4800 = vmatpush1.bf16.msra.mxu0 %v988
  %4801 = vmatprep.subr.bf16.mxu0 %v1019
  %4802 = vmatpush2.bf16.msra.mxu0 %v1018
  %4803 = vmatprep.subr.bf16.mxu0 %v1017
  %4804 = vmatpush2.bf16.msra.mxu0 %v1016
  %4805 = vmatprep.subr.bf16.mxu0 %v1015
  %4806 = vmatpush2.bf16.msra.mxu0 %v1014
  %4807 = vmatprep.subr.bf16.mxu0 %v1013
  %4808 = vmatpush2.bf16.msra.mxu0 %v1012
  %4809 = vmatprep.subr.bf16.mxu0 %v1011
  %4810 = vmatpush2.bf16.msra.mxu0 %v1010
  %4811 = vmatprep.subr.bf16.mxu0 %v1009
  %4812 = vmatpush2.bf16.msra.mxu0 %v1008
  %4813 = vmatprep.subr.bf16.mxu0 %v1007
  %4814 = vmatpush2.bf16.msra.mxu0 %v1006
  %4815 = vmatprep.subr.bf16.mxu0 %v1005
  %4816 = vmatpush2.bf16.msra.mxu0 %v1004
  %4817 = vmatprep.mubr.bf16.mxu0 %v4784
  %4818 = vmatmul.mubr.bf16.gmra.mxu0 %v4783
  %v4819 = vpop.f32.mrf.mxu0
  %v4820 = vadd.f32 %v789, %v4819
  %v4821 = vpop.f32.mrf.mxu0
  %v4822 = vadd.f32 %v793, %v4821
  %v4823 = vpop.f32.mrf.mxu0
  %v4824 = vpop.f32.mrf.mxu0
  %4825 = vdwg.mxu0
  %4826 = vmatprep.subr.bf16.mxu0 %v1035
  %4827 = vmatpush1.bf16.msra.mxu0 %v1034
  %4828 = vmatprep.subr.bf16.mxu0 %v1033
  %4829 = vmatpush1.bf16.msra.mxu0 %v1032
  %4830 = vmatprep.subr.bf16.mxu0 %v1031
  %4831 = vmatpush1.bf16.msra.mxu0 %v1030
  %4832 = vmatprep.subr.bf16.mxu0 %v1029
  %4833 = vmatpush1.bf16.msra.mxu0 %v1028
  %4834 = vmatprep.subr.bf16.mxu0 %v1027
  %4835 = vmatpush1.bf16.msra.mxu0 %v1026
  %4836 = vmatprep.subr.bf16.mxu0 %v1025
  %4837 = vmatpush1.bf16.msra.mxu0 %v1024
  %4838 = vmatprep.subr.bf16.mxu0 %v1023
  %4839 = vmatpush1.bf16.msra.mxu0 %v1022
  %4840 = vmatprep.subr.bf16.mxu0 %v1021
  %4841 = vmatpush1.bf16.msra.mxu0 %v1020
  %4842 = vmatprep.subr.bf16.mxu0 %v1051
  %4843 = vmatpush2.bf16.msra.mxu0 %v1050
  %4844 = vmatprep.subr.bf16.mxu0 %v1049
  %4845 = vmatpush2.bf16.msra.mxu0 %v1048
  %4846 = vmatprep.subr.bf16.mxu0 %v1047
  %4847 = vmatpush2.bf16.msra.mxu0 %v1046
  %4848 = vmatprep.subr.bf16.mxu0 %v1045
  %4849 = vmatpush2.bf16.msra.mxu0 %v1044
  %4850 = vmatprep.subr.bf16.mxu0 %v1043
  %4851 = vmatpush2.bf16.msra.mxu0 %v1042
  %4852 = vmatprep.subr.bf16.mxu0 %v1041
  %4853 = vmatpush2.bf16.msra.mxu0 %v1040
  %4854 = vmatprep.subr.bf16.mxu0 %v1039
  %4855 = vmatpush2.bf16.msra.mxu0 %v1038
  %4856 = vmatprep.subr.bf16.mxu0 %v1037
  %4857 = vmatpush2.bf16.msra.mxu0 %v1036
  %4858 = vmatprep.mubr.bf16.mxu0 %v4564
  %4859 = vmatmul.mubr.bf16.gmra.mxu0 %v4563
  %v4860 = vpop.f32.mrf.mxu0
  %v4861 = vadd.f32 %v4820, %v4860
  %v4862 = vpop.f32.mrf.mxu0
  %v4863 = vadd.f32 %v4822, %v4862
  %v4864 = vpop.f32.mrf.mxu0
  %v4865 = vpop.f32.mrf.mxu0
  %4866 = vdwg.mxu0
  %v4867 = vtanh.pop %v4861
  %v4868 = vtanh.pop %v4863
  %v4869 = vpack.c.bf16 %v4867, %v4867
  %v4870 = vpack.c.bf16 %v4868, %v4868
  %s4871 = scalar_lea.vmem %s6, 1536
  %v4872 = vld [vmem:[%s4871] sm:$0xf]
  %v4873 = vld [vmem:[%s4871 + $0x4] sm:$0xf]
  %v4874 = vld [vmem:[%s4871 + $0x8] sm:$0xf]
  %v4875 = vld [vmem:[%s4871 + $0xc] sm:$0xf]
  %v4876 = vld [vmem:[%s4871 + $0x10] sm:$0xf]
  %v4877 = vld [vmem:[%s4871 + $0x14] sm:$0xf]
  %v4878 = vld [vmem:[%s4871 + $0x18] sm:$0xf]
  %v4879 = vld [vmem:[%s4871 + $0x1c] sm:$0xf]
  %v4880 = vld [vmem:[%s4871 + $0x20] sm:$0xf]
  %v4881 = vld [vmem:[%s4871 + $0x24] sm:$0xf]
  %v4882 = vld [vmem:[%s4871 + $0x28] sm:$0xf]
  %v4883 = vld [vmem:[%s4871 + $0x2c] sm:$0xf]
  %v4884 = vld [vmem:[%s4871 + $0x30] sm:$0xf]
  %v4885 = vld [vmem:[%s4871 + $0x34] sm:$0xf]
  %v4886 = vld [vmem:[%s4871 + $0x38] sm:$0xf]
  %v4887 = vld [vmem:[%s4871 + $0x3c] sm:$0xf]
  %v4888 = vld [vmem:[%s4871 + $0x40] sm:$0xf]
  %v4889 = vld [vmem:[%s4871 + $0x44] sm:$0xf]
  %v4890 = vld [vmem:[%s4871 + $0x48] sm:$0xf]
  %v4891 = vld [vmem:[%s4871 + $0x4c] sm:$0xf]
  %v4892 = vld [vmem:[%s4871 + $0x50] sm:$0xf]
  %v4893 = vld [vmem:[%s4871 + $0x54] sm:$0xf]
  %v4894 = vld [vmem:[%s4871 + $0x58] sm:$0xf]
  %v4895 = vld [vmem:[%s4871 + $0x5c] sm:$0xf]
  %v4896 = vld [vmem:[%s4871 + $0x60] sm:$0xf]
  %v4897 = vld [vmem:[%s4871 + $0x64] sm:$0xf]
  %v4898 = vld [vmem:[%s4871 + $0x68] sm:$0xf]
  %v4899 = vld [vmem:[%s4871 + $0x6c] sm:$0xf]
  %v4900 = vld [vmem:[%s4871 + $0x70] sm:$0xf]
  %v4901 = vld [vmem:[%s4871 + $0x74] sm:$0xf]
  %v4902 = vld [vmem:[%s4871 + $0x78] sm:$0xf]
  %v4903 = vld [vmem:[%s4871 + $0x7c] sm:$0xf]
  %v4936 = vunpack.c.l.b16 %v4872
  %v4937 = vunpack.c.l.b16 %v4873
  %v4938 = vunpack.c.l.b16 %v4874
  %v4939 = vunpack.c.l.b16 %v4875
  %v4940 = vunpack.c.l.b16 %v4876
  %v4941 = vunpack.c.l.b16 %v4877
  %v4942 = vunpack.c.l.b16 %v4878
  %v4943 = vunpack.c.l.b16 %v4879
  %v4944 = vunpack.c.l.b16 %v4880
  %v4945 = vunpack.c.l.b16 %v4881
  %v4946 = vunpack.c.l.b16 %v4882
  %v4947 = vunpack.c.l.b16 %v4883
  %v4948 = vunpack.c.l.b16 %v4884
  %v4949 = vunpack.c.l.b16 %v4885
  %v4950 = vunpack.c.l.b16 %v4886
  %v4951 = vunpack.c.l.b16 %v4887
  %v4952 = vunpack.c.l.b16 %v4888
  %v4953 = vunpack.c.l.b16 %v4889
  %v4954 = vunpack.c.l.b16 %v4890
  %v4955 = vunpack.c.l.b16 %v4891
  %v4956 = vunpack.c.l.b16 %v4892
  %v4957 = vunpack.c.l.b16 %v4893
  %v4958 = vunpack.c.l.b16 %v4894
  %v4959 = vunpack.c.l.b16 %v4895
  %v4960 = vunpack.c.l.b16 %v4896
  %v4961 = vunpack.c.l.b16 %v4897
  %v4962 = vunpack.c.l.b16 %v4898
  %v4963 = vunpack.c.l.b16 %v4899
  %v4964 = vunpack.c.l.b16 %v4900
  %v4965 = vunpack.c.l.b16 %v4901
  %v4966 = vunpack.c.l.b16 %v4902
  %v4967 = vunpack.c.l.b16 %v4903
  %v4968 = vpack.c.b16 %v4937, %v4936
  %v4969 = vpack.c.b16 %v4939, %v4938
  %v4970 = vpack.c.b16 %v4941, %v4940
  %v4971 = vpack.c.b16 %v4943, %v4942
  %v4972 = vpack.c.b16 %v4945, %v4944
  %v4973 = vpack.c.b16 %v4947, %v4946
  %v4974 = vpack.c.b16 %v4949, %v4948
  %v4975 = vpack.c.b16 %v4951, %v4950
  %v4976 = vpack.c.b16 %v4953, %v4952
  %v4977 = vpack.c.b16 %v4955, %v4954
  %v4978 = vpack.c.b16 %v4957, %v4956
  %v4979 = vpack.c.b16 %v4959, %v4958
  %v4980 = vpack.c.b16 %v4961, %v4960
  %v4981 = vpack.c.b16 %v4963, %v4962
  %v4982 = vpack.c.b16 %v4965, %v4964
  %v4983 = vpack.c.b16 %v4967, %v4966
  %5000 = vmatprep.subr.bf16.mxu0 0
  %5001 = vmatpush1.bf16.msra.mxu0 %v4975
  %5002 = vmatprep.subr.bf16.mxu0 0
  %5003 = vmatpush1.bf16.msra.mxu0 %v4974
  %5004 = vmatprep.subr.bf16.mxu0 0
  %5005 = vmatpush1.bf16.msra.mxu0 %v4973
  %5006 = vmatprep.subr.bf16.mxu0 0
  %5007 = vmatpush1.bf16.msra.mxu0 %v4972
  %5008 = vmatprep.subr.bf16.mxu0 0
  %5009 = vmatpush1.bf16.msra.mxu0 %v4971
  %5010 = vmatprep.subr.bf16.mxu0 0
  %5011 = vmatpush1.bf16.msra.mxu0 %v4970
  %5012 = vmatprep.subr.bf16.mxu0 0
  %5013 = vmatpush1.bf16.msra.mxu0 %v4969
  %5014 = vmatprep.subr.bf16.mxu0 0
  %5015 = vmatpush1.bf16.msra.mxu0 %v4968
  %5016 = vmatprep.subr.bf16.mxu0 0
  %5017 = vmatpush2.bf16.msra.mxu0 %v4983
  %5018 = vmatprep.subr.bf16.mxu0 0
  %5019 = vmatpush2.bf16.msra.mxu0 %v4982
  %5020 = vmatprep.subr.bf16.mxu0 0
  %5021 = vmatpush2.bf16.msra.mxu0 %v4981
  %5022 = vmatprep.subr.bf16.mxu0 0
  %5023 = vmatpush2.bf16.msra.mxu0 %v4980
  %5024 = vmatprep.subr.bf16.mxu0 0
  %5025 = vmatpush2.bf16.msra.mxu0 %v4979
  %5026 = vmatprep.subr.bf16.mxu0 0
  %5027 = vmatpush2.bf16.msra.mxu0 %v4978
  %5028 = vmatprep.subr.bf16.mxu0 0
  %5029 = vmatpush2.bf16.msra.mxu0 %v4977
  %5030 = vmatprep.subr.bf16.mxu0 0
  %5031 = vmatpush2.bf16.msra.mxu0 %v4976
  %5032 = vmatprep.mubr.bf16.mxu0 %v4870
  %5033 = vmatmul.mubr.bf16.gmra.mxu0 %v4869
  %v5034 = vpop.f32.mrf.mxu0
  %v5035 = vadd.f32 0.0, %v5034
  %v5036 = vpop.f32.mrf.mxu0
  %v5037 = vpop.f32.mrf.mxu0
  %v5038 = vpop.f32.mrf.mxu0
  %5039 = vdwg.mxu0
  %v5040 = vadd.f32 %v4734, %v5035
  %s5041 = scalar_lea.vmem [#allocation2], 208
  %v5042 = vld [vmem:[%s5041] sm:$0xff]
  %v5043 = vld [vmem:[%s5041 + $0x8] sm:$0xff]
  %5044 = vmatprep.subr.bf16.mxu0 %v625
  %5045 = vmatpush1.bf16.msra.mxu0 %v624
  %5046 = vmatprep.subr.bf16.mxu0 %v623
  %5047 = vmatpush1.bf16.msra.mxu0 %v622
  %5048 = vmatprep.subr.bf16.mxu0 %v621
  %5049 = vmatpush1.bf16.msra.mxu0 %v620
  %5050 = vmatprep.subr.bf16.mxu0 %v619
  %5051 = vmatpush1.bf16.msra.mxu0 %v618
  %5052 = vmatprep.subr.bf16.mxu0 %v617
  %5053 = vmatpush1.bf16.msra.mxu0 %v616
  %5054 = vmatprep.subr.bf16.mxu0 %v615
  %5055 = vmatpush1.bf16.msra.mxu0 %v614
  %5056 = vmatprep.subr.bf16.mxu0 %v613
  %5057 = vmatpush1.bf16.msra.mxu0 %v612
  %5058 = vmatprep.subr.bf16.mxu0 %v611
  %5059 = vmatpush1.bf16.msra.mxu0 %v610
  %5060 = vmatprep.subr.bf16.mxu0 %v641
  %5061 = vmatpush2.bf16.msra.mxu0 %v640
  %5062 = vmatprep.subr.bf16.mxu0 %v639
  %5063 = vmatpush2.bf16.msra.mxu0 %v638
  %5064 = vmatprep.subr.bf16.mxu0 %v637
  %5065 = vmatpush2.bf16.msra.mxu0 %v636
  %5066 = vmatprep.subr.bf16.mxu0 %v635
  %5067 = vmatpush2.bf16.msra.mxu0 %v634
  %5068 = vmatprep.subr.bf16.mxu0 %v633
  %5069 = vmatpush2.bf16.msra.mxu0 %v632
  %5070 = vmatprep.subr.bf16.mxu0 %v631
  %5071 = vmatpush2.bf16.msra.mxu0 %v630
  %5072 = vmatprep.subr.bf16.mxu0 %v629
  %5073 = vmatpush2.bf16.msra.mxu0 %v628
  %5074 = vmatprep.subr.bf16.mxu0 %v627
  %5075 = vmatpush2.bf16.msra.mxu0 %v626
  %5076 = vmatprep.mubr.bf16.mxu0 %v4784
  %5077 = vmatmul.mubr.bf16.gmra.mxu0 %v4783
  %v5078 = vpop.f32.mrf.mxu0
  %v5079 = vadd.f32 0.0, %v5078
  %v5080 = vpop.f32.mrf.mxu0
  %v5081 = vadd.f32 0.0, %v5080
  %v5082 = vpop.f32.mrf.mxu0
  %v5083 = vpop.f32.mrf.mxu0
  %5084 = vdwg.mxu0
  %v5085 = vadd.f32 %v5042, %v5079
  %v5086 = vadd.f32 %v5043, %v5081
  %v5087 = vtanh.pop %v5085
  %v5088 = vtanh.pop %v5086
  %v5089 = vpack.c.bf16 %v5087, %v5087
  %v5090 = vpack.c.bf16 %v5088, %v5088
  %5091 = vmatprep.subr.bf16.mxu0 %v1003
  %5092 = vmatpush1.bf16.msra.mxu0 %v1002
  %5093 = vmatprep.subr.bf16.mxu0 %v1001
  %5094 = vmatpush1.bf16.msra.mxu0 %v1000
  %5095 = vmatprep.subr.bf16.mxu0 %v999
  %5096 = vmatpush1.bf16.msra.mxu0 %v998
  %5097 = vmatprep.subr.bf16.mxu0 %v997
  %5098 = vmatpush1.bf16.msra.mxu0 %v996
  %5099 = vmatprep.subr.bf16.mxu0 %v995
  %5100 = vmatpush1.bf16.msra.mxu0 %v994
  %5101 = vmatprep.subr.bf16.mxu0 %v993
  %5102 = vmatpush1.bf16.msra.mxu0 %v992
  %5103 = vmatprep.subr.bf16.mxu0 %v991
  %5104 = vmatpush1.bf16.msra.mxu0 %v990
  %5105 = vmatprep.subr.bf16.mxu0 %v989
  %5106 = vmatpush1.bf16.msra.mxu0 %v988
  %5107 = vmatprep.subr.bf16.mxu0 %v1019
  %5108 = vmatpush2.bf16.msra.mxu0 %v1018
  %5109 = vmatprep.subr.bf16.mxu0 %v1017
  %5110 = vmatpush2.bf16.msra.mxu0 %v1016
  %5111 = vmatprep.subr.bf16.mxu0 %v1015
  %5112 = vmatpush2.bf16.msra.mxu0 %v1014
  %5113 = vmatprep.subr.bf16.mxu0 %v1013
  %5114 = vmatpush2.bf16.msra.mxu0 %v1012
  %5115 = vmatprep.subr.bf16.mxu0 %v1011
  %5116 = vmatpush2.bf16.msra.mxu0 %v1010
  %5117 = vmatprep.subr.bf16.mxu0 %v1009
  %5118 = vmatpush2.bf16.msra.mxu0 %v1008
  %5119 = vmatprep.subr.bf16.mxu0 %v1007
  %5120 = vmatpush2.bf16.msra.mxu0 %v1006
  %5121 = vmatprep.subr.bf16.mxu0 %v1005
  %5122 = vmatpush2.bf16.msra.mxu0 %v1004
  %5123 = vmatprep.mubr.bf16.mxu0 %v5090
  %5124 = vmatmul.mubr.bf16.gmra.mxu0 %v5089
  %v5125 = vpop.f32.mrf.mxu0
  %v5126 = vadd.f32 %v789, %v5125
  %v5127 = vpop.f32.mrf.mxu0
  %v5128 = vadd.f32 %v793, %v5127
  %v5129 = vpop.f32.mrf.mxu0
  %v5130 = vpop.f32.mrf.mxu0
  %5131 = vdwg.mxu0
  %5132 = vmatprep.subr.bf16.mxu0 %v1035
  %5133 = vmatpush1.bf16.msra.mxu0 %v1034
  %5134 = vmatprep.subr.bf16.mxu0 %v1033
  %5135 = vmatpush1.bf16.msra.mxu0 %v1032
  %5136 = vmatprep.subr.bf16.mxu0 %v1031
  %5137 = vmatpush1.bf16.msra.mxu0 %v1030
  %5138 = vmatprep.subr.bf16.mxu0 %v1029
  %5139 = vmatpush1.bf16.msra.mxu0 %v1028
  %5140 = vmatprep.subr.bf16.mxu0 %v1027
  %5141 = vmatpush1.bf16.msra.mxu0 %v1026
  %5142 = vmatprep.subr.bf16.mxu0 %v1025
  %5143 = vmatpush1.bf16.msra.mxu0 %v1024
  %5144 = vmatprep.subr.bf16.mxu0 %v1023
  %5145 = vmatpush1.bf16.msra.mxu0 %v1022
  %5146 = vmatprep.subr.bf16.mxu0 %v1021
  %5147 = vmatpush1.bf16.msra.mxu0 %v1020
  %5148 = vmatprep.subr.bf16.mxu0 %v1051
  %5149 = vmatpush2.bf16.msra.mxu0 %v1050
  %5150 = vmatprep.subr.bf16.mxu0 %v1049
  %5151 = vmatpush2.bf16.msra.mxu0 %v1048
  %5152 = vmatprep.subr.bf16.mxu0 %v1047
  %5153 = vmatpush2.bf16.msra.mxu0 %v1046
  %5154 = vmatprep.subr.bf16.mxu0 %v1045
  %5155 = vmatpush2.bf16.msra.mxu0 %v1044
  %5156 = vmatprep.subr.bf16.mxu0 %v1043
  %5157 = vmatpush2.bf16.msra.mxu0 %v1042
  %5158 = vmatprep.subr.bf16.mxu0 %v1041
  %5159 = vmatpush2.bf16.msra.mxu0 %v1040
  %5160 = vmatprep.subr.bf16.mxu0 %v1039
  %5161 = vmatpush2.bf16.msra.mxu0 %v1038
  %5162 = vmatprep.subr.bf16.mxu0 %v1037
  %5163 = vmatpush2.bf16.msra.mxu0 %v1036
  %5164 = vmatprep.mubr.bf16.mxu0 %v4870
  %5165 = vmatmul.mubr.bf16.gmra.mxu0 %v4869
  %v5166 = vpop.f32.mrf.mxu0
  %v5167 = vadd.f32 %v5126, %v5166
  %v5168 = vpop.f32.mrf.mxu0
  %v5169 = vadd.f32 %v5128, %v5168
  %v5170 = vpop.f32.mrf.mxu0
  %v5171 = vpop.f32.mrf.mxu0
  %5172 = vdwg.mxu0
  %v5173 = vtanh.pop %v5167
  %v5174 = vtanh.pop %v5169
  %v5175 = vpack.c.bf16 %v5173, %v5173
  %v5176 = vpack.c.bf16 %v5174, %v5174
  %s5177 = scalar_lea.vmem %s6, 1664
  %v5178 = vld [vmem:[%s5177] sm:$0xf]
  %v5179 = vld [vmem:[%s5177 + $0x4] sm:$0xf]
  %v5180 = vld [vmem:[%s5177 + $0x8] sm:$0xf]
  %v5181 = vld [vmem:[%s5177 + $0xc] sm:$0xf]
  %v5182 = vld [vmem:[%s5177 + $0x10] sm:$0xf]
  %v5183 = vld [vmem:[%s5177 + $0x14] sm:$0xf]
  %v5184 = vld [vmem:[%s5177 + $0x18] sm:$0xf]
  %v5185 = vld [vmem:[%s5177 + $0x1c] sm:$0xf]
  %v5186 = vld [vmem:[%s5177 + $0x20] sm:$0xf]
  %v5187 = vld [vmem:[%s5177 + $0x24] sm:$0xf]
  %v5188 = vld [vmem:[%s5177 + $0x28] sm:$0xf]
  %v5189 = vld [vmem:[%s5177 + $0x2c] sm:$0xf]
  %v5190 = vld [vmem:[%s5177 + $0x30] sm:$0xf]
  %v5191 = vld [vmem:[%s5177 + $0x34] sm:$0xf]
  %v5192 = vld [vmem:[%s5177 + $0x38] sm:$0xf]
  %v5193 = vld [vmem:[%s5177 + $0x3c] sm:$0xf]
  %v5194 = vld [vmem:[%s5177 + $0x40] sm:$0xf]
  %v5195 = vld [vmem:[%s5177 + $0x44] sm:$0xf]
  %v5196 = vld [vmem:[%s5177 + $0x48] sm:$0xf]
  %v5197 = vld [vmem:[%s5177 + $0x4c] sm:$0xf]
  %v5198 = vld [vmem:[%s5177 + $0x50] sm:$0xf]
  %v5199 = vld [vmem:[%s5177 + $0x54] sm:$0xf]
  %v5200 = vld [vmem:[%s5177 + $0x58] sm:$0xf]
  %v5201 = vld [vmem:[%s5177 + $0x5c] sm:$0xf]
  %v5202 = vld [vmem:[%s5177 + $0x60] sm:$0xf]
  %v5203 = vld [vmem:[%s5177 + $0x64] sm:$0xf]
  %v5204 = vld [vmem:[%s5177 + $0x68] sm:$0xf]
  %v5205 = vld [vmem:[%s5177 + $0x6c] sm:$0xf]
  %v5206 = vld [vmem:[%s5177 + $0x70] sm:$0xf]
  %v5207 = vld [vmem:[%s5177 + $0x74] sm:$0xf]
  %v5208 = vld [vmem:[%s5177 + $0x78] sm:$0xf]
  %v5209 = vld [vmem:[%s5177 + $0x7c] sm:$0xf]
  %v5242 = vunpack.c.l.b16 %v5178
  %v5243 = vunpack.c.l.b16 %v5179
  %v5244 = vunpack.c.l.b16 %v5180
  %v5245 = vunpack.c.l.b16 %v5181
  %v5246 = vunpack.c.l.b16 %v5182
  %v5247 = vunpack.c.l.b16 %v5183
  %v5248 = vunpack.c.l.b16 %v5184
  %v5249 = vunpack.c.l.b16 %v5185
  %v5250 = vunpack.c.l.b16 %v5186
  %v5251 = vunpack.c.l.b16 %v5187
  %v5252 = vunpack.c.l.b16 %v5188
  %v5253 = vunpack.c.l.b16 %v5189
  %v5254 = vunpack.c.l.b16 %v5190
  %v5255 = vunpack.c.l.b16 %v5191
  %v5256 = vunpack.c.l.b16 %v5192
  %v5257 = vunpack.c.l.b16 %v5193
  %v5258 = vunpack.c.l.b16 %v5194
  %v5259 = vunpack.c.l.b16 %v5195
  %v5260 = vunpack.c.l.b16 %v5196
  %v5261 = vunpack.c.l.b16 %v5197
  %v5262 = vunpack.c.l.b16 %v5198
  %v5263 = vunpack.c.l.b16 %v5199
  %v5264 = vunpack.c.l.b16 %v5200
  %v5265 = vunpack.c.l.b16 %v5201
  %v5266 = vunpack.c.l.b16 %v5202
  %v5267 = vunpack.c.l.b16 %v5203
  %v5268 = vunpack.c.l.b16 %v5204
  %v5269 = vunpack.c.l.b16 %v5205
  %v5270 = vunpack.c.l.b16 %v5206
  %v5271 = vunpack.c.l.b16 %v5207
  %v5272 = vunpack.c.l.b16 %v5208
  %v5273 = vunpack.c.l.b16 %v5209
  %v5274 = vpack.c.b16 %v5243, %v5242
  %v5275 = vpack.c.b16 %v5245, %v5244
  %v5276 = vpack.c.b16 %v5247, %v5246
  %v5277 = vpack.c.b16 %v5249, %v5248
  %v5278 = vpack.c.b16 %v5251, %v5250
  %v5279 = vpack.c.b16 %v5253, %v5252
  %v5280 = vpack.c.b16 %v5255, %v5254
  %v5281 = vpack.c.b16 %v5257, %v5256
  %v5282 = vpack.c.b16 %v5259, %v5258
  %v5283 = vpack.c.b16 %v5261, %v5260
  %v5284 = vpack.c.b16 %v5263, %v5262
  %v5285 = vpack.c.b16 %v5265, %v5264
  %v5286 = vpack.c.b16 %v5267, %v5266
  %v5287 = vpack.c.b16 %v5269, %v5268
  %v5288 = vpack.c.b16 %v5271, %v5270
  %v5289 = vpack.c.b16 %v5273, %v5272
  %5306 = vmatprep.subr.bf16.mxu0 0
  %5307 = vmatpush1.bf16.msra.mxu0 %v5281
  %5308 = vmatprep.subr.bf16.mxu0 0
  %5309 = vmatpush1.bf16.msra.mxu0 %v5280
  %5310 = vmatprep.subr.bf16.mxu0 0
  %5311 = vmatpush1.bf16.msra.mxu0 %v5279
  %5312 = vmatprep.subr.bf16.mxu0 0
  %5313 = vmatpush1.bf16.msra.mxu0 %v5278
  %5314 = vmatprep.subr.bf16.mxu0 0
  %5315 = vmatpush1.bf16.msra.mxu0 %v5277
  %5316 = vmatprep.subr.bf16.mxu0 0
  %5317 = vmatpush1.bf16.msra.mxu0 %v5276
  %5318 = vmatprep.subr.bf16.mxu0 0
  %5319 = vmatpush1.bf16.msra.mxu0 %v5275
  %5320 = vmatprep.subr.bf16.mxu0 0
  %5321 = vmatpush1.bf16.msra.mxu0 %v5274
  %5322 = vmatprep.subr.bf16.mxu0 0
  %5323 = vmatpush2.bf16.msra.mxu0 %v5289
  %5324 = vmatprep.subr.bf16.mxu0 0
  %5325 = vmatpush2.bf16.msra.mxu0 %v5288
  %5326 = vmatprep.subr.bf16.mxu0 0
  %5327 = vmatpush2.bf16.msra.mxu0 %v5287
  %5328 = vmatprep.subr.bf16.mxu0 0
  %5329 = vmatpush2.bf16.msra.mxu0 %v5286
  %5330 = vmatprep.subr.bf16.mxu0 0
  %5331 = vmatpush2.bf16.msra.mxu0 %v5285
  %5332 = vmatprep.subr.bf16.mxu0 0
  %5333 = vmatpush2.bf16.msra.mxu0 %v5284
  %5334 = vmatprep.subr.bf16.mxu0 0
  %5335 = vmatpush2.bf16.msra.mxu0 %v5283
  %5336 = vmatprep.subr.bf16.mxu0 0
  %5337 = vmatpush2.bf16.msra.mxu0 %v5282
  %5338 = vmatprep.mubr.bf16.mxu0 %v5176
  %5339 = vmatmul.mubr.bf16.gmra.mxu0 %v5175
  %v5340 = vpop.f32.mrf.mxu0
  %v5341 = vadd.f32 0.0, %v5340
  %v5342 = vpop.f32.mrf.mxu0
  %v5343 = vpop.f32.mrf.mxu0
  %v5344 = vpop.f32.mrf.mxu0
  %5345 = vdwg.mxu0
  %v5346 = vadd.f32 %v5040, %v5341
  %s5347 = scalar_lea.vmem [#allocation2], 224
  %v5348 = vld [vmem:[%s5347] sm:$0xff]
  %v5349 = vld [vmem:[%s5347 + $0x8] sm:$0xff]
  %5350 = vmatprep.subr.bf16.mxu0 %v625
  %5351 = vmatpush1.bf16.msra.mxu0 %v624
  %5352 = vmatprep.subr.bf16.mxu0 %v623
  %5353 = vmatpush1.bf16.msra.mxu0 %v622
  %5354 = vmatprep.subr.bf16.mxu0 %v621
  %5355 = vmatpush1.bf16.msra.mxu0 %v620
  %5356 = vmatprep.subr.bf16.mxu0 %v619
  %5357 = vmatpush1.bf16.msra.mxu0 %v618
  %5358 = vmatprep.subr.bf16.mxu0 %v617
  %5359 = vmatpush1.bf16.msra.mxu0 %v616
  %5360 = vmatprep.subr.bf16.mxu0 %v615
  %5361 = vmatpush1.bf16.msra.mxu0 %v614
  %5362 = vmatprep.subr.bf16.mxu0 %v613
  %5363 = vmatpush1.bf16.msra.mxu0 %v612
  %5364 = vmatprep.subr.bf16.mxu0 %v611
  %5365 = vmatpush1.bf16.msra.mxu0 %v610
  %5366 = vmatprep.subr.bf16.mxu0 %v641
  %5367 = vmatpush2.bf16.msra.mxu0 %v640
  %5368 = vmatprep.subr.bf16.mxu0 %v639
  %5369 = vmatpush2.bf16.msra.mxu0 %v638
  %5370 = vmatprep.subr.bf16.mxu0 %v637
  %5371 = vmatpush2.bf16.msra.mxu0 %v636
  %5372 = vmatprep.subr.bf16.mxu0 %v635
  %5373 = vmatpush2.bf16.msra.mxu0 %v634
  %5374 = vmatprep.subr.bf16.mxu0 %v633
  %5375 = vmatpush2.bf16.msra.mxu0 %v632
  %5376 = vmatprep.subr.bf16.mxu0 %v631
  %5377 = vmatpush2.bf16.msra.mxu0 %v630
  %5378 = vmatprep.subr.bf16.mxu0 %v629
  %5379 = vmatpush2.bf16.msra.mxu0 %v628
  %5380 = vmatprep.subr.bf16.mxu0 %v627
  %5381 = vmatpush2.bf16.msra.mxu0 %v626
  %5382 = vmatprep.mubr.bf16.mxu0 %v5090
  %5383 = vmatmul.mubr.bf16.gmra.mxu0 %v5089
  %v5384 = vpop.f32.mrf.mxu0
  %v5385 = vadd.f32 0.0, %v5384
  %v5386 = vpop.f32.mrf.mxu0
  %v5387 = vadd.f32 0.0, %v5386
  %v5388 = vpop.f32.mrf.mxu0
  %v5389 = vpop.f32.mrf.mxu0
  %5390 = vdwg.mxu0
  %v5391 = vadd.f32 %v5348, %v5385
  %v5392 = vadd.f32 %v5349, %v5387
  %v5393 = vtanh.pop %v5391
  %v5394 = vtanh.pop %v5392
  %v5395 = vpack.c.bf16 %v5393, %v5393
  %v5396 = vpack.c.bf16 %v5394, %v5394
  %5397 = vmatprep.subr.bf16.mxu0 %v1003
  %5398 = vmatpush1.bf16.msra.mxu0 %v1002
  %5399 = vmatprep.subr.bf16.mxu0 %v1001
  %5400 = vmatpush1.bf16.msra.mxu0 %v1000
  %5401 = vmatprep.subr.bf16.mxu0 %v999
  %5402 = vmatpush1.bf16.msra.mxu0 %v998
  %5403 = vmatprep.subr.bf16.mxu0 %v997
  %5404 = vmatpush1.bf16.msra.mxu0 %v996
  %5405 = vmatprep.subr.bf16.mxu0 %v995
  %5406 = vmatpush1.bf16.msra.mxu0 %v994
  %5407 = vmatprep.subr.bf16.mxu0 %v993
  %5408 = vmatpush1.bf16.msra.mxu0 %v992
  %5409 = vmatprep.subr.bf16.mxu0 %v991
  %5410 = vmatpush1.bf16.msra.mxu0 %v990
  %5411 = vmatprep.subr.bf16.mxu0 %v989
  %5412 = vmatpush1.bf16.msra.mxu0 %v988
  %5413 = vmatprep.subr.bf16.mxu0 %v1019
  %5414 = vmatpush2.bf16.msra.mxu0 %v1018
  %5415 = vmatprep.subr.bf16.mxu0 %v1017
  %5416 = vmatpush2.bf16.msra.mxu0 %v1016
  %5417 = vmatprep.subr.bf16.mxu0 %v1015
  %5418 = vmatpush2.bf16.msra.mxu0 %v1014
  %5419 = vmatprep.subr.bf16.mxu0 %v1013
  %5420 = vmatpush2.bf16.msra.mxu0 %v1012
  %5421 = vmatprep.subr.bf16.mxu0 %v1011
  %5422 = vmatpush2.bf16.msra.mxu0 %v1010
  %5423 = vmatprep.subr.bf16.mxu0 %v1009
  %5424 = vmatpush2.bf16.msra.mxu0 %v1008
  %5425 = vmatprep.subr.bf16.mxu0 %v1007
  %5426 = vmatpush2.bf16.msra.mxu0 %v1006
  %5427 = vmatprep.subr.bf16.mxu0 %v1005
  %5428 = vmatpush2.bf16.msra.mxu0 %v1004
  %5429 = vmatprep.mubr.bf16.mxu0 %v5396
  %5430 = vmatmul.mubr.bf16.gmra.mxu0 %v5395
  %v5431 = vpop.f32.mrf.mxu0
  %v5432 = vadd.f32 %v789, %v5431
  %v5433 = vpop.f32.mrf.mxu0
  %v5434 = vadd.f32 %v793, %v5433
  %v5435 = vpop.f32.mrf.mxu0
  %v5436 = vpop.f32.mrf.mxu0
  %5437 = vdwg.mxu0
  %5438 = vmatprep.subr.bf16.mxu0 %v1035
  %5439 = vmatpush1.bf16.msra.mxu0 %v1034
  %5440 = vmatprep.subr.bf16.mxu0 %v1033
  %5441 = vmatpush1.bf16.msra.mxu0 %v1032
  %5442 = vmatprep.subr.bf16.mxu0 %v1031
  %5443 = vmatpush1.bf16.msra.mxu0 %v1030
  %5444 = vmatprep.subr.bf16.mxu0 %v1029
  %5445 = vmatpush1.bf16.msra.mxu0 %v1028
  %5446 = vmatprep.subr.bf16.mxu0 %v1027
  %5447 = vmatpush1.bf16.msra.mxu0 %v1026
  %5448 = vmatprep.subr.bf16.mxu0 %v1025
  %5449 = vmatpush1.bf16.msra.mxu0 %v1024
  %5450 = vmatprep.subr.bf16.mxu0 %v1023
  %5451 = vmatpush1.bf16.msra.mxu0 %v1022
  %5452 = vmatprep.subr.bf16.mxu0 %v1021
  %5453 = vmatpush1.bf16.msra.mxu0 %v1020
  %5454 = vmatprep.subr.bf16.mxu0 %v1051
  %5455 = vmatpush2.bf16.msra.mxu0 %v1050
  %5456 = vmatprep.subr.bf16.mxu0 %v1049
  %5457 = vmatpush2.bf16.msra.mxu0 %v1048
  %5458 = vmatprep.subr.bf16.mxu0 %v1047
  %5459 = vmatpush2.bf16.msra.mxu0 %v1046
  %5460 = vmatprep.subr.bf16.mxu0 %v1045
  %5461 = vmatpush2.bf16.msra.mxu0 %v1044
  %5462 = vmatprep.subr.bf16.mxu0 %v1043
  %5463 = vmatpush2.bf16.msra.mxu0 %v1042
  %5464 = vmatprep.subr.bf16.mxu0 %v1041
  %5465 = vmatpush2.bf16.msra.mxu0 %v1040
  %5466 = vmatprep.subr.bf16.mxu0 %v1039
  %5467 = vmatpush2.bf16.msra.mxu0 %v1038
  %5468 = vmatprep.subr.bf16.mxu0 %v1037
  %5469 = vmatpush2.bf16.msra.mxu0 %v1036
  %5470 = vmatprep.mubr.bf16.mxu0 %v5176
  %5471 = vmatmul.mubr.bf16.gmra.mxu0 %v5175
  %v5472 = vpop.f32.mrf.mxu0
  %v5473 = vadd.f32 %v5432, %v5472
  %v5474 = vpop.f32.mrf.mxu0
  %v5475 = vadd.f32 %v5434, %v5474
  %v5476 = vpop.f32.mrf.mxu0
  %v5477 = vpop.f32.mrf.mxu0
  %5478 = vdwg.mxu0
  %v5479 = vtanh.pop %v5473
  %v5480 = vtanh.pop %v5475
  %v5481 = vpack.c.bf16 %v5479, %v5479
  %v5482 = vpack.c.bf16 %v5480, %v5480
  %s5483 = scalar_lea.vmem %s6, 1792
  %v5484 = vld [vmem:[%s5483] sm:$0xf]
  %v5485 = vld [vmem:[%s5483 + $0x4] sm:$0xf]
  %v5486 = vld [vmem:[%s5483 + $0x8] sm:$0xf]
  %v5487 = vld [vmem:[%s5483 + $0xc] sm:$0xf]
  %v5488 = vld [vmem:[%s5483 + $0x10] sm:$0xf]
  %v5489 = vld [vmem:[%s5483 + $0x14] sm:$0xf]
  %v5490 = vld [vmem:[%s5483 + $0x18] sm:$0xf]
  %v5491 = vld [vmem:[%s5483 + $0x1c] sm:$0xf]
  %v5492 = vld [vmem:[%s5483 + $0x20] sm:$0xf]
  %v5493 = vld [vmem:[%s5483 + $0x24] sm:$0xf]
  %v5494 = vld [vmem:[%s5483 + $0x28] sm:$0xf]
  %v5495 = vld [vmem:[%s5483 + $0x2c] sm:$0xf]
  %v5496 = vld [vmem:[%s5483 + $0x30] sm:$0xf]
  %v5497 = vld [vmem:[%s5483 + $0x34] sm:$0xf]
  %v5498 = vld [vmem:[%s5483 + $0x38] sm:$0xf]
  %v5499 = vld [vmem:[%s5483 + $0x3c] sm:$0xf]
  %v5500 = vld [vmem:[%s5483 + $0x40] sm:$0xf]
  %v5501 = vld [vmem:[%s5483 + $0x44] sm:$0xf]
  %v5502 = vld [vmem:[%s5483 + $0x48] sm:$0xf]
  %v5503 = vld [vmem:[%s5483 + $0x4c] sm:$0xf]
  %v5504 = vld [vmem:[%s5483 + $0x50] sm:$0xf]
  %v5505 = vld [vmem:[%s5483 + $0x54] sm:$0xf]
  %v5506 = vld [vmem:[%s5483 + $0x58] sm:$0xf]
  %v5507 = vld [vmem:[%s5483 + $0x5c] sm:$0xf]
  %v5508 = vld [vmem:[%s5483 + $0x60] sm:$0xf]
  %v5509 = vld [vmem:[%s5483 + $0x64] sm:$0xf]
  %v5510 = vld [vmem:[%s5483 + $0x68] sm:$0xf]
  %v5511 = vld [vmem:[%s5483 + $0x6c] sm:$0xf]
  %v5512 = vld [vmem:[%s5483 + $0x70] sm:$0xf]
  %v5513 = vld [vmem:[%s5483 + $0x74] sm:$0xf]
  %v5514 = vld [vmem:[%s5483 + $0x78] sm:$0xf]
  %v5515 = vld [vmem:[%s5483 + $0x7c] sm:$0xf]
  %v5548 = vunpack.c.l.b16 %v5484
  %v5549 = vunpack.c.l.b16 %v5485
  %v5550 = vunpack.c.l.b16 %v5486
  %v5551 = vunpack.c.l.b16 %v5487
  %v5552 = vunpack.c.l.b16 %v5488
  %v5553 = vunpack.c.l.b16 %v5489
  %v5554 = vunpack.c.l.b16 %v5490
  %v5555 = vunpack.c.l.b16 %v5491
  %v5556 = vunpack.c.l.b16 %v5492
  %v5557 = vunpack.c.l.b16 %v5493
  %v5558 = vunpack.c.l.b16 %v5494
  %v5559 = vunpack.c.l.b16 %v5495
  %v5560 = vunpack.c.l.b16 %v5496
  %v5561 = vunpack.c.l.b16 %v5497
  %v5562 = vunpack.c.l.b16 %v5498
  %v5563 = vunpack.c.l.b16 %v5499
  %v5564 = vunpack.c.l.b16 %v5500
  %v5565 = vunpack.c.l.b16 %v5501
  %v5566 = vunpack.c.l.b16 %v5502
  %v5567 = vunpack.c.l.b16 %v5503
  %v5568 = vunpack.c.l.b16 %v5504
  %v5569 = vunpack.c.l.b16 %v5505
  %v5570 = vunpack.c.l.b16 %v5506
  %v5571 = vunpack.c.l.b16 %v5507
  %v5572 = vunpack.c.l.b16 %v5508
  %v5573 = vunpack.c.l.b16 %v5509
  %v5574 = vunpack.c.l.b16 %v5510
  %v5575 = vunpack.c.l.b16 %v5511
  %v5576 = vunpack.c.l.b16 %v5512
  %v5577 = vunpack.c.l.b16 %v5513
  %v5578 = vunpack.c.l.b16 %v5514
  %v5579 = vunpack.c.l.b16 %v5515
  %v5580 = vpack.c.b16 %v5549, %v5548
  %v5581 = vpack.c.b16 %v5551, %v5550
  %v5582 = vpack.c.b16 %v5553, %v5552
  %v5583 = vpack.c.b16 %v5555, %v5554
  %v5584 = vpack.c.b16 %v5557, %v5556
  %v5585 = vpack.c.b16 %v5559, %v5558
  %v5586 = vpack.c.b16 %v5561, %v5560
  %v5587 = vpack.c.b16 %v5563, %v5562
  %v5588 = vpack.c.b16 %v5565, %v5564
  %v5589 = vpack.c.b16 %v5567, %v5566
  %v5590 = vpack.c.b16 %v5569, %v5568
  %v5591 = vpack.c.b16 %v5571, %v5570
  %v5592 = vpack.c.b16 %v5573, %v5572
  %v5593 = vpack.c.b16 %v5575, %v5574
  %v5594 = vpack.c.b16 %v5577, %v5576
  %v5595 = vpack.c.b16 %v5579, %v5578
  %5612 = vmatprep.subr.bf16.mxu0 0
  %5613 = vmatpush1.bf16.msra.mxu0 %v5587
  %5614 = vmatprep.subr.bf16.mxu0 0
  %5615 = vmatpush1.bf16.msra.mxu0 %v5586
  %5616 = vmatprep.subr.bf16.mxu0 0
  %5617 = vmatpush1.bf16.msra.mxu0 %v5585
  %5618 = vmatprep.subr.bf16.mxu0 0
  %5619 = vmatpush1.bf16.msra.mxu0 %v5584
  %5620 = vmatprep.subr.bf16.mxu0 0
  %5621 = vmatpush1.bf16.msra.mxu0 %v5583
  %5622 = vmatprep.subr.bf16.mxu0 0
  %5623 = vmatpush1.bf16.msra.mxu0 %v5582
  %5624 = vmatprep.subr.bf16.mxu0 0
  %5625 = vmatpush1.bf16.msra.mxu0 %v5581
  %5626 = vmatprep.subr.bf16.mxu0 0
  %5627 = vmatpush1.bf16.msra.mxu0 %v5580
  %5628 = vmatprep.subr.bf16.mxu0 0
  %5629 = vmatpush2.bf16.msra.mxu0 %v5595
  %5630 = vmatprep.subr.bf16.mxu0 0
  %5631 = vmatpush2.bf16.msra.mxu0 %v5594
  %5632 = vmatprep.subr.bf16.mxu0 0
  %5633 = vmatpush2.bf16.msra.mxu0 %v5593
  %5634 = vmatprep.subr.bf16.mxu0 0
  %5635 = vmatpush2.bf16.msra.mxu0 %v5592
  %5636 = vmatprep.subr.bf16.mxu0 0
  %5637 = vmatpush2.bf16.msra.mxu0 %v5591
  %5638 = vmatprep.subr.bf16.mxu0 0
  %5639 = vmatpush2.bf16.msra.mxu0 %v5590
  %5640 = vmatprep.subr.bf16.mxu0 0
  %5641 = vmatpush2.bf16.msra.mxu0 %v5589
  %5642 = vmatprep.subr.bf16.mxu0 0
  %5643 = vmatpush2.bf16.msra.mxu0 %v5588
  %5644 = vmatprep.mubr.bf16.mxu0 %v5482
  %5645 = vmatmul.mubr.bf16.gmra.mxu0 %v5481
  %v5646 = vpop.f32.mrf.mxu0
  %v5647 = vadd.f32 0.0, %v5646
  %v5648 = vpop.f32.mrf.mxu0
  %v5649 = vpop.f32.mrf.mxu0
  %v5650 = vpop.f32.mrf.mxu0
  %5651 = vdwg.mxu0
  %v5652 = vadd.f32 %v5346, %v5647
  %s5653 = scalar_lea.vmem [#allocation2], 240
  %v5654 = vld [vmem:[%s5653] sm:$0xff]
  %v5655 = vld [vmem:[%s5653 + $0x8] sm:$0xff]
  %5656 = vmatprep.subr.bf16.mxu0 %v625
  %5657 = vmatpush1.bf16.msra.mxu0 %v624
  %5658 = vmatprep.subr.bf16.mxu0 %v623
  %5659 = vmatpush1.bf16.msra.mxu0 %v622
  %5660 = vmatprep.subr.bf16.mxu0 %v621
  %5661 = vmatpush1.bf16.msra.mxu0 %v620
  %5662 = vmatprep.subr.bf16.mxu0 %v619
  %5663 = vmatpush1.bf16.msra.mxu0 %v618
  %5664 = vmatprep.subr.bf16.mxu0 %v617
  %5665 = vmatpush1.bf16.msra.mxu0 %v616
  %5666 = vmatprep.subr.bf16.mxu0 %v615
  %5667 = vmatpush1.bf16.msra.mxu0 %v614
  %5668 = vmatprep.subr.bf16.mxu0 %v613
  %5669 = vmatpush1.bf16.msra.mxu0 %v612
  %5670 = vmatprep.subr.bf16.mxu0 %v611
  %5671 = vmatpush1.bf16.msra.mxu0 %v610
  %5672 = vmatprep.subr.bf16.mxu0 %v641
  %5673 = vmatpush2.bf16.msra.mxu0 %v640
  %5674 = vmatprep.subr.bf16.mxu0 %v639
  %5675 = vmatpush2.bf16.msra.mxu0 %v638
  %5676 = vmatprep.subr.bf16.mxu0 %v637
  %5677 = vmatpush2.bf16.msra.mxu0 %v636
  %5678 = vmatprep.subr.bf16.mxu0 %v635
  %5679 = vmatpush2.bf16.msra.mxu0 %v634
  %5680 = vmatprep.subr.bf16.mxu0 %v633
  %5681 = vmatpush2.bf16.msra.mxu0 %v632
  %5682 = vmatprep.subr.bf16.mxu0 %v631
  %5683 = vmatpush2.bf16.msra.mxu0 %v630
  %5684 = vmatprep.subr.bf16.mxu0 %v629
  %5685 = vmatpush2.bf16.msra.mxu0 %v628
  %5686 = vmatprep.subr.bf16.mxu0 %v627
  %5687 = vmatpush2.bf16.msra.mxu0 %v626
  %5688 = vmatprep.mubr.bf16.mxu0 %v5396
  %5689 = vmatmul.mubr.bf16.gmra.mxu0 %v5395
  %v5690 = vpop.f32.mrf.mxu0
  %v5691 = vadd.f32 0.0, %v5690
  %v5692 = vpop.f32.mrf.mxu0
  %v5693 = vadd.f32 0.0, %v5692
  %v5694 = vpop.f32.mrf.mxu0
  %v5695 = vpop.f32.mrf.mxu0
  %5696 = vdwg.mxu0
  %v5697 = vadd.f32 %v5654, %v5691
  %v5698 = vadd.f32 %v5655, %v5693
  %v5699 = vtanh.pop %v5697
  %v5700 = vtanh.pop %v5698
  %v5701 = vpack.c.bf16 %v5699, %v5699
  %v5702 = vpack.c.bf16 %v5700, %v5700
  %5703 = vmatprep.subr.bf16.mxu0 %v1003
  %5704 = vmatpush1.bf16.msra.mxu0 %v1002
  %5705 = vmatprep.subr.bf16.mxu0 %v1001
  %5706 = vmatpush1.bf16.msra.mxu0 %v1000
  %5707 = vmatprep.subr.bf16.mxu0 %v999
  %5708 = vmatpush1.bf16.msra.mxu0 %v998
  %5709 = vmatprep.subr.bf16.mxu0 %v997
  %5710 = vmatpush1.bf16.msra.mxu0 %v996
  %5711 = vmatprep.subr.bf16.mxu0 %v995
  %5712 = vmatpush1.bf16.msra.mxu0 %v994
  %5713 = vmatprep.subr.bf16.mxu0 %v993
  %5714 = vmatpush1.bf16.msra.mxu0 %v992
  %5715 = vmatprep.subr.bf16.mxu0 %v991
  %5716 = vmatpush1.bf16.msra.mxu0 %v990
  %5717 = vmatprep.subr.bf16.mxu0 %v989
  %5718 = vmatpush1.bf16.msra.mxu0 %v988
  %5719 = vmatprep.subr.bf16.mxu0 %v1019
  %5720 = vmatpush2.bf16.msra.mxu0 %v1018
  %5721 = vmatprep.subr.bf16.mxu0 %v1017
  %5722 = vmatpush2.bf16.msra.mxu0 %v1016
  %5723 = vmatprep.subr.bf16.mxu0 %v1015
  %5724 = vmatpush2.bf16.msra.mxu0 %v1014
  %5725 = vmatprep.subr.bf16.mxu0 %v1013
  %5726 = vmatpush2.bf16.msra.mxu0 %v1012
  %5727 = vmatprep.subr.bf16.mxu0 %v1011
  %5728 = vmatpush2.bf16.msra.mxu0 %v1010
  %5729 = vmatprep.subr.bf16.mxu0 %v1009
  %5730 = vmatpush2.bf16.msra.mxu0 %v1008
  %5731 = vmatprep.subr.bf16.mxu0 %v1007
  %5732 = vmatpush2.bf16.msra.mxu0 %v1006
  %5733 = vmatprep.subr.bf16.mxu0 %v1005
  %5734 = vmatpush2.bf16.msra.mxu0 %v1004
  %5735 = vmatprep.mubr.bf16.mxu0 %v5702
  %5736 = vmatmul.mubr.bf16.gmra.mxu0 %v5701
  %v5737 = vpop.f32.mrf.mxu0
  %v5738 = vadd.f32 %v789, %v5737
  %v5739 = vpop.f32.mrf.mxu0
  %v5740 = vadd.f32 %v793, %v5739
  %v5741 = vpop.f32.mrf.mxu0
  %v5742 = vpop.f32.mrf.mxu0
  %5743 = vdwg.mxu0
  %5744 = vmatprep.subr.bf16.mxu0 %v1035
  %5745 = vmatpush1.bf16.msra.mxu0 %v1034
  %5746 = vmatprep.subr.bf16.mxu0 %v1033
  %5747 = vmatpush1.bf16.msra.mxu0 %v1032
  %5748 = vmatprep.subr.bf16.mxu0 %v1031
  %5749 = vmatpush1.bf16.msra.mxu0 %v1030
  %5750 = vmatprep.subr.bf16.mxu0 %v1029
  %5751 = vmatpush1.bf16.msra.mxu0 %v1028
  %5752 = vmatprep.subr.bf16.mxu0 %v1027
  %5753 = vmatpush1.bf16.msra.mxu0 %v1026
  %5754 = vmatprep.subr.bf16.mxu0 %v1025
  %5755 = vmatpush1.bf16.msra.mxu0 %v1024
  %5756 = vmatprep.subr.bf16.mxu0 %v1023
  %5757 = vmatpush1.bf16.msra.mxu0 %v1022
  %5758 = vmatprep.subr.bf16.mxu0 %v1021
  %5759 = vmatpush1.bf16.msra.mxu0 %v1020
  %5760 = vmatprep.subr.bf16.mxu0 %v1051
  %5761 = vmatpush2.bf16.msra.mxu0 %v1050
  %5762 = vmatprep.subr.bf16.mxu0 %v1049
  %5763 = vmatpush2.bf16.msra.mxu0 %v1048
  %5764 = vmatprep.subr.bf16.mxu0 %v1047
  %5765 = vmatpush2.bf16.msra.mxu0 %v1046
  %5766 = vmatprep.subr.bf16.mxu0 %v1045
  %5767 = vmatpush2.bf16.msra.mxu0 %v1044
  %5768 = vmatprep.subr.bf16.mxu0 %v1043
  %5769 = vmatpush2.bf16.msra.mxu0 %v1042
  %5770 = vmatprep.subr.bf16.mxu0 %v1041
  %5771 = vmatpush2.bf16.msra.mxu0 %v1040
  %5772 = vmatprep.subr.bf16.mxu0 %v1039
  %5773 = vmatpush2.bf16.msra.mxu0 %v1038
  %5774 = vmatprep.subr.bf16.mxu0 %v1037
  %5775 = vmatpush2.bf16.msra.mxu0 %v1036
  %5776 = vmatprep.mubr.bf16.mxu0 %v5482
  %5777 = vmatmul.mubr.bf16.gmra.mxu0 %v5481
  %v5778 = vpop.f32.mrf.mxu0
  %v5779 = vadd.f32 %v5738, %v5778
  %v5780 = vpop.f32.mrf.mxu0
  %v5781 = vadd.f32 %v5740, %v5780
  %v5782 = vpop.f32.mrf.mxu0
  %v5783 = vpop.f32.mrf.mxu0
  %5784 = vdwg.mxu0
  %v5785 = vtanh.pop %v5779
  %v5786 = vtanh.pop %v5781
  %v5787 = vpack.c.bf16 %v5785, %v5785
  %v5788 = vpack.c.bf16 %v5786, %v5786
  %s5789 = scalar_lea.vmem %s6, 1920
  %v5790 = vld [vmem:[%s5789] sm:$0xf]
  %v5791 = vld [vmem:[%s5789 + $0x4] sm:$0xf]
  %v5792 = vld [vmem:[%s5789 + $0x8] sm:$0xf]
  %v5793 = vld [vmem:[%s5789 + $0xc] sm:$0xf]
  %v5794 = vld [vmem:[%s5789 + $0x10] sm:$0xf]
  %v5795 = vld [vmem:[%s5789 + $0x14] sm:$0xf]
  %v5796 = vld [vmem:[%s5789 + $0x18] sm:$0xf]
  %v5797 = vld [vmem:[%s5789 + $0x1c] sm:$0xf]
  %v5798 = vld [vmem:[%s5789 + $0x20] sm:$0xf]
  %v5799 = vld [vmem:[%s5789 + $0x24] sm:$0xf]
  %v5800 = vld [vmem:[%s5789 + $0x28] sm:$0xf]
  %v5801 = vld [vmem:[%s5789 + $0x2c] sm:$0xf]
  %v5802 = vld [vmem:[%s5789 + $0x30] sm:$0xf]
  %v5803 = vld [vmem:[%s5789 + $0x34] sm:$0xf]
  %v5804 = vld [vmem:[%s5789 + $0x38] sm:$0xf]
  %v5805 = vld [vmem:[%s5789 + $0x3c] sm:$0xf]
  %v5806 = vld [vmem:[%s5789 + $0x40] sm:$0xf]
  %v5807 = vld [vmem:[%s5789 + $0x44] sm:$0xf]
  %v5808 = vld [vmem:[%s5789 + $0x48] sm:$0xf]
  %v5809 = vld [vmem:[%s5789 + $0x4c] sm:$0xf]
  %v5810 = vld [vmem:[%s5789 + $0x50] sm:$0xf]
  %v5811 = vld [vmem:[%s5789 + $0x54] sm:$0xf]
  %v5812 = vld [vmem:[%s5789 + $0x58] sm:$0xf]
  %v5813 = vld [vmem:[%s5789 + $0x5c] sm:$0xf]
  %v5814 = vld [vmem:[%s5789 + $0x60] sm:$0xf]
  %v5815 = vld [vmem:[%s5789 + $0x64] sm:$0xf]
  %v5816 = vld [vmem:[%s5789 + $0x68] sm:$0xf]
  %v5817 = vld [vmem:[%s5789 + $0x6c] sm:$0xf]
  %v5818 = vld [vmem:[%s5789 + $0x70] sm:$0xf]
  %v5819 = vld [vmem:[%s5789 + $0x74] sm:$0xf]
  %v5820 = vld [vmem:[%s5789 + $0x78] sm:$0xf]
  %v5821 = vld [vmem:[%s5789 + $0x7c] sm:$0xf]
  %v5854 = vunpack.c.l.b16 %v5790
  %v5855 = vunpack.c.l.b16 %v5791
  %v5856 = vunpack.c.l.b16 %v5792
  %v5857 = vunpack.c.l.b16 %v5793
  %v5858 = vunpack.c.l.b16 %v5794
  %v5859 = vunpack.c.l.b16 %v5795
  %v5860 = vunpack.c.l.b16 %v5796
  %v5861 = vunpack.c.l.b16 %v5797
  %v5862 = vunpack.c.l.b16 %v5798
  %v5863 = vunpack.c.l.b16 %v5799
  %v5864 = vunpack.c.l.b16 %v5800
  %v5865 = vunpack.c.l.b16 %v5801
  %v5866 = vunpack.c.l.b16 %v5802
  %v5867 = vunpack.c.l.b16 %v5803
  %v5868 = vunpack.c.l.b16 %v5804
  %v5869 = vunpack.c.l.b16 %v5805
  %v5870 = vunpack.c.l.b16 %v5806
  %v5871 = vunpack.c.l.b16 %v5807
  %v5872 = vunpack.c.l.b16 %v5808
  %v5873 = vunpack.c.l.b16 %v5809
  %v5874 = vunpack.c.l.b16 %v5810
  %v5875 = vunpack.c.l.b16 %v5811
  %v5876 = vunpack.c.l.b16 %v5812
  %v5877 = vunpack.c.l.b16 %v5813
  %v5878 = vunpack.c.l.b16 %v5814
  %v5879 = vunpack.c.l.b16 %v5815
  %v5880 = vunpack.c.l.b16 %v5816
  %v5881 = vunpack.c.l.b16 %v5817
  %v5882 = vunpack.c.l.b16 %v5818
  %v5883 = vunpack.c.l.b16 %v5819
  %v5884 = vunpack.c.l.b16 %v5820
  %v5885 = vunpack.c.l.b16 %v5821
  %v5886 = vpack.c.b16 %v5855, %v5854
  %v5887 = vpack.c.b16 %v5857, %v5856
  %v5888 = vpack.c.b16 %v5859, %v5858
  %v5889 = vpack.c.b16 %v5861, %v5860
  %v5890 = vpack.c.b16 %v5863, %v5862
  %v5891 = vpack.c.b16 %v5865, %v5864
  %v5892 = vpack.c.b16 %v5867, %v5866
  %v5893 = vpack.c.b16 %v5869, %v5868
  %v5894 = vpack.c.b16 %v5871, %v5870
  %v5895 = vpack.c.b16 %v5873, %v5872
  %v5896 = vpack.c.b16 %v5875, %v5874
  %v5897 = vpack.c.b16 %v5877, %v5876
  %v5898 = vpack.c.b16 %v5879, %v5878
  %v5899 = vpack.c.b16 %v5881, %v5880
  %v5900 = vpack.c.b16 %v5883, %v5882
  %v5901 = vpack.c.b16 %v5885, %v5884
  %5918 = vmatprep.subr.bf16.mxu0 0
  %5919 = vmatpush1.bf16.msra.mxu0 %v5893
  %5920 = vmatprep.subr.bf16.mxu0 0
  %5921 = vmatpush1.bf16.msra.mxu0 %v5892
  %5922 = vmatprep.subr.bf16.mxu0 0
  %5923 = vmatpush1.bf16.msra.mxu0 %v5891
  %5924 = vmatprep.subr.bf16.mxu0 0
  %5925 = vmatpush1.bf16.msra.mxu0 %v5890
  %5926 = vmatprep.subr.bf16.mxu0 0
  %5927 = vmatpush1.bf16.msra.mxu0 %v5889
  %5928 = vmatprep.subr.bf16.mxu0 0
  %5929 = vmatpush1.bf16.msra.mxu0 %v5888
  %5930 = vmatprep.subr.bf16.mxu0 0
  %5931 = vmatpush1.bf16.msra.mxu0 %v5887
  %5932 = vmatprep.subr.bf16.mxu0 0
  %5933 = vmatpush1.bf16.msra.mxu0 %v5886
  %5934 = vmatprep.subr.bf16.mxu0 0
  %5935 = vmatpush2.bf16.msra.mxu0 %v5901
  %5936 = vmatprep.subr.bf16.mxu0 0
  %5937 = vmatpush2.bf16.msra.mxu0 %v5900
  %5938 = vmatprep.subr.bf16.mxu0 0
  %5939 = vmatpush2.bf16.msra.mxu0 %v5899
  %5940 = vmatprep.subr.bf16.mxu0 0
  %5941 = vmatpush2.bf16.msra.mxu0 %v5898
  %5942 = vmatprep.subr.bf16.mxu0 0
  %5943 = vmatpush2.bf16.msra.mxu0 %v5897
  %5944 = vmatprep.subr.bf16.mxu0 0
  %5945 = vmatpush2.bf16.msra.mxu0 %v5896
  %5946 = vmatprep.subr.bf16.mxu0 0
  %5947 = vmatpush2.bf16.msra.mxu0 %v5895
  %5948 = vmatprep.subr.bf16.mxu0 0
  %5949 = vmatpush2.bf16.msra.mxu0 %v5894
  %5950 = vmatprep.mubr.bf16.mxu0 %v5788
  %5951 = vmatmul.mubr.bf16.gmra.mxu0 %v5787
  %v5952 = vpop.f32.mrf.mxu0
  %v5953 = vadd.f32 0.0, %v5952
  %v5954 = vpop.f32.mrf.mxu0
  %v5955 = vpop.f32.mrf.mxu0
  %v5956 = vpop.f32.mrf.mxu0
  %5957 = vdwg.mxu0
  %v5958 = vadd.f32 %v5652, %v5953
  %s5959 = scalar_lea.vmem [#allocation2], 256
  %v5960 = vld [vmem:[%s5959] sm:$0xff]
  %v5961 = vld [vmem:[%s5959 + $0x8] sm:$0xff]
  %5962 = vmatprep.subr.bf16.mxu0 %v625
  %5963 = vmatpush1.bf16.msra.mxu0 %v624
  %5964 = vmatprep.subr.bf16.mxu0 %v623
  %5965 = vmatpush1.bf16.msra.mxu0 %v622
  %5966 = vmatprep.subr.bf16.mxu0 %v621
  %5967 = vmatpush1.bf16.msra.mxu0 %v620
  %5968 = vmatprep.subr.bf16.mxu0 %v619
  %5969 = vmatpush1.bf16.msra.mxu0 %v618
  %5970 = vmatprep.subr.bf16.mxu0 %v617
  %5971 = vmatpush1.bf16.msra.mxu0 %v616
  %5972 = vmatprep.subr.bf16.mxu0 %v615
  %5973 = vmatpush1.bf16.msra.mxu0 %v614
  %5974 = vmatprep.subr.bf16.mxu0 %v613
  %5975 = vmatpush1.bf16.msra.mxu0 %v612
  %5976 = vmatprep.subr.bf16.mxu0 %v611
  %5977 = vmatpush1.bf16.msra.mxu0 %v610
  %5978 = vmatprep.subr.bf16.mxu0 %v641
  %5979 = vmatpush2.bf16.msra.mxu0 %v640
  %5980 = vmatprep.subr.bf16.mxu0 %v639
  %5981 = vmatpush2.bf16.msra.mxu0 %v638
  %5982 = vmatprep.subr.bf16.mxu0 %v637
  %5983 = vmatpush2.bf16.msra.mxu0 %v636
  %5984 = vmatprep.subr.bf16.mxu0 %v635
  %5985 = vmatpush2.bf16.msra.mxu0 %v634
  %5986 = vmatprep.subr.bf16.mxu0 %v633
  %5987 = vmatpush2.bf16.msra.mxu0 %v632
  %5988 = vmatprep.subr.bf16.mxu0 %v631
  %5989 = vmatpush2.bf16.msra.mxu0 %v630
  %5990 = vmatprep.subr.bf16.mxu0 %v629
  %5991 = vmatpush2.bf16.msra.mxu0 %v628
  %5992 = vmatprep.subr.bf16.mxu0 %v627
  %5993 = vmatpush2.bf16.msra.mxu0 %v626
  %5994 = vmatprep.mubr.bf16.mxu0 %v5702
  %5995 = vmatmul.mubr.bf16.gmra.mxu0 %v5701
  %v5996 = vpop.f32.mrf.mxu0
  %v5997 = vadd.f32 0.0, %v5996
  %v5998 = vpop.f32.mrf.mxu0
  %v5999 = vadd.f32 0.0, %v5998
  %v6000 = vpop.f32.mrf.mxu0
  %v6001 = vpop.f32.mrf.mxu0
  %6002 = vdwg.mxu0
  %v6003 = vadd.f32 %v5960, %v5997
  %v6004 = vadd.f32 %v5961, %v5999
  %v6005 = vtanh.pop %v6003
  %v6006 = vtanh.pop %v6004
  %v6007 = vpack.c.bf16 %v6005, %v6005
  %v6008 = vpack.c.bf16 %v6006, %v6006
  %6009 = vmatprep.subr.bf16.mxu0 %v1003
  %6010 = vmatpush1.bf16.msra.mxu0 %v1002
  %6011 = vmatprep.subr.bf16.mxu0 %v1001
  %6012 = vmatpush1.bf16.msra.mxu0 %v1000
  %6013 = vmatprep.subr.bf16.mxu0 %v999
  %6014 = vmatpush1.bf16.msra.mxu0 %v998
  %6015 = vmatprep.subr.bf16.mxu0 %v997
  %6016 = vmatpush1.bf16.msra.mxu0 %v996
  %6017 = vmatprep.subr.bf16.mxu0 %v995
  %6018 = vmatpush1.bf16.msra.mxu0 %v994
  %6019 = vmatprep.subr.bf16.mxu0 %v993
  %6020 = vmatpush1.bf16.msra.mxu0 %v992
  %6021 = vmatprep.subr.bf16.mxu0 %v991
  %6022 = vmatpush1.bf16.msra.mxu0 %v990
  %6023 = vmatprep.subr.bf16.mxu0 %v989
  %6024 = vmatpush1.bf16.msra.mxu0 %v988
  %6025 = vmatprep.subr.bf16.mxu0 %v1019
  %6026 = vmatpush2.bf16.msra.mxu0 %v1018
  %6027 = vmatprep.subr.bf16.mxu0 %v1017
  %6028 = vmatpush2.bf16.msra.mxu0 %v1016
  %6029 = vmatprep.subr.bf16.mxu0 %v1015
  %6030 = vmatpush2.bf16.msra.mxu0 %v1014
  %6031 = vmatprep.subr.bf16.mxu0 %v1013
  %6032 = vmatpush2.bf16.msra.mxu0 %v1012
  %6033 = vmatprep.subr.bf16.mxu0 %v1011
  %6034 = vmatpush2.bf16.msra.mxu0 %v1010
  %6035 = vmatprep.subr.bf16.mxu0 %v1009
  %6036 = vmatpush2.bf16.msra.mxu0 %v1008
  %6037 = vmatprep.subr.bf16.mxu0 %v1007
  %6038 = vmatpush2.bf16.msra.mxu0 %v1006
  %6039 = vmatprep.subr.bf16.mxu0 %v1005
  %6040 = vmatpush2.bf16.msra.mxu0 %v1004
  %6041 = vmatprep.mubr.bf16.mxu0 %v6008
  %6042 = vmatmul.mubr.bf16.gmra.mxu0 %v6007
  %v6043 = vpop.f32.mrf.mxu0
  %v6044 = vadd.f32 %v789, %v6043
  %v6045 = vpop.f32.mrf.mxu0
  %v6046 = vadd.f32 %v793, %v6045
  %v6047 = vpop.f32.mrf.mxu0
  %v6048 = vpop.f32.mrf.mxu0
  %6049 = vdwg.mxu0
  %6050 = vmatprep.subr.bf16.mxu0 %v1035
  %6051 = vmatpush1.bf16.msra.mxu0 %v1034
  %6052 = vmatprep.subr.bf16.mxu0 %v1033
  %6053 = vmatpush1.bf16.msra.mxu0 %v1032
  %6054 = vmatprep.subr.bf16.mxu0 %v1031
  %6055 = vmatpush1.bf16.msra.mxu0 %v1030
  %6056 = vmatprep.subr.bf16.mxu0 %v1029
  %6057 = vmatpush1.bf16.msra.mxu0 %v1028
  %6058 = vmatprep.subr.bf16.mxu0 %v1027
  %6059 = vmatpush1.bf16.msra.mxu0 %v1026
  %6060 = vmatprep.subr.bf16.mxu0 %v1025
  %6061 = vmatpush1.bf16.msra.mxu0 %v1024
  %6062 = vmatprep.subr.bf16.mxu0 %v1023
  %6063 = vmatpush1.bf16.msra.mxu0 %v1022
  %6064 = vmatprep.subr.bf16.mxu0 %v1021
  %6065 = vmatpush1.bf16.msra.mxu0 %v1020
  %6066 = vmatprep.subr.bf16.mxu0 %v1051
  %6067 = vmatpush2.bf16.msra.mxu0 %v1050
  %6068 = vmatprep.subr.bf16.mxu0 %v1049
  %6069 = vmatpush2.bf16.msra.mxu0 %v1048
  %6070 = vmatprep.subr.bf16.mxu0 %v1047
  %6071 = vmatpush2.bf16.msra.mxu0 %v1046
  %6072 = vmatprep.subr.bf16.mxu0 %v1045
  %6073 = vmatpush2.bf16.msra.mxu0 %v1044
  %6074 = vmatprep.subr.bf16.mxu0 %v1043
  %6075 = vmatpush2.bf16.msra.mxu0 %v1042
  %6076 = vmatprep.subr.bf16.mxu0 %v1041
  %6077 = vmatpush2.bf16.msra.mxu0 %v1040
  %6078 = vmatprep.subr.bf16.mxu0 %v1039
  %6079 = vmatpush2.bf16.msra.mxu0 %v1038
  %6080 = vmatprep.subr.bf16.mxu0 %v1037
  %6081 = vmatpush2.bf16.msra.mxu0 %v1036
  %6082 = vmatprep.mubr.bf16.mxu0 %v5788
  %6083 = vmatmul.mubr.bf16.gmra.mxu0 %v5787
  %v6084 = vpop.f32.mrf.mxu0
  %v6085 = vadd.f32 %v6044, %v6084
  %v6086 = vpop.f32.mrf.mxu0
  %v6087 = vadd.f32 %v6046, %v6086
  %v6088 = vpop.f32.mrf.mxu0
  %v6089 = vpop.f32.mrf.mxu0
  %6090 = vdwg.mxu0
  %v6091 = vtanh.pop %v6085
  %v6092 = vtanh.pop %v6087
  %v6093 = vpack.c.bf16 %v6091, %v6091
  %v6094 = vpack.c.bf16 %v6092, %v6092
  %s6095 = scalar_lea.vmem %s6, 2048
  %v6096 = vld [vmem:[%s6095] sm:$0xf]
  %v6097 = vld [vmem:[%s6095 + $0x4] sm:$0xf]
  %v6098 = vld [vmem:[%s6095 + $0x8] sm:$0xf]
  %v6099 = vld [vmem:[%s6095 + $0xc] sm:$0xf]
  %v6100 = vld [vmem:[%s6095 + $0x10] sm:$0xf]
  %v6101 = vld [vmem:[%s6095 + $0x14] sm:$0xf]
  %v6102 = vld [vmem:[%s6095 + $0x18] sm:$0xf]
  %v6103 = vld [vmem:[%s6095 + $0x1c] sm:$0xf]
  %v6104 = vld [vmem:[%s6095 + $0x20] sm:$0xf]
  %v6105 = vld [vmem:[%s6095 + $0x24] sm:$0xf]
  %v6106 = vld [vmem:[%s6095 + $0x28] sm:$0xf]
  %v6107 = vld [vmem:[%s6095 + $0x2c] sm:$0xf]
  %v6108 = vld [vmem:[%s6095 + $0x30] sm:$0xf]
  %v6109 = vld [vmem:[%s6095 + $0x34] sm:$0xf]
  %v6110 = vld [vmem:[%s6095 + $0x38] sm:$0xf]
  %v6111 = vld [vmem:[%s6095 + $0x3c] sm:$0xf]
  %v6112 = vld [vmem:[%s6095 + $0x40] sm:$0xf]
  %v6113 = vld [vmem:[%s6095 + $0x44] sm:$0xf]
  %v6114 = vld [vmem:[%s6095 + $0x48] sm:$0xf]
  %v6115 = vld [vmem:[%s6095 + $0x4c] sm:$0xf]
  %v6116 = vld [vmem:[%s6095 + $0x50] sm:$0xf]
  %v6117 = vld [vmem:[%s6095 + $0x54] sm:$0xf]
  %v6118 = vld [vmem:[%s6095 + $0x58] sm:$0xf]
  %v6119 = vld [vmem:[%s6095 + $0x5c] sm:$0xf]
  %v6120 = vld [vmem:[%s6095 + $0x60] sm:$0xf]
  %v6121 = vld [vmem:[%s6095 + $0x64] sm:$0xf]
  %v6122 = vld [vmem:[%s6095 + $0x68] sm:$0xf]
  %v6123 = vld [vmem:[%s6095 + $0x6c] sm:$0xf]
  %v6124 = vld [vmem:[%s6095 + $0x70] sm:$0xf]
  %v6125 = vld [vmem:[%s6095 + $0x74] sm:$0xf]
  %v6126 = vld [vmem:[%s6095 + $0x78] sm:$0xf]
  %v6127 = vld [vmem:[%s6095 + $0x7c] sm:$0xf]
  %v6160 = vunpack.c.l.b16 %v6096
  %v6161 = vunpack.c.l.b16 %v6097
  %v6162 = vunpack.c.l.b16 %v6098
  %v6163 = vunpack.c.l.b16 %v6099
  %v6164 = vunpack.c.l.b16 %v6100
  %v6165 = vunpack.c.l.b16 %v6101
  %v6166 = vunpack.c.l.b16 %v6102
  %v6167 = vunpack.c.l.b16 %v6103
  %v6168 = vunpack.c.l.b16 %v6104
  %v6169 = vunpack.c.l.b16 %v6105
  %v6170 = vunpack.c.l.b16 %v6106
  %v6171 = vunpack.c.l.b16 %v6107
  %v6172 = vunpack.c.l.b16 %v6108
  %v6173 = vunpack.c.l.b16 %v6109
  %v6174 = vunpack.c.l.b16 %v6110
  %v6175 = vunpack.c.l.b16 %v6111
  %v6176 = vunpack.c.l.b16 %v6112
  %v6177 = vunpack.c.l.b16 %v6113
  %v6178 = vunpack.c.l.b16 %v6114
  %v6179 = vunpack.c.l.b16 %v6115
  %v6180 = vunpack.c.l.b16 %v6116
  %v6181 = vunpack.c.l.b16 %v6117
  %v6182 = vunpack.c.l.b16 %v6118
  %v6183 = vunpack.c.l.b16 %v6119
  %v6184 = vunpack.c.l.b16 %v6120
  %v6185 = vunpack.c.l.b16 %v6121
  %v6186 = vunpack.c.l.b16 %v6122
  %v6187 = vunpack.c.l.b16 %v6123
  %v6188 = vunpack.c.l.b16 %v6124
  %v6189 = vunpack.c.l.b16 %v6125
  %v6190 = vunpack.c.l.b16 %v6126
  %v6191 = vunpack.c.l.b16 %v6127
  %v6192 = vpack.c.b16 %v6161, %v6160
  %v6193 = vpack.c.b16 %v6163, %v6162
  %v6194 = vpack.c.b16 %v6165, %v6164
  %v6195 = vpack.c.b16 %v6167, %v6166
  %v6196 = vpack.c.b16 %v6169, %v6168
  %v6197 = vpack.c.b16 %v6171, %v6170
  %v6198 = vpack.c.b16 %v6173, %v6172
  %v6199 = vpack.c.b16 %v6175, %v6174
  %v6200 = vpack.c.b16 %v6177, %v6176
  %v6201 = vpack.c.b16 %v6179, %v6178
  %v6202 = vpack.c.b16 %v6181, %v6180
  %v6203 = vpack.c.b16 %v6183, %v6182
  %v6204 = vpack.c.b16 %v6185, %v6184
  %v6205 = vpack.c.b16 %v6187, %v6186
  %v6206 = vpack.c.b16 %v6189, %v6188
  %v6207 = vpack.c.b16 %v6191, %v6190
  %6224 = vmatprep.subr.bf16.mxu0 0
  %6225 = vmatpush1.bf16.msra.mxu0 %v6199
  %6226 = vmatprep.subr.bf16.mxu0 0
  %6227 = vmatpush1.bf16.msra.mxu0 %v6198
  %6228 = vmatprep.subr.bf16.mxu0 0
  %6229 = vmatpush1.bf16.msra.mxu0 %v6197
  %6230 = vmatprep.subr.bf16.mxu0 0
  %6231 = vmatpush1.bf16.msra.mxu0 %v6196
  %6232 = vmatprep.subr.bf16.mxu0 0
  %6233 = vmatpush1.bf16.msra.mxu0 %v6195
  %6234 = vmatprep.subr.bf16.mxu0 0
  %6235 = vmatpush1.bf16.msra.mxu0 %v6194
  %6236 = vmatprep.subr.bf16.mxu0 0
  %6237 = vmatpush1.bf16.msra.mxu0 %v6193
  %6238 = vmatprep.subr.bf16.mxu0 0
  %6239 = vmatpush1.bf16.msra.mxu0 %v6192
  %6240 = vmatprep.subr.bf16.mxu0 0
  %6241 = vmatpush2.bf16.msra.mxu0 %v6207
  %6242 = vmatprep.subr.bf16.mxu0 0
  %6243 = vmatpush2.bf16.msra.mxu0 %v6206
  %6244 = vmatprep.subr.bf16.mxu0 0
  %6245 = vmatpush2.bf16.msra.mxu0 %v6205
  %6246 = vmatprep.subr.bf16.mxu0 0
  %6247 = vmatpush2.bf16.msra.mxu0 %v6204
  %6248 = vmatprep.subr.bf16.mxu0 0
  %6249 = vmatpush2.bf16.msra.mxu0 %v6203
  %6250 = vmatprep.subr.bf16.mxu0 0
  %6251 = vmatpush2.bf16.msra.mxu0 %v6202
  %6252 = vmatprep.subr.bf16.mxu0 0
  %6253 = vmatpush2.bf16.msra.mxu0 %v6201
  %6254 = vmatprep.subr.bf16.mxu0 0
  %6255 = vmatpush2.bf16.msra.mxu0 %v6200
  %6256 = vmatprep.mubr.bf16.mxu0 %v6094
  %6257 = vmatmul.mubr.bf16.gmra.mxu0 %v6093
  %v6258 = vpop.f32.mrf.mxu0
  %v6259 = vadd.f32 0.0, %v6258
  %v6260 = vpop.f32.mrf.mxu0
  %v6261 = vpop.f32.mrf.mxu0
  %v6262 = vpop.f32.mrf.mxu0
  %6263 = vdwg.mxu0
  %v6264 = vadd.f32 %v5958, %v6259
  %s6265 = scalar_lea.vmem [#allocation2], 272
  %v6266 = vld [vmem:[%s6265] sm:$0xff]
  %v6267 = vld [vmem:[%s6265 + $0x8] sm:$0xff]
  %6268 = vmatprep.subr.bf16.mxu0 %v625
  %6269 = vmatpush1.bf16.msra.mxu0 %v624
  %6270 = vmatprep.subr.bf16.mxu0 %v623
  %6271 = vmatpush1.bf16.msra.mxu0 %v622
  %6272 = vmatprep.subr.bf16.mxu0 %v621
  %6273 = vmatpush1.bf16.msra.mxu0 %v620
  %6274 = vmatprep.subr.bf16.mxu0 %v619
  %6275 = vmatpush1.bf16.msra.mxu0 %v618
  %6276 = vmatprep.subr.bf16.mxu0 %v617
  %6277 = vmatpush1.bf16.msra.mxu0 %v616
  %6278 = vmatprep.subr.bf16.mxu0 %v615
  %6279 = vmatpush1.bf16.msra.mxu0 %v614
  %6280 = vmatprep.subr.bf16.mxu0 %v613
  %6281 = vmatpush1.bf16.msra.mxu0 %v612
  %6282 = vmatprep.subr.bf16.mxu0 %v611
  %6283 = vmatpush1.bf16.msra.mxu0 %v610
  %6284 = vmatprep.subr.bf16.mxu0 %v641
  %6285 = vmatpush2.bf16.msra.mxu0 %v640
  %6286 = vmatprep.subr.bf16.mxu0 %v639
  %6287 = vmatpush2.bf16.msra.mxu0 %v638
  %6288 = vmatprep.subr.bf16.mxu0 %v637
  %6289 = vmatpush2.bf16.msra.mxu0 %v636
  %6290 = vmatprep.subr.bf16.mxu0 %v635
  %6291 = vmatpush2.bf16.msra.mxu0 %v634
  %6292 = vmatprep.subr.bf16.mxu0 %v633
  %6293 = vmatpush2.bf16.msra.mxu0 %v632
  %6294 = vmatprep.subr.bf16.mxu0 %v631
  %6295 = vmatpush2.bf16.msra.mxu0 %v630
  %6296 = vmatprep.subr.bf16.mxu0 %v629
  %6297 = vmatpush2.bf16.msra.mxu0 %v628
  %6298 = vmatprep.subr.bf16.mxu0 %v627
  %6299 = vmatpush2.bf16.msra.mxu0 %v626
  %6300 = vmatprep.mubr.bf16.mxu0 %v6008
  %6301 = vmatmul.mubr.bf16.gmra.mxu0 %v6007
  %v6302 = vpop.f32.mrf.mxu0
  %v6303 = vadd.f32 0.0, %v6302
  %v6304 = vpop.f32.mrf.mxu0
  %v6305 = vadd.f32 0.0, %v6304
  %v6306 = vpop.f32.mrf.mxu0
  %v6307 = vpop.f32.mrf.mxu0
  %6308 = vdwg.mxu0
  %v6309 = vadd.f32 %v6266, %v6303
  %v6310 = vadd.f32 %v6267, %v6305
  %v6311 = vtanh.pop %v6309
  %v6312 = vtanh.pop %v6310
  %v6313 = vpack.c.bf16 %v6311, %v6311
  %v6314 = vpack.c.bf16 %v6312, %v6312
  %6315 = vmatprep.subr.bf16.mxu0 %v1003
  %6316 = vmatpush1.bf16.msra.mxu0 %v1002
  %6317 = vmatprep.subr.bf16.mxu0 %v1001
  %6318 = vmatpush1.bf16.msra.mxu0 %v1000
  %6319 = vmatprep.subr.bf16.mxu0 %v999
  %6320 = vmatpush1.bf16.msra.mxu0 %v998
  %6321 = vmatprep.subr.bf16.mxu0 %v997
  %6322 = vmatpush1.bf16.msra.mxu0 %v996
  %6323 = vmatprep.subr.bf16.mxu0 %v995
  %6324 = vmatpush1.bf16.msra.mxu0 %v994
  %6325 = vmatprep.subr.bf16.mxu0 %v993
  %6326 = vmatpush1.bf16.msra.mxu0 %v992
  %6327 = vmatprep.subr.bf16.mxu0 %v991
  %6328 = vmatpush1.bf16.msra.mxu0 %v990
  %6329 = vmatprep.subr.bf16.mxu0 %v989
  %6330 = vmatpush1.bf16.msra.mxu0 %v988
  %6331 = vmatprep.subr.bf16.mxu0 %v1019
  %6332 = vmatpush2.bf16.msra.mxu0 %v1018
  %6333 = vmatprep.subr.bf16.mxu0 %v1017
  %6334 = vmatpush2.bf16.msra.mxu0 %v1016
  %6335 = vmatprep.subr.bf16.mxu0 %v1015
  %6336 = vmatpush2.bf16.msra.mxu0 %v1014
  %6337 = vmatprep.subr.bf16.mxu0 %v1013
  %6338 = vmatpush2.bf16.msra.mxu0 %v1012
  %6339 = vmatprep.subr.bf16.mxu0 %v1011
  %6340 = vmatpush2.bf16.msra.mxu0 %v1010
  %6341 = vmatprep.subr.bf16.mxu0 %v1009
  %6342 = vmatpush2.bf16.msra.mxu0 %v1008
  %6343 = vmatprep.subr.bf16.mxu0 %v1007
  %6344 = vmatpush2.bf16.msra.mxu0 %v1006
  %6345 = vmatprep.subr.bf16.mxu0 %v1005
  %6346 = vmatpush2.bf16.msra.mxu0 %v1004
  %6347 = vmatprep.mubr.bf16.mxu0 %v6314
  %6348 = vmatmul.mubr.bf16.gmra.mxu0 %v6313
  %v6349 = vpop.f32.mrf.mxu0
  %v6350 = vadd.f32 %v789, %v6349
  %v6351 = vpop.f32.mrf.mxu0
  %v6352 = vadd.f32 %v793, %v6351
  %v6353 = vpop.f32.mrf.mxu0
  %v6354 = vpop.f32.mrf.mxu0
  %6355 = vdwg.mxu0
  %6356 = vmatprep.subr.bf16.mxu0 %v1035
  %6357 = vmatpush1.bf16.msra.mxu0 %v1034
  %6358 = vmatprep.subr.bf16.mxu0 %v1033
  %6359 = vmatpush1.bf16.msra.mxu0 %v1032
  %6360 = vmatprep.subr.bf16.mxu0 %v1031
  %6361 = vmatpush1.bf16.msra.mxu0 %v1030
  %6362 = vmatprep.subr.bf16.mxu0 %v1029
  %6363 = vmatpush1.bf16.msra.mxu0 %v1028
  %6364 = vmatprep.subr.bf16.mxu0 %v1027
  %6365 = vmatpush1.bf16.msra.mxu0 %v1026
  %6366 = vmatprep.subr.bf16.mxu0 %v1025
  %6367 = vmatpush1.bf16.msra.mxu0 %v1024
  %6368 = vmatprep.subr.bf16.mxu0 %v1023
  %6369 = vmatpush1.bf16.msra.mxu0 %v1022
  %6370 = vmatprep.subr.bf16.mxu0 %v1021
  %6371 = vmatpush1.bf16.msra.mxu0 %v1020
  %6372 = vmatprep.subr.bf16.mxu0 %v1051
  %6373 = vmatpush2.bf16.msra.mxu0 %v1050
  %6374 = vmatprep.subr.bf16.mxu0 %v1049
  %6375 = vmatpush2.bf16.msra.mxu0 %v1048
  %6376 = vmatprep.subr.bf16.mxu0 %v1047
  %6377 = vmatpush2.bf16.msra.mxu0 %v1046
  %6378 = vmatprep.subr.bf16.mxu0 %v1045
  %6379 = vmatpush2.bf16.msra.mxu0 %v1044
  %6380 = vmatprep.subr.bf16.mxu0 %v1043
  %6381 = vmatpush2.bf16.msra.mxu0 %v1042
  %6382 = vmatprep.subr.bf16.mxu0 %v1041
  %6383 = vmatpush2.bf16.msra.mxu0 %v1040
  %6384 = vmatprep.subr.bf16.mxu0 %v1039
  %6385 = vmatpush2.bf16.msra.mxu0 %v1038
  %6386 = vmatprep.subr.bf16.mxu0 %v1037
  %6387 = vmatpush2.bf16.msra.mxu0 %v1036
  %6388 = vmatprep.mubr.bf16.mxu0 %v6094
  %6389 = vmatmul.mubr.bf16.gmra.mxu0 %v6093
  %v6390 = vpop.f32.mrf.mxu0
  %v6391 = vadd.f32 %v6350, %v6390
  %v6392 = vpop.f32.mrf.mxu0
  %v6393 = vadd.f32 %v6352, %v6392
  %v6394 = vpop.f32.mrf.mxu0
  %v6395 = vpop.f32.mrf.mxu0
  %6396 = vdwg.mxu0
  %v6397 = vtanh.pop %v6391
  %v6398 = vtanh.pop %v6393
  %v6399 = vpack.c.bf16 %v6397, %v6397
  %v6400 = vpack.c.bf16 %v6398, %v6398
  %s6401 = scalar_lea.vmem %s6, 2176
  %v6402 = vld [vmem:[%s6401] sm:$0xf]
  %v6403 = vld [vmem:[%s6401 + $0x4] sm:$0xf]
  %v6404 = vld [vmem:[%s6401 + $0x8] sm:$0xf]
  %v6405 = vld [vmem:[%s6401 + $0xc] sm:$0xf]
  %v6406 = vld [vmem:[%s6401 + $0x10] sm:$0xf]
  %v6407 = vld [vmem:[%s6401 + $0x14] sm:$0xf]
  %v6408 = vld [vmem:[%s6401 + $0x18] sm:$0xf]
  %v6409 = vld [vmem:[%s6401 + $0x1c] sm:$0xf]
  %v6410 = vld [vmem:[%s6401 + $0x20] sm:$0xf]
  %v6411 = vld [vmem:[%s6401 + $0x24] sm:$0xf]
  %v6412 = vld [vmem:[%s6401 + $0x28] sm:$0xf]
  %v6413 = vld [vmem:[%s6401 + $0x2c] sm:$0xf]
  %v6414 = vld [vmem:[%s6401 + $0x30] sm:$0xf]
  %v6415 = vld [vmem:[%s6401 + $0x34] sm:$0xf]
  %v6416 = vld [vmem:[%s6401 + $0x38] sm:$0xf]
  %v6417 = vld [vmem:[%s6401 + $0x3c] sm:$0xf]
  %v6418 = vld [vmem:[%s6401 + $0x40] sm:$0xf]
  %v6419 = vld [vmem:[%s6401 + $0x44] sm:$0xf]
  %v6420 = vld [vmem:[%s6401 + $0x48] sm:$0xf]
  %v6421 = vld [vmem:[%s6401 + $0x4c] sm:$0xf]
  %v6422 = vld [vmem:[%s6401 + $0x50] sm:$0xf]
  %v6423 = vld [vmem:[%s6401 + $0x54] sm:$0xf]
  %v6424 = vld [vmem:[%s6401 + $0x58] sm:$0xf]
  %v6425 = vld [vmem:[%s6401 + $0x5c] sm:$0xf]
  %v6426 = vld [vmem:[%s6401 + $0x60] sm:$0xf]
  %v6427 = vld [vmem:[%s6401 + $0x64] sm:$0xf]
  %v6428 = vld [vmem:[%s6401 + $0x68] sm:$0xf]
  %v6429 = vld [vmem:[%s6401 + $0x6c] sm:$0xf]
  %v6430 = vld [vmem:[%s6401 + $0x70] sm:$0xf]
  %v6431 = vld [vmem:[%s6401 + $0x74] sm:$0xf]
  %v6432 = vld [vmem:[%s6401 + $0x78] sm:$0xf]
  %v6433 = vld [vmem:[%s6401 + $0x7c] sm:$0xf]
  %v6466 = vunpack.c.l.b16 %v6402
  %v6467 = vunpack.c.l.b16 %v6403
  %v6468 = vunpack.c.l.b16 %v6404
  %v6469 = vunpack.c.l.b16 %v6405
  %v6470 = vunpack.c.l.b16 %v6406
  %v6471 = vunpack.c.l.b16 %v6407
  %v6472 = vunpack.c.l.b16 %v6408
  %v6473 = vunpack.c.l.b16 %v6409
  %v6474 = vunpack.c.l.b16 %v6410
  %v6475 = vunpack.c.l.b16 %v6411
  %v6476 = vunpack.c.l.b16 %v6412
  %v6477 = vunpack.c.l.b16 %v6413
  %v6478 = vunpack.c.l.b16 %v6414
  %v6479 = vunpack.c.l.b16 %v6415
  %v6480 = vunpack.c.l.b16 %v6416
  %v6481 = vunpack.c.l.b16 %v6417
  %v6482 = vunpack.c.l.b16 %v6418
  %v6483 = vunpack.c.l.b16 %v6419
  %v6484 = vunpack.c.l.b16 %v6420
  %v6485 = vunpack.c.l.b16 %v6421
  %v6486 = vunpack.c.l.b16 %v6422
  %v6487 = vunpack.c.l.b16 %v6423
  %v6488 = vunpack.c.l.b16 %v6424
  %v6489 = vunpack.c.l.b16 %v6425
  %v6490 = vunpack.c.l.b16 %v6426
  %v6491 = vunpack.c.l.b16 %v6427
  %v6492 = vunpack.c.l.b16 %v6428
  %v6493 = vunpack.c.l.b16 %v6429
  %v6494 = vunpack.c.l.b16 %v6430
  %v6495 = vunpack.c.l.b16 %v6431
  %v6496 = vunpack.c.l.b16 %v6432
  %v6497 = vunpack.c.l.b16 %v6433
  %v6498 = vpack.c.b16 %v6467, %v6466
  %v6499 = vpack.c.b16 %v6469, %v6468
  %v6500 = vpack.c.b16 %v6471, %v6470
  %v6501 = vpack.c.b16 %v6473, %v6472
  %v6502 = vpack.c.b16 %v6475, %v6474
  %v6503 = vpack.c.b16 %v6477, %v6476
  %v6504 = vpack.c.b16 %v6479, %v6478
  %v6505 = vpack.c.b16 %v6481, %v6480
  %v6506 = vpack.c.b16 %v6483, %v6482
  %v6507 = vpack.c.b16 %v6485, %v6484
  %v6508 = vpack.c.b16 %v6487, %v6486
  %v6509 = vpack.c.b16 %v6489, %v6488
  %v6510 = vpack.c.b16 %v6491, %v6490
  %v6511 = vpack.c.b16 %v6493, %v6492
  %v6512 = vpack.c.b16 %v6495, %v6494
  %v6513 = vpack.c.b16 %v6497, %v6496
  %6530 = vmatprep.subr.bf16.mxu0 0
  %6531 = vmatpush1.bf16.msra.mxu0 %v6505
  %6532 = vmatprep.subr.bf16.mxu0 0
  %6533 = vmatpush1.bf16.msra.mxu0 %v6504
  %6534 = vmatprep.subr.bf16.mxu0 0
  %6535 = vmatpush1.bf16.msra.mxu0 %v6503
  %6536 = vmatprep.subr.bf16.mxu0 0
  %6537 = vmatpush1.bf16.msra.mxu0 %v6502
  %6538 = vmatprep.subr.bf16.mxu0 0
  %6539 = vmatpush1.bf16.msra.mxu0 %v6501
  %6540 = vmatprep.subr.bf16.mxu0 0
  %6541 = vmatpush1.bf16.msra.mxu0 %v6500
  %6542 = vmatprep.subr.bf16.mxu0 0
  %6543 = vmatpush1.bf16.msra.mxu0 %v6499
  %6544 = vmatprep.subr.bf16.mxu0 0
  %6545 = vmatpush1.bf16.msra.mxu0 %v6498
  %6546 = vmatprep.subr.bf16.mxu0 0
  %6547 = vmatpush2.bf16.msra.mxu0 %v6513
  %6548 = vmatprep.subr.bf16.mxu0 0
  %6549 = vmatpush2.bf16.msra.mxu0 %v6512
  %6550 = vmatprep.subr.bf16.mxu0 0
  %6551 = vmatpush2.bf16.msra.mxu0 %v6511
  %6552 = vmatprep.subr.bf16.mxu0 0
  %6553 = vmatpush2.bf16.msra.mxu0 %v6510
  %6554 = vmatprep.subr.bf16.mxu0 0
  %6555 = vmatpush2.bf16.msra.mxu0 %v6509
  %6556 = vmatprep.subr.bf16.mxu0 0
  %6557 = vmatpush2.bf16.msra.mxu0 %v6508
  %6558 = vmatprep.subr.bf16.mxu0 0
  %6559 = vmatpush2.bf16.msra.mxu0 %v6507
  %6560 = vmatprep.subr.bf16.mxu0 0
  %6561 = vmatpush2.bf16.msra.mxu0 %v6506
  %6562 = vmatprep.mubr.bf16.mxu0 %v6400
  %6563 = vmatmul.mubr.bf16.gmra.mxu0 %v6399
  %v6564 = vpop.f32.mrf.mxu0
  %v6565 = vadd.f32 0.0, %v6564
  %v6566 = vpop.f32.mrf.mxu0
  %v6567 = vpop.f32.mrf.mxu0
  %v6568 = vpop.f32.mrf.mxu0
  %6569 = vdwg.mxu0
  %v6570 = vadd.f32 %v6264, %v6565
  %s6571 = scalar_lea.vmem [#allocation2], 288
  %v6572 = vld [vmem:[%s6571] sm:$0xff]
  %v6573 = vld [vmem:[%s6571 + $0x8] sm:$0xff]
  %6574 = vmatprep.subr.bf16.mxu0 %v625
  %6575 = vmatpush1.bf16.msra.mxu0 %v624
  %6576 = vmatprep.subr.bf16.mxu0 %v623
  %6577 = vmatpush1.bf16.msra.mxu0 %v622
  %6578 = vmatprep.subr.bf16.mxu0 %v621
  %6579 = vmatpush1.bf16.msra.mxu0 %v620
  %6580 = vmatprep.subr.bf16.mxu0 %v619
  %6581 = vmatpush1.bf16.msra.mxu0 %v618
  %6582 = vmatprep.subr.bf16.mxu0 %v617
  %6583 = vmatpush1.bf16.msra.mxu0 %v616
  %6584 = vmatprep.subr.bf16.mxu0 %v615
  %6585 = vmatpush1.bf16.msra.mxu0 %v614
  %6586 = vmatprep.subr.bf16.mxu0 %v613
  %6587 = vmatpush1.bf16.msra.mxu0 %v612
  %6588 = vmatprep.subr.bf16.mxu0 %v611
  %6589 = vmatpush1.bf16.msra.mxu0 %v610
  %6590 = vmatprep.subr.bf16.mxu0 %v641
  %6591 = vmatpush2.bf16.msra.mxu0 %v640
  %6592 = vmatprep.subr.bf16.mxu0 %v639
  %6593 = vmatpush2.bf16.msra.mxu0 %v638
  %6594 = vmatprep.subr.bf16.mxu0 %v637
  %6595 = vmatpush2.bf16.msra.mxu0 %v636
  %6596 = vmatprep.subr.bf16.mxu0 %v635
  %6597 = vmatpush2.bf16.msra.mxu0 %v634
  %6598 = vmatprep.subr.bf16.mxu0 %v633
  %6599 = vmatpush2.bf16.msra.mxu0 %v632
  %6600 = vmatprep.subr.bf16.mxu0 %v631
  %6601 = vmatpush2.bf16.msra.mxu0 %v630
  %6602 = vmatprep.subr.bf16.mxu0 %v629
  %6603 = vmatpush2.bf16.msra.mxu0 %v628
  %6604 = vmatprep.subr.bf16.mxu0 %v627
  %6605 = vmatpush2.bf16.msra.mxu0 %v626
  %6606 = vmatprep.mubr.bf16.mxu0 %v6314
  %6607 = vmatmul.mubr.bf16.gmra.mxu0 %v6313
  %v6608 = vpop.f32.mrf.mxu0
  %v6609 = vadd.f32 0.0, %v6608
  %v6610 = vpop.f32.mrf.mxu0
  %v6611 = vadd.f32 0.0, %v6610
  %v6612 = vpop.f32.mrf.mxu0
  %v6613 = vpop.f32.mrf.mxu0
  %6614 = vdwg.mxu0
  %v6615 = vadd.f32 %v6572, %v6609
  %v6616 = vadd.f32 %v6573, %v6611
  %v6617 = vtanh.pop %v6615
  %v6618 = vtanh.pop %v6616
  %v6619 = vpack.c.bf16 %v6617, %v6617
  %v6620 = vpack.c.bf16 %v6618, %v6618
  %6621 = vmatprep.subr.bf16.mxu0 %v1003
  %6622 = vmatpush1.bf16.msra.mxu0 %v1002
  %6623 = vmatprep.subr.bf16.mxu0 %v1001
  %6624 = vmatpush1.bf16.msra.mxu0 %v1000
  %6625 = vmatprep.subr.bf16.mxu0 %v999
  %6626 = vmatpush1.bf16.msra.mxu0 %v998
  %6627 = vmatprep.subr.bf16.mxu0 %v997
  %6628 = vmatpush1.bf16.msra.mxu0 %v996
  %6629 = vmatprep.subr.bf16.mxu0 %v995
  %6630 = vmatpush1.bf16.msra.mxu0 %v994
  %6631 = vmatprep.subr.bf16.mxu0 %v993
  %6632 = vmatpush1.bf16.msra.mxu0 %v992
  %6633 = vmatprep.subr.bf16.mxu0 %v991
  %6634 = vmatpush1.bf16.msra.mxu0 %v990
  %6635 = vmatprep.subr.bf16.mxu0 %v989
  %6636 = vmatpush1.bf16.msra.mxu0 %v988
  %6637 = vmatprep.subr.bf16.mxu0 %v1019
  %6638 = vmatpush2.bf16.msra.mxu0 %v1018
  %6639 = vmatprep.subr.bf16.mxu0 %v1017
  %6640 = vmatpush2.bf16.msra.mxu0 %v1016
  %6641 = vmatprep.subr.bf16.mxu0 %v1015
  %6642 = vmatpush2.bf16.msra.mxu0 %v1014
  %6643 = vmatprep.subr.bf16.mxu0 %v1013
  %6644 = vmatpush2.bf16.msra.mxu0 %v1012
  %6645 = vmatprep.subr.bf16.mxu0 %v1011
  %6646 = vmatpush2.bf16.msra.mxu0 %v1010
  %6647 = vmatprep.subr.bf16.mxu0 %v1009
  %6648 = vmatpush2.bf16.msra.mxu0 %v1008
  %6649 = vmatprep.subr.bf16.mxu0 %v1007
  %6650 = vmatpush2.bf16.msra.mxu0 %v1006
  %6651 = vmatprep.subr.bf16.mxu0 %v1005
  %6652 = vmatpush2.bf16.msra.mxu0 %v1004
  %6653 = vmatprep.mubr.bf16.mxu0 %v6620
  %6654 = vmatmul.mubr.bf16.gmra.mxu0 %v6619
  %v6655 = vpop.f32.mrf.mxu0
  %v6656 = vadd.f32 %v789, %v6655
  %v6657 = vpop.f32.mrf.mxu0
  %v6658 = vadd.f32 %v793, %v6657
  %v6659 = vpop.f32.mrf.mxu0
  %v6660 = vpop.f32.mrf.mxu0
  %6661 = vdwg.mxu0
  %6662 = vmatprep.subr.bf16.mxu0 %v1035
  %6663 = vmatpush1.bf16.msra.mxu0 %v1034
  %6664 = vmatprep.subr.bf16.mxu0 %v1033
  %6665 = vmatpush1.bf16.msra.mxu0 %v1032
  %6666 = vmatprep.subr.bf16.mxu0 %v1031
  %6667 = vmatpush1.bf16.msra.mxu0 %v1030
  %6668 = vmatprep.subr.bf16.mxu0 %v1029
  %6669 = vmatpush1.bf16.msra.mxu0 %v1028
  %6670 = vmatprep.subr.bf16.mxu0 %v1027
  %6671 = vmatpush1.bf16.msra.mxu0 %v1026
  %6672 = vmatprep.subr.bf16.mxu0 %v1025
  %6673 = vmatpush1.bf16.msra.mxu0 %v1024
  %6674 = vmatprep.subr.bf16.mxu0 %v1023
  %6675 = vmatpush1.bf16.msra.mxu0 %v1022
  %6676 = vmatprep.subr.bf16.mxu0 %v1021
  %6677 = vmatpush1.bf16.msra.mxu0 %v1020
  %6678 = vmatprep.subr.bf16.mxu0 %v1051
  %6679 = vmatpush2.bf16.msra.mxu0 %v1050
  %6680 = vmatprep.subr.bf16.mxu0 %v1049
  %6681 = vmatpush2.bf16.msra.mxu0 %v1048
  %6682 = vmatprep.subr.bf16.mxu0 %v1047
  %6683 = vmatpush2.bf16.msra.mxu0 %v1046
  %6684 = vmatprep.subr.bf16.mxu0 %v1045
  %6685 = vmatpush2.bf16.msra.mxu0 %v1044
  %6686 = vmatprep.subr.bf16.mxu0 %v1043
  %6687 = vmatpush2.bf16.msra.mxu0 %v1042
  %6688 = vmatprep.subr.bf16.mxu0 %v1041
  %6689 = vmatpush2.bf16.msra.mxu0 %v1040
  %6690 = vmatprep.subr.bf16.mxu0 %v1039
  %6691 = vmatpush2.bf16.msra.mxu0 %v1038
  %6692 = vmatprep.subr.bf16.mxu0 %v1037
  %6693 = vmatpush2.bf16.msra.mxu0 %v1036
  %6694 = vmatprep.mubr.bf16.mxu0 %v6400
  %6695 = vmatmul.mubr.bf16.gmra.mxu0 %v6399
  %v6696 = vpop.f32.mrf.mxu0
  %v6697 = vadd.f32 %v6656, %v6696
  %v6698 = vpop.f32.mrf.mxu0
  %v6699 = vadd.f32 %v6658, %v6698
  %v6700 = vpop.f32.mrf.mxu0
  %v6701 = vpop.f32.mrf.mxu0
  %6702 = vdwg.mxu0
  %v6703 = vtanh.pop %v6697
  %v6704 = vtanh.pop %v6699
  %v6705 = vpack.c.bf16 %v6703, %v6703
  %v6706 = vpack.c.bf16 %v6704, %v6704
  %s6707 = scalar_lea.vmem %s6, 2304
  %v6708 = vld [vmem:[%s6707] sm:$0xf]
  %v6709 = vld [vmem:[%s6707 + $0x4] sm:$0xf]
  %v6710 = vld [vmem:[%s6707 + $0x8] sm:$0xf]
  %v6711 = vld [vmem:[%s6707 + $0xc] sm:$0xf]
  %v6712 = vld [vmem:[%s6707 + $0x10] sm:$0xf]
  %v6713 = vld [vmem:[%s6707 + $0x14] sm:$0xf]
  %v6714 = vld [vmem:[%s6707 + $0x18] sm:$0xf]
  %v6715 = vld [vmem:[%s6707 + $0x1c] sm:$0xf]
  %v6716 = vld [vmem:[%s6707 + $0x20] sm:$0xf]
  %v6717 = vld [vmem:[%s6707 + $0x24] sm:$0xf]
  %v6718 = vld [vmem:[%s6707 + $0x28] sm:$0xf]
  %v6719 = vld [vmem:[%s6707 + $0x2c] sm:$0xf]
  %v6720 = vld [vmem:[%s6707 + $0x30] sm:$0xf]
  %v6721 = vld [vmem:[%s6707 + $0x34] sm:$0xf]
  %v6722 = vld [vmem:[%s6707 + $0x38] sm:$0xf]
  %v6723 = vld [vmem:[%s6707 + $0x3c] sm:$0xf]
  %v6724 = vld [vmem:[%s6707 + $0x40] sm:$0xf]
  %v6725 = vld [vmem:[%s6707 + $0x44] sm:$0xf]
  %v6726 = vld [vmem:[%s6707 + $0x48] sm:$0xf]
  %v6727 = vld [vmem:[%s6707 + $0x4c] sm:$0xf]
  %v6728 = vld [vmem:[%s6707 + $0x50] sm:$0xf]
  %v6729 = vld [vmem:[%s6707 + $0x54] sm:$0xf]
  %v6730 = vld [vmem:[%s6707 + $0x58] sm:$0xf]
  %v6731 = vld [vmem:[%s6707 + $0x5c] sm:$0xf]
  %v6732 = vld [vmem:[%s6707 + $0x60] sm:$0xf]
  %v6733 = vld [vmem:[%s6707 + $0x64] sm:$0xf]
  %v6734 = vld [vmem:[%s6707 + $0x68] sm:$0xf]
  %v6735 = vld [vmem:[%s6707 + $0x6c] sm:$0xf]
  %v6736 = vld [vmem:[%s6707 + $0x70] sm:$0xf]
  %v6737 = vld [vmem:[%s6707 + $0x74] sm:$0xf]
  %v6738 = vld [vmem:[%s6707 + $0x78] sm:$0xf]
  %v6739 = vld [vmem:[%s6707 + $0x7c] sm:$0xf]
  %v6772 = vunpack.c.l.b16 %v6708
  %v6773 = vunpack.c.l.b16 %v6709
  %v6774 = vunpack.c.l.b16 %v6710
  %v6775 = vunpack.c.l.b16 %v6711
  %v6776 = vunpack.c.l.b16 %v6712
  %v6777 = vunpack.c.l.b16 %v6713
  %v6778 = vunpack.c.l.b16 %v6714
  %v6779 = vunpack.c.l.b16 %v6715
  %v6780 = vunpack.c.l.b16 %v6716
  %v6781 = vunpack.c.l.b16 %v6717
  %v6782 = vunpack.c.l.b16 %v6718
  %v6783 = vunpack.c.l.b16 %v6719
  %v6784 = vunpack.c.l.b16 %v6720
  %v6785 = vunpack.c.l.b16 %v6721
  %v6786 = vunpack.c.l.b16 %v6722
  %v6787 = vunpack.c.l.b16 %v6723
  %v6788 = vunpack.c.l.b16 %v6724
  %v6789 = vunpack.c.l.b16 %v6725
  %v6790 = vunpack.c.l.b16 %v6726
  %v6791 = vunpack.c.l.b16 %v6727
  %v6792 = vunpack.c.l.b16 %v6728
  %v6793 = vunpack.c.l.b16 %v6729
  %v6794 = vunpack.c.l.b16 %v6730
  %v6795 = vunpack.c.l.b16 %v6731
  %v6796 = vunpack.c.l.b16 %v6732
  %v6797 = vunpack.c.l.b16 %v6733
  %v6798 = vunpack.c.l.b16 %v6734
  %v6799 = vunpack.c.l.b16 %v6735
  %v6800 = vunpack.c.l.b16 %v6736
  %v6801 = vunpack.c.l.b16 %v6737
  %v6802 = vunpack.c.l.b16 %v6738
  %v6803 = vunpack.c.l.b16 %v6739
  %v6804 = vpack.c.b16 %v6773, %v6772
  %v6805 = vpack.c.b16 %v6775, %v6774
  %v6806 = vpack.c.b16 %v6777, %v6776
  %v6807 = vpack.c.b16 %v6779, %v6778
  %v6808 = vpack.c.b16 %v6781, %v6780
  %v6809 = vpack.c.b16 %v6783, %v6782
  %v6810 = vpack.c.b16 %v6785, %v6784
  %v6811 = vpack.c.b16 %v6787, %v6786
  %v6812 = vpack.c.b16 %v6789, %v6788
  %v6813 = vpack.c.b16 %v6791, %v6790
  %v6814 = vpack.c.b16 %v6793, %v6792
  %v6815 = vpack.c.b16 %v6795, %v6794
  %v6816 = vpack.c.b16 %v6797, %v6796
  %v6817 = vpack.c.b16 %v6799, %v6798
  %v6818 = vpack.c.b16 %v6801, %v6800
  %v6819 = vpack.c.b16 %v6803, %v6802
  %6836 = vmatprep.subr.bf16.mxu0 0
  %6837 = vmatpush1.bf16.msra.mxu0 %v6811
  %6838 = vmatprep.subr.bf16.mxu0 0
  %6839 = vmatpush1.bf16.msra.mxu0 %v6810
  %6840 = vmatprep.subr.bf16.mxu0 0
  %6841 = vmatpush1.bf16.msra.mxu0 %v6809
  %6842 = vmatprep.subr.bf16.mxu0 0
  %6843 = vmatpush1.bf16.msra.mxu0 %v6808
  %6844 = vmatprep.subr.bf16.mxu0 0
  %6845 = vmatpush1.bf16.msra.mxu0 %v6807
  %6846 = vmatprep.subr.bf16.mxu0 0
  %6847 = vmatpush1.bf16.msra.mxu0 %v6806
  %6848 = vmatprep.subr.bf16.mxu0 0
  %6849 = vmatpush1.bf16.msra.mxu0 %v6805
  %6850 = vmatprep.subr.bf16.mxu0 0
  %6851 = vmatpush1.bf16.msra.mxu0 %v6804
  %6852 = vmatprep.subr.bf16.mxu0 0
  %6853 = vmatpush2.bf16.msra.mxu0 %v6819
  %6854 = vmatprep.subr.bf16.mxu0 0
  %6855 = vmatpush2.bf16.msra.mxu0 %v6818
  %6856 = vmatprep.subr.bf16.mxu0 0
  %6857 = vmatpush2.bf16.msra.mxu0 %v6817
  %6858 = vmatprep.subr.bf16.mxu0 0
  %6859 = vmatpush2.bf16.msra.mxu0 %v6816
  %6860 = vmatprep.subr.bf16.mxu0 0
  %6861 = vmatpush2.bf16.msra.mxu0 %v6815
  %6862 = vmatprep.subr.bf16.mxu0 0
  %6863 = vmatpush2.bf16.msra.mxu0 %v6814
  %6864 = vmatprep.subr.bf16.mxu0 0
  %6865 = vmatpush2.bf16.msra.mxu0 %v6813
  %6866 = vmatprep.subr.bf16.mxu0 0
  %6867 = vmatpush2.bf16.msra.mxu0 %v6812
  %6868 = vmatprep.mubr.bf16.mxu0 %v6706
  %6869 = vmatmul.mubr.bf16.gmra.mxu0 %v6705
  %v6870 = vpop.f32.mrf.mxu0
  %v6871 = vadd.f32 0.0, %v6870
  %v6872 = vpop.f32.mrf.mxu0
  %v6873 = vpop.f32.mrf.mxu0
  %v6874 = vpop.f32.mrf.mxu0
  %6875 = vdwg.mxu0
  %v6876 = vadd.f32 %v6570, %v6871
  %s6877 = scalar_lea.vmem [#allocation2], 304
  %v6878 = vld [vmem:[%s6877] sm:$0xff]
  %v6879 = vld [vmem:[%s6877 + $0x8] sm:$0xff]
  %6880 = vmatprep.subr.bf16.mxu0 %v625
  %6881 = vmatpush1.bf16.msra.mxu0 %v624
  %6882 = vmatprep.subr.bf16.mxu0 %v623
  %6883 = vmatpush1.bf16.msra.mxu0 %v622
  %6884 = vmatprep.subr.bf16.mxu0 %v621
  %6885 = vmatpush1.bf16.msra.mxu0 %v620
  %6886 = vmatprep.subr.bf16.mxu0 %v619
  %6887 = vmatpush1.bf16.msra.mxu0 %v618
  %6888 = vmatprep.subr.bf16.mxu0 %v617
  %6889 = vmatpush1.bf16.msra.mxu0 %v616
  %6890 = vmatprep.subr.bf16.mxu0 %v615
  %6891 = vmatpush1.bf16.msra.mxu0 %v614
  %6892 = vmatprep.subr.bf16.mxu0 %v613
  %6893 = vmatpush1.bf16.msra.mxu0 %v612
  %6894 = vmatprep.subr.bf16.mxu0 %v611
  %6895 = vmatpush1.bf16.msra.mxu0 %v610
  %6896 = vmatprep.subr.bf16.mxu0 %v641
  %6897 = vmatpush2.bf16.msra.mxu0 %v640
  %6898 = vmatprep.subr.bf16.mxu0 %v639
  %6899 = vmatpush2.bf16.msra.mxu0 %v638
  %6900 = vmatprep.subr.bf16.mxu0 %v637
  %6901 = vmatpush2.bf16.msra.mxu0 %v636
  %6902 = vmatprep.subr.bf16.mxu0 %v635
  %6903 = vmatpush2.bf16.msra.mxu0 %v634
  %6904 = vmatprep.subr.bf16.mxu0 %v633
  %6905 = vmatpush2.bf16.msra.mxu0 %v632
  %6906 = vmatprep.subr.bf16.mxu0 %v631
  %6907 = vmatpush2.bf16.msra.mxu0 %v630
  %6908 = vmatprep.subr.bf16.mxu0 %v629
  %6909 = vmatpush2.bf16.msra.mxu0 %v628
  %6910 = vmatprep.subr.bf16.mxu0 %v627
  %6911 = vmatpush2.bf16.msra.mxu0 %v626
  %6912 = vmatprep.mubr.bf16.mxu0 %v6620
  %6913 = vmatmul.mubr.bf16.gmra.mxu0 %v6619
  %v6914 = vpop.f32.mrf.mxu0
  %v6915 = vadd.f32 0.0, %v6914
  %v6916 = vpop.f32.mrf.mxu0
  %v6917 = vadd.f32 0.0, %v6916
  %v6918 = vpop.f32.mrf.mxu0
  %v6919 = vpop.f32.mrf.mxu0
  %6920 = vdwg.mxu0
  %v6921 = vadd.f32 %v6878, %v6915
  %v6922 = vadd.f32 %v6879, %v6917
  %v6923 = vtanh.pop %v6921
  %v6924 = vtanh.pop %v6922
  %v6925 = vpack.c.bf16 %v6923, %v6923
  %v6926 = vpack.c.bf16 %v6924, %v6924
  %6927 = vmatprep.subr.bf16.mxu0 %v1003
  %6928 = vmatpush1.bf16.msra.mxu0 %v1002
  %6929 = vmatprep.subr.bf16.mxu0 %v1001
  %6930 = vmatpush1.bf16.msra.mxu0 %v1000
  %6931 = vmatprep.subr.bf16.mxu0 %v999
  %6932 = vmatpush1.bf16.msra.mxu0 %v998
  %6933 = vmatprep.subr.bf16.mxu0 %v997
  %6934 = vmatpush1.bf16.msra.mxu0 %v996
  %6935 = vmatprep.subr.bf16.mxu0 %v995
  %6936 = vmatpush1.bf16.msra.mxu0 %v994
  %6937 = vmatprep.subr.bf16.mxu0 %v993
  %6938 = vmatpush1.bf16.msra.mxu0 %v992
  %6939 = vmatprep.subr.bf16.mxu0 %v991
  %6940 = vmatpush1.bf16.msra.mxu0 %v990
  %6941 = vmatprep.subr.bf16.mxu0 %v989
  %6942 = vmatpush1.bf16.msra.mxu0 %v988
  %6943 = vmatprep.subr.bf16.mxu0 %v1019
  %6944 = vmatpush2.bf16.msra.mxu0 %v1018
  %6945 = vmatprep.subr.bf16.mxu0 %v1017
  %6946 = vmatpush2.bf16.msra.mxu0 %v1016
  %6947 = vmatprep.subr.bf16.mxu0 %v1015
  %6948 = vmatpush2.bf16.msra.mxu0 %v1014
  %6949 = vmatprep.subr.bf16.mxu0 %v1013
  %6950 = vmatpush2.bf16.msra.mxu0 %v1012
  %6951 = vmatprep.subr.bf16.mxu0 %v1011
  %6952 = vmatpush2.bf16.msra.mxu0 %v1010
  %6953 = vmatprep.subr.bf16.mxu0 %v1009
  %6954 = vmatpush2.bf16.msra.mxu0 %v1008
  %6955 = vmatprep.subr.bf16.mxu0 %v1007
  %6956 = vmatpush2.bf16.msra.mxu0 %v1006
  %6957 = vmatprep.subr.bf16.mxu0 %v1005
  %6958 = vmatpush2.bf16.msra.mxu0 %v1004
  %6959 = vmatprep.mubr.bf16.mxu0 %v6926
  %6960 = vmatmul.mubr.bf16.gmra.mxu0 %v6925
  %v6961 = vpop.f32.mrf.mxu0
  %v6962 = vadd.f32 %v789, %v6961
  %v6963 = vpop.f32.mrf.mxu0
  %v6964 = vadd.f32 %v793, %v6963
  %v6965 = vpop.f32.mrf.mxu0
  %v6966 = vpop.f32.mrf.mxu0
  %6967 = vdwg.mxu0
  %6968 = vmatprep.subr.bf16.mxu0 %v1035
  %6969 = vmatpush1.bf16.msra.mxu0 %v1034
  %6970 = vmatprep.subr.bf16.mxu0 %v1033
  %6971 = vmatpush1.bf16.msra.mxu0 %v1032
  %6972 = vmatprep.subr.bf16.mxu0 %v1031
  %6973 = vmatpush1.bf16.msra.mxu0 %v1030
  %6974 = vmatprep.subr.bf16.mxu0 %v1029
  %6975 = vmatpush1.bf16.msra.mxu0 %v1028
  %6976 = vmatprep.subr.bf16.mxu0 %v1027
  %6977 = vmatpush1.bf16.msra.mxu0 %v1026
  %6978 = vmatprep.subr.bf16.mxu0 %v1025
  %6979 = vmatpush1.bf16.msra.mxu0 %v1024
  %6980 = vmatprep.subr.bf16.mxu0 %v1023
  %6981 = vmatpush1.bf16.msra.mxu0 %v1022
  %6982 = vmatprep.subr.bf16.mxu0 %v1021
  %6983 = vmatpush1.bf16.msra.mxu0 %v1020
  %6984 = vmatprep.subr.bf16.mxu0 %v1051
  %6985 = vmatpush2.bf16.msra.mxu0 %v1050
  %6986 = vmatprep.subr.bf16.mxu0 %v1049
  %6987 = vmatpush2.bf16.msra.mxu0 %v1048
  %6988 = vmatprep.subr.bf16.mxu0 %v1047
  %6989 = vmatpush2.bf16.msra.mxu0 %v1046
  %6990 = vmatprep.subr.bf16.mxu0 %v1045
  %6991 = vmatpush2.bf16.msra.mxu0 %v1044
  %6992 = vmatprep.subr.bf16.mxu0 %v1043
  %6993 = vmatpush2.bf16.msra.mxu0 %v1042
  %6994 = vmatprep.subr.bf16.mxu0 %v1041
  %6995 = vmatpush2.bf16.msra.mxu0 %v1040
  %6996 = vmatprep.subr.bf16.mxu0 %v1039
  %6997 = vmatpush2.bf16.msra.mxu0 %v1038
  %6998 = vmatprep.subr.bf16.mxu0 %v1037
  %6999 = vmatpush2.bf16.msra.mxu0 %v1036
  %7000 = vmatprep.mubr.bf16.mxu0 %v6706
  %7001 = vmatmul.mubr.bf16.gmra.mxu0 %v6705
  %v7002 = vpop.f32.mrf.mxu0
  %v7003 = vadd.f32 %v6962, %v7002
  %v7004 = vpop.f32.mrf.mxu0
  %v7005 = vadd.f32 %v6964, %v7004
  %v7006 = vpop.f32.mrf.mxu0
  %v7007 = vpop.f32.mrf.mxu0
  %7008 = vdwg.mxu0
  %v7009 = vtanh.pop %v7003
  %v7010 = vtanh.pop %v7005
  %v7011 = vpack.c.bf16 %v7009, %v7009
  %v7012 = vpack.c.bf16 %v7010, %v7010
  %s7013 = scalar_lea.vmem %s6, 2432
  %v7014 = vld [vmem:[%s7013] sm:$0xf]
  %v7015 = vld [vmem:[%s7013 + $0x4] sm:$0xf]
  %v7016 = vld [vmem:[%s7013 + $0x8] sm:$0xf]
  %v7017 = vld [vmem:[%s7013 + $0xc] sm:$0xf]
  %v7018 = vld [vmem:[%s7013 + $0x10] sm:$0xf]
  %v7019 = vld [vmem:[%s7013 + $0x14] sm:$0xf]
  %v7020 = vld [vmem:[%s7013 + $0x18] sm:$0xf]
  %v7021 = vld [vmem:[%s7013 + $0x1c] sm:$0xf]
  %v7022 = vld [vmem:[%s7013 + $0x20] sm:$0xf]
  %v7023 = vld [vmem:[%s7013 + $0x24] sm:$0xf]
  %v7024 = vld [vmem:[%s7013 + $0x28] sm:$0xf]
  %v7025 = vld [vmem:[%s7013 + $0x2c] sm:$0xf]
  %v7026 = vld [vmem:[%s7013 + $0x30] sm:$0xf]
  %v7027 = vld [vmem:[%s7013 + $0x34] sm:$0xf]
  %v7028 = vld [vmem:[%s7013 + $0x38] sm:$0xf]
  %v7029 = vld [vmem:[%s7013 + $0x3c] sm:$0xf]
  %v7030 = vld [vmem:[%s7013 + $0x40] sm:$0xf]
  %v7031 = vld [vmem:[%s7013 + $0x44] sm:$0xf]
  %v7032 = vld [vmem:[%s7013 + $0x48] sm:$0xf]
  %v7033 = vld [vmem:[%s7013 + $0x4c] sm:$0xf]
  %v7034 = vld [vmem:[%s7013 + $0x50] sm:$0xf]
  %v7035 = vld [vmem:[%s7013 + $0x54] sm:$0xf]
  %v7036 = vld [vmem:[%s7013 + $0x58] sm:$0xf]
  %v7037 = vld [vmem:[%s7013 + $0x5c] sm:$0xf]
  %v7038 = vld [vmem:[%s7013 + $0x60] sm:$0xf]
  %v7039 = vld [vmem:[%s7013 + $0x64] sm:$0xf]
  %v7040 = vld [vmem:[%s7013 + $0x68] sm:$0xf]
  %v7041 = vld [vmem:[%s7013 + $0x6c] sm:$0xf]
  %v7042 = vld [vmem:[%s7013 + $0x70] sm:$0xf]
  %v7043 = vld [vmem:[%s7013 + $0x74] sm:$0xf]
  %v7044 = vld [vmem:[%s7013 + $0x78] sm:$0xf]
  %v7045 = vld [vmem:[%s7013 + $0x7c] sm:$0xf]
  %v7078 = vunpack.c.l.b16 %v7014
  %v7079 = vunpack.c.l.b16 %v7015
  %v7080 = vunpack.c.l.b16 %v7016
  %v7081 = vunpack.c.l.b16 %v7017
  %v7082 = vunpack.c.l.b16 %v7018
  %v7083 = vunpack.c.l.b16 %v7019
  %v7084 = vunpack.c.l.b16 %v7020
  %v7085 = vunpack.c.l.b16 %v7021
  %v7086 = vunpack.c.l.b16 %v7022
  %v7087 = vunpack.c.l.b16 %v7023
  %v7088 = vunpack.c.l.b16 %v7024
  %v7089 = vunpack.c.l.b16 %v7025
  %v7090 = vunpack.c.l.b16 %v7026
  %v7091 = vunpack.c.l.b16 %v7027
  %v7092 = vunpack.c.l.b16 %v7028
  %v7093 = vunpack.c.l.b16 %v7029
  %v7094 = vunpack.c.l.b16 %v7030
  %v7095 = vunpack.c.l.b16 %v7031
  %v7096 = vunpack.c.l.b16 %v7032
  %v7097 = vunpack.c.l.b16 %v7033
  %v7098 = vunpack.c.l.b16 %v7034
  %v7099 = vunpack.c.l.b16 %v7035
  %v7100 = vunpack.c.l.b16 %v7036
  %v7101 = vunpack.c.l.b16 %v7037
  %v7102 = vunpack.c.l.b16 %v7038
  %v7103 = vunpack.c.l.b16 %v7039
  %v7104 = vunpack.c.l.b16 %v7040
  %v7105 = vunpack.c.l.b16 %v7041
  %v7106 = vunpack.c.l.b16 %v7042
  %v7107 = vunpack.c.l.b16 %v7043
  %v7108 = vunpack.c.l.b16 %v7044
  %v7109 = vunpack.c.l.b16 %v7045
  %v7110 = vpack.c.b16 %v7079, %v7078
  %v7111 = vpack.c.b16 %v7081, %v7080
  %v7112 = vpack.c.b16 %v7083, %v7082
  %v7113 = vpack.c.b16 %v7085, %v7084
  %v7114 = vpack.c.b16 %v7087, %v7086
  %v7115 = vpack.c.b16 %v7089, %v7088
  %v7116 = vpack.c.b16 %v7091, %v7090
  %v7117 = vpack.c.b16 %v7093, %v7092
  %v7118 = vpack.c.b16 %v7095, %v7094
  %v7119 = vpack.c.b16 %v7097, %v7096
  %v7120 = vpack.c.b16 %v7099, %v7098
  %v7121 = vpack.c.b16 %v7101, %v7100
  %v7122 = vpack.c.b16 %v7103, %v7102
  %v7123 = vpack.c.b16 %v7105, %v7104
  %v7124 = vpack.c.b16 %v7107, %v7106
  %v7125 = vpack.c.b16 %v7109, %v7108
  %7142 = vmatprep.subr.bf16.mxu0 0
  %7143 = vmatpush1.bf16.msra.mxu0 %v7117
  %7144 = vmatprep.subr.bf16.mxu0 0
  %7145 = vmatpush1.bf16.msra.mxu0 %v7116
  %7146 = vmatprep.subr.bf16.mxu0 0
  %7147 = vmatpush1.bf16.msra.mxu0 %v7115
  %7148 = vmatprep.subr.bf16.mxu0 0
  %7149 = vmatpush1.bf16.msra.mxu0 %v7114
  %7150 = vmatprep.subr.bf16.mxu0 0
  %7151 = vmatpush1.bf16.msra.mxu0 %v7113
  %7152 = vmatprep.subr.bf16.mxu0 0
  %7153 = vmatpush1.bf16.msra.mxu0 %v7112
  %7154 = vmatprep.subr.bf16.mxu0 0
  %7155 = vmatpush1.bf16.msra.mxu0 %v7111
  %7156 = vmatprep.subr.bf16.mxu0 0
  %7157 = vmatpush1.bf16.msra.mxu0 %v7110
  %7158 = vmatprep.subr.bf16.mxu0 0
  %7159 = vmatpush2.bf16.msra.mxu0 %v7125
  %7160 = vmatprep.subr.bf16.mxu0 0
  %7161 = vmatpush2.bf16.msra.mxu0 %v7124
  %7162 = vmatprep.subr.bf16.mxu0 0
  %7163 = vmatpush2.bf16.msra.mxu0 %v7123
  %7164 = vmatprep.subr.bf16.mxu0 0
  %7165 = vmatpush2.bf16.msra.mxu0 %v7122
  %7166 = vmatprep.subr.bf16.mxu0 0
  %7167 = vmatpush2.bf16.msra.mxu0 %v7121
  %7168 = vmatprep.subr.bf16.mxu0 0
  %7169 = vmatpush2.bf16.msra.mxu0 %v7120
  %7170 = vmatprep.subr.bf16.mxu0 0
  %7171 = vmatpush2.bf16.msra.mxu0 %v7119
  %7172 = vmatprep.subr.bf16.mxu0 0
  %7173 = vmatpush2.bf16.msra.mxu0 %v7118
  %7174 = vmatprep.mubr.bf16.mxu0 %v7012
  %7175 = vmatmul.mubr.bf16.gmra.mxu0 %v7011
  %v7176 = vpop.f32.mrf.mxu0
  %v7177 = vadd.f32 0.0, %v7176
  %v7178 = vpop.f32.mrf.mxu0
  %v7179 = vpop.f32.mrf.mxu0
  %v7180 = vpop.f32.mrf.mxu0
  %7181 = vdwg.mxu0
  %v7182 = vadd.f32 %v6876, %v7177
  %s7183 = scalar_lea.vmem [#allocation2], 320
  %v7184 = vld [vmem:[%s7183] sm:$0xff]
  %v7185 = vld [vmem:[%s7183 + $0x8] sm:$0xff]
  %7186 = vmatprep.subr.bf16.mxu0 %v625
  %7187 = vmatpush1.bf16.msra.mxu0 %v624
  %7188 = vmatprep.subr.bf16.mxu0 %v623
  %7189 = vmatpush1.bf16.msra.mxu0 %v622
  %7190 = vmatprep.subr.bf16.mxu0 %v621
  %7191 = vmatpush1.bf16.msra.mxu0 %v620
  %7192 = vmatprep.subr.bf16.mxu0 %v619
  %7193 = vmatpush1.bf16.msra.mxu0 %v618
  %7194 = vmatprep.subr.bf16.mxu0 %v617
  %7195 = vmatpush1.bf16.msra.mxu0 %v616
  %7196 = vmatprep.subr.bf16.mxu0 %v615
  %7197 = vmatpush1.bf16.msra.mxu0 %v614
  %7198 = vmatprep.subr.bf16.mxu0 %v613
  %7199 = vmatpush1.bf16.msra.mxu0 %v612
  %7200 = vmatprep.subr.bf16.mxu0 %v611
  %7201 = vmatpush1.bf16.msra.mxu0 %v610
  %7202 = vmatprep.subr.bf16.mxu0 %v641
  %7203 = vmatpush2.bf16.msra.mxu0 %v640
  %7204 = vmatprep.subr.bf16.mxu0 %v639
  %7205 = vmatpush2.bf16.msra.mxu0 %v638
  %7206 = vmatprep.subr.bf16.mxu0 %v637
  %7207 = vmatpush2.bf16.msra.mxu0 %v636
  %7208 = vmatprep.subr.bf16.mxu0 %v635
  %7209 = vmatpush2.bf16.msra.mxu0 %v634
  %7210 = vmatprep.subr.bf16.mxu0 %v633
  %7211 = vmatpush2.bf16.msra.mxu0 %v632
  %7212 = vmatprep.subr.bf16.mxu0 %v631
  %7213 = vmatpush2.bf16.msra.mxu0 %v630
  %7214 = vmatprep.subr.bf16.mxu0 %v629
  %7215 = vmatpush2.bf16.msra.mxu0 %v628
  %7216 = vmatprep.subr.bf16.mxu0 %v627
  %7217 = vmatpush2.bf16.msra.mxu0 %v626
  %7218 = vmatprep.mubr.bf16.mxu0 %v6926
  %7219 = vmatmul.mubr.bf16.gmra.mxu0 %v6925
  %v7220 = vpop.f32.mrf.mxu0
  %v7221 = vadd.f32 0.0, %v7220
  %v7222 = vpop.f32.mrf.mxu0
  %v7223 = vadd.f32 0.0, %v7222
  %v7224 = vpop.f32.mrf.mxu0
  %v7225 = vpop.f32.mrf.mxu0
  %7226 = vdwg.mxu0
  %v7227 = vadd.f32 %v7184, %v7221
  %v7228 = vadd.f32 %v7185, %v7223
  %v7229 = vtanh.pop %v7227
  %v7230 = vtanh.pop %v7228
  %v7231 = vpack.c.bf16 %v7229, %v7229
  %v7232 = vpack.c.bf16 %v7230, %v7230
  %7233 = vmatprep.subr.bf16.mxu0 %v1003
  %7234 = vmatpush1.bf16.msra.mxu0 %v1002
  %7235 = vmatprep.subr.bf16.mxu0 %v1001
  %7236 = vmatpush1.bf16.msra.mxu0 %v1000
  %7237 = vmatprep.subr.bf16.mxu0 %v999
  %7238 = vmatpush1.bf16.msra.mxu0 %v998
  %7239 = vmatprep.subr.bf16.mxu0 %v997
  %7240 = vmatpush1.bf16.msra.mxu0 %v996
  %7241 = vmatprep.subr.bf16.mxu0 %v995
  %7242 = vmatpush1.bf16.msra.mxu0 %v994
  %7243 = vmatprep.subr.bf16.mxu0 %v993
  %7244 = vmatpush1.bf16.msra.mxu0 %v992
  %7245 = vmatprep.subr.bf16.mxu0 %v991
  %7246 = vmatpush1.bf16.msra.mxu0 %v990
  %7247 = vmatprep.subr.bf16.mxu0 %v989
  %7248 = vmatpush1.bf16.msra.mxu0 %v988
  %7249 = vmatprep.subr.bf16.mxu0 %v1019
  %7250 = vmatpush2.bf16.msra.mxu0 %v1018
  %7251 = vmatprep.subr.bf16.mxu0 %v1017
  %7252 = vmatpush2.bf16.msra.mxu0 %v1016
  %7253 = vmatprep.subr.bf16.mxu0 %v1015
  %7254 = vmatpush2.bf16.msra.mxu0 %v1014
  %7255 = vmatprep.subr.bf16.mxu0 %v1013
  %7256 = vmatpush2.bf16.msra.mxu0 %v1012
  %7257 = vmatprep.subr.bf16.mxu0 %v1011
  %7258 = vmatpush2.bf16.msra.mxu0 %v1010
  %7259 = vmatprep.subr.bf16.mxu0 %v1009
  %7260 = vmatpush2.bf16.msra.mxu0 %v1008
  %7261 = vmatprep.subr.bf16.mxu0 %v1007
  %7262 = vmatpush2.bf16.msra.mxu0 %v1006
  %7263 = vmatprep.subr.bf16.mxu0 %v1005
  %7264 = vmatpush2.bf16.msra.mxu0 %v1004
  %7265 = vmatprep.mubr.bf16.mxu0 %v7232
  %7266 = vmatmul.mubr.bf16.gmra.mxu0 %v7231
  %v7267 = vpop.f32.mrf.mxu0
  %v7268 = vadd.f32 %v789, %v7267
  %v7269 = vpop.f32.mrf.mxu0
  %v7270 = vadd.f32 %v793, %v7269
  %v7271 = vpop.f32.mrf.mxu0
  %v7272 = vpop.f32.mrf.mxu0
  %7273 = vdwg.mxu0
  %7274 = vmatprep.subr.bf16.mxu0 %v1035
  %7275 = vmatpush1.bf16.msra.mxu0 %v1034
  %7276 = vmatprep.subr.bf16.mxu0 %v1033
  %7277 = vmatpush1.bf16.msra.mxu0 %v1032
  %7278 = vmatprep.subr.bf16.mxu0 %v1031
  %7279 = vmatpush1.bf16.msra.mxu0 %v1030
  %7280 = vmatprep.subr.bf16.mxu0 %v1029
  %7281 = vmatpush1.bf16.msra.mxu0 %v1028
  %7282 = vmatprep.subr.bf16.mxu0 %v1027
  %7283 = vmatpush1.bf16.msra.mxu0 %v1026
  %7284 = vmatprep.subr.bf16.mxu0 %v1025
  %7285 = vmatpush1.bf16.msra.mxu0 %v1024
  %7286 = vmatprep.subr.bf16.mxu0 %v1023
  %7287 = vmatpush1.bf16.msra.mxu0 %v1022
  %7288 = vmatprep.subr.bf16.mxu0 %v1021
  %7289 = vmatpush1.bf16.msra.mxu0 %v1020
  %7290 = vmatprep.subr.bf16.mxu0 %v1051
  %7291 = vmatpush2.bf16.msra.mxu0 %v1050
  %7292 = vmatprep.subr.bf16.mxu0 %v1049
  %7293 = vmatpush2.bf16.msra.mxu0 %v1048
  %7294 = vmatprep.subr.bf16.mxu0 %v1047
  %7295 = vmatpush2.bf16.msra.mxu0 %v1046
  %7296 = vmatprep.subr.bf16.mxu0 %v1045
  %7297 = vmatpush2.bf16.msra.mxu0 %v1044
  %7298 = vmatprep.subr.bf16.mxu0 %v1043
  %7299 = vmatpush2.bf16.msra.mxu0 %v1042
  %7300 = vmatprep.subr.bf16.mxu0 %v1041
  %7301 = vmatpush2.bf16.msra.mxu0 %v1040
  %7302 = vmatprep.subr.bf16.mxu0 %v1039
  %7303 = vmatpush2.bf16.msra.mxu0 %v1038
  %7304 = vmatprep.subr.bf16.mxu0 %v1037
  %7305 = vmatpush2.bf16.msra.mxu0 %v1036
  %7306 = vmatprep.mubr.bf16.mxu0 %v7012
  %7307 = vmatmul.mubr.bf16.gmra.mxu0 %v7011
  %v7308 = vpop.f32.mrf.mxu0
  %v7309 = vadd.f32 %v7268, %v7308
  %v7310 = vpop.f32.mrf.mxu0
  %v7311 = vadd.f32 %v7270, %v7310
  %v7312 = vpop.f32.mrf.mxu0
  %v7313 = vpop.f32.mrf.mxu0
  %7314 = vdwg.mxu0
  %v7315 = vtanh.pop %v7309
  %v7316 = vtanh.pop %v7311
  %v7317 = vpack.c.bf16 %v7315, %v7315
  %v7318 = vpack.c.bf16 %v7316, %v7316
  %s7319 = scalar_lea.vmem %s6, 2560
  %v7320 = vld [vmem:[%s7319] sm:$0xf]
  %v7321 = vld [vmem:[%s7319 + $0x4] sm:$0xf]
  %v7322 = vld [vmem:[%s7319 + $0x8] sm:$0xf]
  %v7323 = vld [vmem:[%s7319 + $0xc] sm:$0xf]
  %v7324 = vld [vmem:[%s7319 + $0x10] sm:$0xf]
  %v7325 = vld [vmem:[%s7319 + $0x14] sm:$0xf]
  %v7326 = vld [vmem:[%s7319 + $0x18] sm:$0xf]
  %v7327 = vld [vmem:[%s7319 + $0x1c] sm:$0xf]
  %v7328 = vld [vmem:[%s7319 + $0x20] sm:$0xf]
  %v7329 = vld [vmem:[%s7319 + $0x24] sm:$0xf]
  %v7330 = vld [vmem:[%s7319 + $0x28] sm:$0xf]
  %v7331 = vld [vmem:[%s7319 + $0x2c] sm:$0xf]
  %v7332 = vld [vmem:[%s7319 + $0x30] sm:$0xf]
  %v7333 = vld [vmem:[%s7319 + $0x34] sm:$0xf]
  %v7334 = vld [vmem:[%s7319 + $0x38] sm:$0xf]
  %v7335 = vld [vmem:[%s7319 + $0x3c] sm:$0xf]
  %v7336 = vld [vmem:[%s7319 + $0x40] sm:$0xf]
  %v7337 = vld [vmem:[%s7319 + $0x44] sm:$0xf]
  %v7338 = vld [vmem:[%s7319 + $0x48] sm:$0xf]
  %v7339 = vld [vmem:[%s7319 + $0x4c] sm:$0xf]
  %v7340 = vld [vmem:[%s7319 + $0x50] sm:$0xf]
  %v7341 = vld [vmem:[%s7319 + $0x54] sm:$0xf]
  %v7342 = vld [vmem:[%s7319 + $0x58] sm:$0xf]
  %v7343 = vld [vmem:[%s7319 + $0x5c] sm:$0xf]
  %v7344 = vld [vmem:[%s7319 + $0x60] sm:$0xf]
  %v7345 = vld [vmem:[%s7319 + $0x64] sm:$0xf]
  %v7346 = vld [vmem:[%s7319 + $0x68] sm:$0xf]
  %v7347 = vld [vmem:[%s7319 + $0x6c] sm:$0xf]
  %v7348 = vld [vmem:[%s7319 + $0x70] sm:$0xf]
  %v7349 = vld [vmem:[%s7319 + $0x74] sm:$0xf]
  %v7350 = vld [vmem:[%s7319 + $0x78] sm:$0xf]
  %v7351 = vld [vmem:[%s7319 + $0x7c] sm:$0xf]
  %v7384 = vunpack.c.l.b16 %v7320
  %v7385 = vunpack.c.l.b16 %v7321
  %v7386 = vunpack.c.l.b16 %v7322
  %v7387 = vunpack.c.l.b16 %v7323
  %v7388 = vunpack.c.l.b16 %v7324
  %v7389 = vunpack.c.l.b16 %v7325
  %v7390 = vunpack.c.l.b16 %v7326
  %v7391 = vunpack.c.l.b16 %v7327
  %v7392 = vunpack.c.l.b16 %v7328
  %v7393 = vunpack.c.l.b16 %v7329
  %v7394 = vunpack.c.l.b16 %v7330
  %v7395 = vunpack.c.l.b16 %v7331
  %v7396 = vunpack.c.l.b16 %v7332
  %v7397 = vunpack.c.l.b16 %v7333
  %v7398 = vunpack.c.l.b16 %v7334
  %v7399 = vunpack.c.l.b16 %v7335
  %v7400 = vunpack.c.l.b16 %v7336
  %v7401 = vunpack.c.l.b16 %v7337
  %v7402 = vunpack.c.l.b16 %v7338
  %v7403 = vunpack.c.l.b16 %v7339
  %v7404 = vunpack.c.l.b16 %v7340
  %v7405 = vunpack.c.l.b16 %v7341
  %v7406 = vunpack.c.l.b16 %v7342
  %v7407 = vunpack.c.l.b16 %v7343
  %v7408 = vunpack.c.l.b16 %v7344
  %v7409 = vunpack.c.l.b16 %v7345
  %v7410 = vunpack.c.l.b16 %v7346
  %v7411 = vunpack.c.l.b16 %v7347
  %v7412 = vunpack.c.l.b16 %v7348
  %v7413 = vunpack.c.l.b16 %v7349
  %v7414 = vunpack.c.l.b16 %v7350
  %v7415 = vunpack.c.l.b16 %v7351
  %v7416 = vpack.c.b16 %v7385, %v7384
  %v7417 = vpack.c.b16 %v7387, %v7386
  %v7418 = vpack.c.b16 %v7389, %v7388
  %v7419 = vpack.c.b16 %v7391, %v7390
  %v7420 = vpack.c.b16 %v7393, %v7392
  %v7421 = vpack.c.b16 %v7395, %v7394
  %v7422 = vpack.c.b16 %v7397, %v7396
  %v7423 = vpack.c.b16 %v7399, %v7398
  %v7424 = vpack.c.b16 %v7401, %v7400
  %v7425 = vpack.c.b16 %v7403, %v7402
  %v7426 = vpack.c.b16 %v7405, %v7404
  %v7427 = vpack.c.b16 %v7407, %v7406
  %v7428 = vpack.c.b16 %v7409, %v7408
  %v7429 = vpack.c.b16 %v7411, %v7410
  %v7430 = vpack.c.b16 %v7413, %v7412
  %v7431 = vpack.c.b16 %v7415, %v7414
  %7448 = vmatprep.subr.bf16.mxu0 0
  %7449 = vmatpush1.bf16.msra.mxu0 %v7423
  %7450 = vmatprep.subr.bf16.mxu0 0
  %7451 = vmatpush1.bf16.msra.mxu0 %v7422
  %7452 = vmatprep.subr.bf16.mxu0 0
  %7453 = vmatpush1.bf16.msra.mxu0 %v7421
  %7454 = vmatprep.subr.bf16.mxu0 0
  %7455 = vmatpush1.bf16.msra.mxu0 %v7420
  %7456 = vmatprep.subr.bf16.mxu0 0
  %7457 = vmatpush1.bf16.msra.mxu0 %v7419
  %7458 = vmatprep.subr.bf16.mxu0 0
  %7459 = vmatpush1.bf16.msra.mxu0 %v7418
  %7460 = vmatprep.subr.bf16.mxu0 0
  %7461 = vmatpush1.bf16.msra.mxu0 %v7417
  %7462 = vmatprep.subr.bf16.mxu0 0
  %7463 = vmatpush1.bf16.msra.mxu0 %v7416
  %7464 = vmatprep.subr.bf16.mxu0 0
  %7465 = vmatpush2.bf16.msra.mxu0 %v7431
  %7466 = vmatprep.subr.bf16.mxu0 0
  %7467 = vmatpush2.bf16.msra.mxu0 %v7430
  %7468 = vmatprep.subr.bf16.mxu0 0
  %7469 = vmatpush2.bf16.msra.mxu0 %v7429
  %7470 = vmatprep.subr.bf16.mxu0 0
  %7471 = vmatpush2.bf16.msra.mxu0 %v7428
  %7472 = vmatprep.subr.bf16.mxu0 0
  %7473 = vmatpush2.bf16.msra.mxu0 %v7427
  %7474 = vmatprep.subr.bf16.mxu0 0
  %7475 = vmatpush2.bf16.msra.mxu0 %v7426
  %7476 = vmatprep.subr.bf16.mxu0 0
  %7477 = vmatpush2.bf16.msra.mxu0 %v7425
  %7478 = vmatprep.subr.bf16.mxu0 0
  %7479 = vmatpush2.bf16.msra.mxu0 %v7424
  %7480 = vmatprep.mubr.bf16.mxu0 %v7318
  %7481 = vmatmul.mubr.bf16.gmra.mxu0 %v7317
  %v7482 = vpop.f32.mrf.mxu0
  %v7483 = vadd.f32 0.0, %v7482
  %v7484 = vpop.f32.mrf.mxu0
  %v7485 = vpop.f32.mrf.mxu0
  %v7486 = vpop.f32.mrf.mxu0
  %7487 = vdwg.mxu0
  %v7488 = vadd.f32 %v7182, %v7483
  %s7489 = scalar_lea.vmem [#allocation2], 336
  %v7490 = vld [vmem:[%s7489] sm:$0xff]
  %v7491 = vld [vmem:[%s7489 + $0x8] sm:$0xff]
  %7492 = vmatprep.subr.bf16.mxu0 %v625
  %7493 = vmatpush1.bf16.msra.mxu0 %v624
  %7494 = vmatprep.subr.bf16.mxu0 %v623
  %7495 = vmatpush1.bf16.msra.mxu0 %v622
  %7496 = vmatprep.subr.bf16.mxu0 %v621
  %7497 = vmatpush1.bf16.msra.mxu0 %v620
  %7498 = vmatprep.subr.bf16.mxu0 %v619
  %7499 = vmatpush1.bf16.msra.mxu0 %v618
  %7500 = vmatprep.subr.bf16.mxu0 %v617
  %7501 = vmatpush1.bf16.msra.mxu0 %v616
  %7502 = vmatprep.subr.bf16.mxu0 %v615
  %7503 = vmatpush1.bf16.msra.mxu0 %v614
  %7504 = vmatprep.subr.bf16.mxu0 %v613
  %7505 = vmatpush1.bf16.msra.mxu0 %v612
  %7506 = vmatprep.subr.bf16.mxu0 %v611
  %7507 = vmatpush1.bf16.msra.mxu0 %v610
  %7508 = vmatprep.subr.bf16.mxu0 %v641
  %7509 = vmatpush2.bf16.msra.mxu0 %v640
  %7510 = vmatprep.subr.bf16.mxu0 %v639
  %7511 = vmatpush2.bf16.msra.mxu0 %v638
  %7512 = vmatprep.subr.bf16.mxu0 %v637
  %7513 = vmatpush2.bf16.msra.mxu0 %v636
  %7514 = vmatprep.subr.bf16.mxu0 %v635
  %7515 = vmatpush2.bf16.msra.mxu0 %v634
  %7516 = vmatprep.subr.bf16.mxu0 %v633
  %7517 = vmatpush2.bf16.msra.mxu0 %v632
  %7518 = vmatprep.subr.bf16.mxu0 %v631
  %7519 = vmatpush2.bf16.msra.mxu0 %v630
  %7520 = vmatprep.subr.bf16.mxu0 %v629
  %7521 = vmatpush2.bf16.msra.mxu0 %v628
  %7522 = vmatprep.subr.bf16.mxu0 %v627
  %7523 = vmatpush2.bf16.msra.mxu0 %v626
  %7524 = vmatprep.mubr.bf16.mxu0 %v7232
  %7525 = vmatmul.mubr.bf16.gmra.mxu0 %v7231
  %v7526 = vpop.f32.mrf.mxu0
  %v7527 = vadd.f32 0.0, %v7526
  %v7528 = vpop.f32.mrf.mxu0
  %v7529 = vadd.f32 0.0, %v7528
  %v7530 = vpop.f32.mrf.mxu0
  %v7531 = vpop.f32.mrf.mxu0
  %7532 = vdwg.mxu0
  %v7533 = vadd.f32 %v7490, %v7527
  %v7534 = vadd.f32 %v7491, %v7529
  %v7535 = vtanh.pop %v7533
  %v7536 = vtanh.pop %v7534
  %v7537 = vpack.c.bf16 %v7535, %v7535
  %v7538 = vpack.c.bf16 %v7536, %v7536
  %7539 = vmatprep.subr.bf16.mxu0 %v1003
  %7540 = vmatpush1.bf16.msra.mxu0 %v1002
  %7541 = vmatprep.subr.bf16.mxu0 %v1001
  %7542 = vmatpush1.bf16.msra.mxu0 %v1000
  %7543 = vmatprep.subr.bf16.mxu0 %v999
  %7544 = vmatpush1.bf16.msra.mxu0 %v998
  %7545 = vmatprep.subr.bf16.mxu0 %v997
  %7546 = vmatpush1.bf16.msra.mxu0 %v996
  %7547 = vmatprep.subr.bf16.mxu0 %v995
  %7548 = vmatpush1.bf16.msra.mxu0 %v994
  %7549 = vmatprep.subr.bf16.mxu0 %v993
  %7550 = vmatpush1.bf16.msra.mxu0 %v992
  %7551 = vmatprep.subr.bf16.mxu0 %v991
  %7552 = vmatpush1.bf16.msra.mxu0 %v990
  %7553 = vmatprep.subr.bf16.mxu0 %v989
  %7554 = vmatpush1.bf16.msra.mxu0 %v988
  %7555 = vmatprep.subr.bf16.mxu0 %v1019
  %7556 = vmatpush2.bf16.msra.mxu0 %v1018
  %7557 = vmatprep.subr.bf16.mxu0 %v1017
  %7558 = vmatpush2.bf16.msra.mxu0 %v1016
  %7559 = vmatprep.subr.bf16.mxu0 %v1015
  %7560 = vmatpush2.bf16.msra.mxu0 %v1014
  %7561 = vmatprep.subr.bf16.mxu0 %v1013
  %7562 = vmatpush2.bf16.msra.mxu0 %v1012
  %7563 = vmatprep.subr.bf16.mxu0 %v1011
  %7564 = vmatpush2.bf16.msra.mxu0 %v1010
  %7565 = vmatprep.subr.bf16.mxu0 %v1009
  %7566 = vmatpush2.bf16.msra.mxu0 %v1008
  %7567 = vmatprep.subr.bf16.mxu0 %v1007
  %7568 = vmatpush2.bf16.msra.mxu0 %v1006
  %7569 = vmatprep.subr.bf16.mxu0 %v1005
  %7570 = vmatpush2.bf16.msra.mxu0 %v1004
  %7571 = vmatprep.mubr.bf16.mxu0 %v7538
  %7572 = vmatmul.mubr.bf16.gmra.mxu0 %v7537
  %v7573 = vpop.f32.mrf.mxu0
  %v7574 = vadd.f32 %v789, %v7573
  %v7575 = vpop.f32.mrf.mxu0
  %v7576 = vadd.f32 %v793, %v7575
  %v7577 = vpop.f32.mrf.mxu0
  %v7578 = vpop.f32.mrf.mxu0
  %7579 = vdwg.mxu0
  %7580 = vmatprep.subr.bf16.mxu0 %v1035
  %7581 = vmatpush1.bf16.msra.mxu0 %v1034
  %7582 = vmatprep.subr.bf16.mxu0 %v1033
  %7583 = vmatpush1.bf16.msra.mxu0 %v1032
  %7584 = vmatprep.subr.bf16.mxu0 %v1031
  %7585 = vmatpush1.bf16.msra.mxu0 %v1030
  %7586 = vmatprep.subr.bf16.mxu0 %v1029
  %7587 = vmatpush1.bf16.msra.mxu0 %v1028
  %7588 = vmatprep.subr.bf16.mxu0 %v1027
  %7589 = vmatpush1.bf16.msra.mxu0 %v1026
  %7590 = vmatprep.subr.bf16.mxu0 %v1025
  %7591 = vmatpush1.bf16.msra.mxu0 %v1024
  %7592 = vmatprep.subr.bf16.mxu0 %v1023
  %7593 = vmatpush1.bf16.msra.mxu0 %v1022
  %7594 = vmatprep.subr.bf16.mxu0 %v1021
  %7595 = vmatpush1.bf16.msra.mxu0 %v1020
  %7596 = vmatprep.subr.bf16.mxu0 %v1051
  %7597 = vmatpush2.bf16.msra.mxu0 %v1050
  %7598 = vmatprep.subr.bf16.mxu0 %v1049
  %7599 = vmatpush2.bf16.msra.mxu0 %v1048
  %7600 = vmatprep.subr.bf16.mxu0 %v1047
  %7601 = vmatpush2.bf16.msra.mxu0 %v1046
  %7602 = vmatprep.subr.bf16.mxu0 %v1045
  %7603 = vmatpush2.bf16.msra.mxu0 %v1044
  %7604 = vmatprep.subr.bf16.mxu0 %v1043
  %7605 = vmatpush2.bf16.msra.mxu0 %v1042
  %7606 = vmatprep.subr.bf16.mxu0 %v1041
  %7607 = vmatpush2.bf16.msra.mxu0 %v1040
  %7608 = vmatprep.subr.bf16.mxu0 %v1039
  %7609 = vmatpush2.bf16.msra.mxu0 %v1038
  %7610 = vmatprep.subr.bf16.mxu0 %v1037
  %7611 = vmatpush2.bf16.msra.mxu0 %v1036
  %7612 = vmatprep.mubr.bf16.mxu0 %v7318
  %7613 = vmatmul.mubr.bf16.gmra.mxu0 %v7317
  %v7614 = vpop.f32.mrf.mxu0
  %v7615 = vadd.f32 %v7574, %v7614
  %v7616 = vpop.f32.mrf.mxu0
  %v7617 = vadd.f32 %v7576, %v7616
  %v7618 = vpop.f32.mrf.mxu0
  %v7619 = vpop.f32.mrf.mxu0
  %7620 = vdwg.mxu0
  %v7621 = vtanh.pop %v7615
  %v7622 = vtanh.pop %v7617
  %v7623 = vpack.c.bf16 %v7621, %v7621
  %v7624 = vpack.c.bf16 %v7622, %v7622
  %s7625 = scalar_lea.vmem %s6, 2688
  %v7626 = vld [vmem:[%s7625] sm:$0xf]
  %v7627 = vld [vmem:[%s7625 + $0x4] sm:$0xf]
  %v7628 = vld [vmem:[%s7625 + $0x8] sm:$0xf]
  %v7629 = vld [vmem:[%s7625 + $0xc] sm:$0xf]
  %v7630 = vld [vmem:[%s7625 + $0x10] sm:$0xf]
  %v7631 = vld [vmem:[%s7625 + $0x14] sm:$0xf]
  %v7632 = vld [vmem:[%s7625 + $0x18] sm:$0xf]
  %v7633 = vld [vmem:[%s7625 + $0x1c] sm:$0xf]
  %v7634 = vld [vmem:[%s7625 + $0x20] sm:$0xf]
  %v7635 = vld [vmem:[%s7625 + $0x24] sm:$0xf]
  %v7636 = vld [vmem:[%s7625 + $0x28] sm:$0xf]
  %v7637 = vld [vmem:[%s7625 + $0x2c] sm:$0xf]
  %v7638 = vld [vmem:[%s7625 + $0x30] sm:$0xf]
  %v7639 = vld [vmem:[%s7625 + $0x34] sm:$0xf]
  %v7640 = vld [vmem:[%s7625 + $0x38] sm:$0xf]
  %v7641 = vld [vmem:[%s7625 + $0x3c] sm:$0xf]
  %v7642 = vld [vmem:[%s7625 + $0x40] sm:$0xf]
  %v7643 = vld [vmem:[%s7625 + $0x44] sm:$0xf]
  %v7644 = vld [vmem:[%s7625 + $0x48] sm:$0xf]
  %v7645 = vld [vmem:[%s7625 + $0x4c] sm:$0xf]
  %v7646 = vld [vmem:[%s7625 + $0x50] sm:$0xf]
  %v7647 = vld [vmem:[%s7625 + $0x54] sm:$0xf]
  %v7648 = vld [vmem:[%s7625 + $0x58] sm:$0xf]
  %v7649 = vld [vmem:[%s7625 + $0x5c] sm:$0xf]
  %v7650 = vld [vmem:[%s7625 + $0x60] sm:$0xf]
  %v7651 = vld [vmem:[%s7625 + $0x64] sm:$0xf]
  %v7652 = vld [vmem:[%s7625 + $0x68] sm:$0xf]
  %v7653 = vld [vmem:[%s7625 + $0x6c] sm:$0xf]
  %v7654 = vld [vmem:[%s7625 + $0x70] sm:$0xf]
  %v7655 = vld [vmem:[%s7625 + $0x74] sm:$0xf]
  %v7656 = vld [vmem:[%s7625 + $0x78] sm:$0xf]
  %v7657 = vld [vmem:[%s7625 + $0x7c] sm:$0xf]
  %v7690 = vunpack.c.l.b16 %v7626
  %v7691 = vunpack.c.l.b16 %v7627
  %v7692 = vunpack.c.l.b16 %v7628
  %v7693 = vunpack.c.l.b16 %v7629
  %v7694 = vunpack.c.l.b16 %v7630
  %v7695 = vunpack.c.l.b16 %v7631
  %v7696 = vunpack.c.l.b16 %v7632
  %v7697 = vunpack.c.l.b16 %v7633
  %v7698 = vunpack.c.l.b16 %v7634
  %v7699 = vunpack.c.l.b16 %v7635
  %v7700 = vunpack.c.l.b16 %v7636
  %v7701 = vunpack.c.l.b16 %v7637
  %v7702 = vunpack.c.l.b16 %v7638
  %v7703 = vunpack.c.l.b16 %v7639
  %v7704 = vunpack.c.l.b16 %v7640
  %v7705 = vunpack.c.l.b16 %v7641
  %v7706 = vunpack.c.l.b16 %v7642
  %v7707 = vunpack.c.l.b16 %v7643
  %v7708 = vunpack.c.l.b16 %v7644
  %v7709 = vunpack.c.l.b16 %v7645
  %v7710 = vunpack.c.l.b16 %v7646
  %v7711 = vunpack.c.l.b16 %v7647
  %v7712 = vunpack.c.l.b16 %v7648
  %v7713 = vunpack.c.l.b16 %v7649
  %v7714 = vunpack.c.l.b16 %v7650
  %v7715 = vunpack.c.l.b16 %v7651
  %v7716 = vunpack.c.l.b16 %v7652
  %v7717 = vunpack.c.l.b16 %v7653
  %v7718 = vunpack.c.l.b16 %v7654
  %v7719 = vunpack.c.l.b16 %v7655
  %v7720 = vunpack.c.l.b16 %v7656
  %v7721 = vunpack.c.l.b16 %v7657
  %v7722 = vpack.c.b16 %v7691, %v7690
  %v7723 = vpack.c.b16 %v7693, %v7692
  %v7724 = vpack.c.b16 %v7695, %v7694
  %v7725 = vpack.c.b16 %v7697, %v7696
  %v7726 = vpack.c.b16 %v7699, %v7698
  %v7727 = vpack.c.b16 %v7701, %v7700
  %v7728 = vpack.c.b16 %v7703, %v7702
  %v7729 = vpack.c.b16 %v7705, %v7704
  %v7730 = vpack.c.b16 %v7707, %v7706
  %v7731 = vpack.c.b16 %v7709, %v7708
  %v7732 = vpack.c.b16 %v7711, %v7710
  %v7733 = vpack.c.b16 %v7713, %v7712
  %v7734 = vpack.c.b16 %v7715, %v7714
  %v7735 = vpack.c.b16 %v7717, %v7716
  %v7736 = vpack.c.b16 %v7719, %v7718
  %v7737 = vpack.c.b16 %v7721, %v7720
  %7754 = vmatprep.subr.bf16.mxu0 0
  %7755 = vmatpush1.bf16.msra.mxu0 %v7729
  %7756 = vmatprep.subr.bf16.mxu0 0
  %7757 = vmatpush1.bf16.msra.mxu0 %v7728
  %7758 = vmatprep.subr.bf16.mxu0 0
  %7759 = vmatpush1.bf16.msra.mxu0 %v7727
  %7760 = vmatprep.subr.bf16.mxu0 0
  %7761 = vmatpush1.bf16.msra.mxu0 %v7726
  %7762 = vmatprep.subr.bf16.mxu0 0
  %7763 = vmatpush1.bf16.msra.mxu0 %v7725
  %7764 = vmatprep.subr.bf16.mxu0 0
  %7765 = vmatpush1.bf16.msra.mxu0 %v7724
  %7766 = vmatprep.subr.bf16.mxu0 0
  %7767 = vmatpush1.bf16.msra.mxu0 %v7723
  %7768 = vmatprep.subr.bf16.mxu0 0
  %7769 = vmatpush1.bf16.msra.mxu0 %v7722
  %7770 = vmatprep.subr.bf16.mxu0 0
  %7771 = vmatpush2.bf16.msra.mxu0 %v7737
  %7772 = vmatprep.subr.bf16.mxu0 0
  %7773 = vmatpush2.bf16.msra.mxu0 %v7736
  %7774 = vmatprep.subr.bf16.mxu0 0
  %7775 = vmatpush2.bf16.msra.mxu0 %v7735
  %7776 = vmatprep.subr.bf16.mxu0 0
  %7777 = vmatpush2.bf16.msra.mxu0 %v7734
  %7778 = vmatprep.subr.bf16.mxu0 0
  %7779 = vmatpush2.bf16.msra.mxu0 %v7733
  %7780 = vmatprep.subr.bf16.mxu0 0
  %7781 = vmatpush2.bf16.msra.mxu0 %v7732
  %7782 = vmatprep.subr.bf16.mxu0 0
  %7783 = vmatpush2.bf16.msra.mxu0 %v7731
  %7784 = vmatprep.subr.bf16.mxu0 0
  %7785 = vmatpush2.bf16.msra.mxu0 %v7730
  %7786 = vmatprep.mubr.bf16.mxu0 %v7624
  %7787 = vmatmul.mubr.bf16.gmra.mxu0 %v7623
  %v7788 = vpop.f32.mrf.mxu0
  %v7789 = vadd.f32 0.0, %v7788
  %v7790 = vpop.f32.mrf.mxu0
  %v7791 = vpop.f32.mrf.mxu0
  %v7792 = vpop.f32.mrf.mxu0
  %7793 = vdwg.mxu0
  %v7794 = vadd.f32 %v7488, %v7789
  %s7795 = scalar_lea.vmem [#allocation2], 352
  %v7796 = vld [vmem:[%s7795] sm:$0xff]
  %v7797 = vld [vmem:[%s7795 + $0x8] sm:$0xff]
  %7798 = vmatprep.subr.bf16.mxu0 %v625
  %7799 = vmatpush1.bf16.msra.mxu0 %v624
  %7800 = vmatprep.subr.bf16.mxu0 %v623
  %7801 = vmatpush1.bf16.msra.mxu0 %v622
  %7802 = vmatprep.subr.bf16.mxu0 %v621
  %7803 = vmatpush1.bf16.msra.mxu0 %v620
  %7804 = vmatprep.subr.bf16.mxu0 %v619
  %7805 = vmatpush1.bf16.msra.mxu0 %v618
  %7806 = vmatprep.subr.bf16.mxu0 %v617
  %7807 = vmatpush1.bf16.msra.mxu0 %v616
  %7808 = vmatprep.subr.bf16.mxu0 %v615
  %7809 = vmatpush1.bf16.msra.mxu0 %v614
  %7810 = vmatprep.subr.bf16.mxu0 %v613
  %7811 = vmatpush1.bf16.msra.mxu0 %v612
  %7812 = vmatprep.subr.bf16.mxu0 %v611
  %7813 = vmatpush1.bf16.msra.mxu0 %v610
  %7814 = vmatprep.subr.bf16.mxu0 %v641
  %7815 = vmatpush2.bf16.msra.mxu0 %v640
  %7816 = vmatprep.subr.bf16.mxu0 %v639
  %7817 = vmatpush2.bf16.msra.mxu0 %v638
  %7818 = vmatprep.subr.bf16.mxu0 %v637
  %7819 = vmatpush2.bf16.msra.mxu0 %v636
  %7820 = vmatprep.subr.bf16.mxu0 %v635
  %7821 = vmatpush2.bf16.msra.mxu0 %v634
  %7822 = vmatprep.subr.bf16.mxu0 %v633
  %7823 = vmatpush2.bf16.msra.mxu0 %v632
  %7824 = vmatprep.subr.bf16.mxu0 %v631
  %7825 = vmatpush2.bf16.msra.mxu0 %v630
  %7826 = vmatprep.subr.bf16.mxu0 %v629
  %7827 = vmatpush2.bf16.msra.mxu0 %v628
  %7828 = vmatprep.subr.bf16.mxu0 %v627
  %7829 = vmatpush2.bf16.msra.mxu0 %v626
  %7830 = vmatprep.mubr.bf16.mxu0 %v7538
  %7831 = vmatmul.mubr.bf16.gmra.mxu0 %v7537
  %v7832 = vpop.f32.mrf.mxu0
  %v7833 = vadd.f32 0.0, %v7832
  %v7834 = vpop.f32.mrf.mxu0
  %v7835 = vadd.f32 0.0, %v7834
  %v7836 = vpop.f32.mrf.mxu0
  %v7837 = vpop.f32.mrf.mxu0
  %7838 = vdwg.mxu0
  %v7839 = vadd.f32 %v7796, %v7833
  %v7840 = vadd.f32 %v7797, %v7835
  %v7841 = vtanh.pop %v7839
  %v7842 = vtanh.pop %v7840
  %v7843 = vpack.c.bf16 %v7841, %v7841
  %v7844 = vpack.c.bf16 %v7842, %v7842
  %7845 = vmatprep.subr.bf16.mxu0 %v1003
  %7846 = vmatpush1.bf16.msra.mxu0 %v1002
  %7847 = vmatprep.subr.bf16.mxu0 %v1001
  %7848 = vmatpush1.bf16.msra.mxu0 %v1000
  %7849 = vmatprep.subr.bf16.mxu0 %v999
  %7850 = vmatpush1.bf16.msra.mxu0 %v998
  %7851 = vmatprep.subr.bf16.mxu0 %v997
  %7852 = vmatpush1.bf16.msra.mxu0 %v996
  %7853 = vmatprep.subr.bf16.mxu0 %v995
  %7854 = vmatpush1.bf16.msra.mxu0 %v994
  %7855 = vmatprep.subr.bf16.mxu0 %v993
  %7856 = vmatpush1.bf16.msra.mxu0 %v992
  %7857 = vmatprep.subr.bf16.mxu0 %v991
  %7858 = vmatpush1.bf16.msra.mxu0 %v990
  %7859 = vmatprep.subr.bf16.mxu0 %v989
  %7860 = vmatpush1.bf16.msra.mxu0 %v988
  %7861 = vmatprep.subr.bf16.mxu0 %v1019
  %7862 = vmatpush2.bf16.msra.mxu0 %v1018
  %7863 = vmatprep.subr.bf16.mxu0 %v1017
  %7864 = vmatpush2.bf16.msra.mxu0 %v1016
  %7865 = vmatprep.subr.bf16.mxu0 %v1015
  %7866 = vmatpush2.bf16.msra.mxu0 %v1014
  %7867 = vmatprep.subr.bf16.mxu0 %v1013
  %7868 = vmatpush2.bf16.msra.mxu0 %v1012
  %7869 = vmatprep.subr.bf16.mxu0 %v1011
  %7870 = vmatpush2.bf16.msra.mxu0 %v1010
  %7871 = vmatprep.subr.bf16.mxu0 %v1009
  %7872 = vmatpush2.bf16.msra.mxu0 %v1008
  %7873 = vmatprep.subr.bf16.mxu0 %v1007
  %7874 = vmatpush2.bf16.msra.mxu0 %v1006
  %7875 = vmatprep.subr.bf16.mxu0 %v1005
  %7876 = vmatpush2.bf16.msra.mxu0 %v1004
  %7877 = vmatprep.mubr.bf16.mxu0 %v7844
  %7878 = vmatmul.mubr.bf16.gmra.mxu0 %v7843
  %v7879 = vpop.f32.mrf.mxu0
  %v7880 = vadd.f32 %v789, %v7879
  %v7881 = vpop.f32.mrf.mxu0
  %v7882 = vadd.f32 %v793, %v7881
  %v7883 = vpop.f32.mrf.mxu0
  %v7884 = vpop.f32.mrf.mxu0
  %7885 = vdwg.mxu0
  %7886 = vmatprep.subr.bf16.mxu0 %v1035
  %7887 = vmatpush1.bf16.msra.mxu0 %v1034
  %7888 = vmatprep.subr.bf16.mxu0 %v1033
  %7889 = vmatpush1.bf16.msra.mxu0 %v1032
  %7890 = vmatprep.subr.bf16.mxu0 %v1031
  %7891 = vmatpush1.bf16.msra.mxu0 %v1030
  %7892 = vmatprep.subr.bf16.mxu0 %v1029
  %7893 = vmatpush1.bf16.msra.mxu0 %v1028
  %7894 = vmatprep.subr.bf16.mxu0 %v1027
  %7895 = vmatpush1.bf16.msra.mxu0 %v1026
  %7896 = vmatprep.subr.bf16.mxu0 %v1025
  %7897 = vmatpush1.bf16.msra.mxu0 %v1024
  %7898 = vmatprep.subr.bf16.mxu0 %v1023
  %7899 = vmatpush1.bf16.msra.mxu0 %v1022
  %7900 = vmatprep.subr.bf16.mxu0 %v1021
  %7901 = vmatpush1.bf16.msra.mxu0 %v1020
  %7902 = vmatprep.subr.bf16.mxu0 %v1051
  %7903 = vmatpush2.bf16.msra.mxu0 %v1050
  %7904 = vmatprep.subr.bf16.mxu0 %v1049
  %7905 = vmatpush2.bf16.msra.mxu0 %v1048
  %7906 = vmatprep.subr.bf16.mxu0 %v1047
  %7907 = vmatpush2.bf16.msra.mxu0 %v1046
  %7908 = vmatprep.subr.bf16.mxu0 %v1045
  %7909 = vmatpush2.bf16.msra.mxu0 %v1044
  %7910 = vmatprep.subr.bf16.mxu0 %v1043
  %7911 = vmatpush2.bf16.msra.mxu0 %v1042
  %7912 = vmatprep.subr.bf16.mxu0 %v1041
  %7913 = vmatpush2.bf16.msra.mxu0 %v1040
  %7914 = vmatprep.subr.bf16.mxu0 %v1039
  %7915 = vmatpush2.bf16.msra.mxu0 %v1038
  %7916 = vmatprep.subr.bf16.mxu0 %v1037
  %7917 = vmatpush2.bf16.msra.mxu0 %v1036
  %7918 = vmatprep.mubr.bf16.mxu0 %v7624
  %7919 = vmatmul.mubr.bf16.gmra.mxu0 %v7623
  %v7920 = vpop.f32.mrf.mxu0
  %v7921 = vadd.f32 %v7880, %v7920
  %v7922 = vpop.f32.mrf.mxu0
  %v7923 = vadd.f32 %v7882, %v7922
  %v7924 = vpop.f32.mrf.mxu0
  %v7925 = vpop.f32.mrf.mxu0
  %7926 = vdwg.mxu0
  %v7927 = vtanh.pop %v7921
  %v7928 = vtanh.pop %v7923
  %v7929 = vpack.c.bf16 %v7927, %v7927
  %v7930 = vpack.c.bf16 %v7928, %v7928
  %s7931 = scalar_lea.vmem %s6, 2816
  %v7932 = vld [vmem:[%s7931] sm:$0xf]
  %v7933 = vld [vmem:[%s7931 + $0x4] sm:$0xf]
  %v7934 = vld [vmem:[%s7931 + $0x8] sm:$0xf]
  %v7935 = vld [vmem:[%s7931 + $0xc] sm:$0xf]
  %v7936 = vld [vmem:[%s7931 + $0x10] sm:$0xf]
  %v7937 = vld [vmem:[%s7931 + $0x14] sm:$0xf]
  %v7938 = vld [vmem:[%s7931 + $0x18] sm:$0xf]
  %v7939 = vld [vmem:[%s7931 + $0x1c] sm:$0xf]
  %v7940 = vld [vmem:[%s7931 + $0x20] sm:$0xf]
  %v7941 = vld [vmem:[%s7931 + $0x24] sm:$0xf]
  %v7942 = vld [vmem:[%s7931 + $0x28] sm:$0xf]
  %v7943 = vld [vmem:[%s7931 + $0x2c] sm:$0xf]
  %v7944 = vld [vmem:[%s7931 + $0x30] sm:$0xf]
  %v7945 = vld [vmem:[%s7931 + $0x34] sm:$0xf]
  %v7946 = vld [vmem:[%s7931 + $0x38] sm:$0xf]
  %v7947 = vld [vmem:[%s7931 + $0x3c] sm:$0xf]
  %v7948 = vld [vmem:[%s7931 + $0x40] sm:$0xf]
  %v7949 = vld [vmem:[%s7931 + $0x44] sm:$0xf]
  %v7950 = vld [vmem:[%s7931 + $0x48] sm:$0xf]
  %v7951 = vld [vmem:[%s7931 + $0x4c] sm:$0xf]
  %v7952 = vld [vmem:[%s7931 + $0x50] sm:$0xf]
  %v7953 = vld [vmem:[%s7931 + $0x54] sm:$0xf]
  %v7954 = vld [vmem:[%s7931 + $0x58] sm:$0xf]
  %v7955 = vld [vmem:[%s7931 + $0x5c] sm:$0xf]
  %v7956 = vld [vmem:[%s7931 + $0x60] sm:$0xf]
  %v7957 = vld [vmem:[%s7931 + $0x64] sm:$0xf]
  %v7958 = vld [vmem:[%s7931 + $0x68] sm:$0xf]
  %v7959 = vld [vmem:[%s7931 + $0x6c] sm:$0xf]
  %v7960 = vld [vmem:[%s7931 + $0x70] sm:$0xf]
  %v7961 = vld [vmem:[%s7931 + $0x74] sm:$0xf]
  %v7962 = vld [vmem:[%s7931 + $0x78] sm:$0xf]
  %v7963 = vld [vmem:[%s7931 + $0x7c] sm:$0xf]
  %v7996 = vunpack.c.l.b16 %v7932
  %v7997 = vunpack.c.l.b16 %v7933
  %v7998 = vunpack.c.l.b16 %v7934
  %v7999 = vunpack.c.l.b16 %v7935
  %v8000 = vunpack.c.l.b16 %v7936
  %v8001 = vunpack.c.l.b16 %v7937
  %v8002 = vunpack.c.l.b16 %v7938
  %v8003 = vunpack.c.l.b16 %v7939
  %v8004 = vunpack.c.l.b16 %v7940
  %v8005 = vunpack.c.l.b16 %v7941
  %v8006 = vunpack.c.l.b16 %v7942
  %v8007 = vunpack.c.l.b16 %v7943
  %v8008 = vunpack.c.l.b16 %v7944
  %v8009 = vunpack.c.l.b16 %v7945
  %v8010 = vunpack.c.l.b16 %v7946
  %v8011 = vunpack.c.l.b16 %v7947
  %v8012 = vunpack.c.l.b16 %v7948
  %v8013 = vunpack.c.l.b16 %v7949
  %v8014 = vunpack.c.l.b16 %v7950
  %v8015 = vunpack.c.l.b16 %v7951
  %v8016 = vunpack.c.l.b16 %v7952
  %v8017 = vunpack.c.l.b16 %v7953
  %v8018 = vunpack.c.l.b16 %v7954
  %v8019 = vunpack.c.l.b16 %v7955
  %v8020 = vunpack.c.l.b16 %v7956
  %v8021 = vunpack.c.l.b16 %v7957
  %v8022 = vunpack.c.l.b16 %v7958
  %v8023 = vunpack.c.l.b16 %v7959
  %v8024 = vunpack.c.l.b16 %v7960
  %v8025 = vunpack.c.l.b16 %v7961
  %v8026 = vunpack.c.l.b16 %v7962
  %v8027 = vunpack.c.l.b16 %v7963
  %v8028 = vpack.c.b16 %v7997, %v7996
  %v8029 = vpack.c.b16 %v7999, %v7998
  %v8030 = vpack.c.b16 %v8001, %v8000
  %v8031 = vpack.c.b16 %v8003, %v8002
  %v8032 = vpack.c.b16 %v8005, %v8004
  %v8033 = vpack.c.b16 %v8007, %v8006
  %v8034 = vpack.c.b16 %v8009, %v8008
  %v8035 = vpack.c.b16 %v8011, %v8010
  %v8036 = vpack.c.b16 %v8013, %v8012
  %v8037 = vpack.c.b16 %v8015, %v8014
  %v8038 = vpack.c.b16 %v8017, %v8016
  %v8039 = vpack.c.b16 %v8019, %v8018
  %v8040 = vpack.c.b16 %v8021, %v8020
  %v8041 = vpack.c.b16 %v8023, %v8022
  %v8042 = vpack.c.b16 %v8025, %v8024
  %v8043 = vpack.c.b16 %v8027, %v8026
  %8060 = vmatprep.subr.bf16.mxu0 0
  %8061 = vmatpush1.bf16.msra.mxu0 %v8035
  %8062 = vmatprep.subr.bf16.mxu0 0
  %8063 = vmatpush1.bf16.msra.mxu0 %v8034
  %8064 = vmatprep.subr.bf16.mxu0 0
  %8065 = vmatpush1.bf16.msra.mxu0 %v8033
  %8066 = vmatprep.subr.bf16.mxu0 0
  %8067 = vmatpush1.bf16.msra.mxu0 %v8032
  %8068 = vmatprep.subr.bf16.mxu0 0
  %8069 = vmatpush1.bf16.msra.mxu0 %v8031
  %8070 = vmatprep.subr.bf16.mxu0 0
  %8071 = vmatpush1.bf16.msra.mxu0 %v8030
  %8072 = vmatprep.subr.bf16.mxu0 0
  %8073 = vmatpush1.bf16.msra.mxu0 %v8029
  %8074 = vmatprep.subr.bf16.mxu0 0
  %8075 = vmatpush1.bf16.msra.mxu0 %v8028
  %8076 = vmatprep.subr.bf16.mxu0 0
  %8077 = vmatpush2.bf16.msra.mxu0 %v8043
  %8078 = vmatprep.subr.bf16.mxu0 0
  %8079 = vmatpush2.bf16.msra.mxu0 %v8042
  %8080 = vmatprep.subr.bf16.mxu0 0
  %8081 = vmatpush2.bf16.msra.mxu0 %v8041
  %8082 = vmatprep.subr.bf16.mxu0 0
  %8083 = vmatpush2.bf16.msra.mxu0 %v8040
  %8084 = vmatprep.subr.bf16.mxu0 0
  %8085 = vmatpush2.bf16.msra.mxu0 %v8039
  %8086 = vmatprep.subr.bf16.mxu0 0
  %8087 = vmatpush2.bf16.msra.mxu0 %v8038
  %8088 = vmatprep.subr.bf16.mxu0 0
  %8089 = vmatpush2.bf16.msra.mxu0 %v8037
  %8090 = vmatprep.subr.bf16.mxu0 0
  %8091 = vmatpush2.bf16.msra.mxu0 %v8036
  %8092 = vmatprep.mubr.bf16.mxu0 %v7930
  %8093 = vmatmul.mubr.bf16.gmra.mxu0 %v7929
  %v8094 = vpop.f32.mrf.mxu0
  %v8095 = vadd.f32 0.0, %v8094
  %v8096 = vpop.f32.mrf.mxu0
  %v8097 = vpop.f32.mrf.mxu0
  %v8098 = vpop.f32.mrf.mxu0
  %8099 = vdwg.mxu0
  %v8100 = vadd.f32 %v7794, %v8095
  %s8101 = scalar_lea.vmem [#allocation2], 368
  %v8102 = vld [vmem:[%s8101] sm:$0xff]
  %v8103 = vld [vmem:[%s8101 + $0x8] sm:$0xff]
  %8104 = vmatprep.subr.bf16.mxu0 %v625
  %8105 = vmatpush1.bf16.msra.mxu0 %v624
  %8106 = vmatprep.subr.bf16.mxu0 %v623
  %8107 = vmatpush1.bf16.msra.mxu0 %v622
  %8108 = vmatprep.subr.bf16.mxu0 %v621
  %8109 = vmatpush1.bf16.msra.mxu0 %v620
  %8110 = vmatprep.subr.bf16.mxu0 %v619
  %8111 = vmatpush1.bf16.msra.mxu0 %v618
  %8112 = vmatprep.subr.bf16.mxu0 %v617
  %8113 = vmatpush1.bf16.msra.mxu0 %v616
  %8114 = vmatprep.subr.bf16.mxu0 %v615
  %8115 = vmatpush1.bf16.msra.mxu0 %v614
  %8116 = vmatprep.subr.bf16.mxu0 %v613
  %8117 = vmatpush1.bf16.msra.mxu0 %v612
  %8118 = vmatprep.subr.bf16.mxu0 %v611
  %8119 = vmatpush1.bf16.msra.mxu0 %v610
  %8120 = vmatprep.subr.bf16.mxu0 %v641
  %8121 = vmatpush2.bf16.msra.mxu0 %v640
  %8122 = vmatprep.subr.bf16.mxu0 %v639
  %8123 = vmatpush2.bf16.msra.mxu0 %v638
  %8124 = vmatprep.subr.bf16.mxu0 %v637
  %8125 = vmatpush2.bf16.msra.mxu0 %v636
  %8126 = vmatprep.subr.bf16.mxu0 %v635
  %8127 = vmatpush2.bf16.msra.mxu0 %v634
  %8128 = vmatprep.subr.bf16.mxu0 %v633
  %8129 = vmatpush2.bf16.msra.mxu0 %v632
  %8130 = vmatprep.subr.bf16.mxu0 %v631
  %8131 = vmatpush2.bf16.msra.mxu0 %v630
  %8132 = vmatprep.subr.bf16.mxu0 %v629
  %8133 = vmatpush2.bf16.msra.mxu0 %v628
  %8134 = vmatprep.subr.bf16.mxu0 %v627
  %8135 = vmatpush2.bf16.msra.mxu0 %v626
  %8136 = vmatprep.mubr.bf16.mxu0 %v7844
  %8137 = vmatmul.mubr.bf16.gmra.mxu0 %v7843
  %v8138 = vpop.f32.mrf.mxu0
  %v8139 = vadd.f32 0.0, %v8138
  %v8140 = vpop.f32.mrf.mxu0
  %v8141 = vadd.f32 0.0, %v8140
  %v8142 = vpop.f32.mrf.mxu0
  %v8143 = vpop.f32.mrf.mxu0
  %8144 = vdwg.mxu0
  %v8145 = vadd.f32 %v8102, %v8139
  %v8146 = vadd.f32 %v8103, %v8141
  %v8147 = vtanh.pop %v8145
  %v8148 = vtanh.pop %v8146
  %v8149 = vpack.c.bf16 %v8147, %v8147
  %v8150 = vpack.c.bf16 %v8148, %v8148
  %8151 = vmatprep.subr.bf16.mxu0 %v1003
  %8152 = vmatpush1.bf16.msra.mxu0 %v1002
  %8153 = vmatprep.subr.bf16.mxu0 %v1001
  %8154 = vmatpush1.bf16.msra.mxu0 %v1000
  %8155 = vmatprep.subr.bf16.mxu0 %v999
  %8156 = vmatpush1.bf16.msra.mxu0 %v998
  %8157 = vmatprep.subr.bf16.mxu0 %v997
  %8158 = vmatpush1.bf16.msra.mxu0 %v996
  %8159 = vmatprep.subr.bf16.mxu0 %v995
  %8160 = vmatpush1.bf16.msra.mxu0 %v994
  %8161 = vmatprep.subr.bf16.mxu0 %v993
  %8162 = vmatpush1.bf16.msra.mxu0 %v992
  %8163 = vmatprep.subr.bf16.mxu0 %v991
  %8164 = vmatpush1.bf16.msra.mxu0 %v990
  %8165 = vmatprep.subr.bf16.mxu0 %v989
  %8166 = vmatpush1.bf16.msra.mxu0 %v988
  %8167 = vmatprep.subr.bf16.mxu0 %v1019
  %8168 = vmatpush2.bf16.msra.mxu0 %v1018
  %8169 = vmatprep.subr.bf16.mxu0 %v1017
  %8170 = vmatpush2.bf16.msra.mxu0 %v1016
  %8171 = vmatprep.subr.bf16.mxu0 %v1015
  %8172 = vmatpush2.bf16.msra.mxu0 %v1014
  %8173 = vmatprep.subr.bf16.mxu0 %v1013
  %8174 = vmatpush2.bf16.msra.mxu0 %v1012
  %8175 = vmatprep.subr.bf16.mxu0 %v1011
  %8176 = vmatpush2.bf16.msra.mxu0 %v1010
  %8177 = vmatprep.subr.bf16.mxu0 %v1009
  %8178 = vmatpush2.bf16.msra.mxu0 %v1008
  %8179 = vmatprep.subr.bf16.mxu0 %v1007
  %8180 = vmatpush2.bf16.msra.mxu0 %v1006
  %8181 = vmatprep.subr.bf16.mxu0 %v1005
  %8182 = vmatpush2.bf16.msra.mxu0 %v1004
  %8183 = vmatprep.mubr.bf16.mxu0 %v8150
  %8184 = vmatmul.mubr.bf16.gmra.mxu0 %v8149
  %v8185 = vpop.f32.mrf.mxu0
  %v8186 = vadd.f32 %v789, %v8185
  %v8187 = vpop.f32.mrf.mxu0
  %v8188 = vadd.f32 %v793, %v8187
  %v8189 = vpop.f32.mrf.mxu0
  %v8190 = vpop.f32.mrf.mxu0
  %8191 = vdwg.mxu0
  %8192 = vmatprep.subr.bf16.mxu0 %v1035
  %8193 = vmatpush1.bf16.msra.mxu0 %v1034
  %8194 = vmatprep.subr.bf16.mxu0 %v1033
  %8195 = vmatpush1.bf16.msra.mxu0 %v1032
  %8196 = vmatprep.subr.bf16.mxu0 %v1031
  %8197 = vmatpush1.bf16.msra.mxu0 %v1030
  %8198 = vmatprep.subr.bf16.mxu0 %v1029
  %8199 = vmatpush1.bf16.msra.mxu0 %v1028
  %8200 = vmatprep.subr.bf16.mxu0 %v1027
  %8201 = vmatpush1.bf16.msra.mxu0 %v1026
  %8202 = vmatprep.subr.bf16.mxu0 %v1025
  %8203 = vmatpush1.bf16.msra.mxu0 %v1024
  %8204 = vmatprep.subr.bf16.mxu0 %v1023
  %8205 = vmatpush1.bf16.msra.mxu0 %v1022
  %8206 = vmatprep.subr.bf16.mxu0 %v1021
  %8207 = vmatpush1.bf16.msra.mxu0 %v1020
  %8208 = vmatprep.subr.bf16.mxu0 %v1051
  %8209 = vmatpush2.bf16.msra.mxu0 %v1050
  %8210 = vmatprep.subr.bf16.mxu0 %v1049
  %8211 = vmatpush2.bf16.msra.mxu0 %v1048
  %8212 = vmatprep.subr.bf16.mxu0 %v1047
  %8213 = vmatpush2.bf16.msra.mxu0 %v1046
  %8214 = vmatprep.subr.bf16.mxu0 %v1045
  %8215 = vmatpush2.bf16.msra.mxu0 %v1044
  %8216 = vmatprep.subr.bf16.mxu0 %v1043
  %8217 = vmatpush2.bf16.msra.mxu0 %v1042
  %8218 = vmatprep.subr.bf16.mxu0 %v1041
  %8219 = vmatpush2.bf16.msra.mxu0 %v1040
  %8220 = vmatprep.subr.bf16.mxu0 %v1039
  %8221 = vmatpush2.bf16.msra.mxu0 %v1038
  %8222 = vmatprep.subr.bf16.mxu0 %v1037
  %8223 = vmatpush2.bf16.msra.mxu0 %v1036
  %8224 = vmatprep.mubr.bf16.mxu0 %v7930
  %8225 = vmatmul.mubr.bf16.gmra.mxu0 %v7929
  %v8226 = vpop.f32.mrf.mxu0
  %v8227 = vadd.f32 %v8186, %v8226
  %v8228 = vpop.f32.mrf.mxu0
  %v8229 = vadd.f32 %v8188, %v8228
  %v8230 = vpop.f32.mrf.mxu0
  %v8231 = vpop.f32.mrf.mxu0
  %8232 = vdwg.mxu0
  %v8233 = vtanh.pop %v8227
  %v8234 = vtanh.pop %v8229
  %v8235 = vpack.c.bf16 %v8233, %v8233
  %v8236 = vpack.c.bf16 %v8234, %v8234
  %s8237 = scalar_lea.vmem %s6, 2944
  %v8238 = vld [vmem:[%s8237] sm:$0xf]
  %v8239 = vld [vmem:[%s8237 + $0x4] sm:$0xf]
  %v8240 = vld [vmem:[%s8237 + $0x8] sm:$0xf]
  %v8241 = vld [vmem:[%s8237 + $0xc] sm:$0xf]
  %v8242 = vld [vmem:[%s8237 + $0x10] sm:$0xf]
  %v8243 = vld [vmem:[%s8237 + $0x14] sm:$0xf]
  %v8244 = vld [vmem:[%s8237 + $0x18] sm:$0xf]
  %v8245 = vld [vmem:[%s8237 + $0x1c] sm:$0xf]
  %v8246 = vld [vmem:[%s8237 + $0x20] sm:$0xf]
  %v8247 = vld [vmem:[%s8237 + $0x24] sm:$0xf]
  %v8248 = vld [vmem:[%s8237 + $0x28] sm:$0xf]
  %v8249 = vld [vmem:[%s8237 + $0x2c] sm:$0xf]
  %v8250 = vld [vmem:[%s8237 + $0x30] sm:$0xf]
  %v8251 = vld [vmem:[%s8237 + $0x34] sm:$0xf]
  %v8252 = vld [vmem:[%s8237 + $0x38] sm:$0xf]
  %v8253 = vld [vmem:[%s8237 + $0x3c] sm:$0xf]
  %v8254 = vld [vmem:[%s8237 + $0x40] sm:$0xf]
  %v8255 = vld [vmem:[%s8237 + $0x44] sm:$0xf]
  %v8256 = vld [vmem:[%s8237 + $0x48] sm:$0xf]
  %v8257 = vld [vmem:[%s8237 + $0x4c] sm:$0xf]
  %v8258 = vld [vmem:[%s8237 + $0x50] sm:$0xf]
  %v8259 = vld [vmem:[%s8237 + $0x54] sm:$0xf]
  %v8260 = vld [vmem:[%s8237 + $0x58] sm:$0xf]
  %v8261 = vld [vmem:[%s8237 + $0x5c] sm:$0xf]
  %v8262 = vld [vmem:[%s8237 + $0x60] sm:$0xf]
  %v8263 = vld [vmem:[%s8237 + $0x64] sm:$0xf]
  %v8264 = vld [vmem:[%s8237 + $0x68] sm:$0xf]
  %v8265 = vld [vmem:[%s8237 + $0x6c] sm:$0xf]
  %v8266 = vld [vmem:[%s8237 + $0x70] sm:$0xf]
  %v8267 = vld [vmem:[%s8237 + $0x74] sm:$0xf]
  %v8268 = vld [vmem:[%s8237 + $0x78] sm:$0xf]
  %v8269 = vld [vmem:[%s8237 + $0x7c] sm:$0xf]
  %v8302 = vunpack.c.l.b16 %v8238
  %v8303 = vunpack.c.l.b16 %v8239
  %v8304 = vunpack.c.l.b16 %v8240
  %v8305 = vunpack.c.l.b16 %v8241
  %v8306 = vunpack.c.l.b16 %v8242
  %v8307 = vunpack.c.l.b16 %v8243
  %v8308 = vunpack.c.l.b16 %v8244
  %v8309 = vunpack.c.l.b16 %v8245
  %v8310 = vunpack.c.l.b16 %v8246
  %v8311 = vunpack.c.l.b16 %v8247
  %v8312 = vunpack.c.l.b16 %v8248
  %v8313 = vunpack.c.l.b16 %v8249
  %v8314 = vunpack.c.l.b16 %v8250
  %v8315 = vunpack.c.l.b16 %v8251
  %v8316 = vunpack.c.l.b16 %v8252
  %v8317 = vunpack.c.l.b16 %v8253
  %v8318 = vunpack.c.l.b16 %v8254
  %v8319 = vunpack.c.l.b16 %v8255
  %v8320 = vunpack.c.l.b16 %v8256
  %v8321 = vunpack.c.l.b16 %v8257
  %v8322 = vunpack.c.l.b16 %v8258
  %v8323 = vunpack.c.l.b16 %v8259
  %v8324 = vunpack.c.l.b16 %v8260
  %v8325 = vunpack.c.l.b16 %v8261
  %v8326 = vunpack.c.l.b16 %v8262
  %v8327 = vunpack.c.l.b16 %v8263
  %v8328 = vunpack.c.l.b16 %v8264
  %v8329 = vunpack.c.l.b16 %v8265
  %v8330 = vunpack.c.l.b16 %v8266
  %v8331 = vunpack.c.l.b16 %v8267
  %v8332 = vunpack.c.l.b16 %v8268
  %v8333 = vunpack.c.l.b16 %v8269
  %v8334 = vpack.c.b16 %v8303, %v8302
  %v8335 = vpack.c.b16 %v8305, %v8304
  %v8336 = vpack.c.b16 %v8307, %v8306
  %v8337 = vpack.c.b16 %v8309, %v8308
  %v8338 = vpack.c.b16 %v8311, %v8310
  %v8339 = vpack.c.b16 %v8313, %v8312
  %v8340 = vpack.c.b16 %v8315, %v8314
  %v8341 = vpack.c.b16 %v8317, %v8316
  %v8342 = vpack.c.b16 %v8319, %v8318
  %v8343 = vpack.c.b16 %v8321, %v8320
  %v8344 = vpack.c.b16 %v8323, %v8322
  %v8345 = vpack.c.b16 %v8325, %v8324
  %v8346 = vpack.c.b16 %v8327, %v8326
  %v8347 = vpack.c.b16 %v8329, %v8328
  %v8348 = vpack.c.b16 %v8331, %v8330
  %v8349 = vpack.c.b16 %v8333, %v8332
  %8366 = vmatprep.subr.bf16.mxu0 0
  %8367 = vmatpush1.bf16.msra.mxu0 %v8341
  %8368 = vmatprep.subr.bf16.mxu0 0
  %8369 = vmatpush1.bf16.msra.mxu0 %v8340
  %8370 = vmatprep.subr.bf16.mxu0 0
  %8371 = vmatpush1.bf16.msra.mxu0 %v8339
  %8372 = vmatprep.subr.bf16.mxu0 0
  %8373 = vmatpush1.bf16.msra.mxu0 %v8338
  %8374 = vmatprep.subr.bf16.mxu0 0
  %8375 = vmatpush1.bf16.msra.mxu0 %v8337
  %8376 = vmatprep.subr.bf16.mxu0 0
  %8377 = vmatpush1.bf16.msra.mxu0 %v8336
  %8378 = vmatprep.subr.bf16.mxu0 0
  %8379 = vmatpush1.bf16.msra.mxu0 %v8335
  %8380 = vmatprep.subr.bf16.mxu0 0
  %8381 = vmatpush1.bf16.msra.mxu0 %v8334
  %8382 = vmatprep.subr.bf16.mxu0 0
  %8383 = vmatpush2.bf16.msra.mxu0 %v8349
  %8384 = vmatprep.subr.bf16.mxu0 0
  %8385 = vmatpush2.bf16.msra.mxu0 %v8348
  %8386 = vmatprep.subr.bf16.mxu0 0
  %8387 = vmatpush2.bf16.msra.mxu0 %v8347
  %8388 = vmatprep.subr.bf16.mxu0 0
  %8389 = vmatpush2.bf16.msra.mxu0 %v8346
  %8390 = vmatprep.subr.bf16.mxu0 0
  %8391 = vmatpush2.bf16.msra.mxu0 %v8345
  %8392 = vmatprep.subr.bf16.mxu0 0
  %8393 = vmatpush2.bf16.msra.mxu0 %v8344
  %8394 = vmatprep.subr.bf16.mxu0 0
  %8395 = vmatpush2.bf16.msra.mxu0 %v8343
  %8396 = vmatprep.subr.bf16.mxu0 0
  %8397 = vmatpush2.bf16.msra.mxu0 %v8342
  %8398 = vmatprep.mubr.bf16.mxu0 %v8236
  %8399 = vmatmul.mubr.bf16.gmra.mxu0 %v8235
  %v8400 = vpop.f32.mrf.mxu0
  %v8401 = vadd.f32 0.0, %v8400
  %v8402 = vpop.f32.mrf.mxu0
  %v8403 = vpop.f32.mrf.mxu0
  %v8404 = vpop.f32.mrf.mxu0
  %8405 = vdwg.mxu0
  %v8406 = vadd.f32 %v8100, %v8401
  %s8407 = scalar_lea.vmem [#allocation2], 384
  %v8408 = vld [vmem:[%s8407] sm:$0xff]
  %v8409 = vld [vmem:[%s8407 + $0x8] sm:$0xff]
  %8410 = vmatprep.subr.bf16.mxu0 %v625
  %8411 = vmatpush1.bf16.msra.mxu0 %v624
  %8412 = vmatprep.subr.bf16.mxu0 %v623
  %8413 = vmatpush1.bf16.msra.mxu0 %v622
  %8414 = vmatprep.subr.bf16.mxu0 %v621
  %8415 = vmatpush1.bf16.msra.mxu0 %v620
  %8416 = vmatprep.subr.bf16.mxu0 %v619
  %8417 = vmatpush1.bf16.msra.mxu0 %v618
  %8418 = vmatprep.subr.bf16.mxu0 %v617
  %8419 = vmatpush1.bf16.msra.mxu0 %v616
  %8420 = vmatprep.subr.bf16.mxu0 %v615
  %8421 = vmatpush1.bf16.msra.mxu0 %v614
  %8422 = vmatprep.subr.bf16.mxu0 %v613
  %8423 = vmatpush1.bf16.msra.mxu0 %v612
  %8424 = vmatprep.subr.bf16.mxu0 %v611
  %8425 = vmatpush1.bf16.msra.mxu0 %v610
  %8426 = vmatprep.subr.bf16.mxu0 %v641
  %8427 = vmatpush2.bf16.msra.mxu0 %v640
  %8428 = vmatprep.subr.bf16.mxu0 %v639
  %8429 = vmatpush2.bf16.msra.mxu0 %v638
  %8430 = vmatprep.subr.bf16.mxu0 %v637
  %8431 = vmatpush2.bf16.msra.mxu0 %v636
  %8432 = vmatprep.subr.bf16.mxu0 %v635
  %8433 = vmatpush2.bf16.msra.mxu0 %v634
  %8434 = vmatprep.subr.bf16.mxu0 %v633
  %8435 = vmatpush2.bf16.msra.mxu0 %v632
  %8436 = vmatprep.subr.bf16.mxu0 %v631
  %8437 = vmatpush2.bf16.msra.mxu0 %v630
  %8438 = vmatprep.subr.bf16.mxu0 %v629
  %8439 = vmatpush2.bf16.msra.mxu0 %v628
  %8440 = vmatprep.subr.bf16.mxu0 %v627
  %8441 = vmatpush2.bf16.msra.mxu0 %v626
  %8442 = vmatprep.mubr.bf16.mxu0 %v8150
  %8443 = vmatmul.mubr.bf16.gmra.mxu0 %v8149
  %v8444 = vpop.f32.mrf.mxu0
  %v8445 = vadd.f32 0.0, %v8444
  %v8446 = vpop.f32.mrf.mxu0
  %v8447 = vadd.f32 0.0, %v8446
  %v8448 = vpop.f32.mrf.mxu0
  %v8449 = vpop.f32.mrf.mxu0
  %8450 = vdwg.mxu0
  %v8451 = vadd.f32 %v8408, %v8445
  %v8452 = vadd.f32 %v8409, %v8447
  %v8453 = vtanh.pop %v8451
  %v8454 = vtanh.pop %v8452
  %v8455 = vpack.c.bf16 %v8453, %v8453
  %v8456 = vpack.c.bf16 %v8454, %v8454
  %8457 = vmatprep.subr.bf16.mxu0 %v1003
  %8458 = vmatpush1.bf16.msra.mxu0 %v1002
  %8459 = vmatprep.subr.bf16.mxu0 %v1001
  %8460 = vmatpush1.bf16.msra.mxu0 %v1000
  %8461 = vmatprep.subr.bf16.mxu0 %v999
  %8462 = vmatpush1.bf16.msra.mxu0 %v998
  %8463 = vmatprep.subr.bf16.mxu0 %v997
  %8464 = vmatpush1.bf16.msra.mxu0 %v996
  %8465 = vmatprep.subr.bf16.mxu0 %v995
  %8466 = vmatpush1.bf16.msra.mxu0 %v994
  %8467 = vmatprep.subr.bf16.mxu0 %v993
  %8468 = vmatpush1.bf16.msra.mxu0 %v992
  %8469 = vmatprep.subr.bf16.mxu0 %v991
  %8470 = vmatpush1.bf16.msra.mxu0 %v990
  %8471 = vmatprep.subr.bf16.mxu0 %v989
  %8472 = vmatpush1.bf16.msra.mxu0 %v988
  %8473 = vmatprep.subr.bf16.mxu0 %v1019
  %8474 = vmatpush2.bf16.msra.mxu0 %v1018
  %8475 = vmatprep.subr.bf16.mxu0 %v1017
  %8476 = vmatpush2.bf16.msra.mxu0 %v1016
  %8477 = vmatprep.subr.bf16.mxu0 %v1015
  %8478 = vmatpush2.bf16.msra.mxu0 %v1014
  %8479 = vmatprep.subr.bf16.mxu0 %v1013
  %8480 = vmatpush2.bf16.msra.mxu0 %v1012
  %8481 = vmatprep.subr.bf16.mxu0 %v1011
  %8482 = vmatpush2.bf16.msra.mxu0 %v1010
  %8483 = vmatprep.subr.bf16.mxu0 %v1009
  %8484 = vmatpush2.bf16.msra.mxu0 %v1008
  %8485 = vmatprep.subr.bf16.mxu0 %v1007
  %8486 = vmatpush2.bf16.msra.mxu0 %v1006
  %8487 = vmatprep.subr.bf16.mxu0 %v1005
  %8488 = vmatpush2.bf16.msra.mxu0 %v1004
  %8489 = vmatprep.mubr.bf16.mxu0 %v8456
  %8490 = vmatmul.mubr.bf16.gmra.mxu0 %v8455
  %v8491 = vpop.f32.mrf.mxu0
  %v8492 = vadd.f32 %v789, %v8491
  %v8493 = vpop.f32.mrf.mxu0
  %v8494 = vadd.f32 %v793, %v8493
  %v8495 = vpop.f32.mrf.mxu0
  %v8496 = vpop.f32.mrf.mxu0
  %8497 = vdwg.mxu0
  %8498 = vmatprep.subr.bf16.mxu0 %v1035
  %8499 = vmatpush1.bf16.msra.mxu0 %v1034
  %8500 = vmatprep.subr.bf16.mxu0 %v1033
  %8501 = vmatpush1.bf16.msra.mxu0 %v1032
  %8502 = vmatprep.subr.bf16.mxu0 %v1031
  %8503 = vmatpush1.bf16.msra.mxu0 %v1030
  %8504 = vmatprep.subr.bf16.mxu0 %v1029
  %8505 = vmatpush1.bf16.msra.mxu0 %v1028
  %8506 = vmatprep.subr.bf16.mxu0 %v1027
  %8507 = vmatpush1.bf16.msra.mxu0 %v1026
  %8508 = vmatprep.subr.bf16.mxu0 %v1025
  %8509 = vmatpush1.bf16.msra.mxu0 %v1024
  %8510 = vmatprep.subr.bf16.mxu0 %v1023
  %8511 = vmatpush1.bf16.msra.mxu0 %v1022
  %8512 = vmatprep.subr.bf16.mxu0 %v1021
  %8513 = vmatpush1.bf16.msra.mxu0 %v1020
  %8514 = vmatprep.subr.bf16.mxu0 %v1051
  %8515 = vmatpush2.bf16.msra.mxu0 %v1050
  %8516 = vmatprep.subr.bf16.mxu0 %v1049
  %8517 = vmatpush2.bf16.msra.mxu0 %v1048
  %8518 = vmatprep.subr.bf16.mxu0 %v1047
  %8519 = vmatpush2.bf16.msra.mxu0 %v1046
  %8520 = vmatprep.subr.bf16.mxu0 %v1045
  %8521 = vmatpush2.bf16.msra.mxu0 %v1044
  %8522 = vmatprep.subr.bf16.mxu0 %v1043
  %8523 = vmatpush2.bf16.msra.mxu0 %v1042
  %8524 = vmatprep.subr.bf16.mxu0 %v1041
  %8525 = vmatpush2.bf16.msra.mxu0 %v1040
  %8526 = vmatprep.subr.bf16.mxu0 %v1039
  %8527 = vmatpush2.bf16.msra.mxu0 %v1038
  %8528 = vmatprep.subr.bf16.mxu0 %v1037
  %8529 = vmatpush2.bf16.msra.mxu0 %v1036
  %8530 = vmatprep.mubr.bf16.mxu0 %v8236
  %8531 = vmatmul.mubr.bf16.gmra.mxu0 %v8235
  %v8532 = vpop.f32.mrf.mxu0
  %v8533 = vadd.f32 %v8492, %v8532
  %v8534 = vpop.f32.mrf.mxu0
  %v8535 = vadd.f32 %v8494, %v8534
  %v8536 = vpop.f32.mrf.mxu0
  %v8537 = vpop.f32.mrf.mxu0
  %8538 = vdwg.mxu0
  %v8539 = vtanh.pop %v8533
  %v8540 = vtanh.pop %v8535
  %v8541 = vpack.c.bf16 %v8539, %v8539
  %v8542 = vpack.c.bf16 %v8540, %v8540
  %s8543 = scalar_lea.vmem %s6, 3072
  %v8544 = vld [vmem:[%s8543] sm:$0xf]
  %v8545 = vld [vmem:[%s8543 + $0x4] sm:$0xf]
  %v8546 = vld [vmem:[%s8543 + $0x8] sm:$0xf]
  %v8547 = vld [vmem:[%s8543 + $0xc] sm:$0xf]
  %v8548 = vld [vmem:[%s8543 + $0x10] sm:$0xf]
  %v8549 = vld [vmem:[%s8543 + $0x14] sm:$0xf]
  %v8550 = vld [vmem:[%s8543 + $0x18] sm:$0xf]
  %v8551 = vld [vmem:[%s8543 + $0x1c] sm:$0xf]
  %v8552 = vld [vmem:[%s8543 + $0x20] sm:$0xf]
  %v8553 = vld [vmem:[%s8543 + $0x24] sm:$0xf]
  %v8554 = vld [vmem:[%s8543 + $0x28] sm:$0xf]
  %v8555 = vld [vmem:[%s8543 + $0x2c] sm:$0xf]
  %v8556 = vld [vmem:[%s8543 + $0x30] sm:$0xf]
  %v8557 = vld [vmem:[%s8543 + $0x34] sm:$0xf]
  %v8558 = vld [vmem:[%s8543 + $0x38] sm:$0xf]
  %v8559 = vld [vmem:[%s8543 + $0x3c] sm:$0xf]
  %v8560 = vld [vmem:[%s8543 + $0x40] sm:$0xf]
  %v8561 = vld [vmem:[%s8543 + $0x44] sm:$0xf]
  %v8562 = vld [vmem:[%s8543 + $0x48] sm:$0xf]
  %v8563 = vld [vmem:[%s8543 + $0x4c] sm:$0xf]
  %v8564 = vld [vmem:[%s8543 + $0x50] sm:$0xf]
  %v8565 = vld [vmem:[%s8543 + $0x54] sm:$0xf]
  %v8566 = vld [vmem:[%s8543 + $0x58] sm:$0xf]
  %v8567 = vld [vmem:[%s8543 + $0x5c] sm:$0xf]
  %v8568 = vld [vmem:[%s8543 + $0x60] sm:$0xf]
  %v8569 = vld [vmem:[%s8543 + $0x64] sm:$0xf]
  %v8570 = vld [vmem:[%s8543 + $0x68] sm:$0xf]
  %v8571 = vld [vmem:[%s8543 + $0x6c] sm:$0xf]
  %v8572 = vld [vmem:[%s8543 + $0x70] sm:$0xf]
  %v8573 = vld [vmem:[%s8543 + $0x74] sm:$0xf]
  %v8574 = vld [vmem:[%s8543 + $0x78] sm:$0xf]
  %v8575 = vld [vmem:[%s8543 + $0x7c] sm:$0xf]
  %v8608 = vunpack.c.l.b16 %v8544
  %v8609 = vunpack.c.l.b16 %v8545
  %v8610 = vunpack.c.l.b16 %v8546
  %v8611 = vunpack.c.l.b16 %v8547
  %v8612 = vunpack.c.l.b16 %v8548
  %v8613 = vunpack.c.l.b16 %v8549
  %v8614 = vunpack.c.l.b16 %v8550
  %v8615 = vunpack.c.l.b16 %v8551
  %v8616 = vunpack.c.l.b16 %v8552
  %v8617 = vunpack.c.l.b16 %v8553
  %v8618 = vunpack.c.l.b16 %v8554
  %v8619 = vunpack.c.l.b16 %v8555
  %v8620 = vunpack.c.l.b16 %v8556
  %v8621 = vunpack.c.l.b16 %v8557
  %v8622 = vunpack.c.l.b16 %v8558
  %v8623 = vunpack.c.l.b16 %v8559
  %v8624 = vunpack.c.l.b16 %v8560
  %v8625 = vunpack.c.l.b16 %v8561
  %v8626 = vunpack.c.l.b16 %v8562
  %v8627 = vunpack.c.l.b16 %v8563
  %v8628 = vunpack.c.l.b16 %v8564
  %v8629 = vunpack.c.l.b16 %v8565
  %v8630 = vunpack.c.l.b16 %v8566
  %v8631 = vunpack.c.l.b16 %v8567
  %v8632 = vunpack.c.l.b16 %v8568
  %v8633 = vunpack.c.l.b16 %v8569
  %v8634 = vunpack.c.l.b16 %v8570
  %v8635 = vunpack.c.l.b16 %v8571
  %v8636 = vunpack.c.l.b16 %v8572
  %v8637 = vunpack.c.l.b16 %v8573
  %v8638 = vunpack.c.l.b16 %v8574
  %v8639 = vunpack.c.l.b16 %v8575
  %v8640 = vpack.c.b16 %v8609, %v8608
  %v8641 = vpack.c.b16 %v8611, %v8610
  %v8642 = vpack.c.b16 %v8613, %v8612
  %v8643 = vpack.c.b16 %v8615, %v8614
  %v8644 = vpack.c.b16 %v8617, %v8616
  %v8645 = vpack.c.b16 %v8619, %v8618
  %v8646 = vpack.c.b16 %v8621, %v8620
  %v8647 = vpack.c.b16 %v8623, %v8622
  %v8648 = vpack.c.b16 %v8625, %v8624
  %v8649 = vpack.c.b16 %v8627, %v8626
  %v8650 = vpack.c.b16 %v8629, %v8628
  %v8651 = vpack.c.b16 %v8631, %v8630
  %v8652 = vpack.c.b16 %v8633, %v8632
  %v8653 = vpack.c.b16 %v8635, %v8634
  %v8654 = vpack.c.b16 %v8637, %v8636
  %v8655 = vpack.c.b16 %v8639, %v8638
  %8672 = vmatprep.subr.bf16.mxu0 0
  %8673 = vmatpush1.bf16.msra.mxu0 %v8647
  %8674 = vmatprep.subr.bf16.mxu0 0
  %8675 = vmatpush1.bf16.msra.mxu0 %v8646
  %8676 = vmatprep.subr.bf16.mxu0 0
  %8677 = vmatpush1.bf16.msra.mxu0 %v8645
  %8678 = vmatprep.subr.bf16.mxu0 0
  %8679 = vmatpush1.bf16.msra.mxu0 %v8644
  %8680 = vmatprep.subr.bf16.mxu0 0
  %8681 = vmatpush1.bf16.msra.mxu0 %v8643
  %8682 = vmatprep.subr.bf16.mxu0 0
  %8683 = vmatpush1.bf16.msra.mxu0 %v8642
  %8684 = vmatprep.subr.bf16.mxu0 0
  %8685 = vmatpush1.bf16.msra.mxu0 %v8641
  %8686 = vmatprep.subr.bf16.mxu0 0
  %8687 = vmatpush1.bf16.msra.mxu0 %v8640
  %8688 = vmatprep.subr.bf16.mxu0 0
  %8689 = vmatpush2.bf16.msra.mxu0 %v8655
  %8690 = vmatprep.subr.bf16.mxu0 0
  %8691 = vmatpush2.bf16.msra.mxu0 %v8654
  %8692 = vmatprep.subr.bf16.mxu0 0
  %8693 = vmatpush2.bf16.msra.mxu0 %v8653
  %8694 = vmatprep.subr.bf16.mxu0 0
  %8695 = vmatpush2.bf16.msra.mxu0 %v8652
  %8696 = vmatprep.subr.bf16.mxu0 0
  %8697 = vmatpush2.bf16.msra.mxu0 %v8651
  %8698 = vmatprep.subr.bf16.mxu0 0
  %8699 = vmatpush2.bf16.msra.mxu0 %v8650
  %8700 = vmatprep.subr.bf16.mxu0 0
  %8701 = vmatpush2.bf16.msra.mxu0 %v8649
  %8702 = vmatprep.subr.bf16.mxu0 0
  %8703 = vmatpush2.bf16.msra.mxu0 %v8648
  %8704 = vmatprep.mubr.bf16.mxu0 %v8542
  %8705 = vmatmul.mubr.bf16.gmra.mxu0 %v8541
  %v8706 = vpop.f32.mrf.mxu0
  %v8707 = vadd.f32 0.0, %v8706
  %v8708 = vpop.f32.mrf.mxu0
  %v8709 = vpop.f32.mrf.mxu0
  %v8710 = vpop.f32.mrf.mxu0
  %8711 = vdwg.mxu0
  %v8712 = vadd.f32 %v8406, %v8707
  %s8713 = scalar_lea.vmem [#allocation2], 400
  %v8714 = vld [vmem:[%s8713] sm:$0xff]
  %v8715 = vld [vmem:[%s8713 + $0x8] sm:$0xff]
  %8716 = vmatprep.subr.bf16.mxu0 %v625
  %8717 = vmatpush1.bf16.msra.mxu0 %v624
  %8718 = vmatprep.subr.bf16.mxu0 %v623
  %8719 = vmatpush1.bf16.msra.mxu0 %v622
  %8720 = vmatprep.subr.bf16.mxu0 %v621
  %8721 = vmatpush1.bf16.msra.mxu0 %v620
  %8722 = vmatprep.subr.bf16.mxu0 %v619
  %8723 = vmatpush1.bf16.msra.mxu0 %v618
  %8724 = vmatprep.subr.bf16.mxu0 %v617
  %8725 = vmatpush1.bf16.msra.mxu0 %v616
  %8726 = vmatprep.subr.bf16.mxu0 %v615
  %8727 = vmatpush1.bf16.msra.mxu0 %v614
  %8728 = vmatprep.subr.bf16.mxu0 %v613
  %8729 = vmatpush1.bf16.msra.mxu0 %v612
  %8730 = vmatprep.subr.bf16.mxu0 %v611
  %8731 = vmatpush1.bf16.msra.mxu0 %v610
  %8732 = vmatprep.subr.bf16.mxu0 %v641
  %8733 = vmatpush2.bf16.msra.mxu0 %v640
  %8734 = vmatprep.subr.bf16.mxu0 %v639
  %8735 = vmatpush2.bf16.msra.mxu0 %v638
  %8736 = vmatprep.subr.bf16.mxu0 %v637
  %8737 = vmatpush2.bf16.msra.mxu0 %v636
  %8738 = vmatprep.subr.bf16.mxu0 %v635
  %8739 = vmatpush2.bf16.msra.mxu0 %v634
  %8740 = vmatprep.subr.bf16.mxu0 %v633
  %8741 = vmatpush2.bf16.msra.mxu0 %v632
  %8742 = vmatprep.subr.bf16.mxu0 %v631
  %8743 = vmatpush2.bf16.msra.mxu0 %v630
  %8744 = vmatprep.subr.bf16.mxu0 %v629
  %8745 = vmatpush2.bf16.msra.mxu0 %v628
  %8746 = vmatprep.subr.bf16.mxu0 %v627
  %8747 = vmatpush2.bf16.msra.mxu0 %v626
  %8748 = vmatprep.mubr.bf16.mxu0 %v8456
  %8749 = vmatmul.mubr.bf16.gmra.mxu0 %v8455
  %v8750 = vpop.f32.mrf.mxu0
  %v8751 = vadd.f32 0.0, %v8750
  %v8752 = vpop.f32.mrf.mxu0
  %v8753 = vadd.f32 0.0, %v8752
  %v8754 = vpop.f32.mrf.mxu0
  %v8755 = vpop.f32.mrf.mxu0
  %8756 = vdwg.mxu0
  %v8757 = vadd.f32 %v8714, %v8751
  %v8758 = vadd.f32 %v8715, %v8753
  %v8759 = vtanh.pop %v8757
  %v8760 = vtanh.pop %v8758
  %v8761 = vpack.c.bf16 %v8759, %v8759
  %v8762 = vpack.c.bf16 %v8760, %v8760
  %8763 = vmatprep.subr.bf16.mxu0 %v1003
  %8764 = vmatpush1.bf16.msra.mxu0 %v1002
  %8765 = vmatprep.subr.bf16.mxu0 %v1001
  %8766 = vmatpush1.bf16.msra.mxu0 %v1000
  %8767 = vmatprep.subr.bf16.mxu0 %v999
  %8768 = vmatpush1.bf16.msra.mxu0 %v998
  %8769 = vmatprep.subr.bf16.mxu0 %v997
  %8770 = vmatpush1.bf16.msra.mxu0 %v996
  %8771 = vmatprep.subr.bf16.mxu0 %v995
  %8772 = vmatpush1.bf16.msra.mxu0 %v994
  %8773 = vmatprep.subr.bf16.mxu0 %v993
  %8774 = vmatpush1.bf16.msra.mxu0 %v992
  %8775 = vmatprep.subr.bf16.mxu0 %v991
  %8776 = vmatpush1.bf16.msra.mxu0 %v990
  %8777 = vmatprep.subr.bf16.mxu0 %v989
  %8778 = vmatpush1.bf16.msra.mxu0 %v988
  %8779 = vmatprep.subr.bf16.mxu0 %v1019
  %8780 = vmatpush2.bf16.msra.mxu0 %v1018
  %8781 = vmatprep.subr.bf16.mxu0 %v1017
  %8782 = vmatpush2.bf16.msra.mxu0 %v1016
  %8783 = vmatprep.subr.bf16.mxu0 %v1015
  %8784 = vmatpush2.bf16.msra.mxu0 %v1014
  %8785 = vmatprep.subr.bf16.mxu0 %v1013
  %8786 = vmatpush2.bf16.msra.mxu0 %v1012
  %8787 = vmatprep.subr.bf16.mxu0 %v1011
  %8788 = vmatpush2.bf16.msra.mxu0 %v1010
  %8789 = vmatprep.subr.bf16.mxu0 %v1009
  %8790 = vmatpush2.bf16.msra.mxu0 %v1008
  %8791 = vmatprep.subr.bf16.mxu0 %v1007
  %8792 = vmatpush2.bf16.msra.mxu0 %v1006
  %8793 = vmatprep.subr.bf16.mxu0 %v1005
  %8794 = vmatpush2.bf16.msra.mxu0 %v1004
  %8795 = vmatprep.mubr.bf16.mxu0 %v8762
  %8796 = vmatmul.mubr.bf16.gmra.mxu0 %v8761
  %v8797 = vpop.f32.mrf.mxu0
  %v8798 = vadd.f32 %v789, %v8797
  %v8799 = vpop.f32.mrf.mxu0
  %v8800 = vadd.f32 %v793, %v8799
  %v8801 = vpop.f32.mrf.mxu0
  %v8802 = vpop.f32.mrf.mxu0
  %8803 = vdwg.mxu0
  %8804 = vmatprep.subr.bf16.mxu0 %v1035
  %8805 = vmatpush1.bf16.msra.mxu0 %v1034
  %8806 = vmatprep.subr.bf16.mxu0 %v1033
  %8807 = vmatpush1.bf16.msra.mxu0 %v1032
  %8808 = vmatprep.subr.bf16.mxu0 %v1031
  %8809 = vmatpush1.bf16.msra.mxu0 %v1030
  %8810 = vmatprep.subr.bf16.mxu0 %v1029
  %8811 = vmatpush1.bf16.msra.mxu0 %v1028
  %8812 = vmatprep.subr.bf16.mxu0 %v1027
  %8813 = vmatpush1.bf16.msra.mxu0 %v1026
  %8814 = vmatprep.subr.bf16.mxu0 %v1025
  %8815 = vmatpush1.bf16.msra.mxu0 %v1024
  %8816 = vmatprep.subr.bf16.mxu0 %v1023
  %8817 = vmatpush1.bf16.msra.mxu0 %v1022
  %8818 = vmatprep.subr.bf16.mxu0 %v1021
  %8819 = vmatpush1.bf16.msra.mxu0 %v1020
  %8820 = vmatprep.subr.bf16.mxu0 %v1051
  %8821 = vmatpush2.bf16.msra.mxu0 %v1050
  %8822 = vmatprep.subr.bf16.mxu0 %v1049
  %8823 = vmatpush2.bf16.msra.mxu0 %v1048
  %8824 = vmatprep.subr.bf16.mxu0 %v1047
  %8825 = vmatpush2.bf16.msra.mxu0 %v1046
  %8826 = vmatprep.subr.bf16.mxu0 %v1045
  %8827 = vmatpush2.bf16.msra.mxu0 %v1044
  %8828 = vmatprep.subr.bf16.mxu0 %v1043
  %8829 = vmatpush2.bf16.msra.mxu0 %v1042
  %8830 = vmatprep.subr.bf16.mxu0 %v1041
  %8831 = vmatpush2.bf16.msra.mxu0 %v1040
  %8832 = vmatprep.subr.bf16.mxu0 %v1039
  %8833 = vmatpush2.bf16.msra.mxu0 %v1038
  %8834 = vmatprep.subr.bf16.mxu0 %v1037
  %8835 = vmatpush2.bf16.msra.mxu0 %v1036
  %8836 = vmatprep.mubr.bf16.mxu0 %v8542
  %8837 = vmatmul.mubr.bf16.gmra.mxu0 %v8541
  %v8838 = vpop.f32.mrf.mxu0
  %v8839 = vadd.f32 %v8798, %v8838
  %v8840 = vpop.f32.mrf.mxu0
  %v8841 = vadd.f32 %v8800, %v8840
  %v8842 = vpop.f32.mrf.mxu0
  %v8843 = vpop.f32.mrf.mxu0
  %8844 = vdwg.mxu0
  %v8845 = vtanh.pop %v8839
  %v8846 = vtanh.pop %v8841
  %v8847 = vpack.c.bf16 %v8845, %v8845
  %v8848 = vpack.c.bf16 %v8846, %v8846
  %s8849 = scalar_lea.vmem %s6, 3200
  %v8850 = vld [vmem:[%s8849] sm:$0xf]
  %v8851 = vld [vmem:[%s8849 + $0x4] sm:$0xf]
  %v8852 = vld [vmem:[%s8849 + $0x8] sm:$0xf]
  %v8853 = vld [vmem:[%s8849 + $0xc] sm:$0xf]
  %v8854 = vld [vmem:[%s8849 + $0x10] sm:$0xf]
  %v8855 = vld [vmem:[%s8849 + $0x14] sm:$0xf]
  %v8856 = vld [vmem:[%s8849 + $0x18] sm:$0xf]
  %v8857 = vld [vmem:[%s8849 + $0x1c] sm:$0xf]
  %v8858 = vld [vmem:[%s8849 + $0x20] sm:$0xf]
  %v8859 = vld [vmem:[%s8849 + $0x24] sm:$0xf]
  %v8860 = vld [vmem:[%s8849 + $0x28] sm:$0xf]
  %v8861 = vld [vmem:[%s8849 + $0x2c] sm:$0xf]
  %v8862 = vld [vmem:[%s8849 + $0x30] sm:$0xf]
  %v8863 = vld [vmem:[%s8849 + $0x34] sm:$0xf]
  %v8864 = vld [vmem:[%s8849 + $0x38] sm:$0xf]
  %v8865 = vld [vmem:[%s8849 + $0x3c] sm:$0xf]
  %v8866 = vld [vmem:[%s8849 + $0x40] sm:$0xf]
  %v8867 = vld [vmem:[%s8849 + $0x44] sm:$0xf]
  %v8868 = vld [vmem:[%s8849 + $0x48] sm:$0xf]
  %v8869 = vld [vmem:[%s8849 + $0x4c] sm:$0xf]
  %v8870 = vld [vmem:[%s8849 + $0x50] sm:$0xf]
  %v8871 = vld [vmem:[%s8849 + $0x54] sm:$0xf]
  %v8872 = vld [vmem:[%s8849 + $0x58] sm:$0xf]
  %v8873 = vld [vmem:[%s8849 + $0x5c] sm:$0xf]
  %v8874 = vld [vmem:[%s8849 + $0x60] sm:$0xf]
  %v8875 = vld [vmem:[%s8849 + $0x64] sm:$0xf]
  %v8876 = vld [vmem:[%s8849 + $0x68] sm:$0xf]
  %v8877 = vld [vmem:[%s8849 + $0x6c] sm:$0xf]
  %v8878 = vld [vmem:[%s8849 + $0x70] sm:$0xf]
  %v8879 = vld [vmem:[%s8849 + $0x74] sm:$0xf]
  %v8880 = vld [vmem:[%s8849 + $0x78] sm:$0xf]
  %v8881 = vld [vmem:[%s8849 + $0x7c] sm:$0xf]
  %v8914 = vunpack.c.l.b16 %v8850
  %v8915 = vunpack.c.l.b16 %v8851
  %v8916 = vunpack.c.l.b16 %v8852
  %v8917 = vunpack.c.l.b16 %v8853
  %v8918 = vunpack.c.l.b16 %v8854
  %v8919 = vunpack.c.l.b16 %v8855
  %v8920 = vunpack.c.l.b16 %v8856
  %v8921 = vunpack.c.l.b16 %v8857
  %v8922 = vunpack.c.l.b16 %v8858
  %v8923 = vunpack.c.l.b16 %v8859
  %v8924 = vunpack.c.l.b16 %v8860
  %v8925 = vunpack.c.l.b16 %v8861
  %v8926 = vunpack.c.l.b16 %v8862
  %v8927 = vunpack.c.l.b16 %v8863
  %v8928 = vunpack.c.l.b16 %v8864
  %v8929 = vunpack.c.l.b16 %v8865
  %v8930 = vunpack.c.l.b16 %v8866
  %v8931 = vunpack.c.l.b16 %v8867
  %v8932 = vunpack.c.l.b16 %v8868
  %v8933 = vunpack.c.l.b16 %v8869
  %v8934 = vunpack.c.l.b16 %v8870
  %v8935 = vunpack.c.l.b16 %v8871
  %v8936 = vunpack.c.l.b16 %v8872
  %v8937 = vunpack.c.l.b16 %v8873
  %v8938 = vunpack.c.l.b16 %v8874
  %v8939 = vunpack.c.l.b16 %v8875
  %v8940 = vunpack.c.l.b16 %v8876
  %v8941 = vunpack.c.l.b16 %v8877
  %v8942 = vunpack.c.l.b16 %v8878
  %v8943 = vunpack.c.l.b16 %v8879
  %v8944 = vunpack.c.l.b16 %v8880
  %v8945 = vunpack.c.l.b16 %v8881
  %v8946 = vpack.c.b16 %v8915, %v8914
  %v8947 = vpack.c.b16 %v8917, %v8916
  %v8948 = vpack.c.b16 %v8919, %v8918
  %v8949 = vpack.c.b16 %v8921, %v8920
  %v8950 = vpack.c.b16 %v8923, %v8922
  %v8951 = vpack.c.b16 %v8925, %v8924
  %v8952 = vpack.c.b16 %v8927, %v8926
  %v8953 = vpack.c.b16 %v8929, %v8928
  %v8954 = vpack.c.b16 %v8931, %v8930
  %v8955 = vpack.c.b16 %v8933, %v8932
  %v8956 = vpack.c.b16 %v8935, %v8934
  %v8957 = vpack.c.b16 %v8937, %v8936
  %v8958 = vpack.c.b16 %v8939, %v8938
  %v8959 = vpack.c.b16 %v8941, %v8940
  %v8960 = vpack.c.b16 %v8943, %v8942
  %v8961 = vpack.c.b16 %v8945, %v8944
  %8978 = vmatprep.subr.bf16.mxu0 0
  %8979 = vmatpush1.bf16.msra.mxu0 %v8953
  %8980 = vmatprep.subr.bf16.mxu0 0
  %8981 = vmatpush1.bf16.msra.mxu0 %v8952
  %8982 = vmatprep.subr.bf16.mxu0 0
  %8983 = vmatpush1.bf16.msra.mxu0 %v8951
  %8984 = vmatprep.subr.bf16.mxu0 0
  %8985 = vmatpush1.bf16.msra.mxu0 %v8950
  %8986 = vmatprep.subr.bf16.mxu0 0
  %8987 = vmatpush1.bf16.msra.mxu0 %v8949
  %8988 = vmatprep.subr.bf16.mxu0 0
  %8989 = vmatpush1.bf16.msra.mxu0 %v8948
  %8990 = vmatprep.subr.bf16.mxu0 0
  %8991 = vmatpush1.bf16.msra.mxu0 %v8947
  %8992 = vmatprep.subr.bf16.mxu0 0
  %8993 = vmatpush1.bf16.msra.mxu0 %v8946
  %8994 = vmatprep.subr.bf16.mxu0 0
  %8995 = vmatpush2.bf16.msra.mxu0 %v8961
  %8996 = vmatprep.subr.bf16.mxu0 0
  %8997 = vmatpush2.bf16.msra.mxu0 %v8960
  %8998 = vmatprep.subr.bf16.mxu0 0
  %8999 = vmatpush2.bf16.msra.mxu0 %v8959
  %9000 = vmatprep.subr.bf16.mxu0 0
  %9001 = vmatpush2.bf16.msra.mxu0 %v8958
  %9002 = vmatprep.subr.bf16.mxu0 0
  %9003 = vmatpush2.bf16.msra.mxu0 %v8957
  %9004 = vmatprep.subr.bf16.mxu0 0
  %9005 = vmatpush2.bf16.msra.mxu0 %v8956
  %9006 = vmatprep.subr.bf16.mxu0 0
  %9007 = vmatpush2.bf16.msra.mxu0 %v8955
  %9008 = vmatprep.subr.bf16.mxu0 0
  %9009 = vmatpush2.bf16.msra.mxu0 %v8954
  %9010 = vmatprep.mubr.bf16.mxu0 %v8848
  %9011 = vmatmul.mubr.bf16.gmra.mxu0 %v8847
  %v9012 = vpop.f32.mrf.mxu0
  %v9013 = vadd.f32 0.0, %v9012
  %v9014 = vpop.f32.mrf.mxu0
  %v9015 = vpop.f32.mrf.mxu0
  %v9016 = vpop.f32.mrf.mxu0
  %9017 = vdwg.mxu0
  %v9018 = vadd.f32 %v8712, %v9013
  %s9019 = scalar_lea.vmem [#allocation2], 416
  %v9020 = vld [vmem:[%s9019] sm:$0xff]
  %v9021 = vld [vmem:[%s9019 + $0x8] sm:$0xff]
  %9022 = vmatprep.subr.bf16.mxu0 %v625
  %9023 = vmatpush1.bf16.msra.mxu0 %v624
  %9024 = vmatprep.subr.bf16.mxu0 %v623
  %9025 = vmatpush1.bf16.msra.mxu0 %v622
  %9026 = vmatprep.subr.bf16.mxu0 %v621
  %9027 = vmatpush1.bf16.msra.mxu0 %v620
  %9028 = vmatprep.subr.bf16.mxu0 %v619
  %9029 = vmatpush1.bf16.msra.mxu0 %v618
  %9030 = vmatprep.subr.bf16.mxu0 %v617
  %9031 = vmatpush1.bf16.msra.mxu0 %v616
  %9032 = vmatprep.subr.bf16.mxu0 %v615
  %9033 = vmatpush1.bf16.msra.mxu0 %v614
  %9034 = vmatprep.subr.bf16.mxu0 %v613
  %9035 = vmatpush1.bf16.msra.mxu0 %v612
  %9036 = vmatprep.subr.bf16.mxu0 %v611
  %9037 = vmatpush1.bf16.msra.mxu0 %v610
  %9038 = vmatprep.subr.bf16.mxu0 %v641
  %9039 = vmatpush2.bf16.msra.mxu0 %v640
  %9040 = vmatprep.subr.bf16.mxu0 %v639
  %9041 = vmatpush2.bf16.msra.mxu0 %v638
  %9042 = vmatprep.subr.bf16.mxu0 %v637
  %9043 = vmatpush2.bf16.msra.mxu0 %v636
  %9044 = vmatprep.subr.bf16.mxu0 %v635
  %9045 = vmatpush2.bf16.msra.mxu0 %v634
  %9046 = vmatprep.subr.bf16.mxu0 %v633
  %9047 = vmatpush2.bf16.msra.mxu0 %v632
  %9048 = vmatprep.subr.bf16.mxu0 %v631
  %9049 = vmatpush2.bf16.msra.mxu0 %v630
  %9050 = vmatprep.subr.bf16.mxu0 %v629
  %9051 = vmatpush2.bf16.msra.mxu0 %v628
  %9052 = vmatprep.subr.bf16.mxu0 %v627
  %9053 = vmatpush2.bf16.msra.mxu0 %v626
  %9054 = vmatprep.mubr.bf16.mxu0 %v8762
  %9055 = vmatmul.mubr.bf16.gmra.mxu0 %v8761
  %v9056 = vpop.f32.mrf.mxu0
  %v9057 = vadd.f32 0.0, %v9056
  %v9058 = vpop.f32.mrf.mxu0
  %v9059 = vadd.f32 0.0, %v9058
  %v9060 = vpop.f32.mrf.mxu0
  %v9061 = vpop.f32.mrf.mxu0
  %9062 = vdwg.mxu0
  %v9063 = vadd.f32 %v9020, %v9057
  %v9064 = vadd.f32 %v9021, %v9059
  %v9065 = vtanh.pop %v9063
  %v9066 = vtanh.pop %v9064
  %v9067 = vpack.c.bf16 %v9065, %v9065
  %v9068 = vpack.c.bf16 %v9066, %v9066
  %9069 = vmatprep.subr.bf16.mxu0 %v1003
  %9070 = vmatpush1.bf16.msra.mxu0 %v1002
  %9071 = vmatprep.subr.bf16.mxu0 %v1001
  %9072 = vmatpush1.bf16.msra.mxu0 %v1000
  %9073 = vmatprep.subr.bf16.mxu0 %v999
  %9074 = vmatpush1.bf16.msra.mxu0 %v998
  %9075 = vmatprep.subr.bf16.mxu0 %v997
  %9076 = vmatpush1.bf16.msra.mxu0 %v996
  %9077 = vmatprep.subr.bf16.mxu0 %v995
  %9078 = vmatpush1.bf16.msra.mxu0 %v994
  %9079 = vmatprep.subr.bf16.mxu0 %v993
  %9080 = vmatpush1.bf16.msra.mxu0 %v992
  %9081 = vmatprep.subr.bf16.mxu0 %v991
  %9082 = vmatpush1.bf16.msra.mxu0 %v990
  %9083 = vmatprep.subr.bf16.mxu0 %v989
  %9084 = vmatpush1.bf16.msra.mxu0 %v988
  %9085 = vmatprep.subr.bf16.mxu0 %v1019
  %9086 = vmatpush2.bf16.msra.mxu0 %v1018
  %9087 = vmatprep.subr.bf16.mxu0 %v1017
  %9088 = vmatpush2.bf16.msra.mxu0 %v1016
  %9089 = vmatprep.subr.bf16.mxu0 %v1015
  %9090 = vmatpush2.bf16.msra.mxu0 %v1014
  %9091 = vmatprep.subr.bf16.mxu0 %v1013
  %9092 = vmatpush2.bf16.msra.mxu0 %v1012
  %9093 = vmatprep.subr.bf16.mxu0 %v1011
  %9094 = vmatpush2.bf16.msra.mxu0 %v1010
  %9095 = vmatprep.subr.bf16.mxu0 %v1009
  %9096 = vmatpush2.bf16.msra.mxu0 %v1008
  %9097 = vmatprep.subr.bf16.mxu0 %v1007
  %9098 = vmatpush2.bf16.msra.mxu0 %v1006
  %9099 = vmatprep.subr.bf16.mxu0 %v1005
  %9100 = vmatpush2.bf16.msra.mxu0 %v1004
  %9101 = vmatprep.mubr.bf16.mxu0 %v9068
  %9102 = vmatmul.mubr.bf16.gmra.mxu0 %v9067
  %v9103 = vpop.f32.mrf.mxu0
  %v9104 = vadd.f32 %v789, %v9103
  %v9105 = vpop.f32.mrf.mxu0
  %v9106 = vadd.f32 %v793, %v9105
  %v9107 = vpop.f32.mrf.mxu0
  %v9108 = vpop.f32.mrf.mxu0
  %9109 = vdwg.mxu0
  %9110 = vmatprep.subr.bf16.mxu0 %v1035
  %9111 = vmatpush1.bf16.msra.mxu0 %v1034
  %9112 = vmatprep.subr.bf16.mxu0 %v1033
  %9113 = vmatpush1.bf16.msra.mxu0 %v1032
  %9114 = vmatprep.subr.bf16.mxu0 %v1031
  %9115 = vmatpush1.bf16.msra.mxu0 %v1030
  %9116 = vmatprep.subr.bf16.mxu0 %v1029
  %9117 = vmatpush1.bf16.msra.mxu0 %v1028
  %9118 = vmatprep.subr.bf16.mxu0 %v1027
  %9119 = vmatpush1.bf16.msra.mxu0 %v1026
  %9120 = vmatprep.subr.bf16.mxu0 %v1025
  %9121 = vmatpush1.bf16.msra.mxu0 %v1024
  %9122 = vmatprep.subr.bf16.mxu0 %v1023
  %9123 = vmatpush1.bf16.msra.mxu0 %v1022
  %9124 = vmatprep.subr.bf16.mxu0 %v1021
  %9125 = vmatpush1.bf16.msra.mxu0 %v1020
  %9126 = vmatprep.subr.bf16.mxu0 %v1051
  %9127 = vmatpush2.bf16.msra.mxu0 %v1050
  %9128 = vmatprep.subr.bf16.mxu0 %v1049
  %9129 = vmatpush2.bf16.msra.mxu0 %v1048
  %9130 = vmatprep.subr.bf16.mxu0 %v1047
  %9131 = vmatpush2.bf16.msra.mxu0 %v1046
  %9132 = vmatprep.subr.bf16.mxu0 %v1045
  %9133 = vmatpush2.bf16.msra.mxu0 %v1044
  %9134 = vmatprep.subr.bf16.mxu0 %v1043
  %9135 = vmatpush2.bf16.msra.mxu0 %v1042
  %9136 = vmatprep.subr.bf16.mxu0 %v1041
  %9137 = vmatpush2.bf16.msra.mxu0 %v1040
  %9138 = vmatprep.subr.bf16.mxu0 %v1039
  %9139 = vmatpush2.bf16.msra.mxu0 %v1038
  %9140 = vmatprep.subr.bf16.mxu0 %v1037
  %9141 = vmatpush2.bf16.msra.mxu0 %v1036
  %9142 = vmatprep.mubr.bf16.mxu0 %v8848
  %9143 = vmatmul.mubr.bf16.gmra.mxu0 %v8847
  %v9144 = vpop.f32.mrf.mxu0
  %v9145 = vadd.f32 %v9104, %v9144
  %v9146 = vpop.f32.mrf.mxu0
  %v9147 = vadd.f32 %v9106, %v9146
  %v9148 = vpop.f32.mrf.mxu0
  %v9149 = vpop.f32.mrf.mxu0
  %9150 = vdwg.mxu0
  %v9151 = vtanh.pop %v9145
  %v9152 = vtanh.pop %v9147
  %v9153 = vpack.c.bf16 %v9151, %v9151
  %v9154 = vpack.c.bf16 %v9152, %v9152
  %s9155 = scalar_lea.vmem %s6, 3328
  %v9156 = vld [vmem:[%s9155] sm:$0xf]
  %v9157 = vld [vmem:[%s9155 + $0x4] sm:$0xf]
  %v9158 = vld [vmem:[%s9155 + $0x8] sm:$0xf]
  %v9159 = vld [vmem:[%s9155 + $0xc] sm:$0xf]
  %v9160 = vld [vmem:[%s9155 + $0x10] sm:$0xf]
  %v9161 = vld [vmem:[%s9155 + $0x14] sm:$0xf]
  %v9162 = vld [vmem:[%s9155 + $0x18] sm:$0xf]
  %v9163 = vld [vmem:[%s9155 + $0x1c] sm:$0xf]
  %v9164 = vld [vmem:[%s9155 + $0x20] sm:$0xf]
  %v9165 = vld [vmem:[%s9155 + $0x24] sm:$0xf]
  %v9166 = vld [vmem:[%s9155 + $0x28] sm:$0xf]
  %v9167 = vld [vmem:[%s9155 + $0x2c] sm:$0xf]
  %v9168 = vld [vmem:[%s9155 + $0x30] sm:$0xf]
  %v9169 = vld [vmem:[%s9155 + $0x34] sm:$0xf]
  %v9170 = vld [vmem:[%s9155 + $0x38] sm:$0xf]
  %v9171 = vld [vmem:[%s9155 + $0x3c] sm:$0xf]
  %v9172 = vld [vmem:[%s9155 + $0x40] sm:$0xf]
  %v9173 = vld [vmem:[%s9155 + $0x44] sm:$0xf]
  %v9174 = vld [vmem:[%s9155 + $0x48] sm:$0xf]
  %v9175 = vld [vmem:[%s9155 + $0x4c] sm:$0xf]
  %v9176 = vld [vmem:[%s9155 + $0x50] sm:$0xf]
  %v9177 = vld [vmem:[%s9155 + $0x54] sm:$0xf]
  %v9178 = vld [vmem:[%s9155 + $0x58] sm:$0xf]
  %v9179 = vld [vmem:[%s9155 + $0x5c] sm:$0xf]
  %v9180 = vld [vmem:[%s9155 + $0x60] sm:$0xf]
  %v9181 = vld [vmem:[%s9155 + $0x64] sm:$0xf]
  %v9182 = vld [vmem:[%s9155 + $0x68] sm:$0xf]
  %v9183 = vld [vmem:[%s9155 + $0x6c] sm:$0xf]
  %v9184 = vld [vmem:[%s9155 + $0x70] sm:$0xf]
  %v9185 = vld [vmem:[%s9155 + $0x74] sm:$0xf]
  %v9186 = vld [vmem:[%s9155 + $0x78] sm:$0xf]
  %v9187 = vld [vmem:[%s9155 + $0x7c] sm:$0xf]
  %v9220 = vunpack.c.l.b16 %v9156
  %v9221 = vunpack.c.l.b16 %v9157
  %v9222 = vunpack.c.l.b16 %v9158
  %v9223 = vunpack.c.l.b16 %v9159
  %v9224 = vunpack.c.l.b16 %v9160
  %v9225 = vunpack.c.l.b16 %v9161
  %v9226 = vunpack.c.l.b16 %v9162
  %v9227 = vunpack.c.l.b16 %v9163
  %v9228 = vunpack.c.l.b16 %v9164
  %v9229 = vunpack.c.l.b16 %v9165
  %v9230 = vunpack.c.l.b16 %v9166
  %v9231 = vunpack.c.l.b16 %v9167
  %v9232 = vunpack.c.l.b16 %v9168
  %v9233 = vunpack.c.l.b16 %v9169
  %v9234 = vunpack.c.l.b16 %v9170
  %v9235 = vunpack.c.l.b16 %v9171
  %v9236 = vunpack.c.l.b16 %v9172
  %v9237 = vunpack.c.l.b16 %v9173
  %v9238 = vunpack.c.l.b16 %v9174
  %v9239 = vunpack.c.l.b16 %v9175
  %v9240 = vunpack.c.l.b16 %v9176
  %v9241 = vunpack.c.l.b16 %v9177
  %v9242 = vunpack.c.l.b16 %v9178
  %v9243 = vunpack.c.l.b16 %v9179
  %v9244 = vunpack.c.l.b16 %v9180
  %v9245 = vunpack.c.l.b16 %v9181
  %v9246 = vunpack.c.l.b16 %v9182
  %v9247 = vunpack.c.l.b16 %v9183
  %v9248 = vunpack.c.l.b16 %v9184
  %v9249 = vunpack.c.l.b16 %v9185
  %v9250 = vunpack.c.l.b16 %v9186
  %v9251 = vunpack.c.l.b16 %v9187
  %v9252 = vpack.c.b16 %v9221, %v9220
  %v9253 = vpack.c.b16 %v9223, %v9222
  %v9254 = vpack.c.b16 %v9225, %v9224
  %v9255 = vpack.c.b16 %v9227, %v9226
  %v9256 = vpack.c.b16 %v9229, %v9228
  %v9257 = vpack.c.b16 %v9231, %v9230
  %v9258 = vpack.c.b16 %v9233, %v9232
  %v9259 = vpack.c.b16 %v9235, %v9234
  %v9260 = vpack.c.b16 %v9237, %v9236
  %v9261 = vpack.c.b16 %v9239, %v9238
  %v9262 = vpack.c.b16 %v9241, %v9240
  %v9263 = vpack.c.b16 %v9243, %v9242
  %v9264 = vpack.c.b16 %v9245, %v9244
  %v9265 = vpack.c.b16 %v9247, %v9246
  %v9266 = vpack.c.b16 %v9249, %v9248
  %v9267 = vpack.c.b16 %v9251, %v9250
  %9284 = vmatprep.subr.bf16.mxu0 0
  %9285 = vmatpush1.bf16.msra.mxu0 %v9259
  %9286 = vmatprep.subr.bf16.mxu0 0
  %9287 = vmatpush1.bf16.msra.mxu0 %v9258
  %9288 = vmatprep.subr.bf16.mxu0 0
  %9289 = vmatpush1.bf16.msra.mxu0 %v9257
  %9290 = vmatprep.subr.bf16.mxu0 0
  %9291 = vmatpush1.bf16.msra.mxu0 %v9256
  %9292 = vmatprep.subr.bf16.mxu0 0
  %9293 = vmatpush1.bf16.msra.mxu0 %v9255
  %9294 = vmatprep.subr.bf16.mxu0 0
  %9295 = vmatpush1.bf16.msra.mxu0 %v9254
  %9296 = vmatprep.subr.bf16.mxu0 0
  %9297 = vmatpush1.bf16.msra.mxu0 %v9253
  %9298 = vmatprep.subr.bf16.mxu0 0
  %9299 = vmatpush1.bf16.msra.mxu0 %v9252
  %9300 = vmatprep.subr.bf16.mxu0 0
  %9301 = vmatpush2.bf16.msra.mxu0 %v9267
  %9302 = vmatprep.subr.bf16.mxu0 0
  %9303 = vmatpush2.bf16.msra.mxu0 %v9266
  %9304 = vmatprep.subr.bf16.mxu0 0
  %9305 = vmatpush2.bf16.msra.mxu0 %v9265
  %9306 = vmatprep.subr.bf16.mxu0 0
  %9307 = vmatpush2.bf16.msra.mxu0 %v9264
  %9308 = vmatprep.subr.bf16.mxu0 0
  %9309 = vmatpush2.bf16.msra.mxu0 %v9263
  %9310 = vmatprep.subr.bf16.mxu0 0
  %9311 = vmatpush2.bf16.msra.mxu0 %v9262
  %9312 = vmatprep.subr.bf16.mxu0 0
  %9313 = vmatpush2.bf16.msra.mxu0 %v9261
  %9314 = vmatprep.subr.bf16.mxu0 0
  %9315 = vmatpush2.bf16.msra.mxu0 %v9260
  %9316 = vmatprep.mubr.bf16.mxu0 %v9154
  %9317 = vmatmul.mubr.bf16.gmra.mxu0 %v9153
  %v9318 = vpop.f32.mrf.mxu0
  %v9319 = vadd.f32 0.0, %v9318
  %v9320 = vpop.f32.mrf.mxu0
  %v9321 = vpop.f32.mrf.mxu0
  %v9322 = vpop.f32.mrf.mxu0
  %9323 = vdwg.mxu0
  %v9324 = vadd.f32 %v9018, %v9319
  %s9325 = scalar_lea.vmem [#allocation2], 432
  %v9326 = vld [vmem:[%s9325] sm:$0xff]
  %v9327 = vld [vmem:[%s9325 + $0x8] sm:$0xff]
  %9328 = vmatprep.subr.bf16.mxu0 %v625
  %9329 = vmatpush1.bf16.msra.mxu0 %v624
  %9330 = vmatprep.subr.bf16.mxu0 %v623
  %9331 = vmatpush1.bf16.msra.mxu0 %v622
  %9332 = vmatprep.subr.bf16.mxu0 %v621
  %9333 = vmatpush1.bf16.msra.mxu0 %v620
  %9334 = vmatprep.subr.bf16.mxu0 %v619
  %9335 = vmatpush1.bf16.msra.mxu0 %v618
  %9336 = vmatprep.subr.bf16.mxu0 %v617
  %9337 = vmatpush1.bf16.msra.mxu0 %v616
  %9338 = vmatprep.subr.bf16.mxu0 %v615
  %9339 = vmatpush1.bf16.msra.mxu0 %v614
  %9340 = vmatprep.subr.bf16.mxu0 %v613
  %9341 = vmatpush1.bf16.msra.mxu0 %v612
  %9342 = vmatprep.subr.bf16.mxu0 %v611
  %9343 = vmatpush1.bf16.msra.mxu0 %v610
  %9344 = vmatprep.subr.bf16.mxu0 %v641
  %9345 = vmatpush2.bf16.msra.mxu0 %v640
  %9346 = vmatprep.subr.bf16.mxu0 %v639
  %9347 = vmatpush2.bf16.msra.mxu0 %v638
  %9348 = vmatprep.subr.bf16.mxu0 %v637
  %9349 = vmatpush2.bf16.msra.mxu0 %v636
  %9350 = vmatprep.subr.bf16.mxu0 %v635
  %9351 = vmatpush2.bf16.msra.mxu0 %v634
  %9352 = vmatprep.subr.bf16.mxu0 %v633
  %9353 = vmatpush2.bf16.msra.mxu0 %v632
  %9354 = vmatprep.subr.bf16.mxu0 %v631
  %9355 = vmatpush2.bf16.msra.mxu0 %v630
  %9356 = vmatprep.subr.bf16.mxu0 %v629
  %9357 = vmatpush2.bf16.msra.mxu0 %v628
  %9358 = vmatprep.subr.bf16.mxu0 %v627
  %9359 = vmatpush2.bf16.msra.mxu0 %v626
  %9360 = vmatprep.mubr.bf16.mxu0 %v9068
  %9361 = vmatmul.mubr.bf16.gmra.mxu0 %v9067
  %v9362 = vpop.f32.mrf.mxu0
  %v9363 = vadd.f32 0.0, %v9362
  %v9364 = vpop.f32.mrf.mxu0
  %v9365 = vadd.f32 0.0, %v9364
  %v9366 = vpop.f32.mrf.mxu0
  %v9367 = vpop.f32.mrf.mxu0
  %9368 = vdwg.mxu0
  %v9369 = vadd.f32 %v9326, %v9363
  %v9370 = vadd.f32 %v9327, %v9365
  %v9371 = vtanh.pop %v9369
  %v9372 = vtanh.pop %v9370
  %v9373 = vpack.c.bf16 %v9371, %v9371
  %v9374 = vpack.c.bf16 %v9372, %v9372
  %9375 = vmatprep.subr.bf16.mxu0 %v1003
  %9376 = vmatpush1.bf16.msra.mxu0 %v1002
  %9377 = vmatprep.subr.bf16.mxu0 %v1001
  %9378 = vmatpush1.bf16.msra.mxu0 %v1000
  %9379 = vmatprep.subr.bf16.mxu0 %v999
  %9380 = vmatpush1.bf16.msra.mxu0 %v998
  %9381 = vmatprep.subr.bf16.mxu0 %v997
  %9382 = vmatpush1.bf16.msra.mxu0 %v996
  %9383 = vmatprep.subr.bf16.mxu0 %v995
  %9384 = vmatpush1.bf16.msra.mxu0 %v994
  %9385 = vmatprep.subr.bf16.mxu0 %v993
  %9386 = vmatpush1.bf16.msra.mxu0 %v992
  %9387 = vmatprep.subr.bf16.mxu0 %v991
  %9388 = vmatpush1.bf16.msra.mxu0 %v990
  %9389 = vmatprep.subr.bf16.mxu0 %v989
  %9390 = vmatpush1.bf16.msra.mxu0 %v988
  %9391 = vmatprep.subr.bf16.mxu0 %v1019
  %9392 = vmatpush2.bf16.msra.mxu0 %v1018
  %9393 = vmatprep.subr.bf16.mxu0 %v1017
  %9394 = vmatpush2.bf16.msra.mxu0 %v1016
  %9395 = vmatprep.subr.bf16.mxu0 %v1015
  %9396 = vmatpush2.bf16.msra.mxu0 %v1014
  %9397 = vmatprep.subr.bf16.mxu0 %v1013
  %9398 = vmatpush2.bf16.msra.mxu0 %v1012
  %9399 = vmatprep.subr.bf16.mxu0 %v1011
  %9400 = vmatpush2.bf16.msra.mxu0 %v1010
  %9401 = vmatprep.subr.bf16.mxu0 %v1009
  %9402 = vmatpush2.bf16.msra.mxu0 %v1008
  %9403 = vmatprep.subr.bf16.mxu0 %v1007
  %9404 = vmatpush2.bf16.msra.mxu0 %v1006
  %9405 = vmatprep.subr.bf16.mxu0 %v1005
  %9406 = vmatpush2.bf16.msra.mxu0 %v1004
  %9407 = vmatprep.mubr.bf16.mxu0 %v9374
  %9408 = vmatmul.mubr.bf16.gmra.mxu0 %v9373
  %v9409 = vpop.f32.mrf.mxu0
  %v9410 = vadd.f32 %v789, %v9409
  %v9411 = vpop.f32.mrf.mxu0
  %v9412 = vadd.f32 %v793, %v9411
  %v9413 = vpop.f32.mrf.mxu0
  %v9414 = vpop.f32.mrf.mxu0
  %9415 = vdwg.mxu0
  %9416 = vmatprep.subr.bf16.mxu0 %v1035
  %9417 = vmatpush1.bf16.msra.mxu0 %v1034
  %9418 = vmatprep.subr.bf16.mxu0 %v1033
  %9419 = vmatpush1.bf16.msra.mxu0 %v1032
  %9420 = vmatprep.subr.bf16.mxu0 %v1031
  %9421 = vmatpush1.bf16.msra.mxu0 %v1030
  %9422 = vmatprep.subr.bf16.mxu0 %v1029
  %9423 = vmatpush1.bf16.msra.mxu0 %v1028
  %9424 = vmatprep.subr.bf16.mxu0 %v1027
  %9425 = vmatpush1.bf16.msra.mxu0 %v1026
  %9426 = vmatprep.subr.bf16.mxu0 %v1025
  %9427 = vmatpush1.bf16.msra.mxu0 %v1024
  %9428 = vmatprep.subr.bf16.mxu0 %v1023
  %9429 = vmatpush1.bf16.msra.mxu0 %v1022
  %9430 = vmatprep.subr.bf16.mxu0 %v1021
  %9431 = vmatpush1.bf16.msra.mxu0 %v1020
  %9432 = vmatprep.subr.bf16.mxu0 %v1051
  %9433 = vmatpush2.bf16.msra.mxu0 %v1050
  %9434 = vmatprep.subr.bf16.mxu0 %v1049
  %9435 = vmatpush2.bf16.msra.mxu0 %v1048
  %9436 = vmatprep.subr.bf16.mxu0 %v1047
  %9437 = vmatpush2.bf16.msra.mxu0 %v1046
  %9438 = vmatprep.subr.bf16.mxu0 %v1045
  %9439 = vmatpush2.bf16.msra.mxu0 %v1044
  %9440 = vmatprep.subr.bf16.mxu0 %v1043
  %9441 = vmatpush2.bf16.msra.mxu0 %v1042
  %9442 = vmatprep.subr.bf16.mxu0 %v1041
  %9443 = vmatpush2.bf16.msra.mxu0 %v1040
  %9444 = vmatprep.subr.bf16.mxu0 %v1039
  %9445 = vmatpush2.bf16.msra.mxu0 %v1038
  %9446 = vmatprep.subr.bf16.mxu0 %v1037
  %9447 = vmatpush2.bf16.msra.mxu0 %v1036
  %9448 = vmatprep.mubr.bf16.mxu0 %v9154
  %9449 = vmatmul.mubr.bf16.gmra.mxu0 %v9153
  %v9450 = vpop.f32.mrf.mxu0
  %v9451 = vadd.f32 %v9410, %v9450
  %v9452 = vpop.f32.mrf.mxu0
  %v9453 = vadd.f32 %v9412, %v9452
  %v9454 = vpop.f32.mrf.mxu0
  %v9455 = vpop.f32.mrf.mxu0
  %9456 = vdwg.mxu0
  %v9457 = vtanh.pop %v9451
  %v9458 = vtanh.pop %v9453
  %v9459 = vpack.c.bf16 %v9457, %v9457
  %v9460 = vpack.c.bf16 %v9458, %v9458
  %s9461 = scalar_lea.vmem %s6, 3456
  %v9462 = vld [vmem:[%s9461] sm:$0xf]
  %v9463 = vld [vmem:[%s9461 + $0x4] sm:$0xf]
  %v9464 = vld [vmem:[%s9461 + $0x8] sm:$0xf]
  %v9465 = vld [vmem:[%s9461 + $0xc] sm:$0xf]
  %v9466 = vld [vmem:[%s9461 + $0x10] sm:$0xf]
  %v9467 = vld [vmem:[%s9461 + $0x14] sm:$0xf]
  %v9468 = vld [vmem:[%s9461 + $0x18] sm:$0xf]
  %v9469 = vld [vmem:[%s9461 + $0x1c] sm:$0xf]
  %v9470 = vld [vmem:[%s9461 + $0x20] sm:$0xf]
  %v9471 = vld [vmem:[%s9461 + $0x24] sm:$0xf]
  %v9472 = vld [vmem:[%s9461 + $0x28] sm:$0xf]
  %v9473 = vld [vmem:[%s9461 + $0x2c] sm:$0xf]
  %v9474 = vld [vmem:[%s9461 + $0x30] sm:$0xf]
  %v9475 = vld [vmem:[%s9461 + $0x34] sm:$0xf]
  %v9476 = vld [vmem:[%s9461 + $0x38] sm:$0xf]
  %v9477 = vld [vmem:[%s9461 + $0x3c] sm:$0xf]
  %v9478 = vld [vmem:[%s9461 + $0x40] sm:$0xf]
  %v9479 = vld [vmem:[%s9461 + $0x44] sm:$0xf]
  %v9480 = vld [vmem:[%s9461 + $0x48] sm:$0xf]
  %v9481 = vld [vmem:[%s9461 + $0x4c] sm:$0xf]
  %v9482 = vld [vmem:[%s9461 + $0x50] sm:$0xf]
  %v9483 = vld [vmem:[%s9461 + $0x54] sm:$0xf]
  %v9484 = vld [vmem:[%s9461 + $0x58] sm:$0xf]
  %v9485 = vld [vmem:[%s9461 + $0x5c] sm:$0xf]
  %v9486 = vld [vmem:[%s9461 + $0x60] sm:$0xf]
  %v9487 = vld [vmem:[%s9461 + $0x64] sm:$0xf]
  %v9488 = vld [vmem:[%s9461 + $0x68] sm:$0xf]
  %v9489 = vld [vmem:[%s9461 + $0x6c] sm:$0xf]
  %v9490 = vld [vmem:[%s9461 + $0x70] sm:$0xf]
  %v9491 = vld [vmem:[%s9461 + $0x74] sm:$0xf]
  %v9492 = vld [vmem:[%s9461 + $0x78] sm:$0xf]
  %v9493 = vld [vmem:[%s9461 + $0x7c] sm:$0xf]
  %v9526 = vunpack.c.l.b16 %v9462
  %v9527 = vunpack.c.l.b16 %v9463
  %v9528 = vunpack.c.l.b16 %v9464
  %v9529 = vunpack.c.l.b16 %v9465
  %v9530 = vunpack.c.l.b16 %v9466
  %v9531 = vunpack.c.l.b16 %v9467
  %v9532 = vunpack.c.l.b16 %v9468
  %v9533 = vunpack.c.l.b16 %v9469
  %v9534 = vunpack.c.l.b16 %v9470
  %v9535 = vunpack.c.l.b16 %v9471
  %v9536 = vunpack.c.l.b16 %v9472
  %v9537 = vunpack.c.l.b16 %v9473
  %v9538 = vunpack.c.l.b16 %v9474
  %v9539 = vunpack.c.l.b16 %v9475
  %v9540 = vunpack.c.l.b16 %v9476
  %v9541 = vunpack.c.l.b16 %v9477
  %v9542 = vunpack.c.l.b16 %v9478
  %v9543 = vunpack.c.l.b16 %v9479
  %v9544 = vunpack.c.l.b16 %v9480
  %v9545 = vunpack.c.l.b16 %v9481
  %v9546 = vunpack.c.l.b16 %v9482
  %v9547 = vunpack.c.l.b16 %v9483
  %v9548 = vunpack.c.l.b16 %v9484
  %v9549 = vunpack.c.l.b16 %v9485
  %v9550 = vunpack.c.l.b16 %v9486
  %v9551 = vunpack.c.l.b16 %v9487
  %v9552 = vunpack.c.l.b16 %v9488
  %v9553 = vunpack.c.l.b16 %v9489
  %v9554 = vunpack.c.l.b16 %v9490
  %v9555 = vunpack.c.l.b16 %v9491
  %v9556 = vunpack.c.l.b16 %v9492
  %v9557 = vunpack.c.l.b16 %v9493
  %v9558 = vpack.c.b16 %v9527, %v9526
  %v9559 = vpack.c.b16 %v9529, %v9528
  %v9560 = vpack.c.b16 %v9531, %v9530
  %v9561 = vpack.c.b16 %v9533, %v9532
  %v9562 = vpack.c.b16 %v9535, %v9534
  %v9563 = vpack.c.b16 %v9537, %v9536
  %v9564 = vpack.c.b16 %v9539, %v9538
  %v9565 = vpack.c.b16 %v9541, %v9540
  %v9566 = vpack.c.b16 %v9543, %v9542
  %v9567 = vpack.c.b16 %v9545, %v9544
  %v9568 = vpack.c.b16 %v9547, %v9546
  %v9569 = vpack.c.b16 %v9549, %v9548
  %v9570 = vpack.c.b16 %v9551, %v9550
  %v9571 = vpack.c.b16 %v9553, %v9552
  %v9572 = vpack.c.b16 %v9555, %v9554
  %v9573 = vpack.c.b16 %v9557, %v9556
  %9590 = vmatprep.subr.bf16.mxu0 0
  %9591 = vmatpush1.bf16.msra.mxu0 %v9565
  %9592 = vmatprep.subr.bf16.mxu0 0
  %9593 = vmatpush1.bf16.msra.mxu0 %v9564
  %9594 = vmatprep.subr.bf16.mxu0 0
  %9595 = vmatpush1.bf16.msra.mxu0 %v9563
  %9596 = vmatprep.subr.bf16.mxu0 0
  %9597 = vmatpush1.bf16.msra.mxu0 %v9562
  %9598 = vmatprep.subr.bf16.mxu0 0
  %9599 = vmatpush1.bf16.msra.mxu0 %v9561
  %9600 = vmatprep.subr.bf16.mxu0 0
  %9601 = vmatpush1.bf16.msra.mxu0 %v9560
  %9602 = vmatprep.subr.bf16.mxu0 0
  %9603 = vmatpush1.bf16.msra.mxu0 %v9559
  %9604 = vmatprep.subr.bf16.mxu0 0
  %9605 = vmatpush1.bf16.msra.mxu0 %v9558
  %9606 = vmatprep.subr.bf16.mxu0 0
  %9607 = vmatpush2.bf16.msra.mxu0 %v9573
  %9608 = vmatprep.subr.bf16.mxu0 0
  %9609 = vmatpush2.bf16.msra.mxu0 %v9572
  %9610 = vmatprep.subr.bf16.mxu0 0
  %9611 = vmatpush2.bf16.msra.mxu0 %v9571
  %9612 = vmatprep.subr.bf16.mxu0 0
  %9613 = vmatpush2.bf16.msra.mxu0 %v9570
  %9614 = vmatprep.subr.bf16.mxu0 0
  %9615 = vmatpush2.bf16.msra.mxu0 %v9569
  %9616 = vmatprep.subr.bf16.mxu0 0
  %9617 = vmatpush2.bf16.msra.mxu0 %v9568
  %9618 = vmatprep.subr.bf16.mxu0 0
  %9619 = vmatpush2.bf16.msra.mxu0 %v9567
  %9620 = vmatprep.subr.bf16.mxu0 0
  %9621 = vmatpush2.bf16.msra.mxu0 %v9566
  %9622 = vmatprep.mubr.bf16.mxu0 %v9460
  %9623 = vmatmul.mubr.bf16.gmra.mxu0 %v9459
  %v9624 = vpop.f32.mrf.mxu0
  %v9625 = vadd.f32 0.0, %v9624
  %v9626 = vpop.f32.mrf.mxu0
  %v9627 = vpop.f32.mrf.mxu0
  %v9628 = vpop.f32.mrf.mxu0
  %9629 = vdwg.mxu0
  %v9630 = vadd.f32 %v9324, %v9625
  %v9631 = vld [vmem:[%s7] sm:$0x1]
  %v9633 = vlaneseq
  %v9634 = vshrl.u32 %v9633, 7
  %v9635 = vsub.s32 0, %v9634
  %v9636 = vrot.slane %v9631, %v9635
  %v9638 = vadd.f32 %v9630, %v9636
  %vm9639 = vcmask 80896
  %9640 = vst.msk [vmem:[%s8] sm:$0xff] %vm9639, %v9638
  // Predicated region
  $region34: #{rnn_forward.1} parent=0 // pred_check
    _
  $region35: #{rnn_forward.1} parent=0 // pred_check_branch
    %9642 = sbr.rel (0) target = $region37
  $region36: #{rnn_forward.1} parent=0 // pred_region
    _
  $region37: #{rnn_forward.1} parent=0 // pred_fallthru
    _
  // Predicated region
  $region38: #{rnn_forward.1} parent=0 // pred_check
    _
  $region39: #{rnn_forward.1} parent=0 // pred_check_branch
    %9644 = sbr.rel (0) target = $region41
  $region40: #{rnn_forward.1} parent=0 // pred_region
    _
  $region41: #{rnn_forward.1} parent=0 // pred_fallthru
    _

</llo_original>
